<compile_context>
chip_gen: v7x
topology: tpu7x:2x2x1
jax: 0.10.0
libtpu: 0.0.40
codegen_flags: <defaults>
</compile_context>

<pallas_src>
import functools

import jax
import jax.numpy as jnp
from jax.experimental import pallas as pl
from jax.experimental.pallas import tpu as pltpu


# ----------------------------------------------------------------------------
# In-kernel helpers
# ----------------------------------------------------------------------------
def _layer_norm(v, g, b, eps=1e-5):
    # PyTorch LayerNorm: biased variance (divide by E), eps inside the sqrt.
    mu = jnp.mean(v, axis=-1, keepdims=True)
    var = jnp.mean((v - mu) ** 2, axis=-1, keepdims=True)
    return (v - mu) * jax.lax.rsqrt(var + eps) * g + b


# ----------------------------------------------------------------------------
# Single fused forward kernel: encoder stack + summary + heads
# ----------------------------------------------------------------------------
def make_forward_kernel(*, batch, sent_len, embed_len, num_heads, num_layers,
                        compute_dtype=jnp.bfloat16):
    N, L, E = batch, sent_len, embed_len
    dh = E // num_heads
    scale = 1.0 / float(dh) ** 0.5

    def mm(a, b):
        # 2-D matmul on the MXU, f32 accumulation regardless of operand dtype.
        return jnp.dot(a.astype(compute_dtype), b.astype(compute_dtype),
                       preferred_element_type=jnp.float32)

    def kernel(x_ref,
               wqh_ref, wkh_ref, wvh_ref, bqh_ref, bkh_ref, bvh_ref,
               woh_ref, bo_ref,
               g1_ref, be1_ref, wf1_ref, bf1_ref, wf2_ref, bf2_ref,
               g2_ref, be2_ref,
               ssw1_ref, ssb1_ref, ssw2_ref, ssb2_ref,
               fc1w_ref, fc1b_ref, wvad_ref, wquad_ref, bquad_ref,
               out_ref):
        x = x_ref[...]                                   # (N*L, E) float32

        # ---------------- transformer encoder layers (static unroll) --------
        for layer in range(num_layers):
            x_c = x.astype(compute_dtype)                # hoisted: one cast/layer

            acc = jnp.zeros((N * L, E), jnp.float32)
            for h in range(num_heads):                   # static, H iterations
                lh = layer * num_heads + h               # per-(layer, head) weights
                # Per-head projections: batched over all N*L tokens, no lane
                # slices (weights pre-split per head in the wrapper).
                q = mm(x_c, wqh_ref[lh]) + bqh_ref[lh]   # (N*L, dh) f32
                k = mm(x_c, wkh_ref[lh]) + bkh_ref[lh]
                v = mm(x_c, wvh_ref[lh]) + bvh_ref[lh]

                q3 = q.reshape(N, L, dh).astype(compute_dtype)
                k3 = k.reshape(N, L, dh).astype(compute_dtype)
                v3 = v.reshape(N, L, dh).astype(compute_dtype)

                # Scores / softmax / context batched over the batch dim.
                s = jnp.einsum('nld,nmd->nlm', q3, k3,
                               preferred_element_type=jnp.float32) * scale
                s = s - jnp.max(s, axis=-1, keepdims=True)
                p = jnp.exp(s)
                p = p * pl.reciprocal(jnp.sum(p, axis=-1, keepdims=True),
                                      approx=True)
                ctx = jnp.einsum('nlm,nmd->nld', p.astype(compute_dtype), v3,
                                 preferred_element_type=jnp.float32)

                # Fold this head through its slice of the output projection;
                # equivalent to concat(heads) @ Wo but with no concatenate.
                acc = acc + mm(ctx.reshape(N * L, dh), woh_ref[lh])
            attn = acc + bo_ref[layer]                   # (N*L, E)

            # Post-norm residual blocks (PyTorch TransformerEncoderLayer).
            h1 = _layer_norm(x + attn, g1_ref[layer], be1_ref[layer])
            f = jnp.maximum(mm(h1, wf1_ref[layer]) + bf1_ref[layer], 0.0)
            f = mm(f, wf2_ref[layer]) + bf2_ref[layer]
            x = _layer_norm(h1 + f, g2_ref[layer], be2_ref[layer])

        # ---------------- Flatten + sequence_summary (flatten-free) ---------
        # flat(x)[n] @ W1  ==  sum_l x[n, l, :] @ W1[l]  with W1 as (L, E, E).
        x3 = x.reshape(N, L, E)                          # leading-dim split
        e_out = ssw1_ref.shape[-1]
        out1 = jnp.zeros((N, e_out), jnp.float32)
        for l in range(L):                               # static loop
            out1 = out1 + mm(x3[:, l, :], ssw1_ref[l])
        out1 = out1 + ssb1_ref[...]

        h1s = jnp.maximum(out1, 0.0)                     # ReLU
        s2 = mm(h1s, ssw2_ref[...]) + ssb2_ref[...]      # (N, 2H)

        # fc_1: ReLU -> Dropout(identity) -> Linear
        o = mm(jnp.maximum(s2, 0.0), fc1w_ref[...]) + fc1b_ref[...]     # (N, H)

        # Heads: VAD fused into one bias-free matmul; quad: ReLU -> Linear.
        vad = mm(o, wvad_ref[...])                                      # (N, 6)
        quad = mm(jnp.maximum(o, 0.0), wquad_ref[...]) + bquad_ref[...]  # (N,4)

        # Single lane-contiguous store; wrapper splits val/aro/dom/quad.
        out_ref[...] = jnp.concatenate([vad, quad], axis=-1)

    return kernel


# ----------------------------------------------------------------------------
# Parameter init (deterministic, synthetic), layer params stacked on axis 0
# ----------------------------------------------------------------------------
def init_params(key, vocab, L, E, H, mult, num_layers, pad_idx):
    keys = iter(jax.random.split(key, 40))

    def nrm(shape, scale=0.05):
        return (scale * jax.random.normal(next(keys), shape)).astype(jnp.float32)

    p = {}
    word = nrm((vocab, E))
    p['word_emb'] = word.at[pad_idx].set(0.0)            # padding_idx row zeroed
    p['pos_emb'] = nrm((L, E))

    # Per-layer weights pre-transposed to (in, out) and stacked on a leading
    # num_layers axis.
    p['wq'] = nrm((num_layers, E, E))
    p['wk'] = nrm((num_layers, E, E))
    p['wv'] = nrm((num_layers, E, E))
    p['bq'] = nrm((num_layers, 1, E))
    p['bk'] = nrm((num_layers, 1, E))
    p['bv'] = nrm((num_layers, 1, E))
    p['wo'] = nrm((num_layers, E, E))
    p['bo'] = nrm((num_layers, 1, E))
    p['g1'] = jnp.ones((num_layers, 1, E), jnp.float32)
    p['be1'] = jnp.zeros((num_layers, 1, E), jnp.float32)
    p['wf1'] = nrm((num_layers, E, mult))
    p['bf1'] = nrm((num_layers, 1, mult))
    p['wf2'] = nrm((num_layers, mult, E))
    p['bf2'] = nrm((num_layers, 1, E))
    p['g2'] = jnp.ones((num_layers, 1, E), jnp.float32)
    p['be2'] = jnp.zeros((num_layers, 1, E), jnp.float32)

    p['ss_w1'] = nrm((L * E, E))
    p['ss_b1'] = nrm((1, E))
    p['ss_w2'] = nrm((E, 2 * H))
    p['ss_b2'] = nrm((1, 2 * H))
    p['fc1_w'] = nrm((2 * H, H))
    p['fc1_b'] = nrm((1, H))
    p['wval'] = nrm((H, 2))     # bias=False in the reference module
    p['waro'] = nrm((H, 2))     # bias=False
    p['wdom'] = nrm((H, 2))     # bias=False
    p['wquad'] = nrm((H, 4))
    p['bquad'] = nrm((1, 4))
    return p


# ----------------------------------------------------------------------------
# Forward wrapper (version == 0 path, inference mode)
# ----------------------------------------------------------------------------
def multitask_forward(tokens, params, num_heads, use_dom=True,
                      compute_dtype=jnp.bfloat16):
    N, L = tokens.shape
    E = params['word_emb'].shape[1]
    num_layers = params['wq'].shape[0]
    dh = E // num_heads
    cd = compute_dtype

    # word_emb(x) + pos_emb(arange(L)); dropout == identity (eval). Plain-JAX
    # gather glue; the rest of the forward is one fused Pallas kernel.
    x = (params['word_emb'][tokens] + params['pos_emb'][None, :, :]
         ).astype(jnp.float32)
    x2d = x.reshape(N * L, E)

    # ---- free wrapper-side layout plumbing ---------------------------------
    # Split Q/K/V/O weights per head and stack on a flat (num_layers*H) axis
    # so the kernel indexes them with a static leading index (no lane slices).
    def split_heads_w(w):          # (layers, E, E) -> (layers*H, E, dh)
        return (w.reshape(num_layers, E, num_heads, dh)
                 .transpose(0, 2, 1, 3)
                 .reshape(num_layers * num_heads, E, dh))

    def split_heads_b(b):          # (layers, 1, E) -> (layers*H, 1, dh)
        return (b.reshape(num_layers, 1, num_heads, dh)
                 .transpose(0, 2, 1, 3)
                 .reshape(num_layers * num_heads, 1, dh))

    wqh = split_heads_w(params['wq']).astype(cd)
    wkh = split_heads_w(params['wk']).astype(cd)
    wvh = split_heads_w(params['wv']).astype(cd)
    bqh = split_heads_b(params['bq'])
    bkh = split_heads_b(params['bk'])
    bvh = split_heads_b(params['bv'])
    # Wo rows are already head-major: simple reshape, no transpose needed.
    woh = params['wo'].reshape(num_layers * num_heads, dh, E).astype(cd)

    ssw1 = params['ss_w1'].reshape(L, E, params['ss_w1'].shape[-1]).astype(cd)
    wvad = jnp.concatenate(
        [params['wval'], params['waro'], params['wdom']], axis=1).astype(cd)

    wf1 = params['wf1'].astype(cd)
    wf2 = params['wf2'].astype(cd)
    ssw2 = params['ss_w2'].astype(cd)
    fc1w = params['fc1_w'].astype(cd)
    wquad = params['wquad'].astype(cd)

    kernel = make_forward_kernel(batch=N, sent_len=L, embed_len=E,
                                 num_heads=num_heads, num_layers=num_layers,
                                 compute_dtype=compute_dtype)

    out = pl.pallas_call(
        kernel,
        out_shape=jax.ShapeDtypeStruct((N, 10), jnp.float32),
        compiler_params=pltpu.CompilerParams(
            vmem_limit_bytes=32 * 1024 * 1024),
    )(x2d,
      wqh, wkh, wvh, bqh, bkh, bvh, woh, params['bo'],
      params['g1'], params['be1'],
      wf1, params['bf1'], wf2, params['bf2'],
      params['g2'], params['be2'],
      ssw1, params['ss_b1'], ssw2, params['ss_b2'],
      fc1w, params['fc1_b'],
      wvad, wquad, params['bquad'])

    val = out[:, 0:2]
    aro = out[:, 2:4]
    dom = out[:, 4:6]
    quad = out[:, 6:10]
    if use_dom:
        return jnp.stack([val, aro, dom]), quad          # (3, N, 2), (N, 4)
    return jnp.stack([val, aro]), quad


# ----------------------------------------------------------------------------
if __name__ == "__main__":
    N, L, E, H = 2, 8, 32, 32          # batch, sent_len, embed_len, hidden_size
    HEADS, MULT, LAYERS = 4, 64, 2     # att_heads, ffn dim, num_layers
    VOCAB, PAD = 50, 0

    key = jax.random.PRNGKey(0)
    k_tok, k_par = jax.random.split(key)
    params = init_params(k_par, VOCAB, L, E, H, MULT, LAYERS, PAD)
    tokens = jax.random.randint(k_tok, (N, L), 0, VOCAB, dtype=jnp.int32)

    fwd = jax.jit(functools.partial(multitask_forward, num_heads=HEADS,
                                    use_dom=True))
    vad, quad = fwd(tokens, params)
    (vad, quad) = jax.block_until_ready((vad, quad))

    assert vad.shape == (3, N, 2) and vad.dtype == jnp.float32
    assert quad.shape == (N, 4) and quad.dtype == jnp.float32
    print("KERNEL_OK")
</pallas_src>

<mosaic_0001>
module attributes {stable_mosaic.version = 11 : i64} {
  func.func @kernel(%arg0: memref<16x32xf32, #tpu.memory_space<vmem>>, %arg1: memref<8x32x8xbf16, #tpu.memory_space<vmem>>, %arg2: memref<8x32x8xbf16, #tpu.memory_space<vmem>>, %arg3: memref<8x32x8xbf16, #tpu.memory_space<vmem>>, %arg4: memref<8x1x8xf32, #tpu.memory_space<vmem>>, %arg5: memref<8x1x8xf32, #tpu.memory_space<vmem>>, %arg6: memref<8x1x8xf32, #tpu.memory_space<vmem>>, %arg7: memref<8x8x32xbf16, #tpu.memory_space<vmem>>, %arg8: memref<2x1x32xf32, #tpu.memory_space<vmem>>, %arg9: memref<2x1x32xf32, #tpu.memory_space<vmem>>, %arg10: memref<2x1x32xf32, #tpu.memory_space<vmem>>, %arg11: memref<2x32x64xbf16, #tpu.memory_space<vmem>>, %arg12: memref<2x1x64xf32, #tpu.memory_space<vmem>>, %arg13: memref<2x64x32xbf16, #tpu.memory_space<vmem>>, %arg14: memref<2x1x32xf32, #tpu.memory_space<vmem>>, %arg15: memref<2x1x32xf32, #tpu.memory_space<vmem>>, %arg16: memref<2x1x32xf32, #tpu.memory_space<vmem>>, %arg17: memref<8x32x32xbf16, #tpu.memory_space<vmem>>, %arg18: memref<1x32xf32, #tpu.memory_space<vmem>>, %arg19: memref<32x64xbf16, #tpu.memory_space<vmem>>, %arg20: memref<1x64xf32, #tpu.memory_space<vmem>>, %arg21: memref<64x32xbf16, #tpu.memory_space<vmem>>, %arg22: memref<1x32xf32, #tpu.memory_space<vmem>>, %arg23: memref<32x6xbf16, #tpu.memory_space<vmem>>, %arg24: memref<32x4xbf16, #tpu.memory_space<vmem>>, %arg25: memref<1x4xf32, #tpu.memory_space<vmem>>, %arg26: memref<2x10xf32, #tpu.memory_space<vmem>>) attributes {dimension_semantics = [], scalar_prefetch = 0 : i64, scratch_operands = 0 : i64, tpu.core_type = #tpu.core_type<tc>} {
    %c0 = arith.constant 0 : index
    %c0_0 = arith.constant 0 : index
    %0 = vector.load %arg0[%c0, %c0_0] : memref<16x32xf32, #tpu.memory_space<vmem>>, vector<16x32xf32>
    %1 = arith.truncf %0 : vector<16x32xf32> to vector<16x32xbf16>
    %cst = arith.constant 0.000000e+00 : f32
    %2 = vector.broadcast %cst : f32 to vector<16x32xf32>
    %c0_1 = arith.constant 0 : index
    %c0_2 = arith.constant 0 : index
    %c0_3 = arith.constant 0 : index
    %3 = vector.load %arg1[%c0_1, %c0_2, %c0_3] : memref<8x32x8xbf16, #tpu.memory_space<vmem>>, vector<1x32x8xbf16>
    %4 = vector.shape_cast %3 : vector<1x32x8xbf16> to vector<32x8xbf16>
    %cst_4 = arith.constant dense<0.000000e+00> : vector<16x8xf32>
    %5 = tpu.matmul %1, %4, %cst_4 {dimension_numbers = #tpu.dot_dimension_numbers<[1], [0], [0], [1], [0, 0, 1, 1], [], []>} : vector<16x32xbf16>, vector<32x8xbf16>, vector<16x8xf32> -> vector<16x8xf32>
    %c0_5 = arith.constant 0 : index
    %c0_6 = arith.constant 0 : index
    %c0_7 = arith.constant 0 : index
    %6 = vector.load %arg4[%c0_5, %c0_6, %c0_7] : memref<8x1x8xf32, #tpu.memory_space<vmem>>, vector<1x1x8xf32>
    %7 = vector.shape_cast %6 : vector<1x1x8xf32> to vector<1x8xf32>
    %8 = vector.broadcast %7 : vector<1x8xf32> to vector<16x8xf32>
    %9 = arith.addf %5, %8 : vector<16x8xf32>
    %c0_8 = arith.constant 0 : index
    %c0_9 = arith.constant 0 : index
    %c0_10 = arith.constant 0 : index
    %10 = vector.load %arg2[%c0_8, %c0_9, %c0_10] : memref<8x32x8xbf16, #tpu.memory_space<vmem>>, vector<1x32x8xbf16>
    %11 = vector.shape_cast %10 : vector<1x32x8xbf16> to vector<32x8xbf16>
    %cst_11 = arith.constant dense<0.000000e+00> : vector<16x8xf32>
    %12 = tpu.matmul %1, %11, %cst_11 {dimension_numbers = #tpu.dot_dimension_numbers<[1], [0], [0], [1], [0, 0, 1, 1], [], []>} : vector<16x32xbf16>, vector<32x8xbf16>, vector<16x8xf32> -> vector<16x8xf32>
    %c0_12 = arith.constant 0 : index
    %c0_13 = arith.constant 0 : index
    %c0_14 = arith.constant 0 : index
    %13 = vector.load %arg5[%c0_12, %c0_13, %c0_14] : memref<8x1x8xf32, #tpu.memory_space<vmem>>, vector<1x1x8xf32>
    %14 = vector.shape_cast %13 : vector<1x1x8xf32> to vector<1x8xf32>
    %15 = vector.broadcast %14 : vector<1x8xf32> to vector<16x8xf32>
    %16 = arith.addf %12, %15 : vector<16x8xf32>
    %c0_15 = arith.constant 0 : index
    %c0_16 = arith.constant 0 : index
    %c0_17 = arith.constant 0 : index
    %17 = vector.load %arg3[%c0_15, %c0_16, %c0_17] : memref<8x32x8xbf16, #tpu.memory_space<vmem>>, vector<1x32x8xbf16>
    %18 = vector.shape_cast %17 : vector<1x32x8xbf16> to vector<32x8xbf16>
    %cst_18 = arith.constant dense<0.000000e+00> : vector<16x8xf32>
    %19 = tpu.matmul %1, %18, %cst_18 {dimension_numbers = #tpu.dot_dimension_numbers<[1], [0], [0], [1], [0, 0, 1, 1], [], []>} : vector<16x32xbf16>, vector<32x8xbf16>, vector<16x8xf32> -> vector<16x8xf32>
    %c0_19 = arith.constant 0 : index
    %c0_20 = arith.constant 0 : index
    %c0_21 = arith.constant 0 : index
    %20 = vector.load %arg6[%c0_19, %c0_20, %c0_21] : memref<8x1x8xf32, #tpu.memory_space<vmem>>, vector<1x1x8xf32>
    %21 = vector.shape_cast %20 : vector<1x1x8xf32> to vector<1x8xf32>
    %22 = vector.broadcast %21 : vector<1x8xf32> to vector<16x8xf32>
    %23 = arith.addf %19, %22 : vector<16x8xf32>
    %24 = vector.shape_cast %9 : vector<16x8xf32> to vector<2x8x8xf32>
    %25 = arith.truncf %24 : vector<2x8x8xf32> to vector<2x8x8xbf16>
    %26 = vector.shape_cast %16 : vector<16x8xf32> to vector<2x8x8xf32>
    %27 = arith.truncf %26 : vector<2x8x8xf32> to vector<2x8x8xbf16>
    %28 = vector.shape_cast %23 : vector<16x8xf32> to vector<2x8x8xf32>
    %29 = arith.truncf %28 : vector<2x8x8xf32> to vector<2x8x8xbf16>
    "tpu.trace_start"() <{level = 10 : i32, message = "nld,nmd->nlm"}> : () -> ()
    %cst_22 = arith.constant dense<0.000000e+00> : vector<2x8x8xf32>
    %30 = tpu.matmul %25, %27, %cst_22 {dimension_numbers = #tpu.dot_dimension_numbers<[2], [2], [1], [1], [0, 0, 0, 1, 1, 1], [0], [0]>} : vector<2x8x8xbf16>, vector<2x8x8xbf16>, vector<2x8x8xf32> -> vector<2x8x8xf32>
    "tpu.trace_stop"() : () -> ()
    %cst_23 = arith.constant 0.353553385 : f32
    %31 = vector.broadcast %cst_23 : f32 to vector<2x8x8xf32>
    %32 = arith.mulf %30, %31 : vector<2x8x8xf32>
    %cst_24 = arith.constant dense<0xFF800000> : vector<2x8xf32>
    %33 = vector.multi_reduction <maximumf>, %32, %cst_24 [2] : vector<2x8x8xf32> to vector<2x8xf32>
    %34 = vector.shape_cast %33 : vector<2x8xf32> to vector<2x8x1xf32>
    %35 = vector.broadcast %34 : vector<2x8x1xf32> to vector<2x8x8xf32>
    %36 = arith.subf %32, %35 : vector<2x8x8xf32>
    %37 = math.exp %36 : vector<2x8x8xf32>
    %cst_25 = arith.constant dense<0.000000e+00> : vector<2x8xf32>
    %38 = vector.multi_reduction <add>, %37, %cst_25 [2] : vector<2x8x8xf32> to vector<2x8xf32>
    %39 = vector.shape_cast %38 : vector<2x8xf32> to vector<2x8x1xf32>
    %40 = tpu.reciprocal %39 {approx = true} : vector<2x8x1xf32> -> vector<2x8x1xf32>
    %41 = vector.broadcast %40 : vector<2x8x1xf32> to vector<2x8x8xf32>
    %42 = arith.mulf %37, %41 : vector<2x8x8xf32>
    %43 = arith.truncf %42 : vector<2x8x8xf32> to vector<2x8x8xbf16>
    "tpu.trace_start"() <{level = 10 : i32, message = "nlm,nmd->nld"}> : () -> ()
    %cst_26 = arith.constant dense<0.000000e+00> : vector<2x8x8xf32>
    %44 = tpu.matmul %43, %29, %cst_26 {dimension_numbers = #tpu.dot_dimension_numbers<[2], [1], [1], [2], [0, 0, 0, 1, 1, 2], [0], [0]>} : vector<2x8x8xbf16>, vector<2x8x8xbf16>, vector<2x8x8xf32> -> vector<2x8x8xf32>
    "tpu.trace_stop"() : () -> ()
    %45 = vector.shape_cast %44 : vector<2x8x8xf32> to vector<16x8xf32>
    %c0_27 = arith.constant 0 : index
    %c0_28 = arith.constant 0 : index
    %c0_29 = arith.constant 0 : index
    %46 = vector.load %arg7[%c0_27, %c0_28, %c0_29] : memref<8x8x32xbf16, #tpu.memory_space<vmem>>, vector<1x8x32xbf16>
    %47 = vector.shape_cast %46 : vector<1x8x32xbf16> to vector<8x32xbf16>
    %48 = arith.truncf %45 : vector<16x8xf32> to vector<16x8xbf16>
    %cst_30 = arith.constant dense<0.000000e+00> : vector<16x32xf32>
    %49 = tpu.matmul %48, %47, %cst_30 {dimension_numbers = #tpu.dot_dimension_numbers<[1], [0], [0], [1], [0, 0, 1, 1], [], []>} : vector<16x8xbf16>, vector<8x32xbf16>, vector<16x32xf32> -> vector<16x32xf32>
    %50 = arith.addf %2, %49 : vector<16x32xf32>
    %c1 = arith.constant 1 : index
    %c0_31 = arith.constant 0 : index
    %c0_32 = arith.constant 0 : index
    %51 = vector.load %arg1[%c1, %c0_31, %c0_32] : memref<8x32x8xbf16, #tpu.memory_space<vmem>>, vector<1x32x8xbf16>
    %52 = vector.shape_cast %51 : vector<1x32x8xbf16> to vector<32x8xbf16>
    %cst_33 = arith.constant dense<0.000000e+00> : vector<16x8xf32>
    %53 = tpu.matmul %1, %52, %cst_33 {dimension_numbers = #tpu.dot_dimension_numbers<[1], [0], [0], [1], [0, 0, 1, 1], [], []>} : vector<16x32xbf16>, vector<32x8xbf16>, vector<16x8xf32> -> vector<16x8xf32>
    %c1_34 = arith.constant 1 : index
    %c0_35 = arith.constant 0 : index
    %c0_36 = arith.constant 0 : index
    %54 = vector.load %arg4[%c1_34, %c0_35, %c0_36] : memref<8x1x8xf32, #tpu.memory_space<vmem>>, vector<1x1x8xf32>
    %55 = vector.shape_cast %54 : vector<1x1x8xf32> to vector<1x8xf32>
    %56 = vector.broadcast %55 : vector<1x8xf32> to vector<16x8xf32>
    %57 = arith.addf %53, %56 : vector<16x8xf32>
    %c1_37 = arith.constant 1 : index
    %c0_38 = arith.constant 0 : index
    %c0_39 = arith.constant 0 : index
    %58 = vector.load %arg2[%c1_37, %c0_38, %c0_39] : memref<8x32x8xbf16, #tpu.memory_space<vmem>>, vector<1x32x8xbf16>
    %59 = vector.shape_cast %58 : vector<1x32x8xbf16> to vector<32x8xbf16>
    %cst_40 = arith.constant dense<0.000000e+00> : vector<16x8xf32>
    %60 = tpu.matmul %1, %59, %cst_40 {dimension_numbers = #tpu.dot_dimension_numbers<[1], [0], [0], [1], [0, 0, 1, 1], [], []>} : vector<16x32xbf16>, vector<32x8xbf16>, vector<16x8xf32> -> vector<16x8xf32>
    %c1_41 = arith.constant 1 : index
    %c0_42 = arith.constant 0 : index
    %c0_43 = arith.constant 0 : index
    %61 = vector.load %arg5[%c1_41, %c0_42, %c0_43] : memref<8x1x8xf32, #tpu.memory_space<vmem>>, vector<1x1x8xf32>
    %62 = vector.shape_cast %61 : vector<1x1x8xf32> to vector<1x8xf32>
    %63 = vector.broadcast %62 : vector<1x8xf32> to vector<16x8xf32>
    %64 = arith.addf %60, %63 : vector<16x8xf32>
    %c1_44 = arith.constant 1 : index
    %c0_45 = arith.constant 0 : index
    %c0_46 = arith.constant 0 : index
    %65 = vector.load %arg3[%c1_44, %c0_45, %c0_46] : memref<8x32x8xbf16, #tpu.memory_space<vmem>>, vector<1x32x8xbf16>
    %66 = vector.shape_cast %65 : vector<1x32x8xbf16> to vector<32x8xbf16>
    %cst_47 = arith.constant dense<0.000000e+00> : vector<16x8xf32>
    %67 = tpu.matmul %1, %66, %cst_47 {dimension_numbers = #tpu.dot_dimension_numbers<[1], [0], [0], [1], [0, 0, 1, 1], [], []>} : vector<16x32xbf16>, vector<32x8xbf16>, vector<16x8xf32> -> vector<16x8xf32>
    %c1_48 = arith.constant 1 : index
    %c0_49 = arith.constant 0 : index
    %c0_50 = arith.constant 0 : index
    %68 = vector.load %arg6[%c1_48, %c0_49, %c0_50] : memref<8x1x8xf32, #tpu.memory_space<vmem>>, vector<1x1x8xf32>
    %69 = vector.shape_cast %68 : vector<1x1x8xf32> to vector<1x8xf32>
    %70 = vector.broadcast %69 : vector<1x8xf32> to vector<16x8xf32>
    %71 = arith.addf %67, %70 : vector<16x8xf32>
    %72 = vector.shape_cast %57 : vector<16x8xf32> to vector<2x8x8xf32>
    %73 = arith.truncf %72 : vector<2x8x8xf32> to vector<2x8x8xbf16>
    %74 = vector.shape_cast %64 : vector<16x8xf32> to vector<2x8x8xf32>
    %75 = arith.truncf %74 : vector<2x8x8xf32> to vector<2x8x8xbf16>
    %76 = vector.shape_cast %71 : vector<16x8xf32> to vector<2x8x8xf32>
    %77 = arith.truncf %76 : vector<2x8x8xf32> to vector<2x8x8xbf16>
    "tpu.trace_start"() <{level = 10 : i32, message = "nld,nmd->nlm"}> : () -> ()
    %cst_51 = arith.constant dense<0.000000e+00> : vector<2x8x8xf32>
    %78 = tpu.matmul %73, %75, %cst_51 {dimension_numbers = #tpu.dot_dimension_numbers<[2], [2], [1], [1], [0, 0, 0, 1, 1, 1], [0], [0]>} : vector<2x8x8xbf16>, vector<2x8x8xbf16>, vector<2x8x8xf32> -> vector<2x8x8xf32>
    "tpu.trace_stop"() : () -> ()
    %cst_52 = arith.constant 0.353553385 : f32
    %79 = vector.broadcast %cst_52 : f32 to vector<2x8x8xf32>
    %80 = arith.mulf %78, %79 : vector<2x8x8xf32>
    %cst_53 = arith.constant dense<0xFF800000> : vector<2x8xf32>
    %81 = vector.multi_reduction <maximumf>, %80, %cst_53 [2] : vector<2x8x8xf32> to vector<2x8xf32>
    %82 = vector.shape_cast %81 : vector<2x8xf32> to vector<2x8x1xf32>
    %83 = vector.broadcast %82 : vector<2x8x1xf32> to vector<2x8x8xf32>
    %84 = arith.subf %80, %83 : vector<2x8x8xf32>
    %85 = math.exp %84 : vector<2x8x8xf32>
    %cst_54 = arith.constant dense<0.000000e+00> : vector<2x8xf32>
    %86 = vector.multi_reduction <add>, %85, %cst_54 [2] : vector<2x8x8xf32> to vector<2x8xf32>
    %87 = vector.shape_cast %86 : vector<2x8xf32> to vector<2x8x1xf32>
    %88 = tpu.reciprocal %87 {approx = true} : vector<2x8x1xf32> -> vector<2x8x1xf32>
    %89 = vector.broadcast %88 : vector<2x8x1xf32> to vector<2x8x8xf32>
    %90 = arith.mulf %85, %89 : vector<2x8x8xf32>
    %91 = arith.truncf %90 : vector<2x8x8xf32> to vector<2x8x8xbf16>
    "tpu.trace_start"() <{level = 10 : i32, message = "nlm,nmd->nld"}> : () -> ()
    %cst_55 = arith.constant dense<0.000000e+00> : vector<2x8x8xf32>
    %92 = tpu.matmul %91, %77, %cst_55 {dimension_numbers = #tpu.dot_dimension_numbers<[2], [1], [1], [2], [0, 0, 0, 1, 1, 2], [0], [0]>} : vector<2x8x8xbf16>, vector<2x8x8xbf16>, vector<2x8x8xf32> -> vector<2x8x8xf32>
    "tpu.trace_stop"() : () -> ()
    %93 = vector.shape_cast %92 : vector<2x8x8xf32> to vector<16x8xf32>
    %c1_56 = arith.constant 1 : index
    %c0_57 = arith.constant 0 : index
    %c0_58 = arith.constant 0 : index
    %94 = vector.load %arg7[%c1_56, %c0_57, %c0_58] : memref<8x8x32xbf16, #tpu.memory_space<vmem>>, vector<1x8x32xbf16>
    %95 = vector.shape_cast %94 : vector<1x8x32xbf16> to vector<8x32xbf16>
    %96 = arith.truncf %93 : vector<16x8xf32> to vector<16x8xbf16>
    %cst_59 = arith.constant dense<0.000000e+00> : vector<16x32xf32>
    %97 = tpu.matmul %96, %95, %cst_59 {dimension_numbers = #tpu.dot_dimension_numbers<[1], [0], [0], [1], [0, 0, 1, 1], [], []>} : vector<16x8xbf16>, vector<8x32xbf16>, vector<16x32xf32> -> vector<16x32xf32>
    %98 = arith.addf %50, %97 : vector<16x32xf32>
    %c2 = arith.constant 2 : index
    %c0_60 = arith.constant 0 : index
    %c0_61 = arith.constant 0 : index
    %99 = vector.load %arg1[%c2, %c0_60, %c0_61] : memref<8x32x8xbf16, #tpu.memory_space<vmem>>, vector<1x32x8xbf16>
    %100 = vector.shape_cast %99 : vector<1x32x8xbf16> to vector<32x8xbf16>
    %cst_62 = arith.constant dense<0.000000e+00> : vector<16x8xf32>
    %101 = tpu.matmul %1, %100, %cst_62 {dimension_numbers = #tpu.dot_dimension_numbers<[1], [0], [0], [1], [0, 0, 1, 1], [], []>} : vector<16x32xbf16>, vector<32x8xbf16>, vector<16x8xf32> -> vector<16x8xf32>
    %c2_63 = arith.constant 2 : index
    %c0_64 = arith.constant 0 : index
    %c0_65 = arith.constant 0 : index
    %102 = vector.load %arg4[%c2_63, %c0_64, %c0_65] : memref<8x1x8xf32, #tpu.memory_space<vmem>>, vector<1x1x8xf32>
    %103 = vector.shape_cast %102 : vector<1x1x8xf32> to vector<1x8xf32>
    %104 = vector.broadcast %103 : vector<1x8xf32> to vector<16x8xf32>
    %105 = arith.addf %101, %104 : vector<16x8xf32>
    %c2_66 = arith.constant 2 : index
    %c0_67 = arith.constant 0 : index
    %c0_68 = arith.constant 0 : index
    %106 = vector.load %arg2[%c2_66, %c0_67, %c0_68] : memref<8x32x8xbf16, #tpu.memory_space<vmem>>, vector<1x32x8xbf16>
    %107 = vector.shape_cast %106 : vector<1x32x8xbf16> to vector<32x8xbf16>
    %cst_69 = arith.constant dense<0.000000e+00> : vector<16x8xf32>
    %108 = tpu.matmul %1, %107, %cst_69 {dimension_numbers = #tpu.dot_dimension_numbers<[1], [0], [0], [1], [0, 0, 1, 1], [], []>} : vector<16x32xbf16>, vector<32x8xbf16>, vector<16x8xf32> -> vector<16x8xf32>
    %c2_70 = arith.constant 2 : index
    %c0_71 = arith.constant 0 : index
    %c0_72 = arith.constant 0 : index
    %109 = vector.load %arg5[%c2_70, %c0_71, %c0_72] : memref<8x1x8xf32, #tpu.memory_space<vmem>>, vector<1x1x8xf32>
    %110 = vector.shape_cast %109 : vector<1x1x8xf32> to vector<1x8xf32>
    %111 = vector.broadcast %110 : vector<1x8xf32> to vector<16x8xf32>
    %112 = arith.addf %108, %111 : vector<16x8xf32>
    %c2_73 = arith.constant 2 : index
    %c0_74 = arith.constant 0 : index
    %c0_75 = arith.constant 0 : index
    %113 = vector.load %arg3[%c2_73, %c0_74, %c0_75] : memref<8x32x8xbf16, #tpu.memory_space<vmem>>, vector<1x32x8xbf16>
    %114 = vector.shape_cast %113 : vector<1x32x8xbf16> to vector<32x8xbf16>
    %cst_76 = arith.constant dense<0.000000e+00> : vector<16x8xf32>
    %115 = tpu.matmul %1, %114, %cst_76 {dimension_numbers = #tpu.dot_dimension_numbers<[1], [0], [0], [1], [0, 0, 1, 1], [], []>} : vector<16x32xbf16>, vector<32x8xbf16>, vector<16x8xf32> -> vector<16x8xf32>
    %c2_77 = arith.constant 2 : index
    %c0_78 = arith.constant 0 : index
    %c0_79 = arith.constant 0 : index
    %116 = vector.load %arg6[%c2_77, %c0_78, %c0_79] : memref<8x1x8xf32, #tpu.memory_space<vmem>>, vector<1x1x8xf32>
    %117 = vector.shape_cast %116 : vector<1x1x8xf32> to vector<1x8xf32>
    %118 = vector.broadcast %117 : vector<1x8xf32> to vector<16x8xf32>
    %119 = arith.addf %115, %118 : vector<16x8xf32>
    %120 = vector.shape_cast %105 : vector<16x8xf32> to vector<2x8x8xf32>
    %121 = arith.truncf %120 : vector<2x8x8xf32> to vector<2x8x8xbf16>
    %122 = vector.shape_cast %112 : vector<16x8xf32> to vector<2x8x8xf32>
    %123 = arith.truncf %122 : vector<2x8x8xf32> to vector<2x8x8xbf16>
    %124 = vector.shape_cast %119 : vector<16x8xf32> to vector<2x8x8xf32>
    %125 = arith.truncf %124 : vector<2x8x8xf32> to vector<2x8x8xbf16>
    "tpu.trace_start"() <{level = 10 : i32, message = "nld,nmd->nlm"}> : () -> ()
    %cst_80 = arith.constant dense<0.000000e+00> : vector<2x8x8xf32>
    %126 = tpu.matmul %121, %123, %cst_80 {dimension_numbers = #tpu.dot_dimension_numbers<[2], [2], [1], [1], [0, 0, 0, 1, 1, 1], [0], [0]>} : vector<2x8x8xbf16>, vector<2x8x8xbf16>, vector<2x8x8xf32> -> vector<2x8x8xf32>
    "tpu.trace_stop"() : () -> ()
    %cst_81 = arith.constant 0.353553385 : f32
    %127 = vector.broadcast %cst_81 : f32 to vector<2x8x8xf32>
    %128 = arith.mulf %126, %127 : vector<2x8x8xf32>
    %cst_82 = arith.constant dense<0xFF800000> : vector<2x8xf32>
    %129 = vector.multi_reduction <maximumf>, %128, %cst_82 [2] : vector<2x8x8xf32> to vector<2x8xf32>
    %130 = vector.shape_cast %129 : vector<2x8xf32> to vector<2x8x1xf32>
    %131 = vector.broadcast %130 : vector<2x8x1xf32> to vector<2x8x8xf32>
    %132 = arith.subf %128, %131 : vector<2x8x8xf32>
    %133 = math.exp %132 : vector<2x8x8xf32>
    %cst_83 = arith.constant dense<0.000000e+00> : vector<2x8xf32>
    %134 = vector.multi_reduction <add>, %133, %cst_83 [2] : vector<2x8x8xf32> to vector<2x8xf32>
    %135 = vector.shape_cast %134 : vector<2x8xf32> to vector<2x8x1xf32>
    %136 = tpu.reciprocal %135 {approx = true} : vector<2x8x1xf32> -> vector<2x8x1xf32>
    %137 = vector.broadcast %136 : vector<2x8x1xf32> to vector<2x8x8xf32>
    %138 = arith.mulf %133, %137 : vector<2x8x8xf32>
    %139 = arith.truncf %138 : vector<2x8x8xf32> to vector<2x8x8xbf16>
    "tpu.trace_start"() <{level = 10 : i32, message = "nlm,nmd->nld"}> : () -> ()
    %cst_84 = arith.constant dense<0.000000e+00> : vector<2x8x8xf32>
    %140 = tpu.matmul %139, %125, %cst_84 {dimension_numbers = #tpu.dot_dimension_numbers<[2], [1], [1], [2], [0, 0, 0, 1, 1, 2], [0], [0]>} : vector<2x8x8xbf16>, vector<2x8x8xbf16>, vector<2x8x8xf32> -> vector<2x8x8xf32>
    "tpu.trace_stop"() : () -> ()
    %141 = vector.shape_cast %140 : vector<2x8x8xf32> to vector<16x8xf32>
    %c2_85 = arith.constant 2 : index
    %c0_86 = arith.constant 0 : index
    %c0_87 = arith.constant 0 : index
    %142 = vector.load %arg7[%c2_85, %c0_86, %c0_87] : memref<8x8x32xbf16, #tpu.memory_space<vmem>>, vector<1x8x32xbf16>
    %143 = vector.shape_cast %142 : vector<1x8x32xbf16> to vector<8x32xbf16>
    %144 = arith.truncf %141 : vector<16x8xf32> to vector<16x8xbf16>
    %cst_88 = arith.constant dense<0.000000e+00> : vector<16x32xf32>
    %145 = tpu.matmul %144, %143, %cst_88 {dimension_numbers = #tpu.dot_dimension_numbers<[1], [0], [0], [1], [0, 0, 1, 1], [], []>} : vector<16x8xbf16>, vector<8x32xbf16>, vector<16x32xf32> -> vector<16x32xf32>
    %146 = arith.addf %98, %145 : vector<16x32xf32>
    %c3 = arith.constant 3 : index
    %c0_89 = arith.constant 0 : index
    %c0_90 = arith.constant 0 : index
    %147 = vector.load %arg1[%c3, %c0_89, %c0_90] : memref<8x32x8xbf16, #tpu.memory_space<vmem>>, vector<1x32x8xbf16>
    %148 = vector.shape_cast %147 : vector<1x32x8xbf16> to vector<32x8xbf16>
    %cst_91 = arith.constant dense<0.000000e+00> : vector<16x8xf32>
    %149 = tpu.matmul %1, %148, %cst_91 {dimension_numbers = #tpu.dot_dimension_numbers<[1], [0], [0], [1], [0, 0, 1, 1], [], []>} : vector<16x32xbf16>, vector<32x8xbf16>, vector<16x8xf32> -> vector<16x8xf32>
    %c3_92 = arith.constant 3 : index
    %c0_93 = arith.constant 0 : index
    %c0_94 = arith.constant 0 : index
    %150 = vector.load %arg4[%c3_92, %c0_93, %c0_94] : memref<8x1x8xf32, #tpu.memory_space<vmem>>, vector<1x1x8xf32>
    %151 = vector.shape_cast %150 : vector<1x1x8xf32> to vector<1x8xf32>
    %152 = vector.broadcast %151 : vector<1x8xf32> to vector<16x8xf32>
    %153 = arith.addf %149, %152 : vector<16x8xf32>
    %c3_95 = arith.constant 3 : index
    %c0_96 = arith.constant 0 : index
    %c0_97 = arith.constant 0 : index
    %154 = vector.load %arg2[%c3_95, %c0_96, %c0_97] : memref<8x32x8xbf16, #tpu.memory_space<vmem>>, vector<1x32x8xbf16>
    %155 = vector.shape_cast %154 : vector<1x32x8xbf16> to vector<32x8xbf16>
    %cst_98 = arith.constant dense<0.000000e+00> : vector<16x8xf32>
    %156 = tpu.matmul %1, %155, %cst_98 {dimension_numbers = #tpu.dot_dimension_numbers<[1], [0], [0], [1], [0, 0, 1, 1], [], []>} : vector<16x32xbf16>, vector<32x8xbf16>, vector<16x8xf32> -> vector<16x8xf32>
    %c3_99 = arith.constant 3 : index
    %c0_100 = arith.constant 0 : index
    %c0_101 = arith.constant 0 : index
    %157 = vector.load %arg5[%c3_99, %c0_100, %c0_101] : memref<8x1x8xf32, #tpu.memory_space<vmem>>, vector<1x1x8xf32>
    %158 = vector.shape_cast %157 : vector<1x1x8xf32> to vector<1x8xf32>
    %159 = vector.broadcast %158 : vector<1x8xf32> to vector<16x8xf32>
    %160 = arith.addf %156, %159 : vector<16x8xf32>
    %c3_102 = arith.constant 3 : index
    %c0_103 = arith.constant 0 : index
    %c0_104 = arith.constant 0 : index
    %161 = vector.load %arg3[%c3_102, %c0_103, %c0_104] : memref<8x32x8xbf16, #tpu.memory_space<vmem>>, vector<1x32x8xbf16>
    %162 = vector.shape_cast %161 : vector<1x32x8xbf16> to vector<32x8xbf16>
    %cst_105 = arith.constant dense<0.000000e+00> : vector<16x8xf32>
    %163 = tpu.matmul %1, %162, %cst_105 {dimension_numbers = #tpu.dot_dimension_numbers<[1], [0], [0], [1], [0, 0, 1, 1], [], []>} : vector<16x32xbf16>, vector<32x8xbf16>, vector<16x8xf32> -> vector<16x8xf32>
    %c3_106 = arith.constant 3 : index
    %c0_107 = arith.constant 0 : index
    %c0_108 = arith.constant 0 : index
    %164 = vector.load %arg6[%c3_106, %c0_107, %c0_108] : memref<8x1x8xf32, #tpu.memory_space<vmem>>, vector<1x1x8xf32>
    %165 = vector.shape_cast %164 : vector<1x1x8xf32> to vector<1x8xf32>
    %166 = vector.broadcast %165 : vector<1x8xf32> to vector<16x8xf32>
    %167 = arith.addf %163, %166 : vector<16x8xf32>
    %168 = vector.shape_cast %153 : vector<16x8xf32> to vector<2x8x8xf32>
    %169 = arith.truncf %168 : vector<2x8x8xf32> to vector<2x8x8xbf16>
    %170 = vector.shape_cast %160 : vector<16x8xf32> to vector<2x8x8xf32>
    %171 = arith.truncf %170 : vector<2x8x8xf32> to vector<2x8x8xbf16>
    %172 = vector.shape_cast %167 : vector<16x8xf32> to vector<2x8x8xf32>
    %173 = arith.truncf %172 : vector<2x8x8xf32> to vector<2x8x8xbf16>
    "tpu.trace_start"() <{level = 10 : i32, message = "nld,nmd->nlm"}> : () -> ()
    %cst_109 = arith.constant dense<0.000000e+00> : vector<2x8x8xf32>
    %174 = tpu.matmul %169, %171, %cst_109 {dimension_numbers = #tpu.dot_dimension_numbers<[2], [2], [1], [1], [0, 0, 0, 1, 1, 1], [0], [0]>} : vector<2x8x8xbf16>, vector<2x8x8xbf16>, vector<2x8x8xf32> -> vector<2x8x8xf32>
    "tpu.trace_stop"() : () -> ()
    %cst_110 = arith.constant 0.353553385 : f32
    %175 = vector.broadcast %cst_110 : f32 to vector<2x8x8xf32>
    %176 = arith.mulf %174, %175 : vector<2x8x8xf32>
    %cst_111 = arith.constant dense<0xFF800000> : vector<2x8xf32>
    %177 = vector.multi_reduction <maximumf>, %176, %cst_111 [2] : vector<2x8x8xf32> to vector<2x8xf32>
    %178 = vector.shape_cast %177 : vector<2x8xf32> to vector<2x8x1xf32>
    %179 = vector.broadcast %178 : vector<2x8x1xf32> to vector<2x8x8xf32>
    %180 = arith.subf %176, %179 : vector<2x8x8xf32>
    %181 = math.exp %180 : vector<2x8x8xf32>
    %cst_112 = arith.constant dense<0.000000e+00> : vector<2x8xf32>
    %182 = vector.multi_reduction <add>, %181, %cst_112 [2] : vector<2x8x8xf32> to vector<2x8xf32>
    %183 = vector.shape_cast %182 : vector<2x8xf32> to vector<2x8x1xf32>
    %184 = tpu.reciprocal %183 {approx = true} : vector<2x8x1xf32> -> vector<2x8x1xf32>
    %185 = vector.broadcast %184 : vector<2x8x1xf32> to vector<2x8x8xf32>
    %186 = arith.mulf %181, %185 : vector<2x8x8xf32>
    %187 = arith.truncf %186 : vector<2x8x8xf32> to vector<2x8x8xbf16>
    "tpu.trace_start"() <{level = 10 : i32, message = "nlm,nmd->nld"}> : () -> ()
    %cst_113 = arith.constant dense<0.000000e+00> : vector<2x8x8xf32>
    %188 = tpu.matmul %187, %173, %cst_113 {dimension_numbers = #tpu.dot_dimension_numbers<[2], [1], [1], [2], [0, 0, 0, 1, 1, 2], [0], [0]>} : vector<2x8x8xbf16>, vector<2x8x8xbf16>, vector<2x8x8xf32> -> vector<2x8x8xf32>
    "tpu.trace_stop"() : () -> ()
    %189 = vector.shape_cast %188 : vector<2x8x8xf32> to vector<16x8xf32>
    %c3_114 = arith.constant 3 : index
    %c0_115 = arith.constant 0 : index
    %c0_116 = arith.constant 0 : index
    %190 = vector.load %arg7[%c3_114, %c0_115, %c0_116] : memref<8x8x32xbf16, #tpu.memory_space<vmem>>, vector<1x8x32xbf16>
    %191 = vector.shape_cast %190 : vector<1x8x32xbf16> to vector<8x32xbf16>
    %192 = arith.truncf %189 : vector<16x8xf32> to vector<16x8xbf16>
    %cst_117 = arith.constant dense<0.000000e+00> : vector<16x32xf32>
    %193 = tpu.matmul %192, %191, %cst_117 {dimension_numbers = #tpu.dot_dimension_numbers<[1], [0], [0], [1], [0, 0, 1, 1], [], []>} : vector<16x8xbf16>, vector<8x32xbf16>, vector<16x32xf32> -> vector<16x32xf32>
    %194 = arith.addf %146, %193 : vector<16x32xf32>
    %c0_118 = arith.constant 0 : index
    %c0_119 = arith.constant 0 : index
    %c0_120 = arith.constant 0 : index
    %195 = vector.load %arg8[%c0_118, %c0_119, %c0_120] : memref<2x1x32xf32, #tpu.memory_space<vmem>>, vector<1x1x32xf32>
    %196 = vector.shape_cast %195 : vector<1x1x32xf32> to vector<1x32xf32>
    %197 = vector.broadcast %196 : vector<1x32xf32> to vector<16x32xf32>
    %198 = arith.addf %194, %197 : vector<16x32xf32>
    %199 = arith.addf %0, %198 : vector<16x32xf32>
    %c0_121 = arith.constant 0 : index
    %c0_122 = arith.constant 0 : index
    %c0_123 = arith.constant 0 : index
    %200 = vector.load %arg9[%c0_121, %c0_122, %c0_123] : memref<2x1x32xf32, #tpu.memory_space<vmem>>, vector<1x1x32xf32>
    %201 = vector.shape_cast %200 : vector<1x1x32xf32> to vector<1x32xf32>
    %c0_124 = arith.constant 0 : index
    %c0_125 = arith.constant 0 : index
    %c0_126 = arith.constant 0 : index
    %202 = vector.load %arg10[%c0_124, %c0_125, %c0_126] : memref<2x1x32xf32, #tpu.memory_space<vmem>>, vector<1x1x32xf32>
    %203 = vector.shape_cast %202 : vector<1x1x32xf32> to vector<1x32xf32>
    %cst_127 = arith.constant dense<0.000000e+00> : vector<16xf32>
    %204 = vector.multi_reduction <add>, %199, %cst_127 [1] : vector<16x32xf32> to vector<16xf32>
    %205 = vector.shape_cast %204 : vector<16xf32> to vector<16x1xf32>
    %cst_128 = arith.constant 3.200000e+01 : f32
    %206 = vector.broadcast %cst_128 : f32 to vector<16x1xf32>
    %207 = arith.divf %205, %206 : vector<16x1xf32>
    %208 = vector.broadcast %207 : vector<16x1xf32> to vector<16x32xf32>
    %209 = arith.subf %199, %208 : vector<16x32xf32>
    %210 = arith.mulf %209, %209 : vector<16x32xf32>
    %cst_129 = arith.constant dense<0.000000e+00> : vector<16xf32>
    %211 = vector.multi_reduction <add>, %210, %cst_129 [1] : vector<16x32xf32> to vector<16xf32>
    %212 = vector.shape_cast %211 : vector<16xf32> to vector<16x1xf32>
    %cst_130 = arith.constant 3.200000e+01 : f32
    %213 = vector.broadcast %cst_130 : f32 to vector<16x1xf32>
    %214 = arith.divf %212, %213 : vector<16x1xf32>
    %215 = vector.broadcast %207 : vector<16x1xf32> to vector<16x32xf32>
    %216 = arith.subf %199, %215 : vector<16x32xf32>
    %cst_131 = arith.constant 9.99999974E-6 : f32
    %217 = vector.broadcast %cst_131 : f32 to vector<16x1xf32>
    %218 = arith.addf %214, %217 : vector<16x1xf32>
    %219 = math.rsqrt %218 : vector<16x1xf32>
    %220 = vector.broadcast %219 : vector<16x1xf32> to vector<16x32xf32>
    %221 = arith.mulf %216, %220 : vector<16x32xf32>
    %222 = vector.broadcast %201 : vector<1x32xf32> to vector<16x32xf32>
    %223 = arith.mulf %221, %222 : vector<16x32xf32>
    %224 = vector.broadcast %203 : vector<1x32xf32> to vector<16x32xf32>
    %225 = arith.addf %223, %224 : vector<16x32xf32>
    %c0_132 = arith.constant 0 : index
    %c0_133 = arith.constant 0 : index
    %c0_134 = arith.constant 0 : index
    %226 = vector.load %arg11[%c0_132, %c0_133, %c0_134] : memref<2x32x64xbf16, #tpu.memory_space<vmem>>, vector<1x32x64xbf16>
    %227 = vector.shape_cast %226 : vector<1x32x64xbf16> to vector<32x64xbf16>
    %228 = arith.truncf %225 : vector<16x32xf32> to vector<16x32xbf16>
    %cst_135 = arith.constant dense<0.000000e+00> : vector<16x64xf32>
    %229 = tpu.matmul %228, %227, %cst_135 {dimension_numbers = #tpu.dot_dimension_numbers<[1], [0], [0], [1], [0, 0, 1, 1], [], []>} : vector<16x32xbf16>, vector<32x64xbf16>, vector<16x64xf32> -> vector<16x64xf32>
    %c0_136 = arith.constant 0 : index
    %c0_137 = arith.constant 0 : index
    %c0_138 = arith.constant 0 : index
    %230 = vector.load %arg12[%c0_136, %c0_137, %c0_138] : memref<2x1x64xf32, #tpu.memory_space<vmem>>, vector<1x1x64xf32>
    %231 = vector.shape_cast %230 : vector<1x1x64xf32> to vector<1x64xf32>
    %232 = vector.broadcast %231 : vector<1x64xf32> to vector<16x64xf32>
    %233 = arith.addf %229, %232 : vector<16x64xf32>
    %cst_139 = arith.constant 0.000000e+00 : f32
    %234 = vector.broadcast %cst_139 : f32 to vector<16x64xf32>
    %235 = arith.maximumf %233, %234 : vector<16x64xf32>
    %c0_140 = arith.constant 0 : index
    %c0_141 = arith.constant 0 : index
    %c0_142 = arith.constant 0 : index
    %236 = vector.load %arg13[%c0_140, %c0_141, %c0_142] : memref<2x64x32xbf16, #tpu.memory_space<vmem>>, vector<1x64x32xbf16>
    %237 = vector.shape_cast %236 : vector<1x64x32xbf16> to vector<64x32xbf16>
    %238 = arith.truncf %235 : vector<16x64xf32> to vector<16x64xbf16>
    %cst_143 = arith.constant dense<0.000000e+00> : vector<16x32xf32>
    %239 = tpu.matmul %238, %237, %cst_143 {dimension_numbers = #tpu.dot_dimension_numbers<[1], [0], [0], [1], [0, 0, 1, 1], [], []>} : vector<16x64xbf16>, vector<64x32xbf16>, vector<16x32xf32> -> vector<16x32xf32>
    %c0_144 = arith.constant 0 : index
    %c0_145 = arith.constant 0 : index
    %c0_146 = arith.constant 0 : index
    %240 = vector.load %arg14[%c0_144, %c0_145, %c0_146] : memref<2x1x32xf32, #tpu.memory_space<vmem>>, vector<1x1x32xf32>
    %241 = vector.shape_cast %240 : vector<1x1x32xf32> to vector<1x32xf32>
    %242 = vector.broadcast %241 : vector<1x32xf32> to vector<16x32xf32>
    %243 = arith.addf %239, %242 : vector<16x32xf32>
    %244 = arith.addf %225, %243 : vector<16x32xf32>
    %c0_147 = arith.constant 0 : index
    %c0_148 = arith.constant 0 : index
    %c0_149 = arith.constant 0 : index
    %245 = vector.load %arg15[%c0_147, %c0_148, %c0_149] : memref<2x1x32xf32, #tpu.memory_space<vmem>>, vector<1x1x32xf32>
    %246 = vector.shape_cast %245 : vector<1x1x32xf32> to vector<1x32xf32>
    %c0_150 = arith.constant 0 : index
    %c0_151 = arith.constant 0 : index
    %c0_152 = arith.constant 0 : index
    %247 = vector.load %arg16[%c0_150, %c0_151, %c0_152] : memref<2x1x32xf32, #tpu.memory_space<vmem>>, vector<1x1x32xf32>
    %248 = vector.shape_cast %247 : vector<1x1x32xf32> to vector<1x32xf32>
    %cst_153 = arith.constant dense<0.000000e+00> : vector<16xf32>
    %249 = vector.multi_reduction <add>, %244, %cst_153 [1] : vector<16x32xf32> to vector<16xf32>
    %250 = vector.shape_cast %249 : vector<16xf32> to vector<16x1xf32>
    %cst_154 = arith.constant 3.200000e+01 : f32
    %251 = vector.broadcast %cst_154 : f32 to vector<16x1xf32>
    %252 = arith.divf %250, %251 : vector<16x1xf32>
    %253 = vector.broadcast %252 : vector<16x1xf32> to vector<16x32xf32>
    %254 = arith.subf %244, %253 : vector<16x32xf32>
    %255 = arith.mulf %254, %254 : vector<16x32xf32>
    %cst_155 = arith.constant dense<0.000000e+00> : vector<16xf32>
    %256 = vector.multi_reduction <add>, %255, %cst_155 [1] : vector<16x32xf32> to vector<16xf32>
    %257 = vector.shape_cast %256 : vector<16xf32> to vector<16x1xf32>
    %cst_156 = arith.constant 3.200000e+01 : f32
    %258 = vector.broadcast %cst_156 : f32 to vector<16x1xf32>
    %259 = arith.divf %257, %258 : vector<16x1xf32>
    %260 = vector.broadcast %252 : vector<16x1xf32> to vector<16x32xf32>
    %261 = arith.subf %244, %260 : vector<16x32xf32>
    %cst_157 = arith.constant 9.99999974E-6 : f32
    %262 = vector.broadcast %cst_157 : f32 to vector<16x1xf32>
    %263 = arith.addf %259, %262 : vector<16x1xf32>
    %264 = math.rsqrt %263 : vector<16x1xf32>
    %265 = vector.broadcast %264 : vector<16x1xf32> to vector<16x32xf32>
    %266 = arith.mulf %261, %265 : vector<16x32xf32>
    %267 = vector.broadcast %246 : vector<1x32xf32> to vector<16x32xf32>
    %268 = arith.mulf %266, %267 : vector<16x32xf32>
    %269 = vector.broadcast %248 : vector<1x32xf32> to vector<16x32xf32>
    %270 = arith.addf %268, %269 : vector<16x32xf32>
    %271 = arith.truncf %270 : vector<16x32xf32> to vector<16x32xbf16>
    %cst_158 = arith.constant 0.000000e+00 : f32
    %272 = vector.broadcast %cst_158 : f32 to vector<16x32xf32>
    %c4 = arith.constant 4 : index
    %c0_159 = arith.constant 0 : index
    %c0_160 = arith.constant 0 : index
    %273 = vector.load %arg1[%c4, %c0_159, %c0_160] : memref<8x32x8xbf16, #tpu.memory_space<vmem>>, vector<1x32x8xbf16>
    %274 = vector.shape_cast %273 : vector<1x32x8xbf16> to vector<32x8xbf16>
    %cst_161 = arith.constant dense<0.000000e+00> : vector<16x8xf32>
    %275 = tpu.matmul %271, %274, %cst_161 {dimension_numbers = #tpu.dot_dimension_numbers<[1], [0], [0], [1], [0, 0, 1, 1], [], []>} : vector<16x32xbf16>, vector<32x8xbf16>, vector<16x8xf32> -> vector<16x8xf32>
    %c4_162 = arith.constant 4 : index
    %c0_163 = arith.constant 0 : index
    %c0_164 = arith.constant 0 : index
    %276 = vector.load %arg4[%c4_162, %c0_163, %c0_164] : memref<8x1x8xf32, #tpu.memory_space<vmem>>, vector<1x1x8xf32>
    %277 = vector.shape_cast %276 : vector<1x1x8xf32> to vector<1x8xf32>
    %278 = vector.broadcast %277 : vector<1x8xf32> to vector<16x8xf32>
    %279 = arith.addf %275, %278 : vector<16x8xf32>
    %c4_165 = arith.constant 4 : index
    %c0_166 = arith.constant 0 : index
    %c0_167 = arith.constant 0 : index
    %280 = vector.load %arg2[%c4_165, %c0_166, %c0_167] : memref<8x32x8xbf16, #tpu.memory_space<vmem>>, vector<1x32x8xbf16>
    %281 = vector.shape_cast %280 : vector<1x32x8xbf16> to vector<32x8xbf16>
    %cst_168 = arith.constant dense<0.000000e+00> : vector<16x8xf32>
    %282 = tpu.matmul %271, %281, %cst_168 {dimension_numbers = #tpu.dot_dimension_numbers<[1], [0], [0], [1], [0, 0, 1, 1], [], []>} : vector<16x32xbf16>, vector<32x8xbf16>, vector<16x8xf32> -> vector<16x8xf32>
    %c4_169 = arith.constant 4 : index
    %c0_170 = arith.constant 0 : index
    %c0_171 = arith.constant 0 : index
    %283 = vector.load %arg5[%c4_169, %c0_170, %c0_171] : memref<8x1x8xf32, #tpu.memory_space<vmem>>, vector<1x1x8xf32>
    %284 = vector.shape_cast %283 : vector<1x1x8xf32> to vector<1x8xf32>
    %285 = vector.broadcast %284 : vector<1x8xf32> to vector<16x8xf32>
    %286 = arith.addf %282, %285 : vector<16x8xf32>
    %c4_172 = arith.constant 4 : index
    %c0_173 = arith.constant 0 : index
    %c0_174 = arith.constant 0 : index
    %287 = vector.load %arg3[%c4_172, %c0_173, %c0_174] : memref<8x32x8xbf16, #tpu.memory_space<vmem>>, vector<1x32x8xbf16>
    %288 = vector.shape_cast %287 : vector<1x32x8xbf16> to vector<32x8xbf16>
    %cst_175 = arith.constant dense<0.000000e+00> : vector<16x8xf32>
    %289 = tpu.matmul %271, %288, %cst_175 {dimension_numbers = #tpu.dot_dimension_numbers<[1], [0], [0], [1], [0, 0, 1, 1], [], []>} : vector<16x32xbf16>, vector<32x8xbf16>, vector<16x8xf32> -> vector<16x8xf32>
    %c4_176 = arith.constant 4 : index
    %c0_177 = arith.constant 0 : index
    %c0_178 = arith.constant 0 : index
    %290 = vector.load %arg6[%c4_176, %c0_177, %c0_178] : memref<8x1x8xf32, #tpu.memory_space<vmem>>, vector<1x1x8xf32>
    %291 = vector.shape_cast %290 : vector<1x1x8xf32> to vector<1x8xf32>
    %292 = vector.broadcast %291 : vector<1x8xf32> to vector<16x8xf32>
    %293 = arith.addf %289, %292 : vector<16x8xf32>
    %294 = vector.shape_cast %279 : vector<16x8xf32> to vector<2x8x8xf32>
    %295 = arith.truncf %294 : vector<2x8x8xf32> to vector<2x8x8xbf16>
    %296 = vector.shape_cast %286 : vector<16x8xf32> to vector<2x8x8xf32>
    %297 = arith.truncf %296 : vector<2x8x8xf32> to vector<2x8x8xbf16>
    %298 = vector.shape_cast %293 : vector<16x8xf32> to vector<2x8x8xf32>
    %299 = arith.truncf %298 : vector<2x8x8xf32> to vector<2x8x8xbf16>
    "tpu.trace_start"() <{level = 10 : i32, message = "nld,nmd->nlm"}> : () -> ()
    %cst_179 = arith.constant dense<0.000000e+00> : vector<2x8x8xf32>
    %300 = tpu.matmul %295, %297, %cst_179 {dimension_numbers = #tpu.dot_dimension_numbers<[2], [2], [1], [1], [0, 0, 0, 1, 1, 1], [0], [0]>} : vector<2x8x8xbf16>, vector<2x8x8xbf16>, vector<2x8x8xf32> -> vector<2x8x8xf32>
    "tpu.trace_stop"() : () -> ()
    %cst_180 = arith.constant 0.353553385 : f32
    %301 = vector.broadcast %cst_180 : f32 to vector<2x8x8xf32>
    %302 = arith.mulf %300, %301 : vector<2x8x8xf32>
    %cst_181 = arith.constant dense<0xFF800000> : vector<2x8xf32>
    %303 = vector.multi_reduction <maximumf>, %302, %cst_181 [2] : vector<2x8x8xf32> to vector<2x8xf32>
    %304 = vector.shape_cast %303 : vector<2x8xf32> to vector<2x8x1xf32>
    %305 = vector.broadcast %304 : vector<2x8x1xf32> to vector<2x8x8xf32>
    %306 = arith.subf %302, %305 : vector<2x8x8xf32>
    %307 = math.exp %306 : vector<2x8x8xf32>
    %cst_182 = arith.constant dense<0.000000e+00> : vector<2x8xf32>
    %308 = vector.multi_reduction <add>, %307, %cst_182 [2] : vector<2x8x8xf32> to vector<2x8xf32>
    %309 = vector.shape_cast %308 : vector<2x8xf32> to vector<2x8x1xf32>
    %310 = tpu.reciprocal %309 {approx = true} : vector<2x8x1xf32> -> vector<2x8x1xf32>
    %311 = vector.broadcast %310 : vector<2x8x1xf32> to vector<2x8x8xf32>
    %312 = arith.mulf %307, %311 : vector<2x8x8xf32>
    %313 = arith.truncf %312 : vector<2x8x8xf32> to vector<2x8x8xbf16>
    "tpu.trace_start"() <{level = 10 : i32, message = "nlm,nmd->nld"}> : () -> ()
    %cst_183 = arith.constant dense<0.000000e+00> : vector<2x8x8xf32>
    %314 = tpu.matmul %313, %299, %cst_183 {dimension_numbers = #tpu.dot_dimension_numbers<[2], [1], [1], [2], [0, 0, 0, 1, 1, 2], [0], [0]>} : vector<2x8x8xbf16>, vector<2x8x8xbf16>, vector<2x8x8xf32> -> vector<2x8x8xf32>
    "tpu.trace_stop"() : () -> ()
    %315 = vector.shape_cast %314 : vector<2x8x8xf32> to vector<16x8xf32>
    %c4_184 = arith.constant 4 : index
    %c0_185 = arith.constant 0 : index
    %c0_186 = arith.constant 0 : index
    %316 = vector.load %arg7[%c4_184, %c0_185, %c0_186] : memref<8x8x32xbf16, #tpu.memory_space<vmem>>, vector<1x8x32xbf16>
    %317 = vector.shape_cast %316 : vector<1x8x32xbf16> to vector<8x32xbf16>
    %318 = arith.truncf %315 : vector<16x8xf32> to vector<16x8xbf16>
    %cst_187 = arith.constant dense<0.000000e+00> : vector<16x32xf32>
    %319 = tpu.matmul %318, %317, %cst_187 {dimension_numbers = #tpu.dot_dimension_numbers<[1], [0], [0], [1], [0, 0, 1, 1], [], []>} : vector<16x8xbf16>, vector<8x32xbf16>, vector<16x32xf32> -> vector<16x32xf32>
    %320 = arith.addf %272, %319 : vector<16x32xf32>
    %c5 = arith.constant 5 : index
    %c0_188 = arith.constant 0 : index
    %c0_189 = arith.constant 0 : index
    %321 = vector.load %arg1[%c5, %c0_188, %c0_189] : memref<8x32x8xbf16, #tpu.memory_space<vmem>>, vector<1x32x8xbf16>
    %322 = vector.shape_cast %321 : vector<1x32x8xbf16> to vector<32x8xbf16>
    %cst_190 = arith.constant dense<0.000000e+00> : vector<16x8xf32>
    %323 = tpu.matmul %271, %322, %cst_190 {dimension_numbers = #tpu.dot_dimension_numbers<[1], [0], [0], [1], [0, 0, 1, 1], [], []>} : vector<16x32xbf16>, vector<32x8xbf16>, vector<16x8xf32> -> vector<16x8xf32>
    %c5_191 = arith.constant 5 : index
    %c0_192 = arith.constant 0 : index
    %c0_193 = arith.constant 0 : index
    %324 = vector.load %arg4[%c5_191, %c0_192, %c0_193] : memref<8x1x8xf32, #tpu.memory_space<vmem>>, vector<1x1x8xf32>
    %325 = vector.shape_cast %324 : vector<1x1x8xf32> to vector<1x8xf32>
    %326 = vector.broadcast %325 : vector<1x8xf32> to vector<16x8xf32>
    %327 = arith.addf %323, %326 : vector<16x8xf32>
    %c5_194 = arith.constant 5 : index
    %c0_195 = arith.constant 0 : index
    %c0_196 = arith.constant 0 : index
    %328 = vector.load %arg2[%c5_194, %c0_195, %c0_196] : memref<8x32x8xbf16, #tpu.memory_space<vmem>>, vector<1x32x8xbf16>
    %329 = vector.shape_cast %328 : vector<1x32x8xbf16> to vector<32x8xbf16>
    %cst_197 = arith.constant dense<0.000000e+00> : vector<16x8xf32>
    %330 = tpu.matmul %271, %329, %cst_197 {dimension_numbers = #tpu.dot_dimension_numbers<[1], [0], [0], [1], [0, 0, 1, 1], [], []>} : vector<16x32xbf16>, vector<32x8xbf16>, vector<16x8xf32> -> vector<16x8xf32>
    %c5_198 = arith.constant 5 : index
    %c0_199 = arith.constant 0 : index
    %c0_200 = arith.constant 0 : index
    %331 = vector.load %arg5[%c5_198, %c0_199, %c0_200] : memref<8x1x8xf32, #tpu.memory_space<vmem>>, vector<1x1x8xf32>
    %332 = vector.shape_cast %331 : vector<1x1x8xf32> to vector<1x8xf32>
    %333 = vector.broadcast %332 : vector<1x8xf32> to vector<16x8xf32>
    %334 = arith.addf %330, %333 : vector<16x8xf32>
    %c5_201 = arith.constant 5 : index
    %c0_202 = arith.constant 0 : index
    %c0_203 = arith.constant 0 : index
    %335 = vector.load %arg3[%c5_201, %c0_202, %c0_203] : memref<8x32x8xbf16, #tpu.memory_space<vmem>>, vector<1x32x8xbf16>
    %336 = vector.shape_cast %335 : vector<1x32x8xbf16> to vector<32x8xbf16>
    %cst_204 = arith.constant dense<0.000000e+00> : vector<16x8xf32>
    %337 = tpu.matmul %271, %336, %cst_204 {dimension_numbers = #tpu.dot_dimension_numbers<[1], [0], [0], [1], [0, 0, 1, 1], [], []>} : vector<16x32xbf16>, vector<32x8xbf16>, vector<16x8xf32> -> vector<16x8xf32>
    %c5_205 = arith.constant 5 : index
    %c0_206 = arith.constant 0 : index
    %c0_207 = arith.constant 0 : index
    %338 = vector.load %arg6[%c5_205, %c0_206, %c0_207] : memref<8x1x8xf32, #tpu.memory_space<vmem>>, vector<1x1x8xf32>
    %339 = vector.shape_cast %338 : vector<1x1x8xf32> to vector<1x8xf32>
    %340 = vector.broadcast %339 : vector<1x8xf32> to vector<16x8xf32>
    %341 = arith.addf %337, %340 : vector<16x8xf32>
    %342 = vector.shape_cast %327 : vector<16x8xf32> to vector<2x8x8xf32>
    %343 = arith.truncf %342 : vector<2x8x8xf32> to vector<2x8x8xbf16>
    %344 = vector.shape_cast %334 : vector<16x8xf32> to vector<2x8x8xf32>
    %345 = arith.truncf %344 : vector<2x8x8xf32> to vector<2x8x8xbf16>
    %346 = vector.shape_cast %341 : vector<16x8xf32> to vector<2x8x8xf32>
    %347 = arith.truncf %346 : vector<2x8x8xf32> to vector<2x8x8xbf16>
    "tpu.trace_start"() <{level = 10 : i32, message = "nld,nmd->nlm"}> : () -> ()
    %cst_208 = arith.constant dense<0.000000e+00> : vector<2x8x8xf32>
    %348 = tpu.matmul %343, %345, %cst_208 {dimension_numbers = #tpu.dot_dimension_numbers<[2], [2], [1], [1], [0, 0, 0, 1, 1, 1], [0], [0]>} : vector<2x8x8xbf16>, vector<2x8x8xbf16>, vector<2x8x8xf32> -> vector<2x8x8xf32>
    "tpu.trace_stop"() : () -> ()
    %cst_209 = arith.constant 0.353553385 : f32
    %349 = vector.broadcast %cst_209 : f32 to vector<2x8x8xf32>
    %350 = arith.mulf %348, %349 : vector<2x8x8xf32>
    %cst_210 = arith.constant dense<0xFF800000> : vector<2x8xf32>
    %351 = vector.multi_reduction <maximumf>, %350, %cst_210 [2] : vector<2x8x8xf32> to vector<2x8xf32>
    %352 = vector.shape_cast %351 : vector<2x8xf32> to vector<2x8x1xf32>
    %353 = vector.broadcast %352 : vector<2x8x1xf32> to vector<2x8x8xf32>
    %354 = arith.subf %350, %353 : vector<2x8x8xf32>
    %355 = math.exp %354 : vector<2x8x8xf32>
    %cst_211 = arith.constant dense<0.000000e+00> : vector<2x8xf32>
    %356 = vector.multi_reduction <add>, %355, %cst_211 [2] : vector<2x8x8xf32> to vector<2x8xf32>
    %357 = vector.shape_cast %356 : vector<2x8xf32> to vector<2x8x1xf32>
    %358 = tpu.reciprocal %357 {approx = true} : vector<2x8x1xf32> -> vector<2x8x1xf32>
    %359 = vector.broadcast %358 : vector<2x8x1xf32> to vector<2x8x8xf32>
    %360 = arith.mulf %355, %359 : vector<2x8x8xf32>
    %361 = arith.truncf %360 : vector<2x8x8xf32> to vector<2x8x8xbf16>
    "tpu.trace_start"() <{level = 10 : i32, message = "nlm,nmd->nld"}> : () -> ()
    %cst_212 = arith.constant dense<0.000000e+00> : vector<2x8x8xf32>
    %362 = tpu.matmul %361, %347, %cst_212 {dimension_numbers = #tpu.dot_dimension_numbers<[2], [1], [1], [2], [0, 0, 0, 1, 1, 2], [0], [0]>} : vector<2x8x8xbf16>, vector<2x8x8xbf16>, vector<2x8x8xf32> -> vector<2x8x8xf32>
    "tpu.trace_stop"() : () -> ()
    %363 = vector.shape_cast %362 : vector<2x8x8xf32> to vector<16x8xf32>
    %c5_213 = arith.constant 5 : index
    %c0_214 = arith.constant 0 : index
    %c0_215 = arith.constant 0 : index
    %364 = vector.load %arg7[%c5_213, %c0_214, %c0_215] : memref<8x8x32xbf16, #tpu.memory_space<vmem>>, vector<1x8x32xbf16>
    %365 = vector.shape_cast %364 : vector<1x8x32xbf16> to vector<8x32xbf16>
    %366 = arith.truncf %363 : vector<16x8xf32> to vector<16x8xbf16>
    %cst_216 = arith.constant dense<0.000000e+00> : vector<16x32xf32>
    %367 = tpu.matmul %366, %365, %cst_216 {dimension_numbers = #tpu.dot_dimension_numbers<[1], [0], [0], [1], [0, 0, 1, 1], [], []>} : vector<16x8xbf16>, vector<8x32xbf16>, vector<16x32xf32> -> vector<16x32xf32>
    %368 = arith.addf %320, %367 : vector<16x32xf32>
    %c6 = arith.constant 6 : index
    %c0_217 = arith.constant 0 : index
    %c0_218 = arith.constant 0 : index
    %369 = vector.load %arg1[%c6, %c0_217, %c0_218] : memref<8x32x8xbf16, #tpu.memory_space<vmem>>, vector<1x32x8xbf16>
    %370 = vector.shape_cast %369 : vector<1x32x8xbf16> to vector<32x8xbf16>
    %cst_219 = arith.constant dense<0.000000e+00> : vector<16x8xf32>
    %371 = tpu.matmul %271, %370, %cst_219 {dimension_numbers = #tpu.dot_dimension_numbers<[1], [0], [0], [1], [0, 0, 1, 1], [], []>} : vector<16x32xbf16>, vector<32x8xbf16>, vector<16x8xf32> -> vector<16x8xf32>
    %c6_220 = arith.constant 6 : index
    %c0_221 = arith.constant 0 : index
    %c0_222 = arith.constant 0 : index
    %372 = vector.load %arg4[%c6_220, %c0_221, %c0_222] : memref<8x1x8xf32, #tpu.memory_space<vmem>>, vector<1x1x8xf32>
    %373 = vector.shape_cast %372 : vector<1x1x8xf32> to vector<1x8xf32>
    %374 = vector.broadcast %373 : vector<1x8xf32> to vector<16x8xf32>
    %375 = arith.addf %371, %374 : vector<16x8xf32>
    %c6_223 = arith.constant 6 : index
    %c0_224 = arith.constant 0 : index
    %c0_225 = arith.constant 0 : index
    %376 = vector.load %arg2[%c6_223, %c0_224, %c0_225] : memref<8x32x8xbf16, #tpu.memory_space<vmem>>, vector<1x32x8xbf16>
    %377 = vector.shape_cast %376 : vector<1x32x8xbf16> to vector<32x8xbf16>
    %cst_226 = arith.constant dense<0.000000e+00> : vector<16x8xf32>
    %378 = tpu.matmul %271, %377, %cst_226 {dimension_numbers = #tpu.dot_dimension_numbers<[1], [0], [0], [1], [0, 0, 1, 1], [], []>} : vector<16x32xbf16>, vector<32x8xbf16>, vector<16x8xf32> -> vector<16x8xf32>
    %c6_227 = arith.constant 6 : index
    %c0_228 = arith.constant 0 : index
    %c0_229 = arith.constant 0 : index
    %379 = vector.load %arg5[%c6_227, %c0_228, %c0_229] : memref<8x1x8xf32, #tpu.memory_space<vmem>>, vector<1x1x8xf32>
    %380 = vector.shape_cast %379 : vector<1x1x8xf32> to vector<1x8xf32>
    %381 = vector.broadcast %380 : vector<1x8xf32> to vector<16x8xf32>
    %382 = arith.addf %378, %381 : vector<16x8xf32>
    %c6_230 = arith.constant 6 : index
    %c0_231 = arith.constant 0 : index
    %c0_232 = arith.constant 0 : index
    %383 = vector.load %arg3[%c6_230, %c0_231, %c0_232] : memref<8x32x8xbf16, #tpu.memory_space<vmem>>, vector<1x32x8xbf16>
    %384 = vector.shape_cast %383 : vector<1x32x8xbf16> to vector<32x8xbf16>
    %cst_233 = arith.constant dense<0.000000e+00> : vector<16x8xf32>
    %385 = tpu.matmul %271, %384, %cst_233 {dimension_numbers = #tpu.dot_dimension_numbers<[1], [0], [0], [1], [0, 0, 1, 1], [], []>} : vector<16x32xbf16>, vector<32x8xbf16>, vector<16x8xf32> -> vector<16x8xf32>
    %c6_234 = arith.constant 6 : index
    %c0_235 = arith.constant 0 : index
    %c0_236 = arith.constant 0 : index
    %386 = vector.load %arg6[%c6_234, %c0_235, %c0_236] : memref<8x1x8xf32, #tpu.memory_space<vmem>>, vector<1x1x8xf32>
    %387 = vector.shape_cast %386 : vector<1x1x8xf32> to vector<1x8xf32>
    %388 = vector.broadcast %387 : vector<1x8xf32> to vector<16x8xf32>
    %389 = arith.addf %385, %388 : vector<16x8xf32>
    %390 = vector.shape_cast %375 : vector<16x8xf32> to vector<2x8x8xf32>
    %391 = arith.truncf %390 : vector<2x8x8xf32> to vector<2x8x8xbf16>
    %392 = vector.shape_cast %382 : vector<16x8xf32> to vector<2x8x8xf32>
    %393 = arith.truncf %392 : vector<2x8x8xf32> to vector<2x8x8xbf16>
    %394 = vector.shape_cast %389 : vector<16x8xf32> to vector<2x8x8xf32>
    %395 = arith.truncf %394 : vector<2x8x8xf32> to vector<2x8x8xbf16>
    "tpu.trace_start"() <{level = 10 : i32, message = "nld,nmd->nlm"}> : () -> ()
    %cst_237 = arith.constant dense<0.000000e+00> : vector<2x8x8xf32>
    %396 = tpu.matmul %391, %393, %cst_237 {dimension_numbers = #tpu.dot_dimension_numbers<[2], [2], [1], [1], [0, 0, 0, 1, 1, 1], [0], [0]>} : vector<2x8x8xbf16>, vector<2x8x8xbf16>, vector<2x8x8xf32> -> vector<2x8x8xf32>
    "tpu.trace_stop"() : () -> ()
    %cst_238 = arith.constant 0.353553385 : f32
    %397 = vector.broadcast %cst_238 : f32 to vector<2x8x8xf32>
    %398 = arith.mulf %396, %397 : vector<2x8x8xf32>
    %cst_239 = arith.constant dense<0xFF800000> : vector<2x8xf32>
    %399 = vector.multi_reduction <maximumf>, %398, %cst_239 [2] : vector<2x8x8xf32> to vector<2x8xf32>
    %400 = vector.shape_cast %399 : vector<2x8xf32> to vector<2x8x1xf32>
    %401 = vector.broadcast %400 : vector<2x8x1xf32> to vector<2x8x8xf32>
    %402 = arith.subf %398, %401 : vector<2x8x8xf32>
    %403 = math.exp %402 : vector<2x8x8xf32>
    %cst_240 = arith.constant dense<0.000000e+00> : vector<2x8xf32>
    %404 = vector.multi_reduction <add>, %403, %cst_240 [2] : vector<2x8x8xf32> to vector<2x8xf32>
    %405 = vector.shape_cast %404 : vector<2x8xf32> to vector<2x8x1xf32>
    %406 = tpu.reciprocal %405 {approx = true} : vector<2x8x1xf32> -> vector<2x8x1xf32>
    %407 = vector.broadcast %406 : vector<2x8x1xf32> to vector<2x8x8xf32>
    %408 = arith.mulf %403, %407 : vector<2x8x8xf32>
    %409 = arith.truncf %408 : vector<2x8x8xf32> to vector<2x8x8xbf16>
    "tpu.trace_start"() <{level = 10 : i32, message = "nlm,nmd->nld"}> : () -> ()
    %cst_241 = arith.constant dense<0.000000e+00> : vector<2x8x8xf32>
    %410 = tpu.matmul %409, %395, %cst_241 {dimension_numbers = #tpu.dot_dimension_numbers<[2], [1], [1], [2], [0, 0, 0, 1, 1, 2], [0], [0]>} : vector<2x8x8xbf16>, vector<2x8x8xbf16>, vector<2x8x8xf32> -> vector<2x8x8xf32>
    "tpu.trace_stop"() : () -> ()
    %411 = vector.shape_cast %410 : vector<2x8x8xf32> to vector<16x8xf32>
    %c6_242 = arith.constant 6 : index
    %c0_243 = arith.constant 0 : index
    %c0_244 = arith.constant 0 : index
    %412 = vector.load %arg7[%c6_242, %c0_243, %c0_244] : memref<8x8x32xbf16, #tpu.memory_space<vmem>>, vector<1x8x32xbf16>
    %413 = vector.shape_cast %412 : vector<1x8x32xbf16> to vector<8x32xbf16>
    %414 = arith.truncf %411 : vector<16x8xf32> to vector<16x8xbf16>
    %cst_245 = arith.constant dense<0.000000e+00> : vector<16x32xf32>
    %415 = tpu.matmul %414, %413, %cst_245 {dimension_numbers = #tpu.dot_dimension_numbers<[1], [0], [0], [1], [0, 0, 1, 1], [], []>} : vector<16x8xbf16>, vector<8x32xbf16>, vector<16x32xf32> -> vector<16x32xf32>
    %416 = arith.addf %368, %415 : vector<16x32xf32>
    %c7 = arith.constant 7 : index
    %c0_246 = arith.constant 0 : index
    %c0_247 = arith.constant 0 : index
    %417 = vector.load %arg1[%c7, %c0_246, %c0_247] : memref<8x32x8xbf16, #tpu.memory_space<vmem>>, vector<1x32x8xbf16>
    %418 = vector.shape_cast %417 : vector<1x32x8xbf16> to vector<32x8xbf16>
    %cst_248 = arith.constant dense<0.000000e+00> : vector<16x8xf32>
    %419 = tpu.matmul %271, %418, %cst_248 {dimension_numbers = #tpu.dot_dimension_numbers<[1], [0], [0], [1], [0, 0, 1, 1], [], []>} : vector<16x32xbf16>, vector<32x8xbf16>, vector<16x8xf32> -> vector<16x8xf32>
    %c7_249 = arith.constant 7 : index
    %c0_250 = arith.constant 0 : index
    %c0_251 = arith.constant 0 : index
    %420 = vector.load %arg4[%c7_249, %c0_250, %c0_251] : memref<8x1x8xf32, #tpu.memory_space<vmem>>, vector<1x1x8xf32>
    %421 = vector.shape_cast %420 : vector<1x1x8xf32> to vector<1x8xf32>
    %422 = vector.broadcast %421 : vector<1x8xf32> to vector<16x8xf32>
    %423 = arith.addf %419, %422 : vector<16x8xf32>
    %c7_252 = arith.constant 7 : index
    %c0_253 = arith.constant 0 : index
    %c0_254 = arith.constant 0 : index
    %424 = vector.load %arg2[%c7_252, %c0_253, %c0_254] : memref<8x32x8xbf16, #tpu.memory_space<vmem>>, vector<1x32x8xbf16>
    %425 = vector.shape_cast %424 : vector<1x32x8xbf16> to vector<32x8xbf16>
    %cst_255 = arith.constant dense<0.000000e+00> : vector<16x8xf32>
    %426 = tpu.matmul %271, %425, %cst_255 {dimension_numbers = #tpu.dot_dimension_numbers<[1], [0], [0], [1], [0, 0, 1, 1], [], []>} : vector<16x32xbf16>, vector<32x8xbf16>, vector<16x8xf32> -> vector<16x8xf32>
    %c7_256 = arith.constant 7 : index
    %c0_257 = arith.constant 0 : index
    %c0_258 = arith.constant 0 : index
    %427 = vector.load %arg5[%c7_256, %c0_257, %c0_258] : memref<8x1x8xf32, #tpu.memory_space<vmem>>, vector<1x1x8xf32>
    %428 = vector.shape_cast %427 : vector<1x1x8xf32> to vector<1x8xf32>
    %429 = vector.broadcast %428 : vector<1x8xf32> to vector<16x8xf32>
    %430 = arith.addf %426, %429 : vector<16x8xf32>
    %c7_259 = arith.constant 7 : index
    %c0_260 = arith.constant 0 : index
    %c0_261 = arith.constant 0 : index
    %431 = vector.load %arg3[%c7_259, %c0_260, %c0_261] : memref<8x32x8xbf16, #tpu.memory_space<vmem>>, vector<1x32x8xbf16>
    %432 = vector.shape_cast %431 : vector<1x32x8xbf16> to vector<32x8xbf16>
    %cst_262 = arith.constant dense<0.000000e+00> : vector<16x8xf32>
    %433 = tpu.matmul %271, %432, %cst_262 {dimension_numbers = #tpu.dot_dimension_numbers<[1], [0], [0], [1], [0, 0, 1, 1], [], []>} : vector<16x32xbf16>, vector<32x8xbf16>, vector<16x8xf32> -> vector<16x8xf32>
    %c7_263 = arith.constant 7 : index
    %c0_264 = arith.constant 0 : index
    %c0_265 = arith.constant 0 : index
    %434 = vector.load %arg6[%c7_263, %c0_264, %c0_265] : memref<8x1x8xf32, #tpu.memory_space<vmem>>, vector<1x1x8xf32>
    %435 = vector.shape_cast %434 : vector<1x1x8xf32> to vector<1x8xf32>
    %436 = vector.broadcast %435 : vector<1x8xf32> to vector<16x8xf32>
    %437 = arith.addf %433, %436 : vector<16x8xf32>
    %438 = vector.shape_cast %423 : vector<16x8xf32> to vector<2x8x8xf32>
    %439 = arith.truncf %438 : vector<2x8x8xf32> to vector<2x8x8xbf16>
    %440 = vector.shape_cast %430 : vector<16x8xf32> to vector<2x8x8xf32>
    %441 = arith.truncf %440 : vector<2x8x8xf32> to vector<2x8x8xbf16>
    %442 = vector.shape_cast %437 : vector<16x8xf32> to vector<2x8x8xf32>
    %443 = arith.truncf %442 : vector<2x8x8xf32> to vector<2x8x8xbf16>
    "tpu.trace_start"() <{level = 10 : i32, message = "nld,nmd->nlm"}> : () -> ()
    %cst_266 = arith.constant dense<0.000000e+00> : vector<2x8x8xf32>
    %444 = tpu.matmul %439, %441, %cst_266 {dimension_numbers = #tpu.dot_dimension_numbers<[2], [2], [1], [1], [0, 0, 0, 1, 1, 1], [0], [0]>} : vector<2x8x8xbf16>, vector<2x8x8xbf16>, vector<2x8x8xf32> -> vector<2x8x8xf32>
    "tpu.trace_stop"() : () -> ()
    %cst_267 = arith.constant 0.353553385 : f32
    %445 = vector.broadcast %cst_267 : f32 to vector<2x8x8xf32>
    %446 = arith.mulf %444, %445 : vector<2x8x8xf32>
    %cst_268 = arith.constant dense<0xFF800000> : vector<2x8xf32>
    %447 = vector.multi_reduction <maximumf>, %446, %cst_268 [2] : vector<2x8x8xf32> to vector<2x8xf32>
    %448 = vector.shape_cast %447 : vector<2x8xf32> to vector<2x8x1xf32>
    %449 = vector.broadcast %448 : vector<2x8x1xf32> to vector<2x8x8xf32>
    %450 = arith.subf %446, %449 : vector<2x8x8xf32>
    %451 = math.exp %450 : vector<2x8x8xf32>
    %cst_269 = arith.constant dense<0.000000e+00> : vector<2x8xf32>
    %452 = vector.multi_reduction <add>, %451, %cst_269 [2] : vector<2x8x8xf32> to vector<2x8xf32>
    %453 = vector.shape_cast %452 : vector<2x8xf32> to vector<2x8x1xf32>
    %454 = tpu.reciprocal %453 {approx = true} : vector<2x8x1xf32> -> vector<2x8x1xf32>
    %455 = vector.broadcast %454 : vector<2x8x1xf32> to vector<2x8x8xf32>
    %456 = arith.mulf %451, %455 : vector<2x8x8xf32>
    %457 = arith.truncf %456 : vector<2x8x8xf32> to vector<2x8x8xbf16>
    "tpu.trace_start"() <{level = 10 : i32, message = "nlm,nmd->nld"}> : () -> ()
    %cst_270 = arith.constant dense<0.000000e+00> : vector<2x8x8xf32>
    %458 = tpu.matmul %457, %443, %cst_270 {dimension_numbers = #tpu.dot_dimension_numbers<[2], [1], [1], [2], [0, 0, 0, 1, 1, 2], [0], [0]>} : vector<2x8x8xbf16>, vector<2x8x8xbf16>, vector<2x8x8xf32> -> vector<2x8x8xf32>
    "tpu.trace_stop"() : () -> ()
    %459 = vector.shape_cast %458 : vector<2x8x8xf32> to vector<16x8xf32>
    %c7_271 = arith.constant 7 : index
    %c0_272 = arith.constant 0 : index
    %c0_273 = arith.constant 0 : index
    %460 = vector.load %arg7[%c7_271, %c0_272, %c0_273] : memref<8x8x32xbf16, #tpu.memory_space<vmem>>, vector<1x8x32xbf16>
    %461 = vector.shape_cast %460 : vector<1x8x32xbf16> to vector<8x32xbf16>
    %462 = arith.truncf %459 : vector<16x8xf32> to vector<16x8xbf16>
    %cst_274 = arith.constant dense<0.000000e+00> : vector<16x32xf32>
    %463 = tpu.matmul %462, %461, %cst_274 {dimension_numbers = #tpu.dot_dimension_numbers<[1], [0], [0], [1], [0, 0, 1, 1], [], []>} : vector<16x8xbf16>, vector<8x32xbf16>, vector<16x32xf32> -> vector<16x32xf32>
    %464 = arith.addf %416, %463 : vector<16x32xf32>
    %c1_275 = arith.constant 1 : index
    %c0_276 = arith.constant 0 : index
    %c0_277 = arith.constant 0 : index
    %465 = vector.load %arg8[%c1_275, %c0_276, %c0_277] : memref<2x1x32xf32, #tpu.memory_space<vmem>>, vector<1x1x32xf32>
    %466 = vector.shape_cast %465 : vector<1x1x32xf32> to vector<1x32xf32>
    %467 = vector.broadcast %466 : vector<1x32xf32> to vector<16x32xf32>
    %468 = arith.addf %464, %467 : vector<16x32xf32>
    %469 = arith.addf %270, %468 : vector<16x32xf32>
    %c1_278 = arith.constant 1 : index
    %c0_279 = arith.constant 0 : index
    %c0_280 = arith.constant 0 : index
    %470 = vector.load %arg9[%c1_278, %c0_279, %c0_280] : memref<2x1x32xf32, #tpu.memory_space<vmem>>, vector<1x1x32xf32>
    %471 = vector.shape_cast %470 : vector<1x1x32xf32> to vector<1x32xf32>
    %c1_281 = arith.constant 1 : index
    %c0_282 = arith.constant 0 : index
    %c0_283 = arith.constant 0 : index
    %472 = vector.load %arg10[%c1_281, %c0_282, %c0_283] : memref<2x1x32xf32, #tpu.memory_space<vmem>>, vector<1x1x32xf32>
    %473 = vector.shape_cast %472 : vector<1x1x32xf32> to vector<1x32xf32>
    %cst_284 = arith.constant dense<0.000000e+00> : vector<16xf32>
    %474 = vector.multi_reduction <add>, %469, %cst_284 [1] : vector<16x32xf32> to vector<16xf32>
    %475 = vector.shape_cast %474 : vector<16xf32> to vector<16x1xf32>
    %cst_285 = arith.constant 3.200000e+01 : f32
    %476 = vector.broadcast %cst_285 : f32 to vector<16x1xf32>
    %477 = arith.divf %475, %476 : vector<16x1xf32>
    %478 = vector.broadcast %477 : vector<16x1xf32> to vector<16x32xf32>
    %479 = arith.subf %469, %478 : vector<16x32xf32>
    %480 = arith.mulf %479, %479 : vector<16x32xf32>
    %cst_286 = arith.constant dense<0.000000e+00> : vector<16xf32>
    %481 = vector.multi_reduction <add>, %480, %cst_286 [1] : vector<16x32xf32> to vector<16xf32>
    %482 = vector.shape_cast %481 : vector<16xf32> to vector<16x1xf32>
    %cst_287 = arith.constant 3.200000e+01 : f32
    %483 = vector.broadcast %cst_287 : f32 to vector<16x1xf32>
    %484 = arith.divf %482, %483 : vector<16x1xf32>
    %485 = vector.broadcast %477 : vector<16x1xf32> to vector<16x32xf32>
    %486 = arith.subf %469, %485 : vector<16x32xf32>
    %cst_288 = arith.constant 9.99999974E-6 : f32
    %487 = vector.broadcast %cst_288 : f32 to vector<16x1xf32>
    %488 = arith.addf %484, %487 : vector<16x1xf32>
    %489 = math.rsqrt %488 : vector<16x1xf32>
    %490 = vector.broadcast %489 : vector<16x1xf32> to vector<16x32xf32>
    %491 = arith.mulf %486, %490 : vector<16x32xf32>
    %492 = vector.broadcast %471 : vector<1x32xf32> to vector<16x32xf32>
    %493 = arith.mulf %491, %492 : vector<16x32xf32>
    %494 = vector.broadcast %473 : vector<1x32xf32> to vector<16x32xf32>
    %495 = arith.addf %493, %494 : vector<16x32xf32>
    %c1_289 = arith.constant 1 : index
    %c0_290 = arith.constant 0 : index
    %c0_291 = arith.constant 0 : index
    %496 = vector.load %arg11[%c1_289, %c0_290, %c0_291] : memref<2x32x64xbf16, #tpu.memory_space<vmem>>, vector<1x32x64xbf16>
    %497 = vector.shape_cast %496 : vector<1x32x64xbf16> to vector<32x64xbf16>
    %498 = arith.truncf %495 : vector<16x32xf32> to vector<16x32xbf16>
    %cst_292 = arith.constant dense<0.000000e+00> : vector<16x64xf32>
    %499 = tpu.matmul %498, %497, %cst_292 {dimension_numbers = #tpu.dot_dimension_numbers<[1], [0], [0], [1], [0, 0, 1, 1], [], []>} : vector<16x32xbf16>, vector<32x64xbf16>, vector<16x64xf32> -> vector<16x64xf32>
    %c1_293 = arith.constant 1 : index
    %c0_294 = arith.constant 0 : index
    %c0_295 = arith.constant 0 : index
    %500 = vector.load %arg12[%c1_293, %c0_294, %c0_295] : memref<2x1x64xf32, #tpu.memory_space<vmem>>, vector<1x1x64xf32>
    %501 = vector.shape_cast %500 : vector<1x1x64xf32> to vector<1x64xf32>
    %502 = vector.broadcast %501 : vector<1x64xf32> to vector<16x64xf32>
    %503 = arith.addf %499, %502 : vector<16x64xf32>
    %cst_296 = arith.constant 0.000000e+00 : f32
    %504 = vector.broadcast %cst_296 : f32 to vector<16x64xf32>
    %505 = arith.maximumf %503, %504 : vector<16x64xf32>
    %c1_297 = arith.constant 1 : index
    %c0_298 = arith.constant 0 : index
    %c0_299 = arith.constant 0 : index
    %506 = vector.load %arg13[%c1_297, %c0_298, %c0_299] : memref<2x64x32xbf16, #tpu.memory_space<vmem>>, vector<1x64x32xbf16>
    %507 = vector.shape_cast %506 : vector<1x64x32xbf16> to vector<64x32xbf16>
    %508 = arith.truncf %505 : vector<16x64xf32> to vector<16x64xbf16>
    %cst_300 = arith.constant dense<0.000000e+00> : vector<16x32xf32>
    %509 = tpu.matmul %508, %507, %cst_300 {dimension_numbers = #tpu.dot_dimension_numbers<[1], [0], [0], [1], [0, 0, 1, 1], [], []>} : vector<16x64xbf16>, vector<64x32xbf16>, vector<16x32xf32> -> vector<16x32xf32>
    %c1_301 = arith.constant 1 : index
    %c0_302 = arith.constant 0 : index
    %c0_303 = arith.constant 0 : index
    %510 = vector.load %arg14[%c1_301, %c0_302, %c0_303] : memref<2x1x32xf32, #tpu.memory_space<vmem>>, vector<1x1x32xf32>
    %511 = vector.shape_cast %510 : vector<1x1x32xf32> to vector<1x32xf32>
    %512 = vector.broadcast %511 : vector<1x32xf32> to vector<16x32xf32>
    %513 = arith.addf %509, %512 : vector<16x32xf32>
    %514 = arith.addf %495, %513 : vector<16x32xf32>
    %c1_304 = arith.constant 1 : index
    %c0_305 = arith.constant 0 : index
    %c0_306 = arith.constant 0 : index
    %515 = vector.load %arg15[%c1_304, %c0_305, %c0_306] : memref<2x1x32xf32, #tpu.memory_space<vmem>>, vector<1x1x32xf32>
    %516 = vector.shape_cast %515 : vector<1x1x32xf32> to vector<1x32xf32>
    %c1_307 = arith.constant 1 : index
    %c0_308 = arith.constant 0 : index
    %c0_309 = arith.constant 0 : index
    %517 = vector.load %arg16[%c1_307, %c0_308, %c0_309] : memref<2x1x32xf32, #tpu.memory_space<vmem>>, vector<1x1x32xf32>
    %518 = vector.shape_cast %517 : vector<1x1x32xf32> to vector<1x32xf32>
    %cst_310 = arith.constant dense<0.000000e+00> : vector<16xf32>
    %519 = vector.multi_reduction <add>, %514, %cst_310 [1] : vector<16x32xf32> to vector<16xf32>
    %520 = vector.shape_cast %519 : vector<16xf32> to vector<16x1xf32>
    %cst_311 = arith.constant 3.200000e+01 : f32
    %521 = vector.broadcast %cst_311 : f32 to vector<16x1xf32>
    %522 = arith.divf %520, %521 : vector<16x1xf32>
    %523 = vector.broadcast %522 : vector<16x1xf32> to vector<16x32xf32>
    %524 = arith.subf %514, %523 : vector<16x32xf32>
    %525 = arith.mulf %524, %524 : vector<16x32xf32>
    %cst_312 = arith.constant dense<0.000000e+00> : vector<16xf32>
    %526 = vector.multi_reduction <add>, %525, %cst_312 [1] : vector<16x32xf32> to vector<16xf32>
    %527 = vector.shape_cast %526 : vector<16xf32> to vector<16x1xf32>
    %cst_313 = arith.constant 3.200000e+01 : f32
    %528 = vector.broadcast %cst_313 : f32 to vector<16x1xf32>
    %529 = arith.divf %527, %528 : vector<16x1xf32>
    %530 = vector.broadcast %522 : vector<16x1xf32> to vector<16x32xf32>
    %531 = arith.subf %514, %530 : vector<16x32xf32>
    %cst_314 = arith.constant 9.99999974E-6 : f32
    %532 = vector.broadcast %cst_314 : f32 to vector<16x1xf32>
    %533 = arith.addf %529, %532 : vector<16x1xf32>
    %534 = math.rsqrt %533 : vector<16x1xf32>
    %535 = vector.broadcast %534 : vector<16x1xf32> to vector<16x32xf32>
    %536 = arith.mulf %531, %535 : vector<16x32xf32>
    %537 = vector.broadcast %516 : vector<1x32xf32> to vector<16x32xf32>
    %538 = arith.mulf %536, %537 : vector<16x32xf32>
    %539 = vector.broadcast %518 : vector<1x32xf32> to vector<16x32xf32>
    %540 = arith.addf %538, %539 : vector<16x32xf32>
    %541 = vector.shape_cast %540 : vector<16x32xf32> to vector<2x8x32xf32>
    %cst_315 = arith.constant 0.000000e+00 : f32
    %542 = vector.broadcast %cst_315 : f32 to vector<2x32xf32>
    %543 = vector.extract_strided_slice %541 {offsets = [0, 0, 0], sizes = [2, 1, 32], strides = [1, 1, 1]} : vector<2x8x32xf32> to vector<2x1x32xf32>
    %544 = vector.shape_cast %543 : vector<2x1x32xf32> to vector<2x32xf32>
    %c0_316 = arith.constant 0 : index
    %c0_317 = arith.constant 0 : index
    %c0_318 = arith.constant 0 : index
    %545 = vector.load %arg17[%c0_316, %c0_317, %c0_318] : memref<8x32x32xbf16, #tpu.memory_space<vmem>>, vector<1x32x32xbf16>
    %546 = vector.shape_cast %545 : vector<1x32x32xbf16> to vector<32x32xbf16>
    %547 = arith.truncf %544 : vector<2x32xf32> to vector<2x32xbf16>
    %cst_319 = arith.constant dense<0.000000e+00> : vector<2x32xf32>
    %548 = tpu.matmul %547, %546, %cst_319 {dimension_numbers = #tpu.dot_dimension_numbers<[1], [0], [0], [1], [0, 0, 1, 1], [], []>} : vector<2x32xbf16>, vector<32x32xbf16>, vector<2x32xf32> -> vector<2x32xf32>
    %549 = arith.addf %542, %548 : vector<2x32xf32>
    %550 = vector.extract_strided_slice %541 {offsets = [0, 1, 0], sizes = [2, 1, 32], strides = [1, 1, 1]} : vector<2x8x32xf32> to vector<2x1x32xf32>
    %551 = vector.shape_cast %550 : vector<2x1x32xf32> to vector<2x32xf32>
    %c1_320 = arith.constant 1 : index
    %c0_321 = arith.constant 0 : index
    %c0_322 = arith.constant 0 : index
    %552 = vector.load %arg17[%c1_320, %c0_321, %c0_322] : memref<8x32x32xbf16, #tpu.memory_space<vmem>>, vector<1x32x32xbf16>
    %553 = vector.shape_cast %552 : vector<1x32x32xbf16> to vector<32x32xbf16>
    %554 = arith.truncf %551 : vector<2x32xf32> to vector<2x32xbf16>
    %cst_323 = arith.constant dense<0.000000e+00> : vector<2x32xf32>
    %555 = tpu.matmul %554, %553, %cst_323 {dimension_numbers = #tpu.dot_dimension_numbers<[1], [0], [0], [1], [0, 0, 1, 1], [], []>} : vector<2x32xbf16>, vector<32x32xbf16>, vector<2x32xf32> -> vector<2x32xf32>
    %556 = arith.addf %549, %555 : vector<2x32xf32>
    %557 = vector.extract_strided_slice %541 {offsets = [0, 2, 0], sizes = [2, 1, 32], strides = [1, 1, 1]} : vector<2x8x32xf32> to vector<2x1x32xf32>
    %558 = vector.shape_cast %557 : vector<2x1x32xf32> to vector<2x32xf32>
    %c2_324 = arith.constant 2 : index
    %c0_325 = arith.constant 0 : index
    %c0_326 = arith.constant 0 : index
    %559 = vector.load %arg17[%c2_324, %c0_325, %c0_326] : memref<8x32x32xbf16, #tpu.memory_space<vmem>>, vector<1x32x32xbf16>
    %560 = vector.shape_cast %559 : vector<1x32x32xbf16> to vector<32x32xbf16>
    %561 = arith.truncf %558 : vector<2x32xf32> to vector<2x32xbf16>
    %cst_327 = arith.constant dense<0.000000e+00> : vector<2x32xf32>
    %562 = tpu.matmul %561, %560, %cst_327 {dimension_numbers = #tpu.dot_dimension_numbers<[1], [0], [0], [1], [0, 0, 1, 1], [], []>} : vector<2x32xbf16>, vector<32x32xbf16>, vector<2x32xf32> -> vector<2x32xf32>
    %563 = arith.addf %556, %562 : vector<2x32xf32>
    %564 = vector.extract_strided_slice %541 {offsets = [0, 3, 0], sizes = [2, 1, 32], strides = [1, 1, 1]} : vector<2x8x32xf32> to vector<2x1x32xf32>
    %565 = vector.shape_cast %564 : vector<2x1x32xf32> to vector<2x32xf32>
    %c3_328 = arith.constant 3 : index
    %c0_329 = arith.constant 0 : index
    %c0_330 = arith.constant 0 : index
    %566 = vector.load %arg17[%c3_328, %c0_329, %c0_330] : memref<8x32x32xbf16, #tpu.memory_space<vmem>>, vector<1x32x32xbf16>
    %567 = vector.shape_cast %566 : vector<1x32x32xbf16> to vector<32x32xbf16>
    %568 = arith.truncf %565 : vector<2x32xf32> to vector<2x32xbf16>
    %cst_331 = arith.constant dense<0.000000e+00> : vector<2x32xf32>
    %569 = tpu.matmul %568, %567, %cst_331 {dimension_numbers = #tpu.dot_dimension_numbers<[1], [0], [0], [1], [0, 0, 1, 1], [], []>} : vector<2x32xbf16>, vector<32x32xbf16>, vector<2x32xf32> -> vector<2x32xf32>
    %570 = arith.addf %563, %569 : vector<2x32xf32>
    %571 = vector.extract_strided_slice %541 {offsets = [0, 4, 0], sizes = [2, 1, 32], strides = [1, 1, 1]} : vector<2x8x32xf32> to vector<2x1x32xf32>
    %572 = vector.shape_cast %571 : vector<2x1x32xf32> to vector<2x32xf32>
    %c4_332 = arith.constant 4 : index
    %c0_333 = arith.constant 0 : index
    %c0_334 = arith.constant 0 : index
    %573 = vector.load %arg17[%c4_332, %c0_333, %c0_334] : memref<8x32x32xbf16, #tpu.memory_space<vmem>>, vector<1x32x32xbf16>
    %574 = vector.shape_cast %573 : vector<1x32x32xbf16> to vector<32x32xbf16>
    %575 = arith.truncf %572 : vector<2x32xf32> to vector<2x32xbf16>
    %cst_335 = arith.constant dense<0.000000e+00> : vector<2x32xf32>
    %576 = tpu.matmul %575, %574, %cst_335 {dimension_numbers = #tpu.dot_dimension_numbers<[1], [0], [0], [1], [0, 0, 1, 1], [], []>} : vector<2x32xbf16>, vector<32x32xbf16>, vector<2x32xf32> -> vector<2x32xf32>
    %577 = arith.addf %570, %576 : vector<2x32xf32>
    %578 = vector.extract_strided_slice %541 {offsets = [0, 5, 0], sizes = [2, 1, 32], strides = [1, 1, 1]} : vector<2x8x32xf32> to vector<2x1x32xf32>
    %579 = vector.shape_cast %578 : vector<2x1x32xf32> to vector<2x32xf32>
    %c5_336 = arith.constant 5 : index
    %c0_337 = arith.constant 0 : index
    %c0_338 = arith.constant 0 : index
    %580 = vector.load %arg17[%c5_336, %c0_337, %c0_338] : memref<8x32x32xbf16, #tpu.memory_space<vmem>>, vector<1x32x32xbf16>
    %581 = vector.shape_cast %580 : vector<1x32x32xbf16> to vector<32x32xbf16>
    %582 = arith.truncf %579 : vector<2x32xf32> to vector<2x32xbf16>
    %cst_339 = arith.constant dense<0.000000e+00> : vector<2x32xf32>
    %583 = tpu.matmul %582, %581, %cst_339 {dimension_numbers = #tpu.dot_dimension_numbers<[1], [0], [0], [1], [0, 0, 1, 1], [], []>} : vector<2x32xbf16>, vector<32x32xbf16>, vector<2x32xf32> -> vector<2x32xf32>
    %584 = arith.addf %577, %583 : vector<2x32xf32>
    %585 = vector.extract_strided_slice %541 {offsets = [0, 6, 0], sizes = [2, 1, 32], strides = [1, 1, 1]} : vector<2x8x32xf32> to vector<2x1x32xf32>
    %586 = vector.shape_cast %585 : vector<2x1x32xf32> to vector<2x32xf32>
    %c6_340 = arith.constant 6 : index
    %c0_341 = arith.constant 0 : index
    %c0_342 = arith.constant 0 : index
    %587 = vector.load %arg17[%c6_340, %c0_341, %c0_342] : memref<8x32x32xbf16, #tpu.memory_space<vmem>>, vector<1x32x32xbf16>
    %588 = vector.shape_cast %587 : vector<1x32x32xbf16> to vector<32x32xbf16>
    %589 = arith.truncf %586 : vector<2x32xf32> to vector<2x32xbf16>
    %cst_343 = arith.constant dense<0.000000e+00> : vector<2x32xf32>
    %590 = tpu.matmul %589, %588, %cst_343 {dimension_numbers = #tpu.dot_dimension_numbers<[1], [0], [0], [1], [0, 0, 1, 1], [], []>} : vector<2x32xbf16>, vector<32x32xbf16>, vector<2x32xf32> -> vector<2x32xf32>
    %591 = arith.addf %584, %590 : vector<2x32xf32>
    %592 = vector.extract_strided_slice %541 {offsets = [0, 7, 0], sizes = [2, 1, 32], strides = [1, 1, 1]} : vector<2x8x32xf32> to vector<2x1x32xf32>
    %593 = vector.shape_cast %592 : vector<2x1x32xf32> to vector<2x32xf32>
    %c7_344 = arith.constant 7 : index
    %c0_345 = arith.constant 0 : index
    %c0_346 = arith.constant 0 : index
    %594 = vector.load %arg17[%c7_344, %c0_345, %c0_346] : memref<8x32x32xbf16, #tpu.memory_space<vmem>>, vector<1x32x32xbf16>
    %595 = vector.shape_cast %594 : vector<1x32x32xbf16> to vector<32x32xbf16>
    %596 = arith.truncf %593 : vector<2x32xf32> to vector<2x32xbf16>
    %cst_347 = arith.constant dense<0.000000e+00> : vector<2x32xf32>
    %597 = tpu.matmul %596, %595, %cst_347 {dimension_numbers = #tpu.dot_dimension_numbers<[1], [0], [0], [1], [0, 0, 1, 1], [], []>} : vector<2x32xbf16>, vector<32x32xbf16>, vector<2x32xf32> -> vector<2x32xf32>
    %598 = arith.addf %591, %597 : vector<2x32xf32>
    %c0_348 = arith.constant 0 : index
    %c0_349 = arith.constant 0 : index
    %599 = vector.load %arg18[%c0_348, %c0_349] : memref<1x32xf32, #tpu.memory_space<vmem>>, vector<1x32xf32>
    %600 = vector.broadcast %599 : vector<1x32xf32> to vector<2x32xf32>
    %601 = arith.addf %598, %600 : vector<2x32xf32>
    %cst_350 = arith.constant 0.000000e+00 : f32
    %602 = vector.broadcast %cst_350 : f32 to vector<2x32xf32>
    %603 = arith.maximumf %601, %602 : vector<2x32xf32>
    %c0_351 = arith.constant 0 : index
    %c0_352 = arith.constant 0 : index
    %604 = vector.load %arg19[%c0_351, %c0_352] : memref<32x64xbf16, #tpu.memory_space<vmem>>, vector<32x64xbf16>
    %605 = arith.truncf %603 : vector<2x32xf32> to vector<2x32xbf16>
    %cst_353 = arith.constant dense<0.000000e+00> : vector<2x64xf32>
    %606 = tpu.matmul %605, %604, %cst_353 {dimension_numbers = #tpu.dot_dimension_numbers<[1], [0], [0], [1], [0, 0, 1, 1], [], []>} : vector<2x32xbf16>, vector<32x64xbf16>, vector<2x64xf32> -> vector<2x64xf32>
    %c0_354 = arith.constant 0 : index
    %c0_355 = arith.constant 0 : index
    %607 = vector.load %arg20[%c0_354, %c0_355] : memref<1x64xf32, #tpu.memory_space<vmem>>, vector<1x64xf32>
    %608 = vector.broadcast %607 : vector<1x64xf32> to vector<2x64xf32>
    %609 = arith.addf %606, %608 : vector<2x64xf32>
    %cst_356 = arith.constant 0.000000e+00 : f32
    %610 = vector.broadcast %cst_356 : f32 to vector<2x64xf32>
    %611 = arith.maximumf %609, %610 : vector<2x64xf32>
    %c0_357 = arith.constant 0 : index
    %c0_358 = arith.constant 0 : index
    %612 = vector.load %arg21[%c0_357, %c0_358] : memref<64x32xbf16, #tpu.memory_space<vmem>>, vector<64x32xbf16>
    %613 = arith.truncf %611 : vector<2x64xf32> to vector<2x64xbf16>
    %cst_359 = arith.constant dense<0.000000e+00> : vector<2x32xf32>
    %614 = tpu.matmul %613, %612, %cst_359 {dimension_numbers = #tpu.dot_dimension_numbers<[1], [0], [0], [1], [0, 0, 1, 1], [], []>} : vector<2x64xbf16>, vector<64x32xbf16>, vector<2x32xf32> -> vector<2x32xf32>
    %c0_360 = arith.constant 0 : index
    %c0_361 = arith.constant 0 : index
    %615 = vector.load %arg22[%c0_360, %c0_361] : memref<1x32xf32, #tpu.memory_space<vmem>>, vector<1x32xf32>
    %616 = vector.broadcast %615 : vector<1x32xf32> to vector<2x32xf32>
    %617 = arith.addf %614, %616 : vector<2x32xf32>
    %c0_362 = arith.constant 0 : index
    %c0_363 = arith.constant 0 : index
    %618 = vector.load %arg23[%c0_362, %c0_363] : memref<32x6xbf16, #tpu.memory_space<vmem>>, vector<32x6xbf16>
    %619 = arith.truncf %617 : vector<2x32xf32> to vector<2x32xbf16>
    %cst_364 = arith.constant dense<0.000000e+00> : vector<2x6xf32>
    %620 = tpu.matmul %619, %618, %cst_364 {dimension_numbers = #tpu.dot_dimension_numbers<[1], [0], [0], [1], [0, 0, 1, 1], [], []>} : vector<2x32xbf16>, vector<32x6xbf16>, vector<2x6xf32> -> vector<2x6xf32>
    %cst_365 = arith.constant 0.000000e+00 : f32
    %621 = vector.broadcast %cst_365 : f32 to vector<2x32xf32>
    %622 = arith.maximumf %617, %621 : vector<2x32xf32>
    %c0_366 = arith.constant 0 : index
    %c0_367 = arith.constant 0 : index
    %623 = vector.load %arg24[%c0_366, %c0_367] : memref<32x4xbf16, #tpu.memory_space<vmem>>, vector<32x4xbf16>
    %624 = arith.truncf %622 : vector<2x32xf32> to vector<2x32xbf16>
    %cst_368 = arith.constant dense<0.000000e+00> : vector<2x4xf32>
    %625 = tpu.matmul %624, %623, %cst_368 {dimension_numbers = #tpu.dot_dimension_numbers<[1], [0], [0], [1], [0, 0, 1, 1], [], []>} : vector<2x32xbf16>, vector<32x4xbf16>, vector<2x4xf32> -> vector<2x4xf32>
    %c0_369 = arith.constant 0 : index
    %c0_370 = arith.constant 0 : index
    %626 = vector.load %arg25[%c0_369, %c0_370] : memref<1x4xf32, #tpu.memory_space<vmem>>, vector<1x4xf32>
    %627 = vector.broadcast %626 : vector<1x4xf32> to vector<2x4xf32>
    %628 = arith.addf %625, %627 : vector<2x4xf32>
    %629 = tpu.concatenate %620, %628 in 1 : vector<2x6xf32>, vector<2x4xf32> -> vector<2x10xf32>
    %c0_371 = arith.constant 0 : index
    %c0_372 = arith.constant 0 : index
    %630 = vector.load %arg26[%c0_371, %c0_372] : memref<2x10xf32, #tpu.memory_space<vmem>>, vector<2x10xf32>
    tpu.vector_store %arg26[%c0_371, %c0_372], %629 {strides = array<i32>} : memref<2x10xf32, #tpu.memory_space<vmem>>, vector<2x10xf32>,
    return
  }
}

</mosaic_0001>

<llo_original>
// kernel: multitask_forward.1
$region0: #{multitask_forward.1}
  #allocation0 [shape = 'u32[]', space=smem, size = 0x4, offset = 0x4, fixed_abs, tag = 'smem constant byte address 0x4 - core index']
  #allocation1 [shape = 'u32[144,128]{1,0:T(1,128)}', space=vmem, size = 0x12000, scoped, tag = 'internal scratch']
  %s0 = inlined_call_operand.vmem [shape: f32[16,32], index: 0, kind: input, shape index: {}]
  %s1 = inlined_call_operand.vmem [shape: bf16[8,32,8], index: 1, kind: input, shape index: {}]
  %s2 = inlined_call_operand.vmem [shape: bf16[8,32,8], index: 2, kind: input, shape index: {}]
  %s3 = inlined_call_operand.vmem [shape: bf16[8,32,8], index: 3, kind: input, shape index: {}]
  %s4 = inlined_call_operand.vmem [shape: f32[8,1,8], index: 4, kind: input, shape index: {}]
  %s5 = inlined_call_operand.vmem [shape: f32[8,1,8], index: 5, kind: input, shape index: {}]
  %s6 = inlined_call_operand.vmem [shape: f32[8,1,8], index: 6, kind: input, shape index: {}]
  %s7 = inlined_call_operand.vmem [shape: bf16[8,8,32], index: 7, kind: input, shape index: {}]
  %s8 = inlined_call_operand.vmem [shape: f32[2,1,32], index: 8, kind: input, shape index: {}]
  %s9 = inlined_call_operand.vmem [shape: f32[2,1,32], index: 9, kind: input, shape index: {}]
  %s10 = inlined_call_operand.vmem [shape: f32[2,1,32], index: 10, kind: input, shape index: {}]
  %s11 = inlined_call_operand.vmem [shape: bf16[2,32,64], index: 11, kind: input, shape index: {}]
  %s12 = inlined_call_operand.vmem [shape: f32[2,1,64], index: 12, kind: input, shape index: {}]
  %s13 = inlined_call_operand.vmem [shape: bf16[2,64,32], index: 13, kind: input, shape index: {}]
  %s14 = inlined_call_operand.vmem [shape: f32[2,1,32], index: 14, kind: input, shape index: {}]
  %s15 = inlined_call_operand.vmem [shape: f32[2,1,32], index: 15, kind: input, shape index: {}]
  %s16 = inlined_call_operand.vmem [shape: f32[2,1,32], index: 16, kind: input, shape index: {}]
  %s17 = inlined_call_operand.vmem [shape: bf16[8,32,32], index: 17, kind: input, shape index: {}]
  %s18 = inlined_call_operand.vmem [shape: f32[1,32], index: 18, kind: input, shape index: {}]
  %s19 = inlined_call_operand.vmem [shape: bf16[32,64], index: 19, kind: input, shape index: {}]
  %s20 = inlined_call_operand.vmem [shape: f32[1,64], index: 20, kind: input, shape index: {}]
  %s21 = inlined_call_operand.vmem [shape: bf16[64,32], index: 21, kind: input, shape index: {}]
  %s22 = inlined_call_operand.vmem [shape: f32[1,32], index: 22, kind: input, shape index: {}]
  %s23 = inlined_call_operand.vmem [shape: bf16[32,6], index: 23, kind: input, shape index: {}]
  %s24 = inlined_call_operand.vmem [shape: bf16[32,4], index: 24, kind: input, shape index: {}]
  %s25 = inlined_call_operand.vmem [shape: f32[1,4], index: 25, kind: input, shape index: {}]
  %s26 = inlined_call_operand.vmem [shape: f32[2,10], index: 26, kind: output, shape index: {}]
  %s27 = sld [smem:[#allocation0]]
  $region114: #{multitask_forward.1} parent=0
    _
  %s29 = ssub.s32 1, %s27
  %s30 = scalar_select 0, %s29, %s27
  // Predicated region
  $region2: #{multitask_forward.1} parent=0 // pred_check
    _
  $region3: #{multitask_forward.1} parent=0 // pred_check_branch
    %32 = sbr.rel (0) target = $region5
  $region4: #{multitask_forward.1} parent=0 // pred_region
    _
  $region5: #{multitask_forward.1} parent=0 // pred_fallthru
    _
  // Predicated region
  $region6: #{multitask_forward.1} parent=0 // pred_check
    _
  $region7: #{multitask_forward.1} parent=0 // pred_check_branch
    %34 = sbr.rel (0) target = $region9
  $region8: #{multitask_forward.1} parent=0 // pred_region
    _
  $region9: #{multitask_forward.1} parent=0 // pred_fallthru
    _
  // Predicated region
  $region10: #{multitask_forward.1} parent=0 // pred_check
    _
  $region11: #{multitask_forward.1} parent=0 // pred_check_branch
    %36 = sbr.rel (0) target = $region13
  $region12: #{multitask_forward.1} parent=0 // pred_region
    _
  $region13: #{multitask_forward.1} parent=0 // pred_fallthru
    _
  // Predicated region
  $region14: #{multitask_forward.1} parent=0 // pred_check
    _
  $region15: #{multitask_forward.1} parent=0 // pred_check_branch
    %38 = sbr.rel (0) target = $region17
  $region16: #{multitask_forward.1} parent=0 // pred_region
    _
  $region17: #{multitask_forward.1} parent=0 // pred_fallthru
    _
  // Predicated region
  $region18: #{multitask_forward.1} parent=0 // pred_check
    _
  $region19: #{multitask_forward.1} parent=0 // pred_check_branch
    %40 = sbr.rel (0) target = $region21
  $region20: #{multitask_forward.1} parent=0 // pred_region
    _
  $region21: #{multitask_forward.1} parent=0 // pred_fallthru
    _
  // Predicated region
  $region22: #{multitask_forward.1} parent=0 // pred_check
    _
  $region23: #{multitask_forward.1} parent=0 // pred_check_branch
    %42 = sbr.rel (0) target = $region25
  $region24: #{multitask_forward.1} parent=0 // pred_region
    _
  $region25: #{multitask_forward.1} parent=0 // pred_fallthru
    _
  // Predicated region
  $region26: #{multitask_forward.1} parent=0 // pred_check
    _
  $region27: #{multitask_forward.1} parent=0 // pred_check_branch
    %44 = sbr.rel (0) target = $region29
  $region28: #{multitask_forward.1} parent=0 // pred_region
    _
  $region29: #{multitask_forward.1} parent=0 // pred_fallthru
    _
  // Predicated region
  $region30: #{multitask_forward.1} parent=0 // pred_check
    _
  $region31: #{multitask_forward.1} parent=0 // pred_check_branch
    %46 = sbr.rel (0) target = $region33
  $region32: #{multitask_forward.1} parent=0 // pred_region
    _
  $region33: #{multitask_forward.1} parent=0 // pred_fallthru
    _
  // Predicated region
  $region34: #{multitask_forward.1} parent=0 // pred_check
    _
  $region35: #{multitask_forward.1} parent=0 // pred_check_branch
    %48 = sbr.rel (0) target = $region37
  $region36: #{multitask_forward.1} parent=0 // pred_region
    _
  $region37: #{multitask_forward.1} parent=0 // pred_fallthru
    _
  // Predicated region
  $region38: #{multitask_forward.1} parent=0 // pred_check
    _
  $region39: #{multitask_forward.1} parent=0 // pred_check_branch
    %50 = sbr.rel (0) target = $region41
  $region40: #{multitask_forward.1} parent=0 // pred_region
    _
  $region41: #{multitask_forward.1} parent=0 // pred_fallthru
    _
  // Predicated region
  $region42: #{multitask_forward.1} parent=0 // pred_check
    _
  $region43: #{multitask_forward.1} parent=0 // pred_check_branch
    %52 = sbr.rel (0) target = $region45
  $region44: #{multitask_forward.1} parent=0 // pred_region
    _
  $region45: #{multitask_forward.1} parent=0 // pred_fallthru
    _
  // Predicated region
  $region46: #{multitask_forward.1} parent=0 // pred_check
    _
  $region47: #{multitask_forward.1} parent=0 // pred_check_branch
    %54 = sbr.rel (0) target = $region49
  $region48: #{multitask_forward.1} parent=0 // pred_region
    _
  $region49: #{multitask_forward.1} parent=0 // pred_fallthru
    _
  // Predicated region
  $region50: #{multitask_forward.1} parent=0 // pred_check
    _
  $region51: #{multitask_forward.1} parent=0 // pred_check_branch
    %56 = sbr.rel (0) target = $region53
  $region52: #{multitask_forward.1} parent=0 // pred_region
    _
  $region53: #{multitask_forward.1} parent=0 // pred_fallthru
    _
  // Predicated region
  $region54: #{multitask_forward.1} parent=0 // pred_check
    _
  $region55: #{multitask_forward.1} parent=0 // pred_check_branch
    %58 = sbr.rel (0) target = $region57
  $region56: #{multitask_forward.1} parent=0 // pred_region
    _
  $region57: #{multitask_forward.1} parent=0 // pred_fallthru
    _
  // Predicated region
  $region58: #{multitask_forward.1} parent=0 // pred_check
    _
  $region59: #{multitask_forward.1} parent=0 // pred_check_branch
    %60 = sbr.rel (0) target = $region61
  $region60: #{multitask_forward.1} parent=0 // pred_region
    _
  $region61: #{multitask_forward.1} parent=0 // pred_fallthru
    _
  // Predicated region
  $region62: #{multitask_forward.1} parent=0 // pred_check
    _
  $region63: #{multitask_forward.1} parent=0 // pred_check_branch
    %62 = sbr.rel (0) target = $region65
  $region64: #{multitask_forward.1} parent=0 // pred_region
    _
  $region65: #{multitask_forward.1} parent=0 // pred_fallthru
    _
  // Predicated region
  $region66: #{multitask_forward.1} parent=0 // pred_check
    _
  $region67: #{multitask_forward.1} parent=0 // pred_check_branch
    %64 = sbr.rel (0) target = $region69
  $region68: #{multitask_forward.1} parent=0 // pred_region
    _
  $region69: #{multitask_forward.1} parent=0 // pred_fallthru
    _
  // Predicated region
  $region70: #{multitask_forward.1} parent=0 // pred_check
    _
  $region71: #{multitask_forward.1} parent=0 // pred_check_branch
    %66 = sbr.rel (0) target = $region73
  $region72: #{multitask_forward.1} parent=0 // pred_region
    _
  $region73: #{multitask_forward.1} parent=0 // pred_fallthru
    _
  // Predicated region
  $region74: #{multitask_forward.1} parent=0 // pred_check
    _
  $region75: #{multitask_forward.1} parent=0 // pred_check_branch
    %68 = sbr.rel (0) target = $region77
  $region76: #{multitask_forward.1} parent=0 // pred_region
    _
  $region77: #{multitask_forward.1} parent=0 // pred_fallthru
    _
  // Predicated region
  $region78: #{multitask_forward.1} parent=0 // pred_check
    _
  $region79: #{multitask_forward.1} parent=0 // pred_check_branch
    %70 = sbr.rel (0) target = $region81
  $region80: #{multitask_forward.1} parent=0 // pred_region
    _
  $region81: #{multitask_forward.1} parent=0 // pred_fallthru
    _
  // Predicated region
  $region82: #{multitask_forward.1} parent=0 // pred_check
    _
  $region83: #{multitask_forward.1} parent=0 // pred_check_branch
    %72 = sbr.rel (0) target = $region85
  $region84: #{multitask_forward.1} parent=0 // pred_region
    _
  $region85: #{multitask_forward.1} parent=0 // pred_fallthru
    _
  // Predicated region
  $region86: #{multitask_forward.1} parent=0 // pred_check
    _
  $region87: #{multitask_forward.1} parent=0 // pred_check_branch
    %74 = sbr.rel (0) target = $region89
  $region88: #{multitask_forward.1} parent=0 // pred_region
    _
  $region89: #{multitask_forward.1} parent=0 // pred_fallthru
    _
  // Predicated region
  $region90: #{multitask_forward.1} parent=0 // pred_check
    _
  $region91: #{multitask_forward.1} parent=0 // pred_check_branch
    %76 = sbr.rel (0) target = $region93
  $region92: #{multitask_forward.1} parent=0 // pred_region
    _
  $region93: #{multitask_forward.1} parent=0 // pred_fallthru
    _
  // Predicated region
  $region94: #{multitask_forward.1} parent=0 // pred_check
    _
  $region95: #{multitask_forward.1} parent=0 // pred_check_branch
    %78 = sbr.rel (0) target = $region97
  $region96: #{multitask_forward.1} parent=0 // pred_region
    _
  $region97: #{multitask_forward.1} parent=0 // pred_fallthru
    _
  // Predicated region
  $region98: #{multitask_forward.1} parent=0 // pred_check
    _
  $region99: #{multitask_forward.1} parent=0 // pred_check_branch
    %80 = sbr.rel (0) target = $region101
  $region100: #{multitask_forward.1} parent=0 // pred_region
    _
  $region101: #{multitask_forward.1} parent=0 // pred_fallthru
    _
  // Predicated region
  $region102: #{multitask_forward.1} parent=0 // pred_check
    _
  $region103: #{multitask_forward.1} parent=0 // pred_check_branch
    %82 = sbr.rel (0) target = $region105
  $region104: #{multitask_forward.1} parent=0 // pred_region
    _
  $region105: #{multitask_forward.1} parent=0 // pred_fallthru
    _
  %v84 = vld [vmem:[%s0] sm:$0xff]
  %v85 = vld [vmem:[%s0 + $0x8] sm:$0xff]
  %v86 = vpack.c.bf16 %v85, %v84
  %v87 = vld [vmem:[%s1] sm:$0xf]
  %v88 = vld [vmem:[%s1 + $0x4] sm:$0xf]
  %v89 = vld [vmem:[%s1 + $0x8] sm:$0xf]
  %v90 = vld [vmem:[%s1 + $0xc] sm:$0xf]
  %v91 = vld [vmem:[%s4] sm:$0x1]
  %v93 = vlaneseq
  %v94 = vshrl.u32 %v93, 7
  %v95 = vsub.s32 0, %v94
  %v96 = vrot.slane %v91, %v95
  %v102 = vunpack.c.l.b16 %v87
  %v103 = vunpack.c.l.b16 %v88
  %v104 = vunpack.c.l.b16 %v89
  %v105 = vunpack.c.l.b16 %v90
  %v106 = vpack.c.b16 %v103, %v102
  %v107 = vpack.c.b16 %v105, %v104
  %vm110 = vcmask 261120
  %v112 = vsel %vm110, %v86, 0
  %114 = vmatprep.subr.bf16.mxu0 0
  %115 = vmatpush1.bf16.msra.mxu0 %v106
  %116 = vmatprep.subr.bf16.mxu0 0
  %117 = vmatpush1.bf16.msra.mxu0 %v107
  %118 = vmatprep.subr.bf16.mxu0 0
  %119 = vmatpush1.bf16.msra.mxu0 0
  %120 = vmatprep.subr.bf16.mxu0 0
  %121 = vmatpush1.bf16.msra.mxu0 0
  %122 = vmatprep.subr.bf16.mxu0 0
  %123 = vmatpush1.bf16.msra.mxu0 0
  %124 = vmatprep.subr.bf16.mxu0 0
  %125 = vmatpush1.bf16.msra.mxu0 0
  %126 = vmatprep.subr.bf16.mxu0 0
  %127 = vmatpush1.bf16.msra.mxu0 0
  %128 = vmatprep.subr.bf16.mxu0 0
  %129 = vmatpush1.bf16.msra.mxu0 0
  %130 = vmatprep.subr.bf16.mxu0 0
  %131 = vmatpush1.bf16.msra.mxu0 0
  %132 = vmatprep.subr.bf16.mxu0 0
  %133 = vmatpush1.bf16.msra.mxu0 0
  %134 = vmatprep.subr.bf16.mxu0 0
  %135 = vmatpush1.bf16.msra.mxu0 0
  %136 = vmatprep.subr.bf16.mxu0 0
  %137 = vmatpush1.bf16.msra.mxu0 0
  %138 = vmatprep.subr.bf16.mxu0 0
  %139 = vmatpush1.bf16.msra.mxu0 0
  %140 = vmatprep.subr.bf16.mxu0 0
  %141 = vmatpush1.bf16.msra.mxu0 0
  %142 = vmatprep.subr.bf16.mxu0 0
  %143 = vmatpush1.bf16.msra.mxu0 0
  %144 = vmatprep.subr.bf16.mxu0 0
  %145 = vmatpush1.bf16.msra.mxu0 0
  %146 = vmatprep.mubr.bf16.mxu0 0
  %147 = vmatmul.mubr.bf16.gmra.mrb[0].mxu0 %v112
  %v148 = vpop.f32.mrb[0].mxu0
  %v149 = vadd.f32 %v96, %v148
  %v150 = vpop.f32.mrb[0].mxu0
  %v151 = vpop.f32.mrb[0].mxu0
  %v152 = vadd.f32 %v96, %v151
  %v153 = vpop.f32.mrb[0].mxu0
  %154 = vdwg.mxu0
  %v155 = vld [vmem:[%s2] sm:$0xf]
  %v156 = vld [vmem:[%s2 + $0x4] sm:$0xf]
  %v157 = vld [vmem:[%s2 + $0x8] sm:$0xf]
  %v158 = vld [vmem:[%s2 + $0xc] sm:$0xf]
  %v159 = vld [vmem:[%s5] sm:$0x1]
  %v161 = vlaneseq
  %v162 = vshrl.u32 %v161, 7
  %v163 = vsub.s32 0, %v162
  %v164 = vrot.slane %v159, %v163
  %v170 = vunpack.c.l.b16 %v155
  %v171 = vunpack.c.l.b16 %v156
  %v172 = vunpack.c.l.b16 %v157
  %v173 = vunpack.c.l.b16 %v158
  %v174 = vpack.c.b16 %v171, %v170
  %v175 = vpack.c.b16 %v173, %v172
  %178 = vmatprep.subr.bf16.mxu0 0
  %179 = vmatpush1.bf16.msra.mxu0 %v174
  %180 = vmatprep.subr.bf16.mxu0 0
  %181 = vmatpush1.bf16.msra.mxu0 %v175
  %182 = vmatprep.subr.bf16.mxu0 0
  %183 = vmatpush1.bf16.msra.mxu0 0
  %184 = vmatprep.subr.bf16.mxu0 0
  %185 = vmatpush1.bf16.msra.mxu0 0
  %186 = vmatprep.subr.bf16.mxu0 0
  %187 = vmatpush1.bf16.msra.mxu0 0
  %188 = vmatprep.subr.bf16.mxu0 0
  %189 = vmatpush1.bf16.msra.mxu0 0
  %190 = vmatprep.subr.bf16.mxu0 0
  %191 = vmatpush1.bf16.msra.mxu0 0
  %192 = vmatprep.subr.bf16.mxu0 0
  %193 = vmatpush1.bf16.msra.mxu0 0
  %194 = vmatprep.subr.bf16.mxu0 0
  %195 = vmatpush1.bf16.msra.mxu0 0
  %196 = vmatprep.subr.bf16.mxu0 0
  %197 = vmatpush1.bf16.msra.mxu0 0
  %198 = vmatprep.subr.bf16.mxu0 0
  %199 = vmatpush1.bf16.msra.mxu0 0
  %200 = vmatprep.subr.bf16.mxu0 0
  %201 = vmatpush1.bf16.msra.mxu0 0
  %202 = vmatprep.subr.bf16.mxu0 0
  %203 = vmatpush1.bf16.msra.mxu0 0
  %204 = vmatprep.subr.bf16.mxu0 0
  %205 = vmatpush1.bf16.msra.mxu0 0
  %206 = vmatprep.subr.bf16.mxu0 0
  %207 = vmatpush1.bf16.msra.mxu0 0
  %208 = vmatprep.subr.bf16.mxu0 0
  %209 = vmatpush1.bf16.msra.mxu0 0
  %210 = vmatprep.mubr.bf16.mxu0 0
  %211 = vmatmul.mubr.bf16.gmra.mrb[0].mxu0 %v112
  %v212 = vpop.f32.mrb[0].mxu0
  %v213 = vadd.f32 %v164, %v212
  %v214 = vpop.f32.mrb[0].mxu0
  %v215 = vpop.f32.mrb[0].mxu0
  %v216 = vadd.f32 %v164, %v215
  %v217 = vpop.f32.mrb[0].mxu0
  %218 = vdwg.mxu0
  %v219 = vld [vmem:[%s3] sm:$0xf]
  %v220 = vld [vmem:[%s3 + $0x4] sm:$0xf]
  %v221 = vld [vmem:[%s3 + $0x8] sm:$0xf]
  %v222 = vld [vmem:[%s3 + $0xc] sm:$0xf]
  %v223 = vld [vmem:[%s6] sm:$0x1]
  %v225 = vlaneseq
  %v226 = vshrl.u32 %v225, 7
  %v227 = vsub.s32 0, %v226
  %v228 = vrot.slane %v223, %v227
  %v234 = vunpack.c.l.b16 %v219
  %v235 = vunpack.c.l.b16 %v220
  %v236 = vunpack.c.l.b16 %v221
  %v237 = vunpack.c.l.b16 %v222
  %v238 = vpack.c.b16 %v235, %v234
  %v239 = vpack.c.b16 %v237, %v236
  %242 = vmatprep.subr.bf16.mxu0 0
  %243 = vmatpush1.bf16.msra.mxu0 %v238
  %244 = vmatprep.subr.bf16.mxu0 0
  %245 = vmatpush1.bf16.msra.mxu0 %v239
  %246 = vmatprep.subr.bf16.mxu0 0
  %247 = vmatpush1.bf16.msra.mxu0 0
  %248 = vmatprep.subr.bf16.mxu0 0
  %249 = vmatpush1.bf16.msra.mxu0 0
  %250 = vmatprep.subr.bf16.mxu0 0
  %251 = vmatpush1.bf16.msra.mxu0 0
  %252 = vmatprep.subr.bf16.mxu0 0
  %253 = vmatpush1.bf16.msra.mxu0 0
  %254 = vmatprep.subr.bf16.mxu0 0
  %255 = vmatpush1.bf16.msra.mxu0 0
  %256 = vmatprep.subr.bf16.mxu0 0
  %257 = vmatpush1.bf16.msra.mxu0 0
  %258 = vmatprep.subr.bf16.mxu0 0
  %259 = vmatpush1.bf16.msra.mxu0 0
  %260 = vmatprep.subr.bf16.mxu0 0
  %261 = vmatpush1.bf16.msra.mxu0 0
  %262 = vmatprep.subr.bf16.mxu0 0
  %263 = vmatpush1.bf16.msra.mxu0 0
  %264 = vmatprep.subr.bf16.mxu0 0
  %265 = vmatpush1.bf16.msra.mxu0 0
  %266 = vmatprep.subr.bf16.mxu0 0
  %267 = vmatpush1.bf16.msra.mxu0 0
  %268 = vmatprep.subr.bf16.mxu0 0
  %269 = vmatpush1.bf16.msra.mxu0 0
  %270 = vmatprep.subr.bf16.mxu0 0
  %271 = vmatpush1.bf16.msra.mxu0 0
  %272 = vmatprep.subr.bf16.mxu0 0
  %273 = vmatpush1.bf16.msra.mxu0 0
  %274 = vmatprep.mubr.bf16.mxu0 0
  %275 = vmatmul.mubr.bf16.gmra.mrb[0].mxu0 %v112
  %v276 = vpop.f32.mrb[0].mxu0
  %v277 = vadd.f32 %v228, %v276
  %v278 = vpop.f32.mrb[0].mxu0
  %v279 = vpop.f32.mrb[0].mxu0
  %v280 = vadd.f32 %v228, %v279
  %v281 = vpop.f32.mrb[0].mxu0
  %282 = vdwg.mxu0
  %v283 = vpack.c.bf16 %v149, %v149
  %v284 = vpack.c.bf16 %v152, %v152
  %v285 = vpack.c.bf16 %v213, %v213
  %v286 = vpack.c.bf16 %v216, %v216
  %v287 = vpack.c.bf16 %v277, %v277
  %v288 = vpack.c.bf16 %v280, %v280
  %vm289 = vcmask 64512
  %v291 = vsel %vm289, %v283, 0
  %v294 = vsel %vm289, %v285, 0
  %296 = vmatprep.subr.bf16.mxu0 0
  %297 = vmatpush1.bf16.xpose.msra.mxu0 %v294
  %298 = vmatprep.subr.bf16.mxu0 0
  %299 = vmatpush1.bf16.xpose.msra.mxu0 0
  %300 = vmatprep.subr.bf16.mxu0 0
  %301 = vmatpush1.bf16.xpose.msra.mxu0 0
  %302 = vmatprep.subr.bf16.mxu0 0
  %303 = vmatpush1.bf16.xpose.msra.mxu0 0
  %304 = vmatprep.subr.bf16.mxu0 0
  %305 = vmatpush1.bf16.xpose.msra.mxu0 0
  %306 = vmatprep.subr.bf16.mxu0 0
  %307 = vmatpush1.bf16.xpose.msra.mxu0 0
  %308 = vmatprep.subr.bf16.mxu0 0
  %309 = vmatpush1.bf16.xpose.msra.mxu0 0
  %310 = vmatprep.subr.bf16.mxu0 0
  %311 = vmatpush1.bf16.xpose.msra.mxu0 0
  %312 = vmatprep.subr.bf16.mxu0 0
  %313 = vmatpush1.bf16.xpose.msra.mxu0 0
  %314 = vmatprep.subr.bf16.mxu0 0
  %315 = vmatpush1.bf16.xpose.msra.mxu0 0
  %316 = vmatprep.subr.bf16.mxu0 0
  %317 = vmatpush1.bf16.xpose.msra.mxu0 0
  %318 = vmatprep.subr.bf16.mxu0 0
  %319 = vmatpush1.bf16.xpose.msra.mxu0 0
  %320 = vmatprep.subr.bf16.mxu0 0
  %321 = vmatpush1.bf16.xpose.msra.mxu0 0
  %322 = vmatprep.subr.bf16.mxu0 0
  %323 = vmatpush1.bf16.xpose.msra.mxu0 0
  %324 = vmatprep.subr.bf16.mxu0 0
  %325 = vmatpush1.bf16.xpose.msra.mxu0 0
  %326 = vmatprep.subr.bf16.mxu0 0
  %327 = vmatpush1.bf16.xpose.msra.mxu0 0
  %328 = vmatprep.mubr.bf16.mxu0 0
  %329 = vmatmul.mubr.bf16.gmra.mrb[0].mxu0 %v291
  %v330 = vpop.f32.mrb[0].mxu0
  %v331 = vadd.f32 0.0, %v330
  %v332 = vpop.f32.mrb[0].mxu0
  %v333 = vpop.f32.mrb[0].mxu0
  %v334 = vpop.f32.mrb[0].mxu0
  %335 = vdwg.mxu0
  %v337 = vsel %vm289, %v284, 0
  %v340 = vsel %vm289, %v286, 0
  %342 = vmatprep.subr.bf16.mxu0 0
  %343 = vmatpush1.bf16.xpose.msra.mxu0 %v340
  %344 = vmatprep.subr.bf16.mxu0 0
  %345 = vmatpush1.bf16.xpose.msra.mxu0 0
  %346 = vmatprep.subr.bf16.mxu0 0
  %347 = vmatpush1.bf16.xpose.msra.mxu0 0
  %348 = vmatprep.subr.bf16.mxu0 0
  %349 = vmatpush1.bf16.xpose.msra.mxu0 0
  %350 = vmatprep.subr.bf16.mxu0 0
  %351 = vmatpush1.bf16.xpose.msra.mxu0 0
  %352 = vmatprep.subr.bf16.mxu0 0
  %353 = vmatpush1.bf16.xpose.msra.mxu0 0
  %354 = vmatprep.subr.bf16.mxu0 0
  %355 = vmatpush1.bf16.xpose.msra.mxu0 0
  %356 = vmatprep.subr.bf16.mxu0 0
  %357 = vmatpush1.bf16.xpose.msra.mxu0 0
  %358 = vmatprep.subr.bf16.mxu0 0
  %359 = vmatpush1.bf16.xpose.msra.mxu0 0
  %360 = vmatprep.subr.bf16.mxu0 0
  %361 = vmatpush1.bf16.xpose.msra.mxu0 0
  %362 = vmatprep.subr.bf16.mxu0 0
  %363 = vmatpush1.bf16.xpose.msra.mxu0 0
  %364 = vmatprep.subr.bf16.mxu0 0
  %365 = vmatpush1.bf16.xpose.msra.mxu0 0
  %366 = vmatprep.subr.bf16.mxu0 0
  %367 = vmatpush1.bf16.xpose.msra.mxu0 0
  %368 = vmatprep.subr.bf16.mxu0 0
  %369 = vmatpush1.bf16.xpose.msra.mxu0 0
  %370 = vmatprep.subr.bf16.mxu0 0
  %371 = vmatpush1.bf16.xpose.msra.mxu0 0
  %372 = vmatprep.subr.bf16.mxu0 0
  %373 = vmatpush1.bf16.xpose.msra.mxu0 0
  %374 = vmatprep.mubr.bf16.mxu0 0
  %375 = vmatmul.mubr.bf16.gmra.mrb[0].mxu0 %v337
  %v376 = vpop.f32.mrb[0].mxu0
  %v377 = vadd.f32 0.0, %v376
  %v378 = vpop.f32.mrb[0].mxu0
  %v379 = vpop.f32.mrb[0].mxu0
  %v380 = vpop.f32.mrb[0].mxu0
  %381 = vdwg.mxu0
  %v382 = vmul.f32 %v331, 0.35355338
  %v383 = vmul.f32 %v377, 0.35355338
  %v384 = vsel %vm289, %v382, -inf
  %385 = vmax.xlane.f32.xlu0 %v384
  %v386 = vpop.xlane.xlu0 %385
  %v387 = vsel %vm289, %v383, -inf
  %388 = vmax.xlane.f32.xlu0 %v387
  %v389 = vpop.xlane.xlu0 %388
  %v390 = vsub.f32 %v382, %v386
  %v391 = vsub.f32 %v383, %v389
  %v392 = vmul.f32 %v390, 1.442695
  %v393 = vpow.pop %v392
  %v394 = vmul.f32 %v391, 1.442695
  %v395 = vpow.pop %v394
  %v396 = vsel %vm289, %v393, 0.0
  %397 = vadd.xlane.f32.xlu0 %v396
  %v398 = vpop.xlane.xlu0 %397
  %v399 = vsel %vm289, %v395, 0.0
  %400 = vadd.xlane.f32.xlu0 %v399
  %v401 = vpop.xlane.xlu0 %400
  %v402 = vrcp.pop %v398
  %v403 = vrcp.pop %v401
  %v404 = vmul.f32 %v393, %v402
  %v405 = vmul.f32 %v395, %v403
  %v406 = vpack.c.bf16 %v404, %v404
  %v407 = vpack.c.bf16 %v405, %v405
  %v409 = vsel %vm289, %v406, 0
  %vm411 = vcmask 1043456
  %v413 = vsel %vm411, %v287, 0
  %415 = vmatprep.subr.bf16.mxu0 0
  %416 = vmatpush1.bf16.msra.mxu0 %v413
  %417 = vmatprep.subr.bf16.mxu0 0
  %418 = vmatpush1.bf16.msra.mxu0 0
  %419 = vmatprep.subr.bf16.mxu0 0
  %420 = vmatpush1.bf16.msra.mxu0 0
  %421 = vmatprep.subr.bf16.mxu0 0
  %422 = vmatpush1.bf16.msra.mxu0 0
  %423 = vmatprep.subr.bf16.mxu0 0
  %424 = vmatpush1.bf16.msra.mxu0 0
  %425 = vmatprep.subr.bf16.mxu0 0
  %426 = vmatpush1.bf16.msra.mxu0 0
  %427 = vmatprep.subr.bf16.mxu0 0
  %428 = vmatpush1.bf16.msra.mxu0 0
  %429 = vmatprep.subr.bf16.mxu0 0
  %430 = vmatpush1.bf16.msra.mxu0 0
  %431 = vmatprep.subr.bf16.mxu0 0
  %432 = vmatpush1.bf16.msra.mxu0 0
  %433 = vmatprep.subr.bf16.mxu0 0
  %434 = vmatpush1.bf16.msra.mxu0 0
  %435 = vmatprep.subr.bf16.mxu0 0
  %436 = vmatpush1.bf16.msra.mxu0 0
  %437 = vmatprep.subr.bf16.mxu0 0
  %438 = vmatpush1.bf16.msra.mxu0 0
  %439 = vmatprep.subr.bf16.mxu0 0
  %440 = vmatpush1.bf16.msra.mxu0 0
  %441 = vmatprep.subr.bf16.mxu0 0
  %442 = vmatpush1.bf16.msra.mxu0 0
  %443 = vmatprep.subr.bf16.mxu0 0
  %444 = vmatpush1.bf16.msra.mxu0 0
  %445 = vmatprep.subr.bf16.mxu0 0
  %446 = vmatpush1.bf16.msra.mxu0 0
  %447 = vmatprep.mubr.bf16.mxu0 0
  %448 = vmatmul.mubr.bf16.gmra.mrb[0].mxu0 %v409
  %v449 = vpop.f32.mrb[0].mxu0
  %v450 = vadd.f32 0.0, %v449
  %v451 = vpop.f32.mrb[0].mxu0
  %v452 = vpop.f32.mrb[0].mxu0
  %v453 = vpop.f32.mrb[0].mxu0
  %454 = vdwg.mxu0
  %v456 = vsel %vm289, %v407, 0
  %v459 = vsel %vm411, %v288, 0
  %461 = vmatprep.subr.bf16.mxu0 0
  %462 = vmatpush1.bf16.msra.mxu0 %v459
  %463 = vmatprep.subr.bf16.mxu0 0
  %464 = vmatpush1.bf16.msra.mxu0 0
  %465 = vmatprep.subr.bf16.mxu0 0
  %466 = vmatpush1.bf16.msra.mxu0 0
  %467 = vmatprep.subr.bf16.mxu0 0
  %468 = vmatpush1.bf16.msra.mxu0 0
  %469 = vmatprep.subr.bf16.mxu0 0
  %470 = vmatpush1.bf16.msra.mxu0 0
  %471 = vmatprep.subr.bf16.mxu0 0
  %472 = vmatpush1.bf16.msra.mxu0 0
  %473 = vmatprep.subr.bf16.mxu0 0
  %474 = vmatpush1.bf16.msra.mxu0 0
  %475 = vmatprep.subr.bf16.mxu0 0
  %476 = vmatpush1.bf16.msra.mxu0 0
  %477 = vmatprep.subr.bf16.mxu0 0
  %478 = vmatpush1.bf16.msra.mxu0 0
  %479 = vmatprep.subr.bf16.mxu0 0
  %480 = vmatpush1.bf16.msra.mxu0 0
  %481 = vmatprep.subr.bf16.mxu0 0
  %482 = vmatpush1.bf16.msra.mxu0 0
  %483 = vmatprep.subr.bf16.mxu0 0
  %484 = vmatpush1.bf16.msra.mxu0 0
  %485 = vmatprep.subr.bf16.mxu0 0
  %486 = vmatpush1.bf16.msra.mxu0 0
  %487 = vmatprep.subr.bf16.mxu0 0
  %488 = vmatpush1.bf16.msra.mxu0 0
  %489 = vmatprep.subr.bf16.mxu0 0
  %490 = vmatpush1.bf16.msra.mxu0 0
  %491 = vmatprep.subr.bf16.mxu0 0
  %492 = vmatpush1.bf16.msra.mxu0 0
  %493 = vmatprep.mubr.bf16.mxu0 0
  %494 = vmatmul.mubr.bf16.gmra.mrb[0].mxu0 %v456
  %v495 = vpop.f32.mrb[0].mxu0
  %v496 = vadd.f32 0.0, %v495
  %v497 = vpop.f32.mrb[0].mxu0
  %v498 = vpop.f32.mrb[0].mxu0
  %v499 = vpop.f32.mrb[0].mxu0
  %500 = vdwg.mxu0
  %v501 = vld [vmem:[%s7] sm:$0xf]
  %v502 = vpack.c.bf16 %v496, %v450
  %s503 = scalar_lea.vmem %s1, 16
  %v504 = vld [vmem:[%s503] sm:$0xf]
  %v505 = vld [vmem:[%s503 + $0x4] sm:$0xf]
  %v506 = vld [vmem:[%s503 + $0x8] sm:$0xf]
  %v507 = vld [vmem:[%s503 + $0xc] sm:$0xf]
  %s508 = scalar_lea.vmem %s4, 1
  %v509 = vld [vmem:[%s508] sm:$0x1]
  %v511 = vlaneseq
  %v512 = vshrl.u32 %v511, 7
  %v513 = vsub.s32 0, %v512
  %v514 = vrot.slane %v509, %v513
  %v520 = vunpack.c.l.b16 %v504
  %v521 = vunpack.c.l.b16 %v505
  %v522 = vunpack.c.l.b16 %v506
  %v523 = vunpack.c.l.b16 %v507
  %v524 = vpack.c.b16 %v521, %v520
  %v525 = vpack.c.b16 %v523, %v522
  %528 = vmatprep.subr.bf16.mxu0 0
  %529 = vmatpush1.bf16.msra.mxu0 %v524
  %530 = vmatprep.subr.bf16.mxu0 0
  %531 = vmatpush1.bf16.msra.mxu0 %v525
  %532 = vmatprep.subr.bf16.mxu0 0
  %533 = vmatpush1.bf16.msra.mxu0 0
  %534 = vmatprep.subr.bf16.mxu0 0
  %535 = vmatpush1.bf16.msra.mxu0 0
  %536 = vmatprep.subr.bf16.mxu0 0
  %537 = vmatpush1.bf16.msra.mxu0 0
  %538 = vmatprep.subr.bf16.mxu0 0
  %539 = vmatpush1.bf16.msra.mxu0 0
  %540 = vmatprep.subr.bf16.mxu0 0
  %541 = vmatpush1.bf16.msra.mxu0 0
  %542 = vmatprep.subr.bf16.mxu0 0
  %543 = vmatpush1.bf16.msra.mxu0 0
  %544 = vmatprep.subr.bf16.mxu0 0
  %545 = vmatpush1.bf16.msra.mxu0 0
  %546 = vmatprep.subr.bf16.mxu0 0
  %547 = vmatpush1.bf16.msra.mxu0 0
  %548 = vmatprep.subr.bf16.mxu0 0
  %549 = vmatpush1.bf16.msra.mxu0 0
  %550 = vmatprep.subr.bf16.mxu0 0
  %551 = vmatpush1.bf16.msra.mxu0 0
  %552 = vmatprep.subr.bf16.mxu0 0
  %553 = vmatpush1.bf16.msra.mxu0 0
  %554 = vmatprep.subr.bf16.mxu0 0
  %555 = vmatpush1.bf16.msra.mxu0 0
  %556 = vmatprep.subr.bf16.mxu0 0
  %557 = vmatpush1.bf16.msra.mxu0 0
  %558 = vmatprep.subr.bf16.mxu0 0
  %559 = vmatpush1.bf16.msra.mxu0 0
  %560 = vmatprep.mubr.bf16.mxu0 0
  %561 = vmatmul.mubr.bf16.gmra.mrb[0].mxu0 %v112
  %v562 = vpop.f32.mrb[0].mxu0
  %v563 = vadd.f32 %v514, %v562
  %v564 = vpop.f32.mrb[0].mxu0
  %v565 = vpop.f32.mrb[0].mxu0
  %v566 = vadd.f32 %v514, %v565
  %v567 = vpop.f32.mrb[0].mxu0
  %568 = vdwg.mxu0
  %s569 = scalar_lea.vmem %s2, 16
  %v570 = vld [vmem:[%s569] sm:$0xf]
  %v571 = vld [vmem:[%s569 + $0x4] sm:$0xf]
  %v572 = vld [vmem:[%s569 + $0x8] sm:$0xf]
  %v573 = vld [vmem:[%s569 + $0xc] sm:$0xf]
  %s574 = scalar_lea.vmem %s5, 1
  %v575 = vld [vmem:[%s574] sm:$0x1]
  %v577 = vlaneseq
  %v578 = vshrl.u32 %v577, 7
  %v579 = vsub.s32 0, %v578
  %v580 = vrot.slane %v575, %v579
  %v586 = vunpack.c.l.b16 %v570
  %v587 = vunpack.c.l.b16 %v571
  %v588 = vunpack.c.l.b16 %v572
  %v589 = vunpack.c.l.b16 %v573
  %v590 = vpack.c.b16 %v587, %v586
  %v591 = vpack.c.b16 %v589, %v588
  %594 = vmatprep.subr.bf16.mxu0 0
  %595 = vmatpush1.bf16.msra.mxu0 %v590
  %596 = vmatprep.subr.bf16.mxu0 0
  %597 = vmatpush1.bf16.msra.mxu0 %v591
  %598 = vmatprep.subr.bf16.mxu0 0
  %599 = vmatpush1.bf16.msra.mxu0 0
  %600 = vmatprep.subr.bf16.mxu0 0
  %601 = vmatpush1.bf16.msra.mxu0 0
  %602 = vmatprep.subr.bf16.mxu0 0
  %603 = vmatpush1.bf16.msra.mxu0 0
  %604 = vmatprep.subr.bf16.mxu0 0
  %605 = vmatpush1.bf16.msra.mxu0 0
  %606 = vmatprep.subr.bf16.mxu0 0
  %607 = vmatpush1.bf16.msra.mxu0 0
  %608 = vmatprep.subr.bf16.mxu0 0
  %609 = vmatpush1.bf16.msra.mxu0 0
  %610 = vmatprep.subr.bf16.mxu0 0
  %611 = vmatpush1.bf16.msra.mxu0 0
  %612 = vmatprep.subr.bf16.mxu0 0
  %613 = vmatpush1.bf16.msra.mxu0 0
  %614 = vmatprep.subr.bf16.mxu0 0
  %615 = vmatpush1.bf16.msra.mxu0 0
  %616 = vmatprep.subr.bf16.mxu0 0
  %617 = vmatpush1.bf16.msra.mxu0 0
  %618 = vmatprep.subr.bf16.mxu0 0
  %619 = vmatpush1.bf16.msra.mxu0 0
  %620 = vmatprep.subr.bf16.mxu0 0
  %621 = vmatpush1.bf16.msra.mxu0 0
  %622 = vmatprep.subr.bf16.mxu0 0
  %623 = vmatpush1.bf16.msra.mxu0 0
  %624 = vmatprep.subr.bf16.mxu0 0
  %625 = vmatpush1.bf16.msra.mxu0 0
  %626 = vmatprep.mubr.bf16.mxu0 0
  %627 = vmatmul.mubr.bf16.gmra.mrb[0].mxu0 %v112
  %v628 = vpop.f32.mrb[0].mxu0
  %v629 = vadd.f32 %v580, %v628
  %v630 = vpop.f32.mrb[0].mxu0
  %v631 = vpop.f32.mrb[0].mxu0
  %v632 = vadd.f32 %v580, %v631
  %v633 = vpop.f32.mrb[0].mxu0
  %634 = vdwg.mxu0
  %s635 = scalar_lea.vmem %s3, 16
  %v636 = vld [vmem:[%s635] sm:$0xf]
  %v637 = vld [vmem:[%s635 + $0x4] sm:$0xf]
  %v638 = vld [vmem:[%s635 + $0x8] sm:$0xf]
  %v639 = vld [vmem:[%s635 + $0xc] sm:$0xf]
  %s640 = scalar_lea.vmem %s6, 1
  %v641 = vld [vmem:[%s640] sm:$0x1]
  %v643 = vlaneseq
  %v644 = vshrl.u32 %v643, 7
  %v645 = vsub.s32 0, %v644
  %v646 = vrot.slane %v641, %v645
  %v652 = vunpack.c.l.b16 %v636
  %v653 = vunpack.c.l.b16 %v637
  %v654 = vunpack.c.l.b16 %v638
  %v655 = vunpack.c.l.b16 %v639
  %v656 = vpack.c.b16 %v653, %v652
  %v657 = vpack.c.b16 %v655, %v654
  %660 = vmatprep.subr.bf16.mxu0 0
  %661 = vmatpush1.bf16.msra.mxu0 %v656
  %662 = vmatprep.subr.bf16.mxu0 0
  %663 = vmatpush1.bf16.msra.mxu0 %v657
  %664 = vmatprep.subr.bf16.mxu0 0
  %665 = vmatpush1.bf16.msra.mxu0 0
  %666 = vmatprep.subr.bf16.mxu0 0
  %667 = vmatpush1.bf16.msra.mxu0 0
  %668 = vmatprep.subr.bf16.mxu0 0
  %669 = vmatpush1.bf16.msra.mxu0 0
  %670 = vmatprep.subr.bf16.mxu0 0
  %671 = vmatpush1.bf16.msra.mxu0 0
  %672 = vmatprep.subr.bf16.mxu0 0
  %673 = vmatpush1.bf16.msra.mxu0 0
  %674 = vmatprep.subr.bf16.mxu0 0
  %675 = vmatpush1.bf16.msra.mxu0 0
  %676 = vmatprep.subr.bf16.mxu0 0
  %677 = vmatpush1.bf16.msra.mxu0 0
  %678 = vmatprep.subr.bf16.mxu0 0
  %679 = vmatpush1.bf16.msra.mxu0 0
  %680 = vmatprep.subr.bf16.mxu0 0
  %681 = vmatpush1.bf16.msra.mxu0 0
  %682 = vmatprep.subr.bf16.mxu0 0
  %683 = vmatpush1.bf16.msra.mxu0 0
  %684 = vmatprep.subr.bf16.mxu0 0
  %685 = vmatpush1.bf16.msra.mxu0 0
  %686 = vmatprep.subr.bf16.mxu0 0
  %687 = vmatpush1.bf16.msra.mxu0 0
  %688 = vmatprep.subr.bf16.mxu0 0
  %689 = vmatpush1.bf16.msra.mxu0 0
  %690 = vmatprep.subr.bf16.mxu0 0
  %691 = vmatpush1.bf16.msra.mxu0 0
  %692 = vmatprep.mubr.bf16.mxu0 0
  %693 = vmatmul.mubr.bf16.gmra.mrb[0].mxu0 %v112
  %v694 = vpop.f32.mrb[0].mxu0
  %v695 = vadd.f32 %v646, %v694
  %v696 = vpop.f32.mrb[0].mxu0
  %v697 = vpop.f32.mrb[0].mxu0
  %v698 = vadd.f32 %v646, %v697
  %v699 = vpop.f32.mrb[0].mxu0
  %700 = vdwg.mxu0
  %v701 = vpack.c.bf16 %v563, %v563
  %v702 = vpack.c.bf16 %v566, %v566
  %v703 = vpack.c.bf16 %v629, %v629
  %v704 = vpack.c.bf16 %v632, %v632
  %v705 = vpack.c.bf16 %v695, %v695
  %v706 = vpack.c.bf16 %v698, %v698
  %v708 = vsel %vm289, %v701, 0
  %v711 = vsel %vm289, %v703, 0
  %713 = vmatprep.subr.bf16.mxu0 0
  %714 = vmatpush1.bf16.xpose.msra.mxu0 %v711
  %715 = vmatprep.subr.bf16.mxu0 0
  %716 = vmatpush1.bf16.xpose.msra.mxu0 0
  %717 = vmatprep.subr.bf16.mxu0 0
  %718 = vmatpush1.bf16.xpose.msra.mxu0 0
  %719 = vmatprep.subr.bf16.mxu0 0
  %720 = vmatpush1.bf16.xpose.msra.mxu0 0
  %721 = vmatprep.subr.bf16.mxu0 0
  %722 = vmatpush1.bf16.xpose.msra.mxu0 0
  %723 = vmatprep.subr.bf16.mxu0 0
  %724 = vmatpush1.bf16.xpose.msra.mxu0 0
  %725 = vmatprep.subr.bf16.mxu0 0
  %726 = vmatpush1.bf16.xpose.msra.mxu0 0
  %727 = vmatprep.subr.bf16.mxu0 0
  %728 = vmatpush1.bf16.xpose.msra.mxu0 0
  %729 = vmatprep.subr.bf16.mxu0 0
  %730 = vmatpush1.bf16.xpose.msra.mxu0 0
  %731 = vmatprep.subr.bf16.mxu0 0
  %732 = vmatpush1.bf16.xpose.msra.mxu0 0
  %733 = vmatprep.subr.bf16.mxu0 0
  %734 = vmatpush1.bf16.xpose.msra.mxu0 0
  %735 = vmatprep.subr.bf16.mxu0 0
  %736 = vmatpush1.bf16.xpose.msra.mxu0 0
  %737 = vmatprep.subr.bf16.mxu0 0
  %738 = vmatpush1.bf16.xpose.msra.mxu0 0
  %739 = vmatprep.subr.bf16.mxu0 0
  %740 = vmatpush1.bf16.xpose.msra.mxu0 0
  %741 = vmatprep.subr.bf16.mxu0 0
  %742 = vmatpush1.bf16.xpose.msra.mxu0 0
  %743 = vmatprep.subr.bf16.mxu0 0
  %744 = vmatpush1.bf16.xpose.msra.mxu0 0
  %745 = vmatprep.mubr.bf16.mxu0 0
  %746 = vmatmul.mubr.bf16.gmra.mrb[0].mxu0 %v708
  %v747 = vpop.f32.mrb[0].mxu0
  %v748 = vadd.f32 0.0, %v747
  %v749 = vpop.f32.mrb[0].mxu0
  %v750 = vpop.f32.mrb[0].mxu0
  %v751 = vpop.f32.mrb[0].mxu0
  %752 = vdwg.mxu0
  %v754 = vsel %vm289, %v702, 0
  %v757 = vsel %vm289, %v704, 0
  %759 = vmatprep.subr.bf16.mxu0 0
  %760 = vmatpush1.bf16.xpose.msra.mxu0 %v757
  %761 = vmatprep.subr.bf16.mxu0 0
  %762 = vmatpush1.bf16.xpose.msra.mxu0 0
  %763 = vmatprep.subr.bf16.mxu0 0
  %764 = vmatpush1.bf16.xpose.msra.mxu0 0
  %765 = vmatprep.subr.bf16.mxu0 0
  %766 = vmatpush1.bf16.xpose.msra.mxu0 0
  %767 = vmatprep.subr.bf16.mxu0 0
  %768 = vmatpush1.bf16.xpose.msra.mxu0 0
  %769 = vmatprep.subr.bf16.mxu0 0
  %770 = vmatpush1.bf16.xpose.msra.mxu0 0
  %771 = vmatprep.subr.bf16.mxu0 0
  %772 = vmatpush1.bf16.xpose.msra.mxu0 0
  %773 = vmatprep.subr.bf16.mxu0 0
  %774 = vmatpush1.bf16.xpose.msra.mxu0 0
  %775 = vmatprep.subr.bf16.mxu0 0
  %776 = vmatpush1.bf16.xpose.msra.mxu0 0
  %777 = vmatprep.subr.bf16.mxu0 0
  %778 = vmatpush1.bf16.xpose.msra.mxu0 0
  %779 = vmatprep.subr.bf16.mxu0 0
  %780 = vmatpush1.bf16.xpose.msra.mxu0 0
  %781 = vmatprep.subr.bf16.mxu0 0
  %782 = vmatpush1.bf16.xpose.msra.mxu0 0
  %783 = vmatprep.subr.bf16.mxu0 0
  %784 = vmatpush1.bf16.xpose.msra.mxu0 0
  %785 = vmatprep.subr.bf16.mxu0 0
  %786 = vmatpush1.bf16.xpose.msra.mxu0 0
  %787 = vmatprep.subr.bf16.mxu0 0
  %788 = vmatpush1.bf16.xpose.msra.mxu0 0
  %789 = vmatprep.subr.bf16.mxu0 0
  %790 = vmatpush1.bf16.xpose.msra.mxu0 0
  %791 = vmatprep.mubr.bf16.mxu0 0
  %792 = vmatmul.mubr.bf16.gmra.mrb[0].mxu0 %v754
  %v793 = vpop.f32.mrb[0].mxu0
  %v794 = vadd.f32 0.0, %v793
  %v795 = vpop.f32.mrb[0].mxu0
  %v796 = vpop.f32.mrb[0].mxu0
  %v797 = vpop.f32.mrb[0].mxu0
  %798 = vdwg.mxu0
  %v799 = vmul.f32 %v748, 0.35355338
  %v800 = vmul.f32 %v794, 0.35355338
  %v801 = vsel %vm289, %v799, -inf
  %802 = vmax.xlane.f32.xlu0 %v801
  %v803 = vpop.xlane.xlu0 %802
  %v804 = vsel %vm289, %v800, -inf
  %805 = vmax.xlane.f32.xlu0 %v804
  %v806 = vpop.xlane.xlu0 %805
  %v807 = vsub.f32 %v799, %v803
  %v808 = vsub.f32 %v800, %v806
  %v809 = vmul.f32 %v807, 1.442695
  %v810 = vpow.pop %v809
  %v811 = vmul.f32 %v808, 1.442695
  %v812 = vpow.pop %v811
  %v813 = vsel %vm289, %v810, 0.0
  %814 = vadd.xlane.f32.xlu0 %v813
  %v815 = vpop.xlane.xlu0 %814
  %v816 = vsel %vm289, %v812, 0.0
  %817 = vadd.xlane.f32.xlu0 %v816
  %v818 = vpop.xlane.xlu0 %817
  %v819 = vrcp.pop %v815
  %v820 = vrcp.pop %v818
  %v821 = vmul.f32 %v810, %v819
  %v822 = vmul.f32 %v812, %v820
  %v823 = vpack.c.bf16 %v821, %v821
  %v824 = vpack.c.bf16 %v822, %v822
  %v826 = vsel %vm289, %v823, 0
  %v829 = vsel %vm411, %v705, 0
  %831 = vmatprep.subr.bf16.mxu0 0
  %832 = vmatpush1.bf16.msra.mxu0 %v829
  %833 = vmatprep.subr.bf16.mxu0 0
  %834 = vmatpush1.bf16.msra.mxu0 0
  %835 = vmatprep.subr.bf16.mxu0 0
  %836 = vmatpush1.bf16.msra.mxu0 0
  %837 = vmatprep.subr.bf16.mxu0 0
  %838 = vmatpush1.bf16.msra.mxu0 0
  %839 = vmatprep.subr.bf16.mxu0 0
  %840 = vmatpush1.bf16.msra.mxu0 0
  %841 = vmatprep.subr.bf16.mxu0 0
  %842 = vmatpush1.bf16.msra.mxu0 0
  %843 = vmatprep.subr.bf16.mxu0 0
  %844 = vmatpush1.bf16.msra.mxu0 0
  %845 = vmatprep.subr.bf16.mxu0 0
  %846 = vmatpush1.bf16.msra.mxu0 0
  %847 = vmatprep.subr.bf16.mxu0 0
  %848 = vmatpush1.bf16.msra.mxu0 0
  %849 = vmatprep.subr.bf16.mxu0 0
  %850 = vmatpush1.bf16.msra.mxu0 0
  %851 = vmatprep.subr.bf16.mxu0 0
  %852 = vmatpush1.bf16.msra.mxu0 0
  %853 = vmatprep.subr.bf16.mxu0 0
  %854 = vmatpush1.bf16.msra.mxu0 0
  %855 = vmatprep.subr.bf16.mxu0 0
  %856 = vmatpush1.bf16.msra.mxu0 0
  %857 = vmatprep.subr.bf16.mxu0 0
  %858 = vmatpush1.bf16.msra.mxu0 0
  %859 = vmatprep.subr.bf16.mxu0 0
  %860 = vmatpush1.bf16.msra.mxu0 0
  %861 = vmatprep.subr.bf16.mxu0 0
  %862 = vmatpush1.bf16.msra.mxu0 0
  %863 = vmatprep.mubr.bf16.mxu0 0
  %864 = vmatmul.mubr.bf16.gmra.mrb[0].mxu0 %v826
  %v865 = vpop.f32.mrb[0].mxu0
  %v866 = vadd.f32 0.0, %v865
  %v867 = vpop.f32.mrb[0].mxu0
  %v868 = vpop.f32.mrb[0].mxu0
  %v869 = vpop.f32.mrb[0].mxu0
  %870 = vdwg.mxu0
  %v872 = vsel %vm289, %v824, 0
  %v875 = vsel %vm411, %v706, 0
  %877 = vmatprep.subr.bf16.mxu0 0
  %878 = vmatpush1.bf16.msra.mxu0 %v875
  %879 = vmatprep.subr.bf16.mxu0 0
  %880 = vmatpush1.bf16.msra.mxu0 0
  %881 = vmatprep.subr.bf16.mxu0 0
  %882 = vmatpush1.bf16.msra.mxu0 0
  %883 = vmatprep.subr.bf16.mxu0 0
  %884 = vmatpush1.bf16.msra.mxu0 0
  %885 = vmatprep.subr.bf16.mxu0 0
  %886 = vmatpush1.bf16.msra.mxu0 0
  %887 = vmatprep.subr.bf16.mxu0 0
  %888 = vmatpush1.bf16.msra.mxu0 0
  %889 = vmatprep.subr.bf16.mxu0 0
  %890 = vmatpush1.bf16.msra.mxu0 0
  %891 = vmatprep.subr.bf16.mxu0 0
  %892 = vmatpush1.bf16.msra.mxu0 0
  %893 = vmatprep.subr.bf16.mxu0 0
  %894 = vmatpush1.bf16.msra.mxu0 0
  %895 = vmatprep.subr.bf16.mxu0 0
  %896 = vmatpush1.bf16.msra.mxu0 0
  %897 = vmatprep.subr.bf16.mxu0 0
  %898 = vmatpush1.bf16.msra.mxu0 0
  %899 = vmatprep.subr.bf16.mxu0 0
  %900 = vmatpush1.bf16.msra.mxu0 0
  %901 = vmatprep.subr.bf16.mxu0 0
  %902 = vmatpush1.bf16.msra.mxu0 0
  %903 = vmatprep.subr.bf16.mxu0 0
  %904 = vmatpush1.bf16.msra.mxu0 0
  %905 = vmatprep.subr.bf16.mxu0 0
  %906 = vmatpush1.bf16.msra.mxu0 0
  %907 = vmatprep.subr.bf16.mxu0 0
  %908 = vmatpush1.bf16.msra.mxu0 0
  %909 = vmatprep.mubr.bf16.mxu0 0
  %910 = vmatmul.mubr.bf16.gmra.mrb[0].mxu0 %v872
  %v911 = vpop.f32.mrb[0].mxu0
  %v912 = vadd.f32 0.0, %v911
  %v913 = vpop.f32.mrb[0].mxu0
  %v914 = vpop.f32.mrb[0].mxu0
  %v915 = vpop.f32.mrb[0].mxu0
  %916 = vdwg.mxu0
  %s917 = scalar_lea.vmem %s7, 4
  %v918 = vld [vmem:[%s917] sm:$0xf]
  %v919 = vpack.c.bf16 %v912, %v866
  %v921 = vsel %vm289, %v919, 0
  %v924 = vsel %vm411, %v918, 0
  %926 = vmatprep.subr.bf16.mxu0 0
  %927 = vmatpush1.bf16.msra.mxu0 %v924
  %928 = vmatprep.subr.bf16.mxu0 0
  %929 = vmatpush1.bf16.msra.mxu0 0
  %930 = vmatprep.subr.bf16.mxu0 0
  %931 = vmatpush1.bf16.msra.mxu0 0
  %932 = vmatprep.subr.bf16.mxu0 0
  %933 = vmatpush1.bf16.msra.mxu0 0
  %934 = vmatprep.subr.bf16.mxu0 0
  %935 = vmatpush1.bf16.msra.mxu0 0
  %936 = vmatprep.subr.bf16.mxu0 0
  %937 = vmatpush1.bf16.msra.mxu0 0
  %938 = vmatprep.subr.bf16.mxu0 0
  %939 = vmatpush1.bf16.msra.mxu0 0
  %940 = vmatprep.subr.bf16.mxu0 0
  %941 = vmatpush1.bf16.msra.mxu0 0
  %942 = vmatprep.subr.bf16.mxu0 0
  %943 = vmatpush1.bf16.msra.mxu0 0
  %944 = vmatprep.subr.bf16.mxu0 0
  %945 = vmatpush1.bf16.msra.mxu0 0
  %946 = vmatprep.subr.bf16.mxu0 0
  %947 = vmatpush1.bf16.msra.mxu0 0
  %948 = vmatprep.subr.bf16.mxu0 0
  %949 = vmatpush1.bf16.msra.mxu0 0
  %950 = vmatprep.subr.bf16.mxu0 0
  %951 = vmatpush1.bf16.msra.mxu0 0
  %952 = vmatprep.subr.bf16.mxu0 0
  %953 = vmatpush1.bf16.msra.mxu0 0
  %954 = vmatprep.subr.bf16.mxu0 0
  %955 = vmatpush1.bf16.msra.mxu0 0
  %956 = vmatprep.subr.bf16.mxu0 0
  %957 = vmatpush1.bf16.msra.mxu0 0
  %958 = vmatprep.mubr.bf16.mxu0 0
  %959 = vmatmul.mubr.bf16.gmra.mrb[0].mxu0 %v921
  %v960 = vpop.f32.mrb[0].mxu0
  %v961 = vadd.f32 0.0, %v960
  %v962 = vpop.f32.mrb[0].mxu0
  %v963 = vpop.f32.mrb[0].mxu0
  %v964 = vadd.f32 0.0, %v963
  %v965 = vpop.f32.mrb[0].mxu0
  %966 = vdwg.mxu0
  %v968 = vsel %vm289, %v502, 0
  %v971 = vsel %vm411, %v501, 0
  %973 = vmatprep.subr.bf16.mxu0 0
  %974 = vmatpush1.bf16.msra.mxu0 %v971
  %975 = vmatprep.subr.bf16.mxu0 0
  %976 = vmatpush1.bf16.msra.mxu0 0
  %977 = vmatprep.subr.bf16.mxu0 0
  %978 = vmatpush1.bf16.msra.mxu0 0
  %979 = vmatprep.subr.bf16.mxu0 0
  %980 = vmatpush1.bf16.msra.mxu0 0
  %981 = vmatprep.subr.bf16.mxu0 0
  %982 = vmatpush1.bf16.msra.mxu0 0
  %983 = vmatprep.subr.bf16.mxu0 0
  %984 = vmatpush1.bf16.msra.mxu0 0
  %985 = vmatprep.subr.bf16.mxu0 0
  %986 = vmatpush1.bf16.msra.mxu0 0
  %987 = vmatprep.subr.bf16.mxu0 0
  %988 = vmatpush1.bf16.msra.mxu0 0
  %989 = vmatprep.subr.bf16.mxu0 0
  %990 = vmatpush1.bf16.msra.mxu0 0
  %991 = vmatprep.subr.bf16.mxu0 0
  %992 = vmatpush1.bf16.msra.mxu0 0
  %993 = vmatprep.subr.bf16.mxu0 0
  %994 = vmatpush1.bf16.msra.mxu0 0
  %995 = vmatprep.subr.bf16.mxu0 0
  %996 = vmatpush1.bf16.msra.mxu0 0
  %997 = vmatprep.subr.bf16.mxu0 0
  %998 = vmatpush1.bf16.msra.mxu0 0
  %999 = vmatprep.subr.bf16.mxu0 0
  %1000 = vmatpush1.bf16.msra.mxu0 0
  %1001 = vmatprep.subr.bf16.mxu0 0
  %1002 = vmatpush1.bf16.msra.mxu0 0
  %1003 = vmatprep.subr.bf16.mxu0 0
  %1004 = vmatpush1.bf16.msra.mxu0 0
  %1005 = vmatprep.mubr.bf16.mxu0 0
  %1006 = vmatmul.mubr.bf16.gmra.mrb[0].mxu0 %v968
  %v1007 = vpop.f32.mrb[0].mxu0
  %v1008 = vadd.f32 %v961, %v1007
  %v1009 = vpop.f32.mrb[0].mxu0
  %v1010 = vpop.f32.mrb[0].mxu0
  %v1011 = vadd.f32 %v964, %v1010
  %v1012 = vpop.f32.mrb[0].mxu0
  %1013 = vdwg.mxu0
  %s1014 = scalar_lea.vmem %s1, 32
  %v1015 = vld [vmem:[%s1014] sm:$0xf]
  %v1016 = vld [vmem:[%s1014 + $0x4] sm:$0xf]
  %v1017 = vld [vmem:[%s1014 + $0x8] sm:$0xf]
  %v1018 = vld [vmem:[%s1014 + $0xc] sm:$0xf]
  %s1019 = scalar_lea.vmem %s4, 2
  %v1020 = vld [vmem:[%s1019] sm:$0x1]
  %v1022 = vlaneseq
  %v1023 = vshrl.u32 %v1022, 7
  %v1024 = vsub.s32 0, %v1023
  %v1025 = vrot.slane %v1020, %v1024
  %v1031 = vunpack.c.l.b16 %v1015
  %v1032 = vunpack.c.l.b16 %v1016
  %v1033 = vunpack.c.l.b16 %v1017
  %v1034 = vunpack.c.l.b16 %v1018
  %v1035 = vpack.c.b16 %v1032, %v1031
  %v1036 = vpack.c.b16 %v1034, %v1033
  %1039 = vmatprep.subr.bf16.mxu0 0
  %1040 = vmatpush1.bf16.msra.mxu0 %v1035
  %1041 = vmatprep.subr.bf16.mxu0 0
  %1042 = vmatpush1.bf16.msra.mxu0 %v1036
  %1043 = vmatprep.subr.bf16.mxu0 0
  %1044 = vmatpush1.bf16.msra.mxu0 0
  %1045 = vmatprep.subr.bf16.mxu0 0
  %1046 = vmatpush1.bf16.msra.mxu0 0
  %1047 = vmatprep.subr.bf16.mxu0 0
  %1048 = vmatpush1.bf16.msra.mxu0 0
  %1049 = vmatprep.subr.bf16.mxu0 0
  %1050 = vmatpush1.bf16.msra.mxu0 0
  %1051 = vmatprep.subr.bf16.mxu0 0
  %1052 = vmatpush1.bf16.msra.mxu0 0
  %1053 = vmatprep.subr.bf16.mxu0 0
  %1054 = vmatpush1.bf16.msra.mxu0 0
  %1055 = vmatprep.subr.bf16.mxu0 0
  %1056 = vmatpush1.bf16.msra.mxu0 0
  %1057 = vmatprep.subr.bf16.mxu0 0
  %1058 = vmatpush1.bf16.msra.mxu0 0
  %1059 = vmatprep.subr.bf16.mxu0 0
  %1060 = vmatpush1.bf16.msra.mxu0 0
  %1061 = vmatprep.subr.bf16.mxu0 0
  %1062 = vmatpush1.bf16.msra.mxu0 0
  %1063 = vmatprep.subr.bf16.mxu0 0
  %1064 = vmatpush1.bf16.msra.mxu0 0
  %1065 = vmatprep.subr.bf16.mxu0 0
  %1066 = vmatpush1.bf16.msra.mxu0 0
  %1067 = vmatprep.subr.bf16.mxu0 0
  %1068 = vmatpush1.bf16.msra.mxu0 0
  %1069 = vmatprep.subr.bf16.mxu0 0
  %1070 = vmatpush1.bf16.msra.mxu0 0
  %1071 = vmatprep.mubr.bf16.mxu0 0
  %1072 = vmatmul.mubr.bf16.gmra.mrb[0].mxu0 %v112
  %v1073 = vpop.f32.mrb[0].mxu0
  %v1074 = vadd.f32 %v1025, %v1073
  %v1075 = vpop.f32.mrb[0].mxu0
  %v1076 = vpop.f32.mrb[0].mxu0
  %v1077 = vadd.f32 %v1025, %v1076
  %v1078 = vpop.f32.mrb[0].mxu0
  %1079 = vdwg.mxu0
  %s1080 = scalar_lea.vmem %s2, 32
  %v1081 = vld [vmem:[%s1080] sm:$0xf]
  %v1082 = vld [vmem:[%s1080 + $0x4] sm:$0xf]
  %v1083 = vld [vmem:[%s1080 + $0x8] sm:$0xf]
  %v1084 = vld [vmem:[%s1080 + $0xc] sm:$0xf]
  %s1085 = scalar_lea.vmem %s5, 2
  %v1086 = vld [vmem:[%s1085] sm:$0x1]
  %v1088 = vlaneseq
  %v1089 = vshrl.u32 %v1088, 7
  %v1090 = vsub.s32 0, %v1089
  %v1091 = vrot.slane %v1086, %v1090
  %v1097 = vunpack.c.l.b16 %v1081
  %v1098 = vunpack.c.l.b16 %v1082
  %v1099 = vunpack.c.l.b16 %v1083
  %v1100 = vunpack.c.l.b16 %v1084
  %v1101 = vpack.c.b16 %v1098, %v1097
  %v1102 = vpack.c.b16 %v1100, %v1099
  %1105 = vmatprep.subr.bf16.mxu0 0
  %1106 = vmatpush1.bf16.msra.mxu0 %v1101
  %1107 = vmatprep.subr.bf16.mxu0 0
  %1108 = vmatpush1.bf16.msra.mxu0 %v1102
  %1109 = vmatprep.subr.bf16.mxu0 0
  %1110 = vmatpush1.bf16.msra.mxu0 0
  %1111 = vmatprep.subr.bf16.mxu0 0
  %1112 = vmatpush1.bf16.msra.mxu0 0
  %1113 = vmatprep.subr.bf16.mxu0 0
  %1114 = vmatpush1.bf16.msra.mxu0 0
  %1115 = vmatprep.subr.bf16.mxu0 0
  %1116 = vmatpush1.bf16.msra.mxu0 0
  %1117 = vmatprep.subr.bf16.mxu0 0
  %1118 = vmatpush1.bf16.msra.mxu0 0
  %1119 = vmatprep.subr.bf16.mxu0 0
  %1120 = vmatpush1.bf16.msra.mxu0 0
  %1121 = vmatprep.subr.bf16.mxu0 0
  %1122 = vmatpush1.bf16.msra.mxu0 0
  %1123 = vmatprep.subr.bf16.mxu0 0
  %1124 = vmatpush1.bf16.msra.mxu0 0
  %1125 = vmatprep.subr.bf16.mxu0 0
  %1126 = vmatpush1.bf16.msra.mxu0 0
  %1127 = vmatprep.subr.bf16.mxu0 0
  %1128 = vmatpush1.bf16.msra.mxu0 0
  %1129 = vmatprep.subr.bf16.mxu0 0
  %1130 = vmatpush1.bf16.msra.mxu0 0
  %1131 = vmatprep.subr.bf16.mxu0 0
  %1132 = vmatpush1.bf16.msra.mxu0 0
  %1133 = vmatprep.subr.bf16.mxu0 0
  %1134 = vmatpush1.bf16.msra.mxu0 0
  %1135 = vmatprep.subr.bf16.mxu0 0
  %1136 = vmatpush1.bf16.msra.mxu0 0
  %1137 = vmatprep.mubr.bf16.mxu0 0
  %1138 = vmatmul.mubr.bf16.gmra.mrb[0].mxu0 %v112
  %v1139 = vpop.f32.mrb[0].mxu0
  %v1140 = vadd.f32 %v1091, %v1139
  %v1141 = vpop.f32.mrb[0].mxu0
  %v1142 = vpop.f32.mrb[0].mxu0
  %v1143 = vadd.f32 %v1091, %v1142
  %v1144 = vpop.f32.mrb[0].mxu0
  %1145 = vdwg.mxu0
  %s1146 = scalar_lea.vmem %s3, 32
  %v1147 = vld [vmem:[%s1146] sm:$0xf]
  %v1148 = vld [vmem:[%s1146 + $0x4] sm:$0xf]
  %v1149 = vld [vmem:[%s1146 + $0x8] sm:$0xf]
  %v1150 = vld [vmem:[%s1146 + $0xc] sm:$0xf]
  %s1151 = scalar_lea.vmem %s6, 2
  %v1152 = vld [vmem:[%s1151] sm:$0x1]
  %v1154 = vlaneseq
  %v1155 = vshrl.u32 %v1154, 7
  %v1156 = vsub.s32 0, %v1155
  %v1157 = vrot.slane %v1152, %v1156
  %v1163 = vunpack.c.l.b16 %v1147
  %v1164 = vunpack.c.l.b16 %v1148
  %v1165 = vunpack.c.l.b16 %v1149
  %v1166 = vunpack.c.l.b16 %v1150
  %v1167 = vpack.c.b16 %v1164, %v1163
  %v1168 = vpack.c.b16 %v1166, %v1165
  %1171 = vmatprep.subr.bf16.mxu0 0
  %1172 = vmatpush1.bf16.msra.mxu0 %v1167
  %1173 = vmatprep.subr.bf16.mxu0 0
  %1174 = vmatpush1.bf16.msra.mxu0 %v1168
  %1175 = vmatprep.subr.bf16.mxu0 0
  %1176 = vmatpush1.bf16.msra.mxu0 0
  %1177 = vmatprep.subr.bf16.mxu0 0
  %1178 = vmatpush1.bf16.msra.mxu0 0
  %1179 = vmatprep.subr.bf16.mxu0 0
  %1180 = vmatpush1.bf16.msra.mxu0 0
  %1181 = vmatprep.subr.bf16.mxu0 0
  %1182 = vmatpush1.bf16.msra.mxu0 0
  %1183 = vmatprep.subr.bf16.mxu0 0
  %1184 = vmatpush1.bf16.msra.mxu0 0
  %1185 = vmatprep.subr.bf16.mxu0 0
  %1186 = vmatpush1.bf16.msra.mxu0 0
  %1187 = vmatprep.subr.bf16.mxu0 0
  %1188 = vmatpush1.bf16.msra.mxu0 0
  %1189 = vmatprep.subr.bf16.mxu0 0
  %1190 = vmatpush1.bf16.msra.mxu0 0
  %1191 = vmatprep.subr.bf16.mxu0 0
  %1192 = vmatpush1.bf16.msra.mxu0 0
  %1193 = vmatprep.subr.bf16.mxu0 0
  %1194 = vmatpush1.bf16.msra.mxu0 0
  %1195 = vmatprep.subr.bf16.mxu0 0
  %1196 = vmatpush1.bf16.msra.mxu0 0
  %1197 = vmatprep.subr.bf16.mxu0 0
  %1198 = vmatpush1.bf16.msra.mxu0 0
  %1199 = vmatprep.subr.bf16.mxu0 0
  %1200 = vmatpush1.bf16.msra.mxu0 0
  %1201 = vmatprep.subr.bf16.mxu0 0
  %1202 = vmatpush1.bf16.msra.mxu0 0
  %1203 = vmatprep.mubr.bf16.mxu0 0
  %1204 = vmatmul.mubr.bf16.gmra.mrb[0].mxu0 %v112
  %v1205 = vpop.f32.mrb[0].mxu0
  %v1206 = vadd.f32 %v1157, %v1205
  %v1207 = vpop.f32.mrb[0].mxu0
  %v1208 = vpop.f32.mrb[0].mxu0
  %v1209 = vadd.f32 %v1157, %v1208
  %v1210 = vpop.f32.mrb[0].mxu0
  %1211 = vdwg.mxu0
  %v1212 = vpack.c.bf16 %v1074, %v1074
  %v1213 = vpack.c.bf16 %v1077, %v1077
  %v1214 = vpack.c.bf16 %v1140, %v1140
  %v1215 = vpack.c.bf16 %v1143, %v1143
  %v1216 = vpack.c.bf16 %v1206, %v1206
  %v1217 = vpack.c.bf16 %v1209, %v1209
  %v1219 = vsel %vm289, %v1212, 0
  %v1222 = vsel %vm289, %v1214, 0
  %1224 = vmatprep.subr.bf16.mxu0 0
  %1225 = vmatpush1.bf16.xpose.msra.mxu0 %v1222
  %1226 = vmatprep.subr.bf16.mxu0 0
  %1227 = vmatpush1.bf16.xpose.msra.mxu0 0
  %1228 = vmatprep.subr.bf16.mxu0 0
  %1229 = vmatpush1.bf16.xpose.msra.mxu0 0
  %1230 = vmatprep.subr.bf16.mxu0 0
  %1231 = vmatpush1.bf16.xpose.msra.mxu0 0
  %1232 = vmatprep.subr.bf16.mxu0 0
  %1233 = vmatpush1.bf16.xpose.msra.mxu0 0
  %1234 = vmatprep.subr.bf16.mxu0 0
  %1235 = vmatpush1.bf16.xpose.msra.mxu0 0
  %1236 = vmatprep.subr.bf16.mxu0 0
  %1237 = vmatpush1.bf16.xpose.msra.mxu0 0
  %1238 = vmatprep.subr.bf16.mxu0 0
  %1239 = vmatpush1.bf16.xpose.msra.mxu0 0
  %1240 = vmatprep.subr.bf16.mxu0 0
  %1241 = vmatpush1.bf16.xpose.msra.mxu0 0
  %1242 = vmatprep.subr.bf16.mxu0 0
  %1243 = vmatpush1.bf16.xpose.msra.mxu0 0
  %1244 = vmatprep.subr.bf16.mxu0 0
  %1245 = vmatpush1.bf16.xpose.msra.mxu0 0
  %1246 = vmatprep.subr.bf16.mxu0 0
  %1247 = vmatpush1.bf16.xpose.msra.mxu0 0
  %1248 = vmatprep.subr.bf16.mxu0 0
  %1249 = vmatpush1.bf16.xpose.msra.mxu0 0
  %1250 = vmatprep.subr.bf16.mxu0 0
  %1251 = vmatpush1.bf16.xpose.msra.mxu0 0
  %1252 = vmatprep.subr.bf16.mxu0 0
  %1253 = vmatpush1.bf16.xpose.msra.mxu0 0
  %1254 = vmatprep.subr.bf16.mxu0 0
  %1255 = vmatpush1.bf16.xpose.msra.mxu0 0
  %1256 = vmatprep.mubr.bf16.mxu0 0
  %1257 = vmatmul.mubr.bf16.gmra.mrb[0].mxu0 %v1219
  %v1258 = vpop.f32.mrb[0].mxu0
  %v1259 = vadd.f32 0.0, %v1258
  %v1260 = vpop.f32.mrb[0].mxu0
  %v1261 = vpop.f32.mrb[0].mxu0
  %v1262 = vpop.f32.mrb[0].mxu0
  %1263 = vdwg.mxu0
  %v1265 = vsel %vm289, %v1213, 0
  %v1268 = vsel %vm289, %v1215, 0
  %1270 = vmatprep.subr.bf16.mxu0 0
  %1271 = vmatpush1.bf16.xpose.msra.mxu0 %v1268
  %1272 = vmatprep.subr.bf16.mxu0 0
  %1273 = vmatpush1.bf16.xpose.msra.mxu0 0
  %1274 = vmatprep.subr.bf16.mxu0 0
  %1275 = vmatpush1.bf16.xpose.msra.mxu0 0
  %1276 = vmatprep.subr.bf16.mxu0 0
  %1277 = vmatpush1.bf16.xpose.msra.mxu0 0
  %1278 = vmatprep.subr.bf16.mxu0 0
  %1279 = vmatpush1.bf16.xpose.msra.mxu0 0
  %1280 = vmatprep.subr.bf16.mxu0 0
  %1281 = vmatpush1.bf16.xpose.msra.mxu0 0
  %1282 = vmatprep.subr.bf16.mxu0 0
  %1283 = vmatpush1.bf16.xpose.msra.mxu0 0
  %1284 = vmatprep.subr.bf16.mxu0 0
  %1285 = vmatpush1.bf16.xpose.msra.mxu0 0
  %1286 = vmatprep.subr.bf16.mxu0 0
  %1287 = vmatpush1.bf16.xpose.msra.mxu0 0
  %1288 = vmatprep.subr.bf16.mxu0 0
  %1289 = vmatpush1.bf16.xpose.msra.mxu0 0
  %1290 = vmatprep.subr.bf16.mxu0 0
  %1291 = vmatpush1.bf16.xpose.msra.mxu0 0
  %1292 = vmatprep.subr.bf16.mxu0 0
  %1293 = vmatpush1.bf16.xpose.msra.mxu0 0
  %1294 = vmatprep.subr.bf16.mxu0 0
  %1295 = vmatpush1.bf16.xpose.msra.mxu0 0
  %1296 = vmatprep.subr.bf16.mxu0 0
  %1297 = vmatpush1.bf16.xpose.msra.mxu0 0
  %1298 = vmatprep.subr.bf16.mxu0 0
  %1299 = vmatpush1.bf16.xpose.msra.mxu0 0
  %1300 = vmatprep.subr.bf16.mxu0 0
  %1301 = vmatpush1.bf16.xpose.msra.mxu0 0
  %1302 = vmatprep.mubr.bf16.mxu0 0
  %1303 = vmatmul.mubr.bf16.gmra.mrb[0].mxu0 %v1265
  %v1304 = vpop.f32.mrb[0].mxu0
  %v1305 = vadd.f32 0.0, %v1304
  %v1306 = vpop.f32.mrb[0].mxu0
  %v1307 = vpop.f32.mrb[0].mxu0
  %v1308 = vpop.f32.mrb[0].mxu0
  %1309 = vdwg.mxu0
  %v1310 = vmul.f32 %v1259, 0.35355338
  %v1311 = vmul.f32 %v1305, 0.35355338
  %v1312 = vsel %vm289, %v1310, -inf
  %1313 = vmax.xlane.f32.xlu0 %v1312
  %v1314 = vpop.xlane.xlu0 %1313
  %v1315 = vsel %vm289, %v1311, -inf
  %1316 = vmax.xlane.f32.xlu0 %v1315
  %v1317 = vpop.xlane.xlu0 %1316
  %v1318 = vsub.f32 %v1310, %v1314
  %v1319 = vsub.f32 %v1311, %v1317
  %v1320 = vmul.f32 %v1318, 1.442695
  %v1321 = vpow.pop %v1320
  %v1322 = vmul.f32 %v1319, 1.442695
  %v1323 = vpow.pop %v1322
  %v1324 = vsel %vm289, %v1321, 0.0
  %1325 = vadd.xlane.f32.xlu0 %v1324
  %v1326 = vpop.xlane.xlu0 %1325
  %v1327 = vsel %vm289, %v1323, 0.0
  %1328 = vadd.xlane.f32.xlu0 %v1327
  %v1329 = vpop.xlane.xlu0 %1328
  %v1330 = vrcp.pop %v1326
  %v1331 = vrcp.pop %v1329
  %v1332 = vmul.f32 %v1321, %v1330
  %v1333 = vmul.f32 %v1323, %v1331
  %v1334 = vpack.c.bf16 %v1332, %v1332
  %v1335 = vpack.c.bf16 %v1333, %v1333
  %v1337 = vsel %vm289, %v1334, 0
  %v1340 = vsel %vm411, %v1216, 0
  %1342 = vmatprep.subr.bf16.mxu0 0
  %1343 = vmatpush1.bf16.msra.mxu0 %v1340
  %1344 = vmatprep.subr.bf16.mxu0 0
  %1345 = vmatpush1.bf16.msra.mxu0 0
  %1346 = vmatprep.subr.bf16.mxu0 0
  %1347 = vmatpush1.bf16.msra.mxu0 0
  %1348 = vmatprep.subr.bf16.mxu0 0
  %1349 = vmatpush1.bf16.msra.mxu0 0
  %1350 = vmatprep.subr.bf16.mxu0 0
  %1351 = vmatpush1.bf16.msra.mxu0 0
  %1352 = vmatprep.subr.bf16.mxu0 0
  %1353 = vmatpush1.bf16.msra.mxu0 0
  %1354 = vmatprep.subr.bf16.mxu0 0
  %1355 = vmatpush1.bf16.msra.mxu0 0
  %1356 = vmatprep.subr.bf16.mxu0 0
  %1357 = vmatpush1.bf16.msra.mxu0 0
  %1358 = vmatprep.subr.bf16.mxu0 0
  %1359 = vmatpush1.bf16.msra.mxu0 0
  %1360 = vmatprep.subr.bf16.mxu0 0
  %1361 = vmatpush1.bf16.msra.mxu0 0
  %1362 = vmatprep.subr.bf16.mxu0 0
  %1363 = vmatpush1.bf16.msra.mxu0 0
  %1364 = vmatprep.subr.bf16.mxu0 0
  %1365 = vmatpush1.bf16.msra.mxu0 0
  %1366 = vmatprep.subr.bf16.mxu0 0
  %1367 = vmatpush1.bf16.msra.mxu0 0
  %1368 = vmatprep.subr.bf16.mxu0 0
  %1369 = vmatpush1.bf16.msra.mxu0 0
  %1370 = vmatprep.subr.bf16.mxu0 0
  %1371 = vmatpush1.bf16.msra.mxu0 0
  %1372 = vmatprep.subr.bf16.mxu0 0
  %1373 = vmatpush1.bf16.msra.mxu0 0
  %1374 = vmatprep.mubr.bf16.mxu0 0
  %1375 = vmatmul.mubr.bf16.gmra.mrb[0].mxu0 %v1337
  %v1376 = vpop.f32.mrb[0].mxu0
  %v1377 = vadd.f32 0.0, %v1376
  %v1378 = vpop.f32.mrb[0].mxu0
  %v1379 = vpop.f32.mrb[0].mxu0
  %v1380 = vpop.f32.mrb[0].mxu0
  %1381 = vdwg.mxu0
  %v1383 = vsel %vm289, %v1335, 0
  %v1386 = vsel %vm411, %v1217, 0
  %1388 = vmatprep.subr.bf16.mxu0 0
  %1389 = vmatpush1.bf16.msra.mxu0 %v1386
  %1390 = vmatprep.subr.bf16.mxu0 0
  %1391 = vmatpush1.bf16.msra.mxu0 0
  %1392 = vmatprep.subr.bf16.mxu0 0
  %1393 = vmatpush1.bf16.msra.mxu0 0
  %1394 = vmatprep.subr.bf16.mxu0 0
  %1395 = vmatpush1.bf16.msra.mxu0 0
  %1396 = vmatprep.subr.bf16.mxu0 0
  %1397 = vmatpush1.bf16.msra.mxu0 0
  %1398 = vmatprep.subr.bf16.mxu0 0
  %1399 = vmatpush1.bf16.msra.mxu0 0
  %1400 = vmatprep.subr.bf16.mxu0 0
  %1401 = vmatpush1.bf16.msra.mxu0 0
  %1402 = vmatprep.subr.bf16.mxu0 0
  %1403 = vmatpush1.bf16.msra.mxu0 0
  %1404 = vmatprep.subr.bf16.mxu0 0
  %1405 = vmatpush1.bf16.msra.mxu0 0
  %1406 = vmatprep.subr.bf16.mxu0 0
  %1407 = vmatpush1.bf16.msra.mxu0 0
  %1408 = vmatprep.subr.bf16.mxu0 0
  %1409 = vmatpush1.bf16.msra.mxu0 0
  %1410 = vmatprep.subr.bf16.mxu0 0
  %1411 = vmatpush1.bf16.msra.mxu0 0
  %1412 = vmatprep.subr.bf16.mxu0 0
  %1413 = vmatpush1.bf16.msra.mxu0 0
  %1414 = vmatprep.subr.bf16.mxu0 0
  %1415 = vmatpush1.bf16.msra.mxu0 0
  %1416 = vmatprep.subr.bf16.mxu0 0
  %1417 = vmatpush1.bf16.msra.mxu0 0
  %1418 = vmatprep.subr.bf16.mxu0 0
  %1419 = vmatpush1.bf16.msra.mxu0 0
  %1420 = vmatprep.mubr.bf16.mxu0 0
  %1421 = vmatmul.mubr.bf16.gmra.mrb[0].mxu0 %v1383
  %v1422 = vpop.f32.mrb[0].mxu0
  %v1423 = vadd.f32 0.0, %v1422
  %v1424 = vpop.f32.mrb[0].mxu0
  %v1425 = vpop.f32.mrb[0].mxu0
  %v1426 = vpop.f32.mrb[0].mxu0
  %1427 = vdwg.mxu0
  %s1428 = scalar_lea.vmem %s7, 8
  %v1429 = vld [vmem:[%s1428] sm:$0xf]
  %v1430 = vpack.c.bf16 %v1423, %v1377
  %v1432 = vsel %vm289, %v1430, 0
  %v1435 = vsel %vm411, %v1429, 0
  %1437 = vmatprep.subr.bf16.mxu0 0
  %1438 = vmatpush1.bf16.msra.mxu0 %v1435
  %1439 = vmatprep.subr.bf16.mxu0 0
  %1440 = vmatpush1.bf16.msra.mxu0 0
  %1441 = vmatprep.subr.bf16.mxu0 0
  %1442 = vmatpush1.bf16.msra.mxu0 0
  %1443 = vmatprep.subr.bf16.mxu0 0
  %1444 = vmatpush1.bf16.msra.mxu0 0
  %1445 = vmatprep.subr.bf16.mxu0 0
  %1446 = vmatpush1.bf16.msra.mxu0 0
  %1447 = vmatprep.subr.bf16.mxu0 0
  %1448 = vmatpush1.bf16.msra.mxu0 0
  %1449 = vmatprep.subr.bf16.mxu0 0
  %1450 = vmatpush1.bf16.msra.mxu0 0
  %1451 = vmatprep.subr.bf16.mxu0 0
  %1452 = vmatpush1.bf16.msra.mxu0 0
  %1453 = vmatprep.subr.bf16.mxu0 0
  %1454 = vmatpush1.bf16.msra.mxu0 0
  %1455 = vmatprep.subr.bf16.mxu0 0
  %1456 = vmatpush1.bf16.msra.mxu0 0
  %1457 = vmatprep.subr.bf16.mxu0 0
  %1458 = vmatpush1.bf16.msra.mxu0 0
  %1459 = vmatprep.subr.bf16.mxu0 0
  %1460 = vmatpush1.bf16.msra.mxu0 0
  %1461 = vmatprep.subr.bf16.mxu0 0
  %1462 = vmatpush1.bf16.msra.mxu0 0
  %1463 = vmatprep.subr.bf16.mxu0 0
  %1464 = vmatpush1.bf16.msra.mxu0 0
  %1465 = vmatprep.subr.bf16.mxu0 0
  %1466 = vmatpush1.bf16.msra.mxu0 0
  %1467 = vmatprep.subr.bf16.mxu0 0
  %1468 = vmatpush1.bf16.msra.mxu0 0
  %1469 = vmatprep.mubr.bf16.mxu0 0
  %1470 = vmatmul.mubr.bf16.gmra.mrb[0].mxu0 %v1432
  %v1471 = vpop.f32.mrb[0].mxu0
  %v1472 = vadd.f32 0.0, %v1471
  %v1473 = vpop.f32.mrb[0].mxu0
  %v1474 = vpop.f32.mrb[0].mxu0
  %v1475 = vadd.f32 0.0, %v1474
  %v1476 = vpop.f32.mrb[0].mxu0
  %1477 = vdwg.mxu0
  %v1478 = vadd.f32 %v1008, %v1472
  %v1479 = vadd.f32 %v1011, %v1475
  %s1480 = scalar_lea.vmem %s1, 48
  %v1481 = vld [vmem:[%s1480] sm:$0xf]
  %v1482 = vld [vmem:[%s1480 + $0x4] sm:$0xf]
  %v1483 = vld [vmem:[%s1480 + $0x8] sm:$0xf]
  %v1484 = vld [vmem:[%s1480 + $0xc] sm:$0xf]
  %s1485 = scalar_lea.vmem %s4, 3
  %v1486 = vld [vmem:[%s1485] sm:$0x1]
  %v1488 = vlaneseq
  %v1489 = vshrl.u32 %v1488, 7
  %v1490 = vsub.s32 0, %v1489
  %v1491 = vrot.slane %v1486, %v1490
  %v1497 = vunpack.c.l.b16 %v1481
  %v1498 = vunpack.c.l.b16 %v1482
  %v1499 = vunpack.c.l.b16 %v1483
  %v1500 = vunpack.c.l.b16 %v1484
  %v1501 = vpack.c.b16 %v1498, %v1497
  %v1502 = vpack.c.b16 %v1500, %v1499
  %1505 = vmatprep.subr.bf16.mxu0 0
  %1506 = vmatpush1.bf16.msra.mxu0 %v1501
  %1507 = vmatprep.subr.bf16.mxu0 0
  %1508 = vmatpush1.bf16.msra.mxu0 %v1502
  %1509 = vmatprep.subr.bf16.mxu0 0
  %1510 = vmatpush1.bf16.msra.mxu0 0
  %1511 = vmatprep.subr.bf16.mxu0 0
  %1512 = vmatpush1.bf16.msra.mxu0 0
  %1513 = vmatprep.subr.bf16.mxu0 0
  %1514 = vmatpush1.bf16.msra.mxu0 0
  %1515 = vmatprep.subr.bf16.mxu0 0
  %1516 = vmatpush1.bf16.msra.mxu0 0
  %1517 = vmatprep.subr.bf16.mxu0 0
  %1518 = vmatpush1.bf16.msra.mxu0 0
  %1519 = vmatprep.subr.bf16.mxu0 0
  %1520 = vmatpush1.bf16.msra.mxu0 0
  %1521 = vmatprep.subr.bf16.mxu0 0
  %1522 = vmatpush1.bf16.msra.mxu0 0
  %1523 = vmatprep.subr.bf16.mxu0 0
  %1524 = vmatpush1.bf16.msra.mxu0 0
  %1525 = vmatprep.subr.bf16.mxu0 0
  %1526 = vmatpush1.bf16.msra.mxu0 0
  %1527 = vmatprep.subr.bf16.mxu0 0
  %1528 = vmatpush1.bf16.msra.mxu0 0
  %1529 = vmatprep.subr.bf16.mxu0 0
  %1530 = vmatpush1.bf16.msra.mxu0 0
  %1531 = vmatprep.subr.bf16.mxu0 0
  %1532 = vmatpush1.bf16.msra.mxu0 0
  %1533 = vmatprep.subr.bf16.mxu0 0
  %1534 = vmatpush1.bf16.msra.mxu0 0
  %1535 = vmatprep.subr.bf16.mxu0 0
  %1536 = vmatpush1.bf16.msra.mxu0 0
  %1537 = vmatprep.mubr.bf16.mxu0 0
  %1538 = vmatmul.mubr.bf16.gmra.mrb[0].mxu0 %v112
  %v1539 = vpop.f32.mrb[0].mxu0
  %v1540 = vadd.f32 %v1491, %v1539
  %v1541 = vpop.f32.mrb[0].mxu0
  %v1542 = vpop.f32.mrb[0].mxu0
  %v1543 = vadd.f32 %v1491, %v1542
  %v1544 = vpop.f32.mrb[0].mxu0
  %1545 = vdwg.mxu0
  %s1546 = scalar_lea.vmem %s2, 48
  %v1547 = vld [vmem:[%s1546] sm:$0xf]
  %v1548 = vld [vmem:[%s1546 + $0x4] sm:$0xf]
  %v1549 = vld [vmem:[%s1546 + $0x8] sm:$0xf]
  %v1550 = vld [vmem:[%s1546 + $0xc] sm:$0xf]
  %s1551 = scalar_lea.vmem %s5, 3
  %v1552 = vld [vmem:[%s1551] sm:$0x1]
  %v1554 = vlaneseq
  %v1555 = vshrl.u32 %v1554, 7
  %v1556 = vsub.s32 0, %v1555
  %v1557 = vrot.slane %v1552, %v1556
  %v1563 = vunpack.c.l.b16 %v1547
  %v1564 = vunpack.c.l.b16 %v1548
  %v1565 = vunpack.c.l.b16 %v1549
  %v1566 = vunpack.c.l.b16 %v1550
  %v1567 = vpack.c.b16 %v1564, %v1563
  %v1568 = vpack.c.b16 %v1566, %v1565
  %1571 = vmatprep.subr.bf16.mxu0 0
  %1572 = vmatpush1.bf16.msra.mxu0 %v1567
  %1573 = vmatprep.subr.bf16.mxu0 0
  %1574 = vmatpush1.bf16.msra.mxu0 %v1568
  %1575 = vmatprep.subr.bf16.mxu0 0
  %1576 = vmatpush1.bf16.msra.mxu0 0
  %1577 = vmatprep.subr.bf16.mxu0 0
  %1578 = vmatpush1.bf16.msra.mxu0 0
  %1579 = vmatprep.subr.bf16.mxu0 0
  %1580 = vmatpush1.bf16.msra.mxu0 0
  %1581 = vmatprep.subr.bf16.mxu0 0
  %1582 = vmatpush1.bf16.msra.mxu0 0
  %1583 = vmatprep.subr.bf16.mxu0 0
  %1584 = vmatpush1.bf16.msra.mxu0 0
  %1585 = vmatprep.subr.bf16.mxu0 0
  %1586 = vmatpush1.bf16.msra.mxu0 0
  %1587 = vmatprep.subr.bf16.mxu0 0
  %1588 = vmatpush1.bf16.msra.mxu0 0
  %1589 = vmatprep.subr.bf16.mxu0 0
  %1590 = vmatpush1.bf16.msra.mxu0 0
  %1591 = vmatprep.subr.bf16.mxu0 0
  %1592 = vmatpush1.bf16.msra.mxu0 0
  %1593 = vmatprep.subr.bf16.mxu0 0
  %1594 = vmatpush1.bf16.msra.mxu0 0
  %1595 = vmatprep.subr.bf16.mxu0 0
  %1596 = vmatpush1.bf16.msra.mxu0 0
  %1597 = vmatprep.subr.bf16.mxu0 0
  %1598 = vmatpush1.bf16.msra.mxu0 0
  %1599 = vmatprep.subr.bf16.mxu0 0
  %1600 = vmatpush1.bf16.msra.mxu0 0
  %1601 = vmatprep.subr.bf16.mxu0 0
  %1602 = vmatpush1.bf16.msra.mxu0 0
  %1603 = vmatprep.mubr.bf16.mxu0 0
  %1604 = vmatmul.mubr.bf16.gmra.mrb[0].mxu0 %v112
  %v1605 = vpop.f32.mrb[0].mxu0
  %v1606 = vadd.f32 %v1557, %v1605
  %v1607 = vpop.f32.mrb[0].mxu0
  %v1608 = vpop.f32.mrb[0].mxu0
  %v1609 = vadd.f32 %v1557, %v1608
  %v1610 = vpop.f32.mrb[0].mxu0
  %1611 = vdwg.mxu0
  %s1612 = scalar_lea.vmem %s3, 48
  %v1613 = vld [vmem:[%s1612] sm:$0xf]
  %v1614 = vld [vmem:[%s1612 + $0x4] sm:$0xf]
  %v1615 = vld [vmem:[%s1612 + $0x8] sm:$0xf]
  %v1616 = vld [vmem:[%s1612 + $0xc] sm:$0xf]
  %s1617 = scalar_lea.vmem %s6, 3
  %v1618 = vld [vmem:[%s1617] sm:$0x1]
  %v1620 = vlaneseq
  %v1621 = vshrl.u32 %v1620, 7
  %v1622 = vsub.s32 0, %v1621
  %v1623 = vrot.slane %v1618, %v1622
  %v1629 = vunpack.c.l.b16 %v1613
  %v1630 = vunpack.c.l.b16 %v1614
  %v1631 = vunpack.c.l.b16 %v1615
  %v1632 = vunpack.c.l.b16 %v1616
  %v1633 = vpack.c.b16 %v1630, %v1629
  %v1634 = vpack.c.b16 %v1632, %v1631
  %1637 = vmatprep.subr.bf16.mxu0 0
  %1638 = vmatpush1.bf16.msra.mxu0 %v1633
  %1639 = vmatprep.subr.bf16.mxu0 0
  %1640 = vmatpush1.bf16.msra.mxu0 %v1634
  %1641 = vmatprep.subr.bf16.mxu0 0
  %1642 = vmatpush1.bf16.msra.mxu0 0
  %1643 = vmatprep.subr.bf16.mxu0 0
  %1644 = vmatpush1.bf16.msra.mxu0 0
  %1645 = vmatprep.subr.bf16.mxu0 0
  %1646 = vmatpush1.bf16.msra.mxu0 0
  %1647 = vmatprep.subr.bf16.mxu0 0
  %1648 = vmatpush1.bf16.msra.mxu0 0
  %1649 = vmatprep.subr.bf16.mxu0 0
  %1650 = vmatpush1.bf16.msra.mxu0 0
  %1651 = vmatprep.subr.bf16.mxu0 0
  %1652 = vmatpush1.bf16.msra.mxu0 0
  %1653 = vmatprep.subr.bf16.mxu0 0
  %1654 = vmatpush1.bf16.msra.mxu0 0
  %1655 = vmatprep.subr.bf16.mxu0 0
  %1656 = vmatpush1.bf16.msra.mxu0 0
  %1657 = vmatprep.subr.bf16.mxu0 0
  %1658 = vmatpush1.bf16.msra.mxu0 0
  %1659 = vmatprep.subr.bf16.mxu0 0
  %1660 = vmatpush1.bf16.msra.mxu0 0
  %1661 = vmatprep.subr.bf16.mxu0 0
  %1662 = vmatpush1.bf16.msra.mxu0 0
  %1663 = vmatprep.subr.bf16.mxu0 0
  %1664 = vmatpush1.bf16.msra.mxu0 0
  %1665 = vmatprep.subr.bf16.mxu0 0
  %1666 = vmatpush1.bf16.msra.mxu0 0
  %1667 = vmatprep.subr.bf16.mxu0 0
  %1668 = vmatpush1.bf16.msra.mxu0 0
  %1669 = vmatprep.mubr.bf16.mxu0 0
  %1670 = vmatmul.mubr.bf16.gmra.mrb[0].mxu0 %v112
  %v1671 = vpop.f32.mrb[0].mxu0
  %v1672 = vadd.f32 %v1623, %v1671
  %v1673 = vpop.f32.mrb[0].mxu0
  %v1674 = vpop.f32.mrb[0].mxu0
  %v1675 = vadd.f32 %v1623, %v1674
  %v1676 = vpop.f32.mrb[0].mxu0
  %1677 = vdwg.mxu0
  %v1678 = vpack.c.bf16 %v1540, %v1540
  %v1679 = vpack.c.bf16 %v1543, %v1543
  %v1680 = vpack.c.bf16 %v1606, %v1606
  %v1681 = vpack.c.bf16 %v1609, %v1609
  %v1682 = vpack.c.bf16 %v1672, %v1672
  %v1683 = vpack.c.bf16 %v1675, %v1675
  %v1685 = vsel %vm289, %v1678, 0
  %v1688 = vsel %vm289, %v1680, 0
  %1690 = vmatprep.subr.bf16.mxu0 0
  %1691 = vmatpush1.bf16.xpose.msra.mxu0 %v1688
  %1692 = vmatprep.subr.bf16.mxu0 0
  %1693 = vmatpush1.bf16.xpose.msra.mxu0 0
  %1694 = vmatprep.subr.bf16.mxu0 0
  %1695 = vmatpush1.bf16.xpose.msra.mxu0 0
  %1696 = vmatprep.subr.bf16.mxu0 0
  %1697 = vmatpush1.bf16.xpose.msra.mxu0 0
  %1698 = vmatprep.subr.bf16.mxu0 0
  %1699 = vmatpush1.bf16.xpose.msra.mxu0 0
  %1700 = vmatprep.subr.bf16.mxu0 0
  %1701 = vmatpush1.bf16.xpose.msra.mxu0 0
  %1702 = vmatprep.subr.bf16.mxu0 0
  %1703 = vmatpush1.bf16.xpose.msra.mxu0 0
  %1704 = vmatprep.subr.bf16.mxu0 0
  %1705 = vmatpush1.bf16.xpose.msra.mxu0 0
  %1706 = vmatprep.subr.bf16.mxu0 0
  %1707 = vmatpush1.bf16.xpose.msra.mxu0 0
  %1708 = vmatprep.subr.bf16.mxu0 0
  %1709 = vmatpush1.bf16.xpose.msra.mxu0 0
  %1710 = vmatprep.subr.bf16.mxu0 0
  %1711 = vmatpush1.bf16.xpose.msra.mxu0 0
  %1712 = vmatprep.subr.bf16.mxu0 0
  %1713 = vmatpush1.bf16.xpose.msra.mxu0 0
  %1714 = vmatprep.subr.bf16.mxu0 0
  %1715 = vmatpush1.bf16.xpose.msra.mxu0 0
  %1716 = vmatprep.subr.bf16.mxu0 0
  %1717 = vmatpush1.bf16.xpose.msra.mxu0 0
  %1718 = vmatprep.subr.bf16.mxu0 0
  %1719 = vmatpush1.bf16.xpose.msra.mxu0 0
  %1720 = vmatprep.subr.bf16.mxu0 0
  %1721 = vmatpush1.bf16.xpose.msra.mxu0 0
  %1722 = vmatprep.mubr.bf16.mxu0 0
  %1723 = vmatmul.mubr.bf16.gmra.mrb[0].mxu0 %v1685
  %v1724 = vpop.f32.mrb[0].mxu0
  %v1725 = vadd.f32 0.0, %v1724
  %v1726 = vpop.f32.mrb[0].mxu0
  %v1727 = vpop.f32.mrb[0].mxu0
  %v1728 = vpop.f32.mrb[0].mxu0
  %1729 = vdwg.mxu0
  %v1731 = vsel %vm289, %v1679, 0
  %v1734 = vsel %vm289, %v1681, 0
  %1736 = vmatprep.subr.bf16.mxu0 0
  %1737 = vmatpush1.bf16.xpose.msra.mxu0 %v1734
  %1738 = vmatprep.subr.bf16.mxu0 0
  %1739 = vmatpush1.bf16.xpose.msra.mxu0 0
  %1740 = vmatprep.subr.bf16.mxu0 0
  %1741 = vmatpush1.bf16.xpose.msra.mxu0 0
  %1742 = vmatprep.subr.bf16.mxu0 0
  %1743 = vmatpush1.bf16.xpose.msra.mxu0 0
  %1744 = vmatprep.subr.bf16.mxu0 0
  %1745 = vmatpush1.bf16.xpose.msra.mxu0 0
  %1746 = vmatprep.subr.bf16.mxu0 0
  %1747 = vmatpush1.bf16.xpose.msra.mxu0 0
  %1748 = vmatprep.subr.bf16.mxu0 0
  %1749 = vmatpush1.bf16.xpose.msra.mxu0 0
  %1750 = vmatprep.subr.bf16.mxu0 0
  %1751 = vmatpush1.bf16.xpose.msra.mxu0 0
  %1752 = vmatprep.subr.bf16.mxu0 0
  %1753 = vmatpush1.bf16.xpose.msra.mxu0 0
  %1754 = vmatprep.subr.bf16.mxu0 0
  %1755 = vmatpush1.bf16.xpose.msra.mxu0 0
  %1756 = vmatprep.subr.bf16.mxu0 0
  %1757 = vmatpush1.bf16.xpose.msra.mxu0 0
  %1758 = vmatprep.subr.bf16.mxu0 0
  %1759 = vmatpush1.bf16.xpose.msra.mxu0 0
  %1760 = vmatprep.subr.bf16.mxu0 0
  %1761 = vmatpush1.bf16.xpose.msra.mxu0 0
  %1762 = vmatprep.subr.bf16.mxu0 0
  %1763 = vmatpush1.bf16.xpose.msra.mxu0 0
  %1764 = vmatprep.subr.bf16.mxu0 0
  %1765 = vmatpush1.bf16.xpose.msra.mxu0 0
  %1766 = vmatprep.subr.bf16.mxu0 0
  %1767 = vmatpush1.bf16.xpose.msra.mxu0 0
  %1768 = vmatprep.mubr.bf16.mxu0 0
  %1769 = vmatmul.mubr.bf16.gmra.mrb[0].mxu0 %v1731
  %v1770 = vpop.f32.mrb[0].mxu0
  %v1771 = vadd.f32 0.0, %v1770
  %v1772 = vpop.f32.mrb[0].mxu0
  %v1773 = vpop.f32.mrb[0].mxu0
  %v1774 = vpop.f32.mrb[0].mxu0
  %1775 = vdwg.mxu0
  %v1776 = vmul.f32 %v1725, 0.35355338
  %v1777 = vmul.f32 %v1771, 0.35355338
  %v1778 = vsel %vm289, %v1776, -inf
  %1779 = vmax.xlane.f32.xlu0 %v1778
  %v1780 = vpop.xlane.xlu0 %1779
  %v1781 = vsel %vm289, %v1777, -inf
  %1782 = vmax.xlane.f32.xlu0 %v1781
  %v1783 = vpop.xlane.xlu0 %1782
  %v1784 = vsub.f32 %v1776, %v1780
  %v1785 = vsub.f32 %v1777, %v1783
  %v1786 = vmul.f32 %v1784, 1.442695
  %v1787 = vpow.pop %v1786
  %v1788 = vmul.f32 %v1785, 1.442695
  %v1789 = vpow.pop %v1788
  %v1790 = vsel %vm289, %v1787, 0.0
  %1791 = vadd.xlane.f32.xlu0 %v1790
  %v1792 = vpop.xlane.xlu0 %1791
  %v1793 = vsel %vm289, %v1789, 0.0
  %1794 = vadd.xlane.f32.xlu0 %v1793
  %v1795 = vpop.xlane.xlu0 %1794
  %v1796 = vrcp.pop %v1792
  %v1797 = vrcp.pop %v1795
  %v1798 = vmul.f32 %v1787, %v1796
  %v1799 = vmul.f32 %v1789, %v1797
  %v1800 = vpack.c.bf16 %v1798, %v1798
  %v1801 = vpack.c.bf16 %v1799, %v1799
  %v1803 = vsel %vm289, %v1800, 0
  %v1806 = vsel %vm411, %v1682, 0
  %1808 = vmatprep.subr.bf16.mxu0 0
  %1809 = vmatpush1.bf16.msra.mxu0 %v1806
  %1810 = vmatprep.subr.bf16.mxu0 0
  %1811 = vmatpush1.bf16.msra.mxu0 0
  %1812 = vmatprep.subr.bf16.mxu0 0
  %1813 = vmatpush1.bf16.msra.mxu0 0
  %1814 = vmatprep.subr.bf16.mxu0 0
  %1815 = vmatpush1.bf16.msra.mxu0 0
  %1816 = vmatprep.subr.bf16.mxu0 0
  %1817 = vmatpush1.bf16.msra.mxu0 0
  %1818 = vmatprep.subr.bf16.mxu0 0
  %1819 = vmatpush1.bf16.msra.mxu0 0
  %1820 = vmatprep.subr.bf16.mxu0 0
  %1821 = vmatpush1.bf16.msra.mxu0 0
  %1822 = vmatprep.subr.bf16.mxu0 0
  %1823 = vmatpush1.bf16.msra.mxu0 0
  %1824 = vmatprep.subr.bf16.mxu0 0
  %1825 = vmatpush1.bf16.msra.mxu0 0
  %1826 = vmatprep.subr.bf16.mxu0 0
  %1827 = vmatpush1.bf16.msra.mxu0 0
  %1828 = vmatprep.subr.bf16.mxu0 0
  %1829 = vmatpush1.bf16.msra.mxu0 0
  %1830 = vmatprep.subr.bf16.mxu0 0
  %1831 = vmatpush1.bf16.msra.mxu0 0
  %1832 = vmatprep.subr.bf16.mxu0 0
  %1833 = vmatpush1.bf16.msra.mxu0 0
  %1834 = vmatprep.subr.bf16.mxu0 0
  %1835 = vmatpush1.bf16.msra.mxu0 0
  %1836 = vmatprep.subr.bf16.mxu0 0
  %1837 = vmatpush1.bf16.msra.mxu0 0
  %1838 = vmatprep.subr.bf16.mxu0 0
  %1839 = vmatpush1.bf16.msra.mxu0 0
  %1840 = vmatprep.mubr.bf16.mxu0 0
  %1841 = vmatmul.mubr.bf16.gmra.mrb[0].mxu0 %v1803
  %v1842 = vpop.f32.mrb[0].mxu0
  %v1843 = vadd.f32 0.0, %v1842
  %v1844 = vpop.f32.mrb[0].mxu0
  %v1845 = vpop.f32.mrb[0].mxu0
  %v1846 = vpop.f32.mrb[0].mxu0
  %1847 = vdwg.mxu0
  %v1849 = vsel %vm289, %v1801, 0
  %v1852 = vsel %vm411, %v1683, 0
  %1854 = vmatprep.subr.bf16.mxu0 0
  %1855 = vmatpush1.bf16.msra.mxu0 %v1852
  %1856 = vmatprep.subr.bf16.mxu0 0
  %1857 = vmatpush1.bf16.msra.mxu0 0
  %1858 = vmatprep.subr.bf16.mxu0 0
  %1859 = vmatpush1.bf16.msra.mxu0 0
  %1860 = vmatprep.subr.bf16.mxu0 0
  %1861 = vmatpush1.bf16.msra.mxu0 0
  %1862 = vmatprep.subr.bf16.mxu0 0
  %1863 = vmatpush1.bf16.msra.mxu0 0
  %1864 = vmatprep.subr.bf16.mxu0 0
  %1865 = vmatpush1.bf16.msra.mxu0 0
  %1866 = vmatprep.subr.bf16.mxu0 0
  %1867 = vmatpush1.bf16.msra.mxu0 0
  %1868 = vmatprep.subr.bf16.mxu0 0
  %1869 = vmatpush1.bf16.msra.mxu0 0
  %1870 = vmatprep.subr.bf16.mxu0 0
  %1871 = vmatpush1.bf16.msra.mxu0 0
  %1872 = vmatprep.subr.bf16.mxu0 0
  %1873 = vmatpush1.bf16.msra.mxu0 0
  %1874 = vmatprep.subr.bf16.mxu0 0
  %1875 = vmatpush1.bf16.msra.mxu0 0
  %1876 = vmatprep.subr.bf16.mxu0 0
  %1877 = vmatpush1.bf16.msra.mxu0 0
  %1878 = vmatprep.subr.bf16.mxu0 0
  %1879 = vmatpush1.bf16.msra.mxu0 0
  %1880 = vmatprep.subr.bf16.mxu0 0
  %1881 = vmatpush1.bf16.msra.mxu0 0
  %1882 = vmatprep.subr.bf16.mxu0 0
  %1883 = vmatpush1.bf16.msra.mxu0 0
  %1884 = vmatprep.subr.bf16.mxu0 0
  %1885 = vmatpush1.bf16.msra.mxu0 0
  %1886 = vmatprep.mubr.bf16.mxu0 0
  %1887 = vmatmul.mubr.bf16.gmra.mrb[0].mxu0 %v1849
  %v1888 = vpop.f32.mrb[0].mxu0
  %v1889 = vadd.f32 0.0, %v1888
  %v1890 = vpop.f32.mrb[0].mxu0
  %v1891 = vpop.f32.mrb[0].mxu0
  %v1892 = vpop.f32.mrb[0].mxu0
  %1893 = vdwg.mxu0
  %s1894 = scalar_lea.vmem %s7, 12
  %v1895 = vld [vmem:[%s1894] sm:$0xf]
  %v1896 = vpack.c.bf16 %v1889, %v1843
  %v1898 = vsel %vm289, %v1896, 0
  %v1901 = vsel %vm411, %v1895, 0
  %1903 = vmatprep.subr.bf16.mxu0 0
  %1904 = vmatpush1.bf16.msra.mxu0 %v1901
  %1905 = vmatprep.subr.bf16.mxu0 0
  %1906 = vmatpush1.bf16.msra.mxu0 0
  %1907 = vmatprep.subr.bf16.mxu0 0
  %1908 = vmatpush1.bf16.msra.mxu0 0
  %1909 = vmatprep.subr.bf16.mxu0 0
  %1910 = vmatpush1.bf16.msra.mxu0 0
  %1911 = vmatprep.subr.bf16.mxu0 0
  %1912 = vmatpush1.bf16.msra.mxu0 0
  %1913 = vmatprep.subr.bf16.mxu0 0
  %1914 = vmatpush1.bf16.msra.mxu0 0
  %1915 = vmatprep.subr.bf16.mxu0 0
  %1916 = vmatpush1.bf16.msra.mxu0 0
  %1917 = vmatprep.subr.bf16.mxu0 0
  %1918 = vmatpush1.bf16.msra.mxu0 0
  %1919 = vmatprep.subr.bf16.mxu0 0
  %1920 = vmatpush1.bf16.msra.mxu0 0
  %1921 = vmatprep.subr.bf16.mxu0 0
  %1922 = vmatpush1.bf16.msra.mxu0 0
  %1923 = vmatprep.subr.bf16.mxu0 0
  %1924 = vmatpush1.bf16.msra.mxu0 0
  %1925 = vmatprep.subr.bf16.mxu0 0
  %1926 = vmatpush1.bf16.msra.mxu0 0
  %1927 = vmatprep.subr.bf16.mxu0 0
  %1928 = vmatpush1.bf16.msra.mxu0 0
  %1929 = vmatprep.subr.bf16.mxu0 0
  %1930 = vmatpush1.bf16.msra.mxu0 0
  %1931 = vmatprep.subr.bf16.mxu0 0
  %1932 = vmatpush1.bf16.msra.mxu0 0
  %1933 = vmatprep.subr.bf16.mxu0 0
  %1934 = vmatpush1.bf16.msra.mxu0 0
  %1935 = vmatprep.mubr.bf16.mxu0 0
  %1936 = vmatmul.mubr.bf16.gmra.mrb[0].mxu0 %v1898
  %v1937 = vpop.f32.mrb[0].mxu0
  %v1938 = vadd.f32 0.0, %v1937
  %v1939 = vpop.f32.mrb[0].mxu0
  %v1940 = vpop.f32.mrb[0].mxu0
  %v1941 = vadd.f32 0.0, %v1940
  %v1942 = vpop.f32.mrb[0].mxu0
  %1943 = vdwg.mxu0
  %v1944 = vadd.f32 %v1478, %v1938
  %v1945 = vadd.f32 %v1479, %v1941
  %v1946 = vld [vmem:[%s8] sm:$0x1]
  %v1948 = vlaneseq
  %v1949 = vshrl.u32 %v1948, 7
  %v1950 = vsub.s32 0, %v1949
  %v1951 = vrot.slane %v1946, %v1950
  %v1953 = vadd.f32 %v1944, %v1951
  %v1954 = vadd.f32 %v1945, %v1951
  %v1955 = vadd.f32 %v84, %v1953
  %v1956 = vadd.f32 %v85, %v1954
  %v1957 = vld [vmem:[%s9] sm:$0x1]
  %v1958 = vld [vmem:[%s10] sm:$0x1]
  %v1959 = vsel %vm110, %v1955, 0.0
  %1960 = vadd.xlane.f32.xlu0 %v1959
  %v1961 = vpop.xlane.xlu0 %1960
  %v1962 = vsel %vm110, %v1956, 0.0
  %1963 = vadd.xlane.f32.xlu0 %v1962
  %v1964 = vpop.xlane.xlu0 %1963
  %v1965 = vrcp.pop 32.0
  %v1966 = vmul.f32 %v1961, %v1965
  %v1967 = vmul.f32 %v1964, %v1965
  %v1968 = vsub.f32 %v1955, %v1966
  %v1969 = vsub.f32 %v1956, %v1967
  %v1970 = vmul.f32 %v1968, %v1968
  %v1971 = vmul.f32 %v1969, %v1969
  %v1972 = vsel %vm110, %v1970, 0.0
  %1973 = vadd.xlane.f32.xlu0 %v1972
  %v1974 = vpop.xlane.xlu0 %1973
  %v1975 = vsel %vm110, %v1971, 0.0
  %1976 = vadd.xlane.f32.xlu0 %v1975
  %v1977 = vpop.xlane.xlu0 %1976
  %v1978 = vmul.f32 %v1974, %v1965
  %v1979 = vmul.f32 %v1977, %v1965
  %v1980 = vadd.f32 %v1978, 1e-05
  %v1981 = vadd.f32 %v1979, 1e-05
  %v1982 = vrsqrt.pop %v1980
  %v1983 = vrsqrt.pop %v1981
  %v1984 = vmul.f32 %v1968, %v1982
  %v1985 = vmul.f32 %v1969, %v1983
  %v1987 = vlaneseq
  %v1988 = vshrl.u32 %v1987, 7
  %v1989 = vsub.s32 0, %v1988
  %v1990 = vrot.slane %v1957, %v1989
  %v1992 = vmul.f32 %v1984, %v1990
  %v1993 = vmul.f32 %v1985, %v1990
  %v1995 = vlaneseq
  %v1996 = vshrl.u32 %v1995, 7
  %v1997 = vsub.s32 0, %v1996
  %v1998 = vrot.slane %v1958, %v1997
  %v2000 = vadd.f32 %v1992, %v1998
  %v2001 = vadd.f32 %v1993, %v1998
  %v2002 = vld [vmem:[%s11] sm:$0xf]
  %v2003 = vld [vmem:[%s11 + $0x4] sm:$0xf]
  %v2004 = vld [vmem:[%s11 + $0x8] sm:$0xf]
  %v2005 = vld [vmem:[%s11 + $0xc] sm:$0xf]
  %v2006 = vpack.c.bf16 %v2001, %v2000
  %v2007 = vld [vmem:[%s12] sm:$0x1]
  %v2009 = vlaneseq
  %v2010 = vshrl.u32 %v2009, 7
  %v2011 = vsub.s32 0, %v2010
  %v2012 = vrot.slane %v2007, %v2011
  %v2018 = vunpack.c.l.b16 %v2002
  %v2019 = vunpack.c.l.b16 %v2003
  %v2020 = vunpack.c.l.b16 %v2004
  %v2021 = vunpack.c.l.b16 %v2005
  %v2022 = vpack.c.b16 %v2019, %v2018
  %v2023 = vpack.c.b16 %v2021, %v2020
  %v2027 = vsel %vm110, %v2006, 0
  %2029 = vmatprep.subr.bf16.mxu0 0
  %2030 = vmatpush1.bf16.msra.mxu0 %v2022
  %2031 = vmatprep.subr.bf16.mxu0 0
  %2032 = vmatpush1.bf16.msra.mxu0 %v2023
  %2033 = vmatprep.subr.bf16.mxu0 0
  %2034 = vmatpush1.bf16.msra.mxu0 0
  %2035 = vmatprep.subr.bf16.mxu0 0
  %2036 = vmatpush1.bf16.msra.mxu0 0
  %2037 = vmatprep.subr.bf16.mxu0 0
  %2038 = vmatpush1.bf16.msra.mxu0 0
  %2039 = vmatprep.subr.bf16.mxu0 0
  %2040 = vmatpush1.bf16.msra.mxu0 0
  %2041 = vmatprep.subr.bf16.mxu0 0
  %2042 = vmatpush1.bf16.msra.mxu0 0
  %2043 = vmatprep.subr.bf16.mxu0 0
  %2044 = vmatpush1.bf16.msra.mxu0 0
  %2045 = vmatprep.subr.bf16.mxu0 0
  %2046 = vmatpush1.bf16.msra.mxu0 0
  %2047 = vmatprep.subr.bf16.mxu0 0
  %2048 = vmatpush1.bf16.msra.mxu0 0
  %2049 = vmatprep.subr.bf16.mxu0 0
  %2050 = vmatpush1.bf16.msra.mxu0 0
  %2051 = vmatprep.subr.bf16.mxu0 0
  %2052 = vmatpush1.bf16.msra.mxu0 0
  %2053 = vmatprep.subr.bf16.mxu0 0
  %2054 = vmatpush1.bf16.msra.mxu0 0
  %2055 = vmatprep.subr.bf16.mxu0 0
  %2056 = vmatpush1.bf16.msra.mxu0 0
  %2057 = vmatprep.subr.bf16.mxu0 0
  %2058 = vmatpush1.bf16.msra.mxu0 0
  %2059 = vmatprep.subr.bf16.mxu0 0
  %2060 = vmatpush1.bf16.msra.mxu0 0
  %2061 = vmatprep.mubr.bf16.mxu0 0
  %2062 = vmatmul.mubr.bf16.gmra.mrb[0].mxu0 %v2027
  %v2063 = vpop.f32.mrb[0].mxu0
  %v2064 = vadd.f32 %v2012, %v2063
  %v2065 = vpop.f32.mrb[0].mxu0
  %v2066 = vpop.f32.mrb[0].mxu0
  %v2067 = vadd.f32 %v2012, %v2066
  %v2068 = vpop.f32.mrb[0].mxu0
  %2069 = vdwg.mxu0
  %v2070 = vmax.f32 %v2064, 0.0
  %v2071 = vmax.f32 %v2067, 0.0
  %v2072 = vld [vmem:[%s13] sm:$0xf]
  %v2073 = vld [vmem:[%s13 + $0x4] sm:$0xf]
  %v2074 = vld [vmem:[%s13 + $0x8] sm:$0xf]
  %v2075 = vld [vmem:[%s13 + $0xc] sm:$0xf]
  %v2076 = vld [vmem:[%s13 + $0x10] sm:$0xf]
  %v2077 = vld [vmem:[%s13 + $0x14] sm:$0xf]
  %v2078 = vld [vmem:[%s13 + $0x18] sm:$0xf]
  %v2079 = vld [vmem:[%s13 + $0x1c] sm:$0xf]
  %v2080 = vpack.c.bf16 %v2071, %v2070
  %v2081 = vld [vmem:[%s14] sm:$0x1]
  %v2083 = vlaneseq
  %v2084 = vshrl.u32 %v2083, 7
  %v2085 = vsub.s32 0, %v2084
  %v2086 = vrot.slane %v2081, %v2085
  %v2096 = vunpack.c.l.b16 %v2072
  %v2097 = vunpack.c.l.b16 %v2073
  %v2098 = vunpack.c.l.b16 %v2074
  %v2099 = vunpack.c.l.b16 %v2075
  %v2100 = vunpack.c.l.b16 %v2076
  %v2101 = vunpack.c.l.b16 %v2077
  %v2102 = vunpack.c.l.b16 %v2078
  %v2103 = vunpack.c.l.b16 %v2079
  %v2104 = vpack.c.b16 %v2097, %v2096
  %v2105 = vpack.c.b16 %v2099, %v2098
  %v2106 = vpack.c.b16 %v2101, %v2100
  %v2107 = vpack.c.b16 %v2103, %v2102
  %vm2112 = vcmask 523264
  %v2114 = vsel %vm2112, %v2080, 0
  %2116 = vmatprep.subr.bf16.mxu0 0
  %2117 = vmatpush1.bf16.msra.mxu0 %v2104
  %2118 = vmatprep.subr.bf16.mxu0 0
  %2119 = vmatpush1.bf16.msra.mxu0 %v2105
  %2120 = vmatprep.subr.bf16.mxu0 0
  %2121 = vmatpush1.bf16.msra.mxu0 %v2106
  %2122 = vmatprep.subr.bf16.mxu0 0
  %2123 = vmatpush1.bf16.msra.mxu0 %v2107
  %2124 = vmatprep.subr.bf16.mxu0 0
  %2125 = vmatpush1.bf16.msra.mxu0 0
  %2126 = vmatprep.subr.bf16.mxu0 0
  %2127 = vmatpush1.bf16.msra.mxu0 0
  %2128 = vmatprep.subr.bf16.mxu0 0
  %2129 = vmatpush1.bf16.msra.mxu0 0
  %2130 = vmatprep.subr.bf16.mxu0 0
  %2131 = vmatpush1.bf16.msra.mxu0 0
  %2132 = vmatprep.subr.bf16.mxu0 0
  %2133 = vmatpush1.bf16.msra.mxu0 0
  %2134 = vmatprep.subr.bf16.mxu0 0
  %2135 = vmatpush1.bf16.msra.mxu0 0
  %2136 = vmatprep.subr.bf16.mxu0 0
  %2137 = vmatpush1.bf16.msra.mxu0 0
  %2138 = vmatprep.subr.bf16.mxu0 0
  %2139 = vmatpush1.bf16.msra.mxu0 0
  %2140 = vmatprep.subr.bf16.mxu0 0
  %2141 = vmatpush1.bf16.msra.mxu0 0
  %2142 = vmatprep.subr.bf16.mxu0 0
  %2143 = vmatpush1.bf16.msra.mxu0 0
  %2144 = vmatprep.subr.bf16.mxu0 0
  %2145 = vmatpush1.bf16.msra.mxu0 0
  %2146 = vmatprep.subr.bf16.mxu0 0
  %2147 = vmatpush1.bf16.msra.mxu0 0
  %2148 = vmatprep.mubr.bf16.mxu0 0
  %2149 = vmatmul.mubr.bf16.gmra.mrb[0].mxu0 %v2114
  %v2150 = vpop.f32.mrb[0].mxu0
  %v2151 = vadd.f32 %v2086, %v2150
  %v2152 = vpop.f32.mrb[0].mxu0
  %v2153 = vpop.f32.mrb[0].mxu0
  %v2154 = vadd.f32 %v2086, %v2153
  %v2155 = vpop.f32.mrb[0].mxu0
  %2156 = vdwg.mxu0
  %v2157 = vadd.f32 %v2000, %v2151
  %v2158 = vadd.f32 %v2001, %v2154
  %v2159 = vld [vmem:[%s15] sm:$0x1]
  %v2160 = vld [vmem:[%s16] sm:$0x1]
  %v2161 = vsel %vm110, %v2157, 0.0
  %2162 = vadd.xlane.f32.xlu0 %v2161
  %v2163 = vpop.xlane.xlu0 %2162
  %v2164 = vsel %vm110, %v2158, 0.0
  %2165 = vadd.xlane.f32.xlu0 %v2164
  %v2166 = vpop.xlane.xlu0 %2165
  %v2167 = vmul.f32 %v2163, %v1965
  %v2168 = vmul.f32 %v2166, %v1965
  %v2169 = vsub.f32 %v2157, %v2167
  %v2170 = vsub.f32 %v2158, %v2168
  %v2171 = vmul.f32 %v2169, %v2169
  %v2172 = vmul.f32 %v2170, %v2170
  %v2173 = vsel %vm110, %v2171, 0.0
  %2174 = vadd.xlane.f32.xlu0 %v2173
  %v2175 = vpop.xlane.xlu0 %2174
  %v2176 = vsel %vm110, %v2172, 0.0
  %2177 = vadd.xlane.f32.xlu0 %v2176
  %v2178 = vpop.xlane.xlu0 %2177
  %v2179 = vmul.f32 %v2175, %v1965
  %v2180 = vmul.f32 %v2178, %v1965
  %v2181 = vadd.f32 %v2179, 1e-05
  %v2182 = vadd.f32 %v2180, 1e-05
  %v2183 = vrsqrt.pop %v2181
  %v2184 = vrsqrt.pop %v2182
  %v2185 = vmul.f32 %v2169, %v2183
  %v2186 = vmul.f32 %v2170, %v2184
  %v2188 = vlaneseq
  %v2189 = vshrl.u32 %v2188, 7
  %v2190 = vsub.s32 0, %v2189
  %v2191 = vrot.slane %v2159, %v2190
  %v2193 = vmul.f32 %v2185, %v2191
  %v2194 = vmul.f32 %v2186, %v2191
  %v2196 = vlaneseq
  %v2197 = vshrl.u32 %v2196, 7
  %v2198 = vsub.s32 0, %v2197
  %v2199 = vrot.slane %v2160, %v2198
  %v2201 = vadd.f32 %v2193, %v2199
  %v2202 = vadd.f32 %v2194, %v2199
  %v2203 = vpack.c.bf16 %v2202, %v2201
  %s2204 = scalar_lea.vmem %s1, 64
  %v2205 = vld [vmem:[%s2204] sm:$0xf]
  %v2206 = vld [vmem:[%s2204 + $0x4] sm:$0xf]
  %v2207 = vld [vmem:[%s2204 + $0x8] sm:$0xf]
  %v2208 = vld [vmem:[%s2204 + $0xc] sm:$0xf]
  %s2209 = scalar_lea.vmem %s4, 4
  %v2210 = vld [vmem:[%s2209] sm:$0x1]
  %v2212 = vlaneseq
  %v2213 = vshrl.u32 %v2212, 7
  %v2214 = vsub.s32 0, %v2213
  %v2215 = vrot.slane %v2210, %v2214
  %v2221 = vunpack.c.l.b16 %v2205
  %v2222 = vunpack.c.l.b16 %v2206
  %v2223 = vunpack.c.l.b16 %v2207
  %v2224 = vunpack.c.l.b16 %v2208
  %v2225 = vpack.c.b16 %v2222, %v2221
  %v2226 = vpack.c.b16 %v2224, %v2223
  %v2230 = vsel %vm110, %v2203, 0
  %2232 = vmatprep.subr.bf16.mxu0 0
  %2233 = vmatpush1.bf16.msra.mxu0 %v2225
  %2234 = vmatprep.subr.bf16.mxu0 0
  %2235 = vmatpush1.bf16.msra.mxu0 %v2226
  %2236 = vmatprep.subr.bf16.mxu0 0
  %2237 = vmatpush1.bf16.msra.mxu0 0
  %2238 = vmatprep.subr.bf16.mxu0 0
  %2239 = vmatpush1.bf16.msra.mxu0 0
  %2240 = vmatprep.subr.bf16.mxu0 0
  %2241 = vmatpush1.bf16.msra.mxu0 0
  %2242 = vmatprep.subr.bf16.mxu0 0
  %2243 = vmatpush1.bf16.msra.mxu0 0
  %2244 = vmatprep.subr.bf16.mxu0 0
  %2245 = vmatpush1.bf16.msra.mxu0 0
  %2246 = vmatprep.subr.bf16.mxu0 0
  %2247 = vmatpush1.bf16.msra.mxu0 0
  %2248 = vmatprep.subr.bf16.mxu0 0
  %2249 = vmatpush1.bf16.msra.mxu0 0
  %2250 = vmatprep.subr.bf16.mxu0 0
  %2251 = vmatpush1.bf16.msra.mxu0 0
  %2252 = vmatprep.subr.bf16.mxu0 0
  %2253 = vmatpush1.bf16.msra.mxu0 0
  %2254 = vmatprep.subr.bf16.mxu0 0
  %2255 = vmatpush1.bf16.msra.mxu0 0
  %2256 = vmatprep.subr.bf16.mxu0 0
  %2257 = vmatpush1.bf16.msra.mxu0 0
  %2258 = vmatprep.subr.bf16.mxu0 0
  %2259 = vmatpush1.bf16.msra.mxu0 0
  %2260 = vmatprep.subr.bf16.mxu0 0
  %2261 = vmatpush1.bf16.msra.mxu0 0
  %2262 = vmatprep.subr.bf16.mxu0 0
  %2263 = vmatpush1.bf16.msra.mxu0 0
  %2264 = vmatprep.mubr.bf16.mxu0 0
  %2265 = vmatmul.mubr.bf16.gmra.mrb[0].mxu0 %v2230
  %v2266 = vpop.f32.mrb[0].mxu0
  %v2267 = vadd.f32 %v2215, %v2266
  %v2268 = vpop.f32.mrb[0].mxu0
  %v2269 = vpop.f32.mrb[0].mxu0
  %v2270 = vadd.f32 %v2215, %v2269
  %v2271 = vpop.f32.mrb[0].mxu0
  %2272 = vdwg.mxu0
  %s2273 = scalar_lea.vmem %s2, 64
  %v2274 = vld [vmem:[%s2273] sm:$0xf]
  %v2275 = vld [vmem:[%s2273 + $0x4] sm:$0xf]
  %v2276 = vld [vmem:[%s2273 + $0x8] sm:$0xf]
  %v2277 = vld [vmem:[%s2273 + $0xc] sm:$0xf]
  %s2278 = scalar_lea.vmem %s5, 4
  %v2279 = vld [vmem:[%s2278] sm:$0x1]
  %v2281 = vlaneseq
  %v2282 = vshrl.u32 %v2281, 7
  %v2283 = vsub.s32 0, %v2282
  %v2284 = vrot.slane %v2279, %v2283
  %v2290 = vunpack.c.l.b16 %v2274
  %v2291 = vunpack.c.l.b16 %v2275
  %v2292 = vunpack.c.l.b16 %v2276
  %v2293 = vunpack.c.l.b16 %v2277
  %v2294 = vpack.c.b16 %v2291, %v2290
  %v2295 = vpack.c.b16 %v2293, %v2292
  %2298 = vmatprep.subr.bf16.mxu0 0
  %2299 = vmatpush1.bf16.msra.mxu0 %v2294
  %2300 = vmatprep.subr.bf16.mxu0 0
  %2301 = vmatpush1.bf16.msra.mxu0 %v2295
  %2302 = vmatprep.subr.bf16.mxu0 0
  %2303 = vmatpush1.bf16.msra.mxu0 0
  %2304 = vmatprep.subr.bf16.mxu0 0
  %2305 = vmatpush1.bf16.msra.mxu0 0
  %2306 = vmatprep.subr.bf16.mxu0 0
  %2307 = vmatpush1.bf16.msra.mxu0 0
  %2308 = vmatprep.subr.bf16.mxu0 0
  %2309 = vmatpush1.bf16.msra.mxu0 0
  %2310 = vmatprep.subr.bf16.mxu0 0
  %2311 = vmatpush1.bf16.msra.mxu0 0
  %2312 = vmatprep.subr.bf16.mxu0 0
  %2313 = vmatpush1.bf16.msra.mxu0 0
  %2314 = vmatprep.subr.bf16.mxu0 0
  %2315 = vmatpush1.bf16.msra.mxu0 0
  %2316 = vmatprep.subr.bf16.mxu0 0
  %2317 = vmatpush1.bf16.msra.mxu0 0
  %2318 = vmatprep.subr.bf16.mxu0 0
  %2319 = vmatpush1.bf16.msra.mxu0 0
  %2320 = vmatprep.subr.bf16.mxu0 0
  %2321 = vmatpush1.bf16.msra.mxu0 0
  %2322 = vmatprep.subr.bf16.mxu0 0
  %2323 = vmatpush1.bf16.msra.mxu0 0
  %2324 = vmatprep.subr.bf16.mxu0 0
  %2325 = vmatpush1.bf16.msra.mxu0 0
  %2326 = vmatprep.subr.bf16.mxu0 0
  %2327 = vmatpush1.bf16.msra.mxu0 0
  %2328 = vmatprep.subr.bf16.mxu0 0
  %2329 = vmatpush1.bf16.msra.mxu0 0
  %2330 = vmatprep.mubr.bf16.mxu0 0
  %2331 = vmatmul.mubr.bf16.gmra.mrb[0].mxu0 %v2230
  %v2332 = vpop.f32.mrb[0].mxu0
  %v2333 = vadd.f32 %v2284, %v2332
  %v2334 = vpop.f32.mrb[0].mxu0
  %v2335 = vpop.f32.mrb[0].mxu0
  %v2336 = vadd.f32 %v2284, %v2335
  %v2337 = vpop.f32.mrb[0].mxu0
  %2338 = vdwg.mxu0
  %s2339 = scalar_lea.vmem %s3, 64
  %v2340 = vld [vmem:[%s2339] sm:$0xf]
  %v2341 = vld [vmem:[%s2339 + $0x4] sm:$0xf]
  %v2342 = vld [vmem:[%s2339 + $0x8] sm:$0xf]
  %v2343 = vld [vmem:[%s2339 + $0xc] sm:$0xf]
  %s2344 = scalar_lea.vmem %s6, 4
  %v2345 = vld [vmem:[%s2344] sm:$0x1]
  %v2347 = vlaneseq
  %v2348 = vshrl.u32 %v2347, 7
  %v2349 = vsub.s32 0, %v2348
  %v2350 = vrot.slane %v2345, %v2349
  %v2356 = vunpack.c.l.b16 %v2340
  %v2357 = vunpack.c.l.b16 %v2341
  %v2358 = vunpack.c.l.b16 %v2342
  %v2359 = vunpack.c.l.b16 %v2343
  %v2360 = vpack.c.b16 %v2357, %v2356
  %v2361 = vpack.c.b16 %v2359, %v2358
  %2364 = vmatprep.subr.bf16.mxu0 0
  %2365 = vmatpush1.bf16.msra.mxu0 %v2360
  %2366 = vmatprep.subr.bf16.mxu0 0
  %2367 = vmatpush1.bf16.msra.mxu0 %v2361
  %2368 = vmatprep.subr.bf16.mxu0 0
  %2369 = vmatpush1.bf16.msra.mxu0 0
  %2370 = vmatprep.subr.bf16.mxu0 0
  %2371 = vmatpush1.bf16.msra.mxu0 0
  %2372 = vmatprep.subr.bf16.mxu0 0
  %2373 = vmatpush1.bf16.msra.mxu0 0
  %2374 = vmatprep.subr.bf16.mxu0 0
  %2375 = vmatpush1.bf16.msra.mxu0 0
  %2376 = vmatprep.subr.bf16.mxu0 0
  %2377 = vmatpush1.bf16.msra.mxu0 0
  %2378 = vmatprep.subr.bf16.mxu0 0
  %2379 = vmatpush1.bf16.msra.mxu0 0
  %2380 = vmatprep.subr.bf16.mxu0 0
  %2381 = vmatpush1.bf16.msra.mxu0 0
  %2382 = vmatprep.subr.bf16.mxu0 0
  %2383 = vmatpush1.bf16.msra.mxu0 0
  %2384 = vmatprep.subr.bf16.mxu0 0
  %2385 = vmatpush1.bf16.msra.mxu0 0
  %2386 = vmatprep.subr.bf16.mxu0 0
  %2387 = vmatpush1.bf16.msra.mxu0 0
  %2388 = vmatprep.subr.bf16.mxu0 0
  %2389 = vmatpush1.bf16.msra.mxu0 0
  %2390 = vmatprep.subr.bf16.mxu0 0
  %2391 = vmatpush1.bf16.msra.mxu0 0
  %2392 = vmatprep.subr.bf16.mxu0 0
  %2393 = vmatpush1.bf16.msra.mxu0 0
  %2394 = vmatprep.subr.bf16.mxu0 0
  %2395 = vmatpush1.bf16.msra.mxu0 0
  %2396 = vmatprep.mubr.bf16.mxu0 0
  %2397 = vmatmul.mubr.bf16.gmra.mrb[0].mxu0 %v2230
  %v2398 = vpop.f32.mrb[0].mxu0
  %v2399 = vadd.f32 %v2350, %v2398
  %v2400 = vpop.f32.mrb[0].mxu0
  %v2401 = vpop.f32.mrb[0].mxu0
  %v2402 = vadd.f32 %v2350, %v2401
  %v2403 = vpop.f32.mrb[0].mxu0
  %2404 = vdwg.mxu0
  %v2405 = vpack.c.bf16 %v2267, %v2267
  %v2406 = vpack.c.bf16 %v2270, %v2270
  %v2407 = vpack.c.bf16 %v2333, %v2333
  %v2408 = vpack.c.bf16 %v2336, %v2336
  %v2409 = vpack.c.bf16 %v2399, %v2399
  %v2410 = vpack.c.bf16 %v2402, %v2402
  %v2412 = vsel %vm289, %v2405, 0
  %v2415 = vsel %vm289, %v2407, 0
  %2417 = vmatprep.subr.bf16.mxu0 0
  %2418 = vmatpush1.bf16.xpose.msra.mxu0 %v2415
  %2419 = vmatprep.subr.bf16.mxu0 0
  %2420 = vmatpush1.bf16.xpose.msra.mxu0 0
  %2421 = vmatprep.subr.bf16.mxu0 0
  %2422 = vmatpush1.bf16.xpose.msra.mxu0 0
  %2423 = vmatprep.subr.bf16.mxu0 0
  %2424 = vmatpush1.bf16.xpose.msra.mxu0 0
  %2425 = vmatprep.subr.bf16.mxu0 0
  %2426 = vmatpush1.bf16.xpose.msra.mxu0 0
  %2427 = vmatprep.subr.bf16.mxu0 0
  %2428 = vmatpush1.bf16.xpose.msra.mxu0 0
  %2429 = vmatprep.subr.bf16.mxu0 0
  %2430 = vmatpush1.bf16.xpose.msra.mxu0 0
  %2431 = vmatprep.subr.bf16.mxu0 0
  %2432 = vmatpush1.bf16.xpose.msra.mxu0 0
  %2433 = vmatprep.subr.bf16.mxu0 0
  %2434 = vmatpush1.bf16.xpose.msra.mxu0 0
  %2435 = vmatprep.subr.bf16.mxu0 0
  %2436 = vmatpush1.bf16.xpose.msra.mxu0 0
  %2437 = vmatprep.subr.bf16.mxu0 0
  %2438 = vmatpush1.bf16.xpose.msra.mxu0 0
  %2439 = vmatprep.subr.bf16.mxu0 0
  %2440 = vmatpush1.bf16.xpose.msra.mxu0 0
  %2441 = vmatprep.subr.bf16.mxu0 0
  %2442 = vmatpush1.bf16.xpose.msra.mxu0 0
  %2443 = vmatprep.subr.bf16.mxu0 0
  %2444 = vmatpush1.bf16.xpose.msra.mxu0 0
  %2445 = vmatprep.subr.bf16.mxu0 0
  %2446 = vmatpush1.bf16.xpose.msra.mxu0 0
  %2447 = vmatprep.subr.bf16.mxu0 0
  %2448 = vmatpush1.bf16.xpose.msra.mxu0 0
  %2449 = vmatprep.mubr.bf16.mxu0 0
  %2450 = vmatmul.mubr.bf16.gmra.mrb[0].mxu0 %v2412
  %v2451 = vpop.f32.mrb[0].mxu0
  %v2452 = vadd.f32 0.0, %v2451
  %v2453 = vpop.f32.mrb[0].mxu0
  %v2454 = vpop.f32.mrb[0].mxu0
  %v2455 = vpop.f32.mrb[0].mxu0
  %2456 = vdwg.mxu0
  %v2458 = vsel %vm289, %v2406, 0
  %v2461 = vsel %vm289, %v2408, 0
  %2463 = vmatprep.subr.bf16.mxu0 0
  %2464 = vmatpush1.bf16.xpose.msra.mxu0 %v2461
  %2465 = vmatprep.subr.bf16.mxu0 0
  %2466 = vmatpush1.bf16.xpose.msra.mxu0 0
  %2467 = vmatprep.subr.bf16.mxu0 0
  %2468 = vmatpush1.bf16.xpose.msra.mxu0 0
  %2469 = vmatprep.subr.bf16.mxu0 0
  %2470 = vmatpush1.bf16.xpose.msra.mxu0 0
  %2471 = vmatprep.subr.bf16.mxu0 0
  %2472 = vmatpush1.bf16.xpose.msra.mxu0 0
  %2473 = vmatprep.subr.bf16.mxu0 0
  %2474 = vmatpush1.bf16.xpose.msra.mxu0 0
  %2475 = vmatprep.subr.bf16.mxu0 0
  %2476 = vmatpush1.bf16.xpose.msra.mxu0 0
  %2477 = vmatprep.subr.bf16.mxu0 0
  %2478 = vmatpush1.bf16.xpose.msra.mxu0 0
  %2479 = vmatprep.subr.bf16.mxu0 0
  %2480 = vmatpush1.bf16.xpose.msra.mxu0 0
  %2481 = vmatprep.subr.bf16.mxu0 0
  %2482 = vmatpush1.bf16.xpose.msra.mxu0 0
  %2483 = vmatprep.subr.bf16.mxu0 0
  %2484 = vmatpush1.bf16.xpose.msra.mxu0 0
  %2485 = vmatprep.subr.bf16.mxu0 0
  %2486 = vmatpush1.bf16.xpose.msra.mxu0 0
  %2487 = vmatprep.subr.bf16.mxu0 0
  %2488 = vmatpush1.bf16.xpose.msra.mxu0 0
  %2489 = vmatprep.subr.bf16.mxu0 0
  %2490 = vmatpush1.bf16.xpose.msra.mxu0 0
  %2491 = vmatprep.subr.bf16.mxu0 0
  %2492 = vmatpush1.bf16.xpose.msra.mxu0 0
  %2493 = vmatprep.subr.bf16.mxu0 0
  %2494 = vmatpush1.bf16.xpose.msra.mxu0 0
  %2495 = vmatprep.mubr.bf16.mxu0 0
  %2496 = vmatmul.mubr.bf16.gmra.mrb[0].mxu0 %v2458
  %v2497 = vpop.f32.mrb[0].mxu0
  %v2498 = vadd.f32 0.0, %v2497
  %v2499 = vpop.f32.mrb[0].mxu0
  %v2500 = vpop.f32.mrb[0].mxu0
  %v2501 = vpop.f32.mrb[0].mxu0
  %2502 = vdwg.mxu0
  %v2503 = vmul.f32 %v2452, 0.35355338
  %v2504 = vmul.f32 %v2498, 0.35355338
  %v2505 = vsel %vm289, %v2503, -inf
  %2506 = vmax.xlane.f32.xlu0 %v2505
  %v2507 = vpop.xlane.xlu0 %2506
  %v2508 = vsel %vm289, %v2504, -inf
  %2509 = vmax.xlane.f32.xlu0 %v2508
  %v2510 = vpop.xlane.xlu0 %2509
  %v2511 = vsub.f32 %v2503, %v2507
  %v2512 = vsub.f32 %v2504, %v2510
  %v2513 = vmul.f32 %v2511, 1.442695
  %v2514 = vpow.pop %v2513
  %v2515 = vmul.f32 %v2512, 1.442695
  %v2516 = vpow.pop %v2515
  %v2517 = vsel %vm289, %v2514, 0.0
  %2518 = vadd.xlane.f32.xlu0 %v2517
  %v2519 = vpop.xlane.xlu0 %2518
  %v2520 = vsel %vm289, %v2516, 0.0
  %2521 = vadd.xlane.f32.xlu0 %v2520
  %v2522 = vpop.xlane.xlu0 %2521
  %v2523 = vrcp.pop %v2519
  %v2524 = vrcp.pop %v2522
  %v2525 = vmul.f32 %v2514, %v2523
  %v2526 = vmul.f32 %v2516, %v2524
  %v2527 = vpack.c.bf16 %v2525, %v2525
  %v2528 = vpack.c.bf16 %v2526, %v2526
  %v2530 = vsel %vm289, %v2527, 0
  %v2533 = vsel %vm411, %v2409, 0
  %2535 = vmatprep.subr.bf16.mxu0 0
  %2536 = vmatpush1.bf16.msra.mxu0 %v2533
  %2537 = vmatprep.subr.bf16.mxu0 0
  %2538 = vmatpush1.bf16.msra.mxu0 0
  %2539 = vmatprep.subr.bf16.mxu0 0
  %2540 = vmatpush1.bf16.msra.mxu0 0
  %2541 = vmatprep.subr.bf16.mxu0 0
  %2542 = vmatpush1.bf16.msra.mxu0 0
  %2543 = vmatprep.subr.bf16.mxu0 0
  %2544 = vmatpush1.bf16.msra.mxu0 0
  %2545 = vmatprep.subr.bf16.mxu0 0
  %2546 = vmatpush1.bf16.msra.mxu0 0
  %2547 = vmatprep.subr.bf16.mxu0 0
  %2548 = vmatpush1.bf16.msra.mxu0 0
  %2549 = vmatprep.subr.bf16.mxu0 0
  %2550 = vmatpush1.bf16.msra.mxu0 0
  %2551 = vmatprep.subr.bf16.mxu0 0
  %2552 = vmatpush1.bf16.msra.mxu0 0
  %2553 = vmatprep.subr.bf16.mxu0 0
  %2554 = vmatpush1.bf16.msra.mxu0 0
  %2555 = vmatprep.subr.bf16.mxu0 0
  %2556 = vmatpush1.bf16.msra.mxu0 0
  %2557 = vmatprep.subr.bf16.mxu0 0
  %2558 = vmatpush1.bf16.msra.mxu0 0
  %2559 = vmatprep.subr.bf16.mxu0 0
  %2560 = vmatpush1.bf16.msra.mxu0 0
  %2561 = vmatprep.subr.bf16.mxu0 0
  %2562 = vmatpush1.bf16.msra.mxu0 0
  %2563 = vmatprep.subr.bf16.mxu0 0
  %2564 = vmatpush1.bf16.msra.mxu0 0
  %2565 = vmatprep.subr.bf16.mxu0 0
  %2566 = vmatpush1.bf16.msra.mxu0 0
  %2567 = vmatprep.mubr.bf16.mxu0 0
  %2568 = vmatmul.mubr.bf16.gmra.mrb[0].mxu0 %v2530
  %v2569 = vpop.f32.mrb[0].mxu0
  %v2570 = vadd.f32 0.0, %v2569
  %v2571 = vpop.f32.mrb[0].mxu0
  %v2572 = vpop.f32.mrb[0].mxu0
  %v2573 = vpop.f32.mrb[0].mxu0
  %2574 = vdwg.mxu0
  %v2576 = vsel %vm289, %v2528, 0
  %v2579 = vsel %vm411, %v2410, 0
  %2581 = vmatprep.subr.bf16.mxu0 0
  %2582 = vmatpush1.bf16.msra.mxu0 %v2579
  %2583 = vmatprep.subr.bf16.mxu0 0
  %2584 = vmatpush1.bf16.msra.mxu0 0
  %2585 = vmatprep.subr.bf16.mxu0 0
  %2586 = vmatpush1.bf16.msra.mxu0 0
  %2587 = vmatprep.subr.bf16.mxu0 0
  %2588 = vmatpush1.bf16.msra.mxu0 0
  %2589 = vmatprep.subr.bf16.mxu0 0
  %2590 = vmatpush1.bf16.msra.mxu0 0
  %2591 = vmatprep.subr.bf16.mxu0 0
  %2592 = vmatpush1.bf16.msra.mxu0 0
  %2593 = vmatprep.subr.bf16.mxu0 0
  %2594 = vmatpush1.bf16.msra.mxu0 0
  %2595 = vmatprep.subr.bf16.mxu0 0
  %2596 = vmatpush1.bf16.msra.mxu0 0
  %2597 = vmatprep.subr.bf16.mxu0 0
  %2598 = vmatpush1.bf16.msra.mxu0 0
  %2599 = vmatprep.subr.bf16.mxu0 0
  %2600 = vmatpush1.bf16.msra.mxu0 0
  %2601 = vmatprep.subr.bf16.mxu0 0
  %2602 = vmatpush1.bf16.msra.mxu0 0
  %2603 = vmatprep.subr.bf16.mxu0 0
  %2604 = vmatpush1.bf16.msra.mxu0 0
  %2605 = vmatprep.subr.bf16.mxu0 0
  %2606 = vmatpush1.bf16.msra.mxu0 0
  %2607 = vmatprep.subr.bf16.mxu0 0
  %2608 = vmatpush1.bf16.msra.mxu0 0
  %2609 = vmatprep.subr.bf16.mxu0 0
  %2610 = vmatpush1.bf16.msra.mxu0 0
  %2611 = vmatprep.subr.bf16.mxu0 0
  %2612 = vmatpush1.bf16.msra.mxu0 0
  %2613 = vmatprep.mubr.bf16.mxu0 0
  %2614 = vmatmul.mubr.bf16.gmra.mrb[0].mxu0 %v2576
  %v2615 = vpop.f32.mrb[0].mxu0
  %v2616 = vadd.f32 0.0, %v2615
  %v2617 = vpop.f32.mrb[0].mxu0
  %v2618 = vpop.f32.mrb[0].mxu0
  %v2619 = vpop.f32.mrb[0].mxu0
  %2620 = vdwg.mxu0
  %s2621 = scalar_lea.vmem %s7, 16
  %v2622 = vld [vmem:[%s2621] sm:$0xf]
  %v2623 = vpack.c.bf16 %v2616, %v2570
  %s2624 = scalar_lea.vmem %s1, 80
  %v2625 = vld [vmem:[%s2624] sm:$0xf]
  %v2626 = vld [vmem:[%s2624 + $0x4] sm:$0xf]
  %v2627 = vld [vmem:[%s2624 + $0x8] sm:$0xf]
  %v2628 = vld [vmem:[%s2624 + $0xc] sm:$0xf]
  %s2629 = scalar_lea.vmem %s4, 5
  %v2630 = vld [vmem:[%s2629] sm:$0x1]
  %v2632 = vlaneseq
  %v2633 = vshrl.u32 %v2632, 7
  %v2634 = vsub.s32 0, %v2633
  %v2635 = vrot.slane %v2630, %v2634
  %v2641 = vunpack.c.l.b16 %v2625
  %v2642 = vunpack.c.l.b16 %v2626
  %v2643 = vunpack.c.l.b16 %v2627
  %v2644 = vunpack.c.l.b16 %v2628
  %v2645 = vpack.c.b16 %v2642, %v2641
  %v2646 = vpack.c.b16 %v2644, %v2643
  %2649 = vmatprep.subr.bf16.mxu0 0
  %2650 = vmatpush1.bf16.msra.mxu0 %v2645
  %2651 = vmatprep.subr.bf16.mxu0 0
  %2652 = vmatpush1.bf16.msra.mxu0 %v2646
  %2653 = vmatprep.subr.bf16.mxu0 0
  %2654 = vmatpush1.bf16.msra.mxu0 0
  %2655 = vmatprep.subr.bf16.mxu0 0
  %2656 = vmatpush1.bf16.msra.mxu0 0
  %2657 = vmatprep.subr.bf16.mxu0 0
  %2658 = vmatpush1.bf16.msra.mxu0 0
  %2659 = vmatprep.subr.bf16.mxu0 0
  %2660 = vmatpush1.bf16.msra.mxu0 0
  %2661 = vmatprep.subr.bf16.mxu0 0
  %2662 = vmatpush1.bf16.msra.mxu0 0
  %2663 = vmatprep.subr.bf16.mxu0 0
  %2664 = vmatpush1.bf16.msra.mxu0 0
  %2665 = vmatprep.subr.bf16.mxu0 0
  %2666 = vmatpush1.bf16.msra.mxu0 0
  %2667 = vmatprep.subr.bf16.mxu0 0
  %2668 = vmatpush1.bf16.msra.mxu0 0
  %2669 = vmatprep.subr.bf16.mxu0 0
  %2670 = vmatpush1.bf16.msra.mxu0 0
  %2671 = vmatprep.subr.bf16.mxu0 0
  %2672 = vmatpush1.bf16.msra.mxu0 0
  %2673 = vmatprep.subr.bf16.mxu0 0
  %2674 = vmatpush1.bf16.msra.mxu0 0
  %2675 = vmatprep.subr.bf16.mxu0 0
  %2676 = vmatpush1.bf16.msra.mxu0 0
  %2677 = vmatprep.subr.bf16.mxu0 0
  %2678 = vmatpush1.bf16.msra.mxu0 0
  %2679 = vmatprep.subr.bf16.mxu0 0
  %2680 = vmatpush1.bf16.msra.mxu0 0
  %2681 = vmatprep.mubr.bf16.mxu0 0
  %2682 = vmatmul.mubr.bf16.gmra.mrb[0].mxu0 %v2230
  %v2683 = vpop.f32.mrb[0].mxu0
  %v2684 = vadd.f32 %v2635, %v2683
  %v2685 = vpop.f32.mrb[0].mxu0
  %v2686 = vpop.f32.mrb[0].mxu0
  %v2687 = vadd.f32 %v2635, %v2686
  %v2688 = vpop.f32.mrb[0].mxu0
  %2689 = vdwg.mxu0
  %s2690 = scalar_lea.vmem %s2, 80
  %v2691 = vld [vmem:[%s2690] sm:$0xf]
  %v2692 = vld [vmem:[%s2690 + $0x4] sm:$0xf]
  %v2693 = vld [vmem:[%s2690 + $0x8] sm:$0xf]
  %v2694 = vld [vmem:[%s2690 + $0xc] sm:$0xf]
  %s2695 = scalar_lea.vmem %s5, 5
  %v2696 = vld [vmem:[%s2695] sm:$0x1]
  %v2698 = vlaneseq
  %v2699 = vshrl.u32 %v2698, 7
  %v2700 = vsub.s32 0, %v2699
  %v2701 = vrot.slane %v2696, %v2700
  %v2707 = vunpack.c.l.b16 %v2691
  %v2708 = vunpack.c.l.b16 %v2692
  %v2709 = vunpack.c.l.b16 %v2693
  %v2710 = vunpack.c.l.b16 %v2694
  %v2711 = vpack.c.b16 %v2708, %v2707
  %v2712 = vpack.c.b16 %v2710, %v2709
  %2715 = vmatprep.subr.bf16.mxu0 0
  %2716 = vmatpush1.bf16.msra.mxu0 %v2711
  %2717 = vmatprep.subr.bf16.mxu0 0
  %2718 = vmatpush1.bf16.msra.mxu0 %v2712
  %2719 = vmatprep.subr.bf16.mxu0 0
  %2720 = vmatpush1.bf16.msra.mxu0 0
  %2721 = vmatprep.subr.bf16.mxu0 0
  %2722 = vmatpush1.bf16.msra.mxu0 0
  %2723 = vmatprep.subr.bf16.mxu0 0
  %2724 = vmatpush1.bf16.msra.mxu0 0
  %2725 = vmatprep.subr.bf16.mxu0 0
  %2726 = vmatpush1.bf16.msra.mxu0 0
  %2727 = vmatprep.subr.bf16.mxu0 0
  %2728 = vmatpush1.bf16.msra.mxu0 0
  %2729 = vmatprep.subr.bf16.mxu0 0
  %2730 = vmatpush1.bf16.msra.mxu0 0
  %2731 = vmatprep.subr.bf16.mxu0 0
  %2732 = vmatpush1.bf16.msra.mxu0 0
  %2733 = vmatprep.subr.bf16.mxu0 0
  %2734 = vmatpush1.bf16.msra.mxu0 0
  %2735 = vmatprep.subr.bf16.mxu0 0
  %2736 = vmatpush1.bf16.msra.mxu0 0
  %2737 = vmatprep.subr.bf16.mxu0 0
  %2738 = vmatpush1.bf16.msra.mxu0 0
  %2739 = vmatprep.subr.bf16.mxu0 0
  %2740 = vmatpush1.bf16.msra.mxu0 0
  %2741 = vmatprep.subr.bf16.mxu0 0
  %2742 = vmatpush1.bf16.msra.mxu0 0
  %2743 = vmatprep.subr.bf16.mxu0 0
  %2744 = vmatpush1.bf16.msra.mxu0 0
  %2745 = vmatprep.subr.bf16.mxu0 0
  %2746 = vmatpush1.bf16.msra.mxu0 0
  %2747 = vmatprep.mubr.bf16.mxu0 0
  %2748 = vmatmul.mubr.bf16.gmra.mrb[0].mxu0 %v2230
  %v2749 = vpop.f32.mrb[0].mxu0
  %v2750 = vadd.f32 %v2701, %v2749
  %v2751 = vpop.f32.mrb[0].mxu0
  %v2752 = vpop.f32.mrb[0].mxu0
  %v2753 = vadd.f32 %v2701, %v2752
  %v2754 = vpop.f32.mrb[0].mxu0
  %2755 = vdwg.mxu0
  %s2756 = scalar_lea.vmem %s3, 80
  %v2757 = vld [vmem:[%s2756] sm:$0xf]
  %v2758 = vld [vmem:[%s2756 + $0x4] sm:$0xf]
  %v2759 = vld [vmem:[%s2756 + $0x8] sm:$0xf]
  %v2760 = vld [vmem:[%s2756 + $0xc] sm:$0xf]
  %s2761 = scalar_lea.vmem %s6, 5
  %v2762 = vld [vmem:[%s2761] sm:$0x1]
  %v2764 = vlaneseq
  %v2765 = vshrl.u32 %v2764, 7
  %v2766 = vsub.s32 0, %v2765
  %v2767 = vrot.slane %v2762, %v2766
  %v2773 = vunpack.c.l.b16 %v2757
  %v2774 = vunpack.c.l.b16 %v2758
  %v2775 = vunpack.c.l.b16 %v2759
  %v2776 = vunpack.c.l.b16 %v2760
  %v2777 = vpack.c.b16 %v2774, %v2773
  %v2778 = vpack.c.b16 %v2776, %v2775
  %2781 = vmatprep.subr.bf16.mxu0 0
  %2782 = vmatpush1.bf16.msra.mxu0 %v2777
  %2783 = vmatprep.subr.bf16.mxu0 0
  %2784 = vmatpush1.bf16.msra.mxu0 %v2778
  %2785 = vmatprep.subr.bf16.mxu0 0
  %2786 = vmatpush1.bf16.msra.mxu0 0
  %2787 = vmatprep.subr.bf16.mxu0 0
  %2788 = vmatpush1.bf16.msra.mxu0 0
  %2789 = vmatprep.subr.bf16.mxu0 0
  %2790 = vmatpush1.bf16.msra.mxu0 0
  %2791 = vmatprep.subr.bf16.mxu0 0
  %2792 = vmatpush1.bf16.msra.mxu0 0
  %2793 = vmatprep.subr.bf16.mxu0 0
  %2794 = vmatpush1.bf16.msra.mxu0 0
  %2795 = vmatprep.subr.bf16.mxu0 0
  %2796 = vmatpush1.bf16.msra.mxu0 0
  %2797 = vmatprep.subr.bf16.mxu0 0
  %2798 = vmatpush1.bf16.msra.mxu0 0
  %2799 = vmatprep.subr.bf16.mxu0 0
  %2800 = vmatpush1.bf16.msra.mxu0 0
  %2801 = vmatprep.subr.bf16.mxu0 0
  %2802 = vmatpush1.bf16.msra.mxu0 0
  %2803 = vmatprep.subr.bf16.mxu0 0
  %2804 = vmatpush1.bf16.msra.mxu0 0
  %2805 = vmatprep.subr.bf16.mxu0 0
  %2806 = vmatpush1.bf16.msra.mxu0 0
  %2807 = vmatprep.subr.bf16.mxu0 0
  %2808 = vmatpush1.bf16.msra.mxu0 0
  %2809 = vmatprep.subr.bf16.mxu0 0
  %2810 = vmatpush1.bf16.msra.mxu0 0
  %2811 = vmatprep.subr.bf16.mxu0 0
  %2812 = vmatpush1.bf16.msra.mxu0 0
  %2813 = vmatprep.mubr.bf16.mxu0 0
  %2814 = vmatmul.mubr.bf16.gmra.mrb[0].mxu0 %v2230
  %v2815 = vpop.f32.mrb[0].mxu0
  %v2816 = vadd.f32 %v2767, %v2815
  %v2817 = vpop.f32.mrb[0].mxu0
  %v2818 = vpop.f32.mrb[0].mxu0
  %v2819 = vadd.f32 %v2767, %v2818
  %v2820 = vpop.f32.mrb[0].mxu0
  %2821 = vdwg.mxu0
  %v2822 = vpack.c.bf16 %v2684, %v2684
  %v2823 = vpack.c.bf16 %v2687, %v2687
  %v2824 = vpack.c.bf16 %v2750, %v2750
  %v2825 = vpack.c.bf16 %v2753, %v2753
  %v2826 = vpack.c.bf16 %v2816, %v2816
  %v2827 = vpack.c.bf16 %v2819, %v2819
  %v2829 = vsel %vm289, %v2822, 0
  %v2832 = vsel %vm289, %v2824, 0
  %2834 = vmatprep.subr.bf16.mxu0 0
  %2835 = vmatpush1.bf16.xpose.msra.mxu0 %v2832
  %2836 = vmatprep.subr.bf16.mxu0 0
  %2837 = vmatpush1.bf16.xpose.msra.mxu0 0
  %2838 = vmatprep.subr.bf16.mxu0 0
  %2839 = vmatpush1.bf16.xpose.msra.mxu0 0
  %2840 = vmatprep.subr.bf16.mxu0 0
  %2841 = vmatpush1.bf16.xpose.msra.mxu0 0
  %2842 = vmatprep.subr.bf16.mxu0 0
  %2843 = vmatpush1.bf16.xpose.msra.mxu0 0
  %2844 = vmatprep.subr.bf16.mxu0 0
  %2845 = vmatpush1.bf16.xpose.msra.mxu0 0
  %2846 = vmatprep.subr.bf16.mxu0 0
  %2847 = vmatpush1.bf16.xpose.msra.mxu0 0
  %2848 = vmatprep.subr.bf16.mxu0 0
  %2849 = vmatpush1.bf16.xpose.msra.mxu0 0
  %2850 = vmatprep.subr.bf16.mxu0 0
  %2851 = vmatpush1.bf16.xpose.msra.mxu0 0
  %2852 = vmatprep.subr.bf16.mxu0 0
  %2853 = vmatpush1.bf16.xpose.msra.mxu0 0
  %2854 = vmatprep.subr.bf16.mxu0 0
  %2855 = vmatpush1.bf16.xpose.msra.mxu0 0
  %2856 = vmatprep.subr.bf16.mxu0 0
  %2857 = vmatpush1.bf16.xpose.msra.mxu0 0
  %2858 = vmatprep.subr.bf16.mxu0 0
  %2859 = vmatpush1.bf16.xpose.msra.mxu0 0
  %2860 = vmatprep.subr.bf16.mxu0 0
  %2861 = vmatpush1.bf16.xpose.msra.mxu0 0
  %2862 = vmatprep.subr.bf16.mxu0 0
  %2863 = vmatpush1.bf16.xpose.msra.mxu0 0
  %2864 = vmatprep.subr.bf16.mxu0 0
  %2865 = vmatpush1.bf16.xpose.msra.mxu0 0
  %2866 = vmatprep.mubr.bf16.mxu0 0
  %2867 = vmatmul.mubr.bf16.gmra.mrb[0].mxu0 %v2829
  %v2868 = vpop.f32.mrb[0].mxu0
  %v2869 = vadd.f32 0.0, %v2868
  %v2870 = vpop.f32.mrb[0].mxu0
  %v2871 = vpop.f32.mrb[0].mxu0
  %v2872 = vpop.f32.mrb[0].mxu0
  %2873 = vdwg.mxu0
  %v2875 = vsel %vm289, %v2823, 0
  %v2878 = vsel %vm289, %v2825, 0
  %2880 = vmatprep.subr.bf16.mxu0 0
  %2881 = vmatpush1.bf16.xpose.msra.mxu0 %v2878
  %2882 = vmatprep.subr.bf16.mxu0 0
  %2883 = vmatpush1.bf16.xpose.msra.mxu0 0
  %2884 = vmatprep.subr.bf16.mxu0 0
  %2885 = vmatpush1.bf16.xpose.msra.mxu0 0
  %2886 = vmatprep.subr.bf16.mxu0 0
  %2887 = vmatpush1.bf16.xpose.msra.mxu0 0
  %2888 = vmatprep.subr.bf16.mxu0 0
  %2889 = vmatpush1.bf16.xpose.msra.mxu0 0
  %2890 = vmatprep.subr.bf16.mxu0 0
  %2891 = vmatpush1.bf16.xpose.msra.mxu0 0
  %2892 = vmatprep.subr.bf16.mxu0 0
  %2893 = vmatpush1.bf16.xpose.msra.mxu0 0
  %2894 = vmatprep.subr.bf16.mxu0 0
  %2895 = vmatpush1.bf16.xpose.msra.mxu0 0
  %2896 = vmatprep.subr.bf16.mxu0 0
  %2897 = vmatpush1.bf16.xpose.msra.mxu0 0
  %2898 = vmatprep.subr.bf16.mxu0 0
  %2899 = vmatpush1.bf16.xpose.msra.mxu0 0
  %2900 = vmatprep.subr.bf16.mxu0 0
  %2901 = vmatpush1.bf16.xpose.msra.mxu0 0
  %2902 = vmatprep.subr.bf16.mxu0 0
  %2903 = vmatpush1.bf16.xpose.msra.mxu0 0
  %2904 = vmatprep.subr.bf16.mxu0 0
  %2905 = vmatpush1.bf16.xpose.msra.mxu0 0
  %2906 = vmatprep.subr.bf16.mxu0 0
  %2907 = vmatpush1.bf16.xpose.msra.mxu0 0
  %2908 = vmatprep.subr.bf16.mxu0 0
  %2909 = vmatpush1.bf16.xpose.msra.mxu0 0
  %2910 = vmatprep.subr.bf16.mxu0 0
  %2911 = vmatpush1.bf16.xpose.msra.mxu0 0
  %2912 = vmatprep.mubr.bf16.mxu0 0
  %2913 = vmatmul.mubr.bf16.gmra.mrb[0].mxu0 %v2875
  %v2914 = vpop.f32.mrb[0].mxu0
  %v2915 = vadd.f32 0.0, %v2914
  %v2916 = vpop.f32.mrb[0].mxu0
  %v2917 = vpop.f32.mrb[0].mxu0
  %v2918 = vpop.f32.mrb[0].mxu0
  %2919 = vdwg.mxu0
  %v2920 = vmul.f32 %v2869, 0.35355338
  %v2921 = vmul.f32 %v2915, 0.35355338
  %v2922 = vsel %vm289, %v2920, -inf
  %2923 = vmax.xlane.f32.xlu0 %v2922
  %v2924 = vpop.xlane.xlu0 %2923
  %v2925 = vsel %vm289, %v2921, -inf
  %2926 = vmax.xlane.f32.xlu0 %v2925
  %v2927 = vpop.xlane.xlu0 %2926
  %v2928 = vsub.f32 %v2920, %v2924
  %v2929 = vsub.f32 %v2921, %v2927
  %v2930 = vmul.f32 %v2928, 1.442695
  %v2931 = vpow.pop %v2930
  %v2932 = vmul.f32 %v2929, 1.442695
  %v2933 = vpow.pop %v2932
  %v2934 = vsel %vm289, %v2931, 0.0
  %2935 = vadd.xlane.f32.xlu0 %v2934
  %v2936 = vpop.xlane.xlu0 %2935
  %v2937 = vsel %vm289, %v2933, 0.0
  %2938 = vadd.xlane.f32.xlu0 %v2937
  %v2939 = vpop.xlane.xlu0 %2938
  %v2940 = vrcp.pop %v2936
  %v2941 = vrcp.pop %v2939
  %v2942 = vmul.f32 %v2931, %v2940
  %v2943 = vmul.f32 %v2933, %v2941
  %v2944 = vpack.c.bf16 %v2942, %v2942
  %v2945 = vpack.c.bf16 %v2943, %v2943
  %v2947 = vsel %vm289, %v2944, 0
  %v2950 = vsel %vm411, %v2826, 0
  %2952 = vmatprep.subr.bf16.mxu0 0
  %2953 = vmatpush1.bf16.msra.mxu0 %v2950
  %2954 = vmatprep.subr.bf16.mxu0 0
  %2955 = vmatpush1.bf16.msra.mxu0 0
  %2956 = vmatprep.subr.bf16.mxu0 0
  %2957 = vmatpush1.bf16.msra.mxu0 0
  %2958 = vmatprep.subr.bf16.mxu0 0
  %2959 = vmatpush1.bf16.msra.mxu0 0
  %2960 = vmatprep.subr.bf16.mxu0 0
  %2961 = vmatpush1.bf16.msra.mxu0 0
  %2962 = vmatprep.subr.bf16.mxu0 0
  %2963 = vmatpush1.bf16.msra.mxu0 0
  %2964 = vmatprep.subr.bf16.mxu0 0
  %2965 = vmatpush1.bf16.msra.mxu0 0
  %2966 = vmatprep.subr.bf16.mxu0 0
  %2967 = vmatpush1.bf16.msra.mxu0 0
  %2968 = vmatprep.subr.bf16.mxu0 0
  %2969 = vmatpush1.bf16.msra.mxu0 0
  %2970 = vmatprep.subr.bf16.mxu0 0
  %2971 = vmatpush1.bf16.msra.mxu0 0
  %2972 = vmatprep.subr.bf16.mxu0 0
  %2973 = vmatpush1.bf16.msra.mxu0 0
  %2974 = vmatprep.subr.bf16.mxu0 0
  %2975 = vmatpush1.bf16.msra.mxu0 0
  %2976 = vmatprep.subr.bf16.mxu0 0
  %2977 = vmatpush1.bf16.msra.mxu0 0
  %2978 = vmatprep.subr.bf16.mxu0 0
  %2979 = vmatpush1.bf16.msra.mxu0 0
  %2980 = vmatprep.subr.bf16.mxu0 0
  %2981 = vmatpush1.bf16.msra.mxu0 0
  %2982 = vmatprep.subr.bf16.mxu0 0
  %2983 = vmatpush1.bf16.msra.mxu0 0
  %2984 = vmatprep.mubr.bf16.mxu0 0
  %2985 = vmatmul.mubr.bf16.gmra.mrb[0].mxu0 %v2947
  %v2986 = vpop.f32.mrb[0].mxu0
  %v2987 = vadd.f32 0.0, %v2986
  %v2988 = vpop.f32.mrb[0].mxu0
  %v2989 = vpop.f32.mrb[0].mxu0
  %v2990 = vpop.f32.mrb[0].mxu0
  %2991 = vdwg.mxu0
  %v2993 = vsel %vm289, %v2945, 0
  %v2996 = vsel %vm411, %v2827, 0
  %2998 = vmatprep.subr.bf16.mxu0 0
  %2999 = vmatpush1.bf16.msra.mxu0 %v2996
  %3000 = vmatprep.subr.bf16.mxu0 0
  %3001 = vmatpush1.bf16.msra.mxu0 0
  %3002 = vmatprep.subr.bf16.mxu0 0
  %3003 = vmatpush1.bf16.msra.mxu0 0
  %3004 = vmatprep.subr.bf16.mxu0 0
  %3005 = vmatpush1.bf16.msra.mxu0 0
  %3006 = vmatprep.subr.bf16.mxu0 0
  %3007 = vmatpush1.bf16.msra.mxu0 0
  %3008 = vmatprep.subr.bf16.mxu0 0
  %3009 = vmatpush1.bf16.msra.mxu0 0
  %3010 = vmatprep.subr.bf16.mxu0 0
  %3011 = vmatpush1.bf16.msra.mxu0 0
  %3012 = vmatprep.subr.bf16.mxu0 0
  %3013 = vmatpush1.bf16.msra.mxu0 0
  %3014 = vmatprep.subr.bf16.mxu0 0
  %3015 = vmatpush1.bf16.msra.mxu0 0
  %3016 = vmatprep.subr.bf16.mxu0 0
  %3017 = vmatpush1.bf16.msra.mxu0 0
  %3018 = vmatprep.subr.bf16.mxu0 0
  %3019 = vmatpush1.bf16.msra.mxu0 0
  %3020 = vmatprep.subr.bf16.mxu0 0
  %3021 = vmatpush1.bf16.msra.mxu0 0
  %3022 = vmatprep.subr.bf16.mxu0 0
  %3023 = vmatpush1.bf16.msra.mxu0 0
  %3024 = vmatprep.subr.bf16.mxu0 0
  %3025 = vmatpush1.bf16.msra.mxu0 0
  %3026 = vmatprep.subr.bf16.mxu0 0
  %3027 = vmatpush1.bf16.msra.mxu0 0
  %3028 = vmatprep.subr.bf16.mxu0 0
  %3029 = vmatpush1.bf16.msra.mxu0 0
  %3030 = vmatprep.mubr.bf16.mxu0 0
  %3031 = vmatmul.mubr.bf16.gmra.mrb[0].mxu0 %v2993
  %v3032 = vpop.f32.mrb[0].mxu0
  %v3033 = vadd.f32 0.0, %v3032
  %v3034 = vpop.f32.mrb[0].mxu0
  %v3035 = vpop.f32.mrb[0].mxu0
  %v3036 = vpop.f32.mrb[0].mxu0
  %3037 = vdwg.mxu0
  %s3038 = scalar_lea.vmem %s7, 20
  %v3039 = vld [vmem:[%s3038] sm:$0xf]
  %v3040 = vpack.c.bf16 %v3033, %v2987
  %v3042 = vsel %vm289, %v3040, 0
  %v3045 = vsel %vm411, %v3039, 0
  %3047 = vmatprep.subr.bf16.mxu0 0
  %3048 = vmatpush1.bf16.msra.mxu0 %v3045
  %3049 = vmatprep.subr.bf16.mxu0 0
  %3050 = vmatpush1.bf16.msra.mxu0 0
  %3051 = vmatprep.subr.bf16.mxu0 0
  %3052 = vmatpush1.bf16.msra.mxu0 0
  %3053 = vmatprep.subr.bf16.mxu0 0
  %3054 = vmatpush1.bf16.msra.mxu0 0
  %3055 = vmatprep.subr.bf16.mxu0 0
  %3056 = vmatpush1.bf16.msra.mxu0 0
  %3057 = vmatprep.subr.bf16.mxu0 0
  %3058 = vmatpush1.bf16.msra.mxu0 0
  %3059 = vmatprep.subr.bf16.mxu0 0
  %3060 = vmatpush1.bf16.msra.mxu0 0
  %3061 = vmatprep.subr.bf16.mxu0 0
  %3062 = vmatpush1.bf16.msra.mxu0 0
  %3063 = vmatprep.subr.bf16.mxu0 0
  %3064 = vmatpush1.bf16.msra.mxu0 0
  %3065 = vmatprep.subr.bf16.mxu0 0
  %3066 = vmatpush1.bf16.msra.mxu0 0
  %3067 = vmatprep.subr.bf16.mxu0 0
  %3068 = vmatpush1.bf16.msra.mxu0 0
  %3069 = vmatprep.subr.bf16.mxu0 0
  %3070 = vmatpush1.bf16.msra.mxu0 0
  %3071 = vmatprep.subr.bf16.mxu0 0
  %3072 = vmatpush1.bf16.msra.mxu0 0
  %3073 = vmatprep.subr.bf16.mxu0 0
  %3074 = vmatpush1.bf16.msra.mxu0 0
  %3075 = vmatprep.subr.bf16.mxu0 0
  %3076 = vmatpush1.bf16.msra.mxu0 0
  %3077 = vmatprep.subr.bf16.mxu0 0
  %3078 = vmatpush1.bf16.msra.mxu0 0
  %3079 = vmatprep.mubr.bf16.mxu0 0
  %3080 = vmatmul.mubr.bf16.gmra.mrb[0].mxu0 %v3042
  %v3081 = vpop.f32.mrb[0].mxu0
  %v3082 = vadd.f32 0.0, %v3081
  %v3083 = vpop.f32.mrb[0].mxu0
  %v3084 = vpop.f32.mrb[0].mxu0
  %v3085 = vadd.f32 0.0, %v3084
  %v3086 = vpop.f32.mrb[0].mxu0
  %3087 = vdwg.mxu0
  %v3089 = vsel %vm289, %v2623, 0
  %v3092 = vsel %vm411, %v2622, 0
  %3094 = vmatprep.subr.bf16.mxu0 0
  %3095 = vmatpush1.bf16.msra.mxu0 %v3092
  %3096 = vmatprep.subr.bf16.mxu0 0
  %3097 = vmatpush1.bf16.msra.mxu0 0
  %3098 = vmatprep.subr.bf16.mxu0 0
  %3099 = vmatpush1.bf16.msra.mxu0 0
  %3100 = vmatprep.subr.bf16.mxu0 0
  %3101 = vmatpush1.bf16.msra.mxu0 0
  %3102 = vmatprep.subr.bf16.mxu0 0
  %3103 = vmatpush1.bf16.msra.mxu0 0
  %3104 = vmatprep.subr.bf16.mxu0 0
  %3105 = vmatpush1.bf16.msra.mxu0 0
  %3106 = vmatprep.subr.bf16.mxu0 0
  %3107 = vmatpush1.bf16.msra.mxu0 0
  %3108 = vmatprep.subr.bf16.mxu0 0
  %3109 = vmatpush1.bf16.msra.mxu0 0
  %3110 = vmatprep.subr.bf16.mxu0 0
  %3111 = vmatpush1.bf16.msra.mxu0 0
  %3112 = vmatprep.subr.bf16.mxu0 0
  %3113 = vmatpush1.bf16.msra.mxu0 0
  %3114 = vmatprep.subr.bf16.mxu0 0
  %3115 = vmatpush1.bf16.msra.mxu0 0
  %3116 = vmatprep.subr.bf16.mxu0 0
  %3117 = vmatpush1.bf16.msra.mxu0 0
  %3118 = vmatprep.subr.bf16.mxu0 0
  %3119 = vmatpush1.bf16.msra.mxu0 0
  %3120 = vmatprep.subr.bf16.mxu0 0
  %3121 = vmatpush1.bf16.msra.mxu0 0
  %3122 = vmatprep.subr.bf16.mxu0 0
  %3123 = vmatpush1.bf16.msra.mxu0 0
  %3124 = vmatprep.subr.bf16.mxu0 0
  %3125 = vmatpush1.bf16.msra.mxu0 0
  %3126 = vmatprep.mubr.bf16.mxu0 0
  %3127 = vmatmul.mubr.bf16.gmra.mrb[0].mxu0 %v3089
  %v3128 = vpop.f32.mrb[0].mxu0
  %v3129 = vadd.f32 %v3082, %v3128
  %v3130 = vpop.f32.mrb[0].mxu0
  %v3131 = vpop.f32.mrb[0].mxu0
  %v3132 = vadd.f32 %v3085, %v3131
  %v3133 = vpop.f32.mrb[0].mxu0
  %3134 = vdwg.mxu0
  %s3135 = scalar_lea.vmem %s1, 96
  %v3136 = vld [vmem:[%s3135] sm:$0xf]
  %v3137 = vld [vmem:[%s3135 + $0x4] sm:$0xf]
  %v3138 = vld [vmem:[%s3135 + $0x8] sm:$0xf]
  %v3139 = vld [vmem:[%s3135 + $0xc] sm:$0xf]
  %s3140 = scalar_lea.vmem %s4, 6
  %v3141 = vld [vmem:[%s3140] sm:$0x1]
  %v3143 = vlaneseq
  %v3144 = vshrl.u32 %v3143, 7
  %v3145 = vsub.s32 0, %v3144
  %v3146 = vrot.slane %v3141, %v3145
  %v3152 = vunpack.c.l.b16 %v3136
  %v3153 = vunpack.c.l.b16 %v3137
  %v3154 = vunpack.c.l.b16 %v3138
  %v3155 = vunpack.c.l.b16 %v3139
  %v3156 = vpack.c.b16 %v3153, %v3152
  %v3157 = vpack.c.b16 %v3155, %v3154
  %3160 = vmatprep.subr.bf16.mxu0 0
  %3161 = vmatpush1.bf16.msra.mxu0 %v3156
  %3162 = vmatprep.subr.bf16.mxu0 0
  %3163 = vmatpush1.bf16.msra.mxu0 %v3157
  %3164 = vmatprep.subr.bf16.mxu0 0
  %3165 = vmatpush1.bf16.msra.mxu0 0
  %3166 = vmatprep.subr.bf16.mxu0 0
  %3167 = vmatpush1.bf16.msra.mxu0 0
  %3168 = vmatprep.subr.bf16.mxu0 0
  %3169 = vmatpush1.bf16.msra.mxu0 0
  %3170 = vmatprep.subr.bf16.mxu0 0
  %3171 = vmatpush1.bf16.msra.mxu0 0
  %3172 = vmatprep.subr.bf16.mxu0 0
  %3173 = vmatpush1.bf16.msra.mxu0 0
  %3174 = vmatprep.subr.bf16.mxu0 0
  %3175 = vmatpush1.bf16.msra.mxu0 0
  %3176 = vmatprep.subr.bf16.mxu0 0
  %3177 = vmatpush1.bf16.msra.mxu0 0
  %3178 = vmatprep.subr.bf16.mxu0 0
  %3179 = vmatpush1.bf16.msra.mxu0 0
  %3180 = vmatprep.subr.bf16.mxu0 0
  %3181 = vmatpush1.bf16.msra.mxu0 0
  %3182 = vmatprep.subr.bf16.mxu0 0
  %3183 = vmatpush1.bf16.msra.mxu0 0
  %3184 = vmatprep.subr.bf16.mxu0 0
  %3185 = vmatpush1.bf16.msra.mxu0 0
  %3186 = vmatprep.subr.bf16.mxu0 0
  %3187 = vmatpush1.bf16.msra.mxu0 0
  %3188 = vmatprep.subr.bf16.mxu0 0
  %3189 = vmatpush1.bf16.msra.mxu0 0
  %3190 = vmatprep.subr.bf16.mxu0 0
  %3191 = vmatpush1.bf16.msra.mxu0 0
  %3192 = vmatprep.mubr.bf16.mxu0 0
  %3193 = vmatmul.mubr.bf16.gmra.mrb[0].mxu0 %v2230
  %v3194 = vpop.f32.mrb[0].mxu0
  %v3195 = vadd.f32 %v3146, %v3194
  %v3196 = vpop.f32.mrb[0].mxu0
  %v3197 = vpop.f32.mrb[0].mxu0
  %v3198 = vadd.f32 %v3146, %v3197
  %v3199 = vpop.f32.mrb[0].mxu0
  %3200 = vdwg.mxu0
  %s3201 = scalar_lea.vmem %s2, 96
  %v3202 = vld [vmem:[%s3201] sm:$0xf]
  %v3203 = vld [vmem:[%s3201 + $0x4] sm:$0xf]
  %v3204 = vld [vmem:[%s3201 + $0x8] sm:$0xf]
  %v3205 = vld [vmem:[%s3201 + $0xc] sm:$0xf]
  %s3206 = scalar_lea.vmem %s5, 6
  %v3207 = vld [vmem:[%s3206] sm:$0x1]
  %v3209 = vlaneseq
  %v3210 = vshrl.u32 %v3209, 7
  %v3211 = vsub.s32 0, %v3210
  %v3212 = vrot.slane %v3207, %v3211
  %v3218 = vunpack.c.l.b16 %v3202
  %v3219 = vunpack.c.l.b16 %v3203
  %v3220 = vunpack.c.l.b16 %v3204
  %v3221 = vunpack.c.l.b16 %v3205
  %v3222 = vpack.c.b16 %v3219, %v3218
  %v3223 = vpack.c.b16 %v3221, %v3220
  %3226 = vmatprep.subr.bf16.mxu0 0
  %3227 = vmatpush1.bf16.msra.mxu0 %v3222
  %3228 = vmatprep.subr.bf16.mxu0 0
  %3229 = vmatpush1.bf16.msra.mxu0 %v3223
  %3230 = vmatprep.subr.bf16.mxu0 0
  %3231 = vmatpush1.bf16.msra.mxu0 0
  %3232 = vmatprep.subr.bf16.mxu0 0
  %3233 = vmatpush1.bf16.msra.mxu0 0
  %3234 = vmatprep.subr.bf16.mxu0 0
  %3235 = vmatpush1.bf16.msra.mxu0 0
  %3236 = vmatprep.subr.bf16.mxu0 0
  %3237 = vmatpush1.bf16.msra.mxu0 0
  %3238 = vmatprep.subr.bf16.mxu0 0
  %3239 = vmatpush1.bf16.msra.mxu0 0
  %3240 = vmatprep.subr.bf16.mxu0 0
  %3241 = vmatpush1.bf16.msra.mxu0 0
  %3242 = vmatprep.subr.bf16.mxu0 0
  %3243 = vmatpush1.bf16.msra.mxu0 0
  %3244 = vmatprep.subr.bf16.mxu0 0
  %3245 = vmatpush1.bf16.msra.mxu0 0
  %3246 = vmatprep.subr.bf16.mxu0 0
  %3247 = vmatpush1.bf16.msra.mxu0 0
  %3248 = vmatprep.subr.bf16.mxu0 0
  %3249 = vmatpush1.bf16.msra.mxu0 0
  %3250 = vmatprep.subr.bf16.mxu0 0
  %3251 = vmatpush1.bf16.msra.mxu0 0
  %3252 = vmatprep.subr.bf16.mxu0 0
  %3253 = vmatpush1.bf16.msra.mxu0 0
  %3254 = vmatprep.subr.bf16.mxu0 0
  %3255 = vmatpush1.bf16.msra.mxu0 0
  %3256 = vmatprep.subr.bf16.mxu0 0
  %3257 = vmatpush1.bf16.msra.mxu0 0
  %3258 = vmatprep.mubr.bf16.mxu0 0
  %3259 = vmatmul.mubr.bf16.gmra.mrb[0].mxu0 %v2230
  %v3260 = vpop.f32.mrb[0].mxu0
  %v3261 = vadd.f32 %v3212, %v3260
  %v3262 = vpop.f32.mrb[0].mxu0
  %v3263 = vpop.f32.mrb[0].mxu0
  %v3264 = vadd.f32 %v3212, %v3263
  %v3265 = vpop.f32.mrb[0].mxu0
  %3266 = vdwg.mxu0
  %s3267 = scalar_lea.vmem %s3, 96
  %v3268 = vld [vmem:[%s3267] sm:$0xf]
  %v3269 = vld [vmem:[%s3267 + $0x4] sm:$0xf]
  %v3270 = vld [vmem:[%s3267 + $0x8] sm:$0xf]
  %v3271 = vld [vmem:[%s3267 + $0xc] sm:$0xf]
  %s3272 = scalar_lea.vmem %s6, 6
  %v3273 = vld [vmem:[%s3272] sm:$0x1]
  %v3275 = vlaneseq
  %v3276 = vshrl.u32 %v3275, 7
  %v3277 = vsub.s32 0, %v3276
  %v3278 = vrot.slane %v3273, %v3277
  %v3284 = vunpack.c.l.b16 %v3268
  %v3285 = vunpack.c.l.b16 %v3269
  %v3286 = vunpack.c.l.b16 %v3270
  %v3287 = vunpack.c.l.b16 %v3271
  %v3288 = vpack.c.b16 %v3285, %v3284
  %v3289 = vpack.c.b16 %v3287, %v3286
  %3292 = vmatprep.subr.bf16.mxu0 0
  %3293 = vmatpush1.bf16.msra.mxu0 %v3288
  %3294 = vmatprep.subr.bf16.mxu0 0
  %3295 = vmatpush1.bf16.msra.mxu0 %v3289
  %3296 = vmatprep.subr.bf16.mxu0 0
  %3297 = vmatpush1.bf16.msra.mxu0 0
  %3298 = vmatprep.subr.bf16.mxu0 0
  %3299 = vmatpush1.bf16.msra.mxu0 0
  %3300 = vmatprep.subr.bf16.mxu0 0
  %3301 = vmatpush1.bf16.msra.mxu0 0
  %3302 = vmatprep.subr.bf16.mxu0 0
  %3303 = vmatpush1.bf16.msra.mxu0 0
  %3304 = vmatprep.subr.bf16.mxu0 0
  %3305 = vmatpush1.bf16.msra.mxu0 0
  %3306 = vmatprep.subr.bf16.mxu0 0
  %3307 = vmatpush1.bf16.msra.mxu0 0
  %3308 = vmatprep.subr.bf16.mxu0 0
  %3309 = vmatpush1.bf16.msra.mxu0 0
  %3310 = vmatprep.subr.bf16.mxu0 0
  %3311 = vmatpush1.bf16.msra.mxu0 0
  %3312 = vmatprep.subr.bf16.mxu0 0
  %3313 = vmatpush1.bf16.msra.mxu0 0
  %3314 = vmatprep.subr.bf16.mxu0 0
  %3315 = vmatpush1.bf16.msra.mxu0 0
  %3316 = vmatprep.subr.bf16.mxu0 0
  %3317 = vmatpush1.bf16.msra.mxu0 0
  %3318 = vmatprep.subr.bf16.mxu0 0
  %3319 = vmatpush1.bf16.msra.mxu0 0
  %3320 = vmatprep.subr.bf16.mxu0 0
  %3321 = vmatpush1.bf16.msra.mxu0 0
  %3322 = vmatprep.subr.bf16.mxu0 0
  %3323 = vmatpush1.bf16.msra.mxu0 0
  %3324 = vmatprep.mubr.bf16.mxu0 0
  %3325 = vmatmul.mubr.bf16.gmra.mrb[0].mxu0 %v2230
  %v3326 = vpop.f32.mrb[0].mxu0
  %v3327 = vadd.f32 %v3278, %v3326
  %v3328 = vpop.f32.mrb[0].mxu0
  %v3329 = vpop.f32.mrb[0].mxu0
  %v3330 = vadd.f32 %v3278, %v3329
  %v3331 = vpop.f32.mrb[0].mxu0
  %3332 = vdwg.mxu0
  %v3333 = vpack.c.bf16 %v3195, %v3195
  %v3334 = vpack.c.bf16 %v3198, %v3198
  %v3335 = vpack.c.bf16 %v3261, %v3261
  %v3336 = vpack.c.bf16 %v3264, %v3264
  %v3337 = vpack.c.bf16 %v3327, %v3327
  %v3338 = vpack.c.bf16 %v3330, %v3330
  %v3340 = vsel %vm289, %v3333, 0
  %v3343 = vsel %vm289, %v3335, 0
  %3345 = vmatprep.subr.bf16.mxu0 0
  %3346 = vmatpush1.bf16.xpose.msra.mxu0 %v3343
  %3347 = vmatprep.subr.bf16.mxu0 0
  %3348 = vmatpush1.bf16.xpose.msra.mxu0 0
  %3349 = vmatprep.subr.bf16.mxu0 0
  %3350 = vmatpush1.bf16.xpose.msra.mxu0 0
  %3351 = vmatprep.subr.bf16.mxu0 0
  %3352 = vmatpush1.bf16.xpose.msra.mxu0 0
  %3353 = vmatprep.subr.bf16.mxu0 0
  %3354 = vmatpush1.bf16.xpose.msra.mxu0 0
  %3355 = vmatprep.subr.bf16.mxu0 0
  %3356 = vmatpush1.bf16.xpose.msra.mxu0 0
  %3357 = vmatprep.subr.bf16.mxu0 0
  %3358 = vmatpush1.bf16.xpose.msra.mxu0 0
  %3359 = vmatprep.subr.bf16.mxu0 0
  %3360 = vmatpush1.bf16.xpose.msra.mxu0 0
  %3361 = vmatprep.subr.bf16.mxu0 0
  %3362 = vmatpush1.bf16.xpose.msra.mxu0 0
  %3363 = vmatprep.subr.bf16.mxu0 0
  %3364 = vmatpush1.bf16.xpose.msra.mxu0 0
  %3365 = vmatprep.subr.bf16.mxu0 0
  %3366 = vmatpush1.bf16.xpose.msra.mxu0 0
  %3367 = vmatprep.subr.bf16.mxu0 0
  %3368 = vmatpush1.bf16.xpose.msra.mxu0 0
  %3369 = vmatprep.subr.bf16.mxu0 0
  %3370 = vmatpush1.bf16.xpose.msra.mxu0 0
  %3371 = vmatprep.subr.bf16.mxu0 0
  %3372 = vmatpush1.bf16.xpose.msra.mxu0 0
  %3373 = vmatprep.subr.bf16.mxu0 0
  %3374 = vmatpush1.bf16.xpose.msra.mxu0 0
  %3375 = vmatprep.subr.bf16.mxu0 0
  %3376 = vmatpush1.bf16.xpose.msra.mxu0 0
  %3377 = vmatprep.mubr.bf16.mxu0 0
  %3378 = vmatmul.mubr.bf16.gmra.mrb[0].mxu0 %v3340
  %v3379 = vpop.f32.mrb[0].mxu0
  %v3380 = vadd.f32 0.0, %v3379
  %v3381 = vpop.f32.mrb[0].mxu0
  %v3382 = vpop.f32.mrb[0].mxu0
  %v3383 = vpop.f32.mrb[0].mxu0
  %3384 = vdwg.mxu0
  %v3386 = vsel %vm289, %v3334, 0
  %v3389 = vsel %vm289, %v3336, 0
  %3391 = vmatprep.subr.bf16.mxu0 0
  %3392 = vmatpush1.bf16.xpose.msra.mxu0 %v3389
  %3393 = vmatprep.subr.bf16.mxu0 0
  %3394 = vmatpush1.bf16.xpose.msra.mxu0 0
  %3395 = vmatprep.subr.bf16.mxu0 0
  %3396 = vmatpush1.bf16.xpose.msra.mxu0 0
  %3397 = vmatprep.subr.bf16.mxu0 0
  %3398 = vmatpush1.bf16.xpose.msra.mxu0 0
  %3399 = vmatprep.subr.bf16.mxu0 0
  %3400 = vmatpush1.bf16.xpose.msra.mxu0 0
  %3401 = vmatprep.subr.bf16.mxu0 0
  %3402 = vmatpush1.bf16.xpose.msra.mxu0 0
  %3403 = vmatprep.subr.bf16.mxu0 0
  %3404 = vmatpush1.bf16.xpose.msra.mxu0 0
  %3405 = vmatprep.subr.bf16.mxu0 0
  %3406 = vmatpush1.bf16.xpose.msra.mxu0 0
  %3407 = vmatprep.subr.bf16.mxu0 0
  %3408 = vmatpush1.bf16.xpose.msra.mxu0 0
  %3409 = vmatprep.subr.bf16.mxu0 0
  %3410 = vmatpush1.bf16.xpose.msra.mxu0 0
  %3411 = vmatprep.subr.bf16.mxu0 0
  %3412 = vmatpush1.bf16.xpose.msra.mxu0 0
  %3413 = vmatprep.subr.bf16.mxu0 0
  %3414 = vmatpush1.bf16.xpose.msra.mxu0 0
  %3415 = vmatprep.subr.bf16.mxu0 0
  %3416 = vmatpush1.bf16.xpose.msra.mxu0 0
  %3417 = vmatprep.subr.bf16.mxu0 0
  %3418 = vmatpush1.bf16.xpose.msra.mxu0 0
  %3419 = vmatprep.subr.bf16.mxu0 0
  %3420 = vmatpush1.bf16.xpose.msra.mxu0 0
  %3421 = vmatprep.subr.bf16.mxu0 0
  %3422 = vmatpush1.bf16.xpose.msra.mxu0 0
  %3423 = vmatprep.mubr.bf16.mxu0 0
  %3424 = vmatmul.mubr.bf16.gmra.mrb[0].mxu0 %v3386
  %v3425 = vpop.f32.mrb[0].mxu0
  %v3426 = vadd.f32 0.0, %v3425
  %v3427 = vpop.f32.mrb[0].mxu0
  %v3428 = vpop.f32.mrb[0].mxu0
  %v3429 = vpop.f32.mrb[0].mxu0
  %3430 = vdwg.mxu0
  %v3431 = vmul.f32 %v3380, 0.35355338
  %v3432 = vmul.f32 %v3426, 0.35355338
  %v3433 = vsel %vm289, %v3431, -inf
  %3434 = vmax.xlane.f32.xlu0 %v3433
  %v3435 = vpop.xlane.xlu0 %3434
  %v3436 = vsel %vm289, %v3432, -inf
  %3437 = vmax.xlane.f32.xlu0 %v3436
  %v3438 = vpop.xlane.xlu0 %3437
  %v3439 = vsub.f32 %v3431, %v3435
  %v3440 = vsub.f32 %v3432, %v3438
  %v3441 = vmul.f32 %v3439, 1.442695
  %v3442 = vpow.pop %v3441
  %v3443 = vmul.f32 %v3440, 1.442695
  %v3444 = vpow.pop %v3443
  %v3445 = vsel %vm289, %v3442, 0.0
  %3446 = vadd.xlane.f32.xlu0 %v3445
  %v3447 = vpop.xlane.xlu0 %3446
  %v3448 = vsel %vm289, %v3444, 0.0
  %3449 = vadd.xlane.f32.xlu0 %v3448
  %v3450 = vpop.xlane.xlu0 %3449
  %v3451 = vrcp.pop %v3447
  %v3452 = vrcp.pop %v3450
  %v3453 = vmul.f32 %v3442, %v3451
  %v3454 = vmul.f32 %v3444, %v3452
  %v3455 = vpack.c.bf16 %v3453, %v3453
  %v3456 = vpack.c.bf16 %v3454, %v3454
  %v3458 = vsel %vm289, %v3455, 0
  %v3461 = vsel %vm411, %v3337, 0
  %3463 = vmatprep.subr.bf16.mxu0 0
  %3464 = vmatpush1.bf16.msra.mxu0 %v3461
  %3465 = vmatprep.subr.bf16.mxu0 0
  %3466 = vmatpush1.bf16.msra.mxu0 0
  %3467 = vmatprep.subr.bf16.mxu0 0
  %3468 = vmatpush1.bf16.msra.mxu0 0
  %3469 = vmatprep.subr.bf16.mxu0 0
  %3470 = vmatpush1.bf16.msra.mxu0 0
  %3471 = vmatprep.subr.bf16.mxu0 0
  %3472 = vmatpush1.bf16.msra.mxu0 0
  %3473 = vmatprep.subr.bf16.mxu0 0
  %3474 = vmatpush1.bf16.msra.mxu0 0
  %3475 = vmatprep.subr.bf16.mxu0 0
  %3476 = vmatpush1.bf16.msra.mxu0 0
  %3477 = vmatprep.subr.bf16.mxu0 0
  %3478 = vmatpush1.bf16.msra.mxu0 0
  %3479 = vmatprep.subr.bf16.mxu0 0
  %3480 = vmatpush1.bf16.msra.mxu0 0
  %3481 = vmatprep.subr.bf16.mxu0 0
  %3482 = vmatpush1.bf16.msra.mxu0 0
  %3483 = vmatprep.subr.bf16.mxu0 0
  %3484 = vmatpush1.bf16.msra.mxu0 0
  %3485 = vmatprep.subr.bf16.mxu0 0
  %3486 = vmatpush1.bf16.msra.mxu0 0
  %3487 = vmatprep.subr.bf16.mxu0 0
  %3488 = vmatpush1.bf16.msra.mxu0 0
  %3489 = vmatprep.subr.bf16.mxu0 0
  %3490 = vmatpush1.bf16.msra.mxu0 0
  %3491 = vmatprep.subr.bf16.mxu0 0
  %3492 = vmatpush1.bf16.msra.mxu0 0
  %3493 = vmatprep.subr.bf16.mxu0 0
  %3494 = vmatpush1.bf16.msra.mxu0 0
  %3495 = vmatprep.mubr.bf16.mxu0 0
  %3496 = vmatmul.mubr.bf16.gmra.mrb[0].mxu0 %v3458
  %v3497 = vpop.f32.mrb[0].mxu0
  %v3498 = vadd.f32 0.0, %v3497
  %v3499 = vpop.f32.mrb[0].mxu0
  %v3500 = vpop.f32.mrb[0].mxu0
  %v3501 = vpop.f32.mrb[0].mxu0
  %3502 = vdwg.mxu0
  %v3504 = vsel %vm289, %v3456, 0
  %v3507 = vsel %vm411, %v3338, 0
  %3509 = vmatprep.subr.bf16.mxu0 0
  %3510 = vmatpush1.bf16.msra.mxu0 %v3507
  %3511 = vmatprep.subr.bf16.mxu0 0
  %3512 = vmatpush1.bf16.msra.mxu0 0
  %3513 = vmatprep.subr.bf16.mxu0 0
  %3514 = vmatpush1.bf16.msra.mxu0 0
  %3515 = vmatprep.subr.bf16.mxu0 0
  %3516 = vmatpush1.bf16.msra.mxu0 0
  %3517 = vmatprep.subr.bf16.mxu0 0
  %3518 = vmatpush1.bf16.msra.mxu0 0
  %3519 = vmatprep.subr.bf16.mxu0 0
  %3520 = vmatpush1.bf16.msra.mxu0 0
  %3521 = vmatprep.subr.bf16.mxu0 0
  %3522 = vmatpush1.bf16.msra.mxu0 0
  %3523 = vmatprep.subr.bf16.mxu0 0
  %3524 = vmatpush1.bf16.msra.mxu0 0
  %3525 = vmatprep.subr.bf16.mxu0 0
  %3526 = vmatpush1.bf16.msra.mxu0 0
  %3527 = vmatprep.subr.bf16.mxu0 0
  %3528 = vmatpush1.bf16.msra.mxu0 0
  %3529 = vmatprep.subr.bf16.mxu0 0
  %3530 = vmatpush1.bf16.msra.mxu0 0
  %3531 = vmatprep.subr.bf16.mxu0 0
  %3532 = vmatpush1.bf16.msra.mxu0 0
  %3533 = vmatprep.subr.bf16.mxu0 0
  %3534 = vmatpush1.bf16.msra.mxu0 0
  %3535 = vmatprep.subr.bf16.mxu0 0
  %3536 = vmatpush1.bf16.msra.mxu0 0
  %3537 = vmatprep.subr.bf16.mxu0 0
  %3538 = vmatpush1.bf16.msra.mxu0 0
  %3539 = vmatprep.subr.bf16.mxu0 0
  %3540 = vmatpush1.bf16.msra.mxu0 0
  %3541 = vmatprep.mubr.bf16.mxu0 0
  %3542 = vmatmul.mubr.bf16.gmra.mrb[0].mxu0 %v3504
  %v3543 = vpop.f32.mrb[0].mxu0
  %v3544 = vadd.f32 0.0, %v3543
  %v3545 = vpop.f32.mrb[0].mxu0
  %v3546 = vpop.f32.mrb[0].mxu0
  %v3547 = vpop.f32.mrb[0].mxu0
  %3548 = vdwg.mxu0
  %s3549 = scalar_lea.vmem %s7, 24
  %v3550 = vld [vmem:[%s3549] sm:$0xf]
  %v3551 = vpack.c.bf16 %v3544, %v3498
  %v3553 = vsel %vm289, %v3551, 0
  %v3556 = vsel %vm411, %v3550, 0
  %3558 = vmatprep.subr.bf16.mxu0 0
  %3559 = vmatpush1.bf16.msra.mxu0 %v3556
  %3560 = vmatprep.subr.bf16.mxu0 0
  %3561 = vmatpush1.bf16.msra.mxu0 0
  %3562 = vmatprep.subr.bf16.mxu0 0
  %3563 = vmatpush1.bf16.msra.mxu0 0
  %3564 = vmatprep.subr.bf16.mxu0 0
  %3565 = vmatpush1.bf16.msra.mxu0 0
  %3566 = vmatprep.subr.bf16.mxu0 0
  %3567 = vmatpush1.bf16.msra.mxu0 0
  %3568 = vmatprep.subr.bf16.mxu0 0
  %3569 = vmatpush1.bf16.msra.mxu0 0
  %3570 = vmatprep.subr.bf16.mxu0 0
  %3571 = vmatpush1.bf16.msra.mxu0 0
  %3572 = vmatprep.subr.bf16.mxu0 0
  %3573 = vmatpush1.bf16.msra.mxu0 0
  %3574 = vmatprep.subr.bf16.mxu0 0
  %3575 = vmatpush1.bf16.msra.mxu0 0
  %3576 = vmatprep.subr.bf16.mxu0 0
  %3577 = vmatpush1.bf16.msra.mxu0 0
  %3578 = vmatprep.subr.bf16.mxu0 0
  %3579 = vmatpush1.bf16.msra.mxu0 0
  %3580 = vmatprep.subr.bf16.mxu0 0
  %3581 = vmatpush1.bf16.msra.mxu0 0
  %3582 = vmatprep.subr.bf16.mxu0 0
  %3583 = vmatpush1.bf16.msra.mxu0 0
  %3584 = vmatprep.subr.bf16.mxu0 0
  %3585 = vmatpush1.bf16.msra.mxu0 0
  %3586 = vmatprep.subr.bf16.mxu0 0
  %3587 = vmatpush1.bf16.msra.mxu0 0
  %3588 = vmatprep.subr.bf16.mxu0 0
  %3589 = vmatpush1.bf16.msra.mxu0 0
  %3590 = vmatprep.mubr.bf16.mxu0 0
  %3591 = vmatmul.mubr.bf16.gmra.mrb[0].mxu0 %v3553
  %v3592 = vpop.f32.mrb[0].mxu0
  %v3593 = vadd.f32 0.0, %v3592
  %v3594 = vpop.f32.mrb[0].mxu0
  %v3595 = vpop.f32.mrb[0].mxu0
  %v3596 = vadd.f32 0.0, %v3595
  %v3597 = vpop.f32.mrb[0].mxu0
  %3598 = vdwg.mxu0
  %v3599 = vadd.f32 %v3129, %v3593
  %v3600 = vadd.f32 %v3132, %v3596
  %s3601 = scalar_lea.vmem %s1, 112
  %v3602 = vld [vmem:[%s3601] sm:$0xf]
  %v3603 = vld [vmem:[%s3601 + $0x4] sm:$0xf]
  %v3604 = vld [vmem:[%s3601 + $0x8] sm:$0xf]
  %v3605 = vld [vmem:[%s3601 + $0xc] sm:$0xf]
  %s3606 = scalar_lea.vmem %s4, 7
  %v3607 = vld [vmem:[%s3606] sm:$0x1]
  %v3609 = vlaneseq
  %v3610 = vshrl.u32 %v3609, 7
  %v3611 = vsub.s32 0, %v3610
  %v3612 = vrot.slane %v3607, %v3611
  %v3618 = vunpack.c.l.b16 %v3602
  %v3619 = vunpack.c.l.b16 %v3603
  %v3620 = vunpack.c.l.b16 %v3604
  %v3621 = vunpack.c.l.b16 %v3605
  %v3622 = vpack.c.b16 %v3619, %v3618
  %v3623 = vpack.c.b16 %v3621, %v3620
  %3626 = vmatprep.subr.bf16.mxu0 0
  %3627 = vmatpush1.bf16.msra.mxu0 %v3622
  %3628 = vmatprep.subr.bf16.mxu0 0
  %3629 = vmatpush1.bf16.msra.mxu0 %v3623
  %3630 = vmatprep.subr.bf16.mxu0 0
  %3631 = vmatpush1.bf16.msra.mxu0 0
  %3632 = vmatprep.subr.bf16.mxu0 0
  %3633 = vmatpush1.bf16.msra.mxu0 0
  %3634 = vmatprep.subr.bf16.mxu0 0
  %3635 = vmatpush1.bf16.msra.mxu0 0
  %3636 = vmatprep.subr.bf16.mxu0 0
  %3637 = vmatpush1.bf16.msra.mxu0 0
  %3638 = vmatprep.subr.bf16.mxu0 0
  %3639 = vmatpush1.bf16.msra.mxu0 0
  %3640 = vmatprep.subr.bf16.mxu0 0
  %3641 = vmatpush1.bf16.msra.mxu0 0
  %3642 = vmatprep.subr.bf16.mxu0 0
  %3643 = vmatpush1.bf16.msra.mxu0 0
  %3644 = vmatprep.subr.bf16.mxu0 0
  %3645 = vmatpush1.bf16.msra.mxu0 0
  %3646 = vmatprep.subr.bf16.mxu0 0
  %3647 = vmatpush1.bf16.msra.mxu0 0
  %3648 = vmatprep.subr.bf16.mxu0 0
  %3649 = vmatpush1.bf16.msra.mxu0 0
  %3650 = vmatprep.subr.bf16.mxu0 0
  %3651 = vmatpush1.bf16.msra.mxu0 0
  %3652 = vmatprep.subr.bf16.mxu0 0
  %3653 = vmatpush1.bf16.msra.mxu0 0
  %3654 = vmatprep.subr.bf16.mxu0 0
  %3655 = vmatpush1.bf16.msra.mxu0 0
  %3656 = vmatprep.subr.bf16.mxu0 0
  %3657 = vmatpush1.bf16.msra.mxu0 0
  %3658 = vmatprep.mubr.bf16.mxu0 0
  %3659 = vmatmul.mubr.bf16.gmra.mrb[0].mxu0 %v2230
  %v3660 = vpop.f32.mrb[0].mxu0
  %v3661 = vadd.f32 %v3612, %v3660
  %v3662 = vpop.f32.mrb[0].mxu0
  %v3663 = vpop.f32.mrb[0].mxu0
  %v3664 = vadd.f32 %v3612, %v3663
  %v3665 = vpop.f32.mrb[0].mxu0
  %3666 = vdwg.mxu0
  %s3667 = scalar_lea.vmem %s2, 112
  %v3668 = vld [vmem:[%s3667] sm:$0xf]
  %v3669 = vld [vmem:[%s3667 + $0x4] sm:$0xf]
  %v3670 = vld [vmem:[%s3667 + $0x8] sm:$0xf]
  %v3671 = vld [vmem:[%s3667 + $0xc] sm:$0xf]
  %s3672 = scalar_lea.vmem %s5, 7
  %v3673 = vld [vmem:[%s3672] sm:$0x1]
  %v3675 = vlaneseq
  %v3676 = vshrl.u32 %v3675, 7
  %v3677 = vsub.s32 0, %v3676
  %v3678 = vrot.slane %v3673, %v3677
  %v3684 = vunpack.c.l.b16 %v3668
  %v3685 = vunpack.c.l.b16 %v3669
  %v3686 = vunpack.c.l.b16 %v3670
  %v3687 = vunpack.c.l.b16 %v3671
  %v3688 = vpack.c.b16 %v3685, %v3684
  %v3689 = vpack.c.b16 %v3687, %v3686
  %3692 = vmatprep.subr.bf16.mxu0 0
  %3693 = vmatpush1.bf16.msra.mxu0 %v3688
  %3694 = vmatprep.subr.bf16.mxu0 0
  %3695 = vmatpush1.bf16.msra.mxu0 %v3689
  %3696 = vmatprep.subr.bf16.mxu0 0
  %3697 = vmatpush1.bf16.msra.mxu0 0
  %3698 = vmatprep.subr.bf16.mxu0 0
  %3699 = vmatpush1.bf16.msra.mxu0 0
  %3700 = vmatprep.subr.bf16.mxu0 0
  %3701 = vmatpush1.bf16.msra.mxu0 0
  %3702 = vmatprep.subr.bf16.mxu0 0
  %3703 = vmatpush1.bf16.msra.mxu0 0
  %3704 = vmatprep.subr.bf16.mxu0 0
  %3705 = vmatpush1.bf16.msra.mxu0 0
  %3706 = vmatprep.subr.bf16.mxu0 0
  %3707 = vmatpush1.bf16.msra.mxu0 0
  %3708 = vmatprep.subr.bf16.mxu0 0
  %3709 = vmatpush1.bf16.msra.mxu0 0
  %3710 = vmatprep.subr.bf16.mxu0 0
  %3711 = vmatpush1.bf16.msra.mxu0 0
  %3712 = vmatprep.subr.bf16.mxu0 0
  %3713 = vmatpush1.bf16.msra.mxu0 0
  %3714 = vmatprep.subr.bf16.mxu0 0
  %3715 = vmatpush1.bf16.msra.mxu0 0
  %3716 = vmatprep.subr.bf16.mxu0 0
  %3717 = vmatpush1.bf16.msra.mxu0 0
  %3718 = vmatprep.subr.bf16.mxu0 0
  %3719 = vmatpush1.bf16.msra.mxu0 0
  %3720 = vmatprep.subr.bf16.mxu0 0
  %3721 = vmatpush1.bf16.msra.mxu0 0
  %3722 = vmatprep.subr.bf16.mxu0 0
  %3723 = vmatpush1.bf16.msra.mxu0 0
  %3724 = vmatprep.mubr.bf16.mxu0 0
  %3725 = vmatmul.mubr.bf16.gmra.mrb[0].mxu0 %v2230
  %v3726 = vpop.f32.mrb[0].mxu0
  %v3727 = vadd.f32 %v3678, %v3726
  %v3728 = vpop.f32.mrb[0].mxu0
  %v3729 = vpop.f32.mrb[0].mxu0
  %v3730 = vadd.f32 %v3678, %v3729
  %v3731 = vpop.f32.mrb[0].mxu0
  %3732 = vdwg.mxu0
  %s3733 = scalar_lea.vmem %s3, 112
  %v3734 = vld [vmem:[%s3733] sm:$0xf]
  %v3735 = vld [vmem:[%s3733 + $0x4] sm:$0xf]
  %v3736 = vld [vmem:[%s3733 + $0x8] sm:$0xf]
  %v3737 = vld [vmem:[%s3733 + $0xc] sm:$0xf]
  %s3738 = scalar_lea.vmem %s6, 7
  %v3739 = vld [vmem:[%s3738] sm:$0x1]
  %v3741 = vlaneseq
  %v3742 = vshrl.u32 %v3741, 7
  %v3743 = vsub.s32 0, %v3742
  %v3744 = vrot.slane %v3739, %v3743
  %v3750 = vunpack.c.l.b16 %v3734
  %v3751 = vunpack.c.l.b16 %v3735
  %v3752 = vunpack.c.l.b16 %v3736
  %v3753 = vunpack.c.l.b16 %v3737
  %v3754 = vpack.c.b16 %v3751, %v3750
  %v3755 = vpack.c.b16 %v3753, %v3752
  %3758 = vmatprep.subr.bf16.mxu0 0
  %3759 = vmatpush1.bf16.msra.mxu0 %v3754
  %3760 = vmatprep.subr.bf16.mxu0 0
  %3761 = vmatpush1.bf16.msra.mxu0 %v3755
  %3762 = vmatprep.subr.bf16.mxu0 0
  %3763 = vmatpush1.bf16.msra.mxu0 0
  %3764 = vmatprep.subr.bf16.mxu0 0
  %3765 = vmatpush1.bf16.msra.mxu0 0
  %3766 = vmatprep.subr.bf16.mxu0 0
  %3767 = vmatpush1.bf16.msra.mxu0 0
  %3768 = vmatprep.subr.bf16.mxu0 0
  %3769 = vmatpush1.bf16.msra.mxu0 0
  %3770 = vmatprep.subr.bf16.mxu0 0
  %3771 = vmatpush1.bf16.msra.mxu0 0
  %3772 = vmatprep.subr.bf16.mxu0 0
  %3773 = vmatpush1.bf16.msra.mxu0 0
  %3774 = vmatprep.subr.bf16.mxu0 0
  %3775 = vmatpush1.bf16.msra.mxu0 0
  %3776 = vmatprep.subr.bf16.mxu0 0
  %3777 = vmatpush1.bf16.msra.mxu0 0
  %3778 = vmatprep.subr.bf16.mxu0 0
  %3779 = vmatpush1.bf16.msra.mxu0 0
  %3780 = vmatprep.subr.bf16.mxu0 0
  %3781 = vmatpush1.bf16.msra.mxu0 0
  %3782 = vmatprep.subr.bf16.mxu0 0
  %3783 = vmatpush1.bf16.msra.mxu0 0
  %3784 = vmatprep.subr.bf16.mxu0 0
  %3785 = vmatpush1.bf16.msra.mxu0 0
  %3786 = vmatprep.subr.bf16.mxu0 0
  %3787 = vmatpush1.bf16.msra.mxu0 0
  %3788 = vmatprep.subr.bf16.mxu0 0
  %3789 = vmatpush1.bf16.msra.mxu0 0
  %3790 = vmatprep.mubr.bf16.mxu0 0
  %3791 = vmatmul.mubr.bf16.gmra.mrb[0].mxu0 %v2230
  %v3792 = vpop.f32.mrb[0].mxu0
  %v3793 = vadd.f32 %v3744, %v3792
  %v3794 = vpop.f32.mrb[0].mxu0
  %v3795 = vpop.f32.mrb[0].mxu0
  %v3796 = vadd.f32 %v3744, %v3795
  %v3797 = vpop.f32.mrb[0].mxu0
  %3798 = vdwg.mxu0
  %v3799 = vpack.c.bf16 %v3661, %v3661
  %v3800 = vpack.c.bf16 %v3664, %v3664
  %v3801 = vpack.c.bf16 %v3727, %v3727
  %v3802 = vpack.c.bf16 %v3730, %v3730
  %v3803 = vpack.c.bf16 %v3793, %v3793
  %v3804 = vpack.c.bf16 %v3796, %v3796
  %v3806 = vsel %vm289, %v3799, 0
  %v3809 = vsel %vm289, %v3801, 0
  %3811 = vmatprep.subr.bf16.mxu0 0
  %3812 = vmatpush1.bf16.xpose.msra.mxu0 %v3809
  %3813 = vmatprep.subr.bf16.mxu0 0
  %3814 = vmatpush1.bf16.xpose.msra.mxu0 0
  %3815 = vmatprep.subr.bf16.mxu0 0
  %3816 = vmatpush1.bf16.xpose.msra.mxu0 0
  %3817 = vmatprep.subr.bf16.mxu0 0
  %3818 = vmatpush1.bf16.xpose.msra.mxu0 0
  %3819 = vmatprep.subr.bf16.mxu0 0
  %3820 = vmatpush1.bf16.xpose.msra.mxu0 0
  %3821 = vmatprep.subr.bf16.mxu0 0
  %3822 = vmatpush1.bf16.xpose.msra.mxu0 0
  %3823 = vmatprep.subr.bf16.mxu0 0
  %3824 = vmatpush1.bf16.xpose.msra.mxu0 0
  %3825 = vmatprep.subr.bf16.mxu0 0
  %3826 = vmatpush1.bf16.xpose.msra.mxu0 0
  %3827 = vmatprep.subr.bf16.mxu0 0
  %3828 = vmatpush1.bf16.xpose.msra.mxu0 0
  %3829 = vmatprep.subr.bf16.mxu0 0
  %3830 = vmatpush1.bf16.xpose.msra.mxu0 0
  %3831 = vmatprep.subr.bf16.mxu0 0
  %3832 = vmatpush1.bf16.xpose.msra.mxu0 0
  %3833 = vmatprep.subr.bf16.mxu0 0
  %3834 = vmatpush1.bf16.xpose.msra.mxu0 0
  %3835 = vmatprep.subr.bf16.mxu0 0
  %3836 = vmatpush1.bf16.xpose.msra.mxu0 0
  %3837 = vmatprep.subr.bf16.mxu0 0
  %3838 = vmatpush1.bf16.xpose.msra.mxu0 0
  %3839 = vmatprep.subr.bf16.mxu0 0
  %3840 = vmatpush1.bf16.xpose.msra.mxu0 0
  %3841 = vmatprep.subr.bf16.mxu0 0
  %3842 = vmatpush1.bf16.xpose.msra.mxu0 0
  %3843 = vmatprep.mubr.bf16.mxu0 0
  %3844 = vmatmul.mubr.bf16.gmra.mrb[0].mxu0 %v3806
  %v3845 = vpop.f32.mrb[0].mxu0
  %v3846 = vadd.f32 0.0, %v3845
  %v3847 = vpop.f32.mrb[0].mxu0
  %v3848 = vpop.f32.mrb[0].mxu0
  %v3849 = vpop.f32.mrb[0].mxu0
  %3850 = vdwg.mxu0
  %v3852 = vsel %vm289, %v3800, 0
  %v3855 = vsel %vm289, %v3802, 0
  %3857 = vmatprep.subr.bf16.mxu0 0
  %3858 = vmatpush1.bf16.xpose.msra.mxu0 %v3855
  %3859 = vmatprep.subr.bf16.mxu0 0
  %3860 = vmatpush1.bf16.xpose.msra.mxu0 0
  %3861 = vmatprep.subr.bf16.mxu0 0
  %3862 = vmatpush1.bf16.xpose.msra.mxu0 0
  %3863 = vmatprep.subr.bf16.mxu0 0
  %3864 = vmatpush1.bf16.xpose.msra.mxu0 0
  %3865 = vmatprep.subr.bf16.mxu0 0
  %3866 = vmatpush1.bf16.xpose.msra.mxu0 0
  %3867 = vmatprep.subr.bf16.mxu0 0
  %3868 = vmatpush1.bf16.xpose.msra.mxu0 0
  %3869 = vmatprep.subr.bf16.mxu0 0
  %3870 = vmatpush1.bf16.xpose.msra.mxu0 0
  %3871 = vmatprep.subr.bf16.mxu0 0
  %3872 = vmatpush1.bf16.xpose.msra.mxu0 0
  %3873 = vmatprep.subr.bf16.mxu0 0
  %3874 = vmatpush1.bf16.xpose.msra.mxu0 0
  %3875 = vmatprep.subr.bf16.mxu0 0
  %3876 = vmatpush1.bf16.xpose.msra.mxu0 0
  %3877 = vmatprep.subr.bf16.mxu0 0
  %3878 = vmatpush1.bf16.xpose.msra.mxu0 0
  %3879 = vmatprep.subr.bf16.mxu0 0
  %3880 = vmatpush1.bf16.xpose.msra.mxu0 0
  %3881 = vmatprep.subr.bf16.mxu0 0
  %3882 = vmatpush1.bf16.xpose.msra.mxu0 0
  %3883 = vmatprep.subr.bf16.mxu0 0
  %3884 = vmatpush1.bf16.xpose.msra.mxu0 0
  %3885 = vmatprep.subr.bf16.mxu0 0
  %3886 = vmatpush1.bf16.xpose.msra.mxu0 0
  %3887 = vmatprep.subr.bf16.mxu0 0
  %3888 = vmatpush1.bf16.xpose.msra.mxu0 0
  %3889 = vmatprep.mubr.bf16.mxu0 0
  %3890 = vmatmul.mubr.bf16.gmra.mrb[0].mxu0 %v3852
  %v3891 = vpop.f32.mrb[0].mxu0
  %v3892 = vadd.f32 0.0, %v3891
  %v3893 = vpop.f32.mrb[0].mxu0
  %v3894 = vpop.f32.mrb[0].mxu0
  %v3895 = vpop.f32.mrb[0].mxu0
  %3896 = vdwg.mxu0
  %v3897 = vmul.f32 %v3846, 0.35355338
  %v3898 = vmul.f32 %v3892, 0.35355338
  %v3899 = vsel %vm289, %v3897, -inf
  %3900 = vmax.xlane.f32.xlu0 %v3899
  %v3901 = vpop.xlane.xlu0 %3900
  %v3902 = vsel %vm289, %v3898, -inf
  %3903 = vmax.xlane.f32.xlu0 %v3902
  %v3904 = vpop.xlane.xlu0 %3903
  %v3905 = vsub.f32 %v3897, %v3901
  %v3906 = vsub.f32 %v3898, %v3904
  %v3907 = vmul.f32 %v3905, 1.442695
  %v3908 = vpow.pop %v3907
  %v3909 = vmul.f32 %v3906, 1.442695
  %v3910 = vpow.pop %v3909
  %v3911 = vsel %vm289, %v3908, 0.0
  %3912 = vadd.xlane.f32.xlu0 %v3911
  %v3913 = vpop.xlane.xlu0 %3912
  %v3914 = vsel %vm289, %v3910, 0.0
  %3915 = vadd.xlane.f32.xlu0 %v3914
  %v3916 = vpop.xlane.xlu0 %3915
  %v3917 = vrcp.pop %v3913
  %v3918 = vrcp.pop %v3916
  %v3919 = vmul.f32 %v3908, %v3917
  %v3920 = vmul.f32 %v3910, %v3918
  %v3921 = vpack.c.bf16 %v3919, %v3919
  %v3922 = vpack.c.bf16 %v3920, %v3920
  %v3924 = vsel %vm289, %v3921, 0
  %v3927 = vsel %vm411, %v3803, 0
  %3929 = vmatprep.subr.bf16.mxu0 0
  %3930 = vmatpush1.bf16.msra.mxu0 %v3927
  %3931 = vmatprep.subr.bf16.mxu0 0
  %3932 = vmatpush1.bf16.msra.mxu0 0
  %3933 = vmatprep.subr.bf16.mxu0 0
  %3934 = vmatpush1.bf16.msra.mxu0 0
  %3935 = vmatprep.subr.bf16.mxu0 0
  %3936 = vmatpush1.bf16.msra.mxu0 0
  %3937 = vmatprep.subr.bf16.mxu0 0
  %3938 = vmatpush1.bf16.msra.mxu0 0
  %3939 = vmatprep.subr.bf16.mxu0 0
  %3940 = vmatpush1.bf16.msra.mxu0 0
  %3941 = vmatprep.subr.bf16.mxu0 0
  %3942 = vmatpush1.bf16.msra.mxu0 0
  %3943 = vmatprep.subr.bf16.mxu0 0
  %3944 = vmatpush1.bf16.msra.mxu0 0
  %3945 = vmatprep.subr.bf16.mxu0 0
  %3946 = vmatpush1.bf16.msra.mxu0 0
  %3947 = vmatprep.subr.bf16.mxu0 0
  %3948 = vmatpush1.bf16.msra.mxu0 0
  %3949 = vmatprep.subr.bf16.mxu0 0
  %3950 = vmatpush1.bf16.msra.mxu0 0
  %3951 = vmatprep.subr.bf16.mxu0 0
  %3952 = vmatpush1.bf16.msra.mxu0 0
  %3953 = vmatprep.subr.bf16.mxu0 0
  %3954 = vmatpush1.bf16.msra.mxu0 0
  %3955 = vmatprep.subr.bf16.mxu0 0
  %3956 = vmatpush1.bf16.msra.mxu0 0
  %3957 = vmatprep.subr.bf16.mxu0 0
  %3958 = vmatpush1.bf16.msra.mxu0 0
  %3959 = vmatprep.subr.bf16.mxu0 0
  %3960 = vmatpush1.bf16.msra.mxu0 0
  %3961 = vmatprep.mubr.bf16.mxu0 0
  %3962 = vmatmul.mubr.bf16.gmra.mrb[0].mxu0 %v3924
  %v3963 = vpop.f32.mrb[0].mxu0
  %v3964 = vadd.f32 0.0, %v3963
  %v3965 = vpop.f32.mrb[0].mxu0
  %v3966 = vpop.f32.mrb[0].mxu0
  %v3967 = vpop.f32.mrb[0].mxu0
  %3968 = vdwg.mxu0
  %v3970 = vsel %vm289, %v3922, 0
  %v3973 = vsel %vm411, %v3804, 0
  %3975 = vmatprep.subr.bf16.mxu0 0
  %3976 = vmatpush1.bf16.msra.mxu0 %v3973
  %3977 = vmatprep.subr.bf16.mxu0 0
  %3978 = vmatpush1.bf16.msra.mxu0 0
  %3979 = vmatprep.subr.bf16.mxu0 0
  %3980 = vmatpush1.bf16.msra.mxu0 0
  %3981 = vmatprep.subr.bf16.mxu0 0
  %3982 = vmatpush1.bf16.msra.mxu0 0
  %3983 = vmatprep.subr.bf16.mxu0 0
  %3984 = vmatpush1.bf16.msra.mxu0 0
  %3985 = vmatprep.subr.bf16.mxu0 0
  %3986 = vmatpush1.bf16.msra.mxu0 0
  %3987 = vmatprep.subr.bf16.mxu0 0
  %3988 = vmatpush1.bf16.msra.mxu0 0
  %3989 = vmatprep.subr.bf16.mxu0 0
  %3990 = vmatpush1.bf16.msra.mxu0 0
  %3991 = vmatprep.subr.bf16.mxu0 0
  %3992 = vmatpush1.bf16.msra.mxu0 0
  %3993 = vmatprep.subr.bf16.mxu0 0
  %3994 = vmatpush1.bf16.msra.mxu0 0
  %3995 = vmatprep.subr.bf16.mxu0 0
  %3996 = vmatpush1.bf16.msra.mxu0 0
  %3997 = vmatprep.subr.bf16.mxu0 0
  %3998 = vmatpush1.bf16.msra.mxu0 0
  %3999 = vmatprep.subr.bf16.mxu0 0
  %4000 = vmatpush1.bf16.msra.mxu0 0
  %4001 = vmatprep.subr.bf16.mxu0 0
  %4002 = vmatpush1.bf16.msra.mxu0 0
  %4003 = vmatprep.subr.bf16.mxu0 0
  %4004 = vmatpush1.bf16.msra.mxu0 0
  %4005 = vmatprep.subr.bf16.mxu0 0
  %4006 = vmatpush1.bf16.msra.mxu0 0
  %4007 = vmatprep.mubr.bf16.mxu0 0
  %4008 = vmatmul.mubr.bf16.gmra.mrb[0].mxu0 %v3970
  %v4009 = vpop.f32.mrb[0].mxu0
  %v4010 = vadd.f32 0.0, %v4009
  %v4011 = vpop.f32.mrb[0].mxu0
  %v4012 = vpop.f32.mrb[0].mxu0
  %v4013 = vpop.f32.mrb[0].mxu0
  %4014 = vdwg.mxu0
  %s4015 = scalar_lea.vmem %s7, 28
  %v4016 = vld [vmem:[%s4015] sm:$0xf]
  %v4017 = vpack.c.bf16 %v4010, %v3964
  %v4019 = vsel %vm289, %v4017, 0
  %v4022 = vsel %vm411, %v4016, 0
  %4024 = vmatprep.subr.bf16.mxu0 0
  %4025 = vmatpush1.bf16.msra.mxu0 %v4022
  %4026 = vmatprep.subr.bf16.mxu0 0
  %4027 = vmatpush1.bf16.msra.mxu0 0
  %4028 = vmatprep.subr.bf16.mxu0 0
  %4029 = vmatpush1.bf16.msra.mxu0 0
  %4030 = vmatprep.subr.bf16.mxu0 0
  %4031 = vmatpush1.bf16.msra.mxu0 0
  %4032 = vmatprep.subr.bf16.mxu0 0
  %4033 = vmatpush1.bf16.msra.mxu0 0
  %4034 = vmatprep.subr.bf16.mxu0 0
  %4035 = vmatpush1.bf16.msra.mxu0 0
  %4036 = vmatprep.subr.bf16.mxu0 0
  %4037 = vmatpush1.bf16.msra.mxu0 0
  %4038 = vmatprep.subr.bf16.mxu0 0
  %4039 = vmatpush1.bf16.msra.mxu0 0
  %4040 = vmatprep.subr.bf16.mxu0 0
  %4041 = vmatpush1.bf16.msra.mxu0 0
  %4042 = vmatprep.subr.bf16.mxu0 0
  %4043 = vmatpush1.bf16.msra.mxu0 0
  %4044 = vmatprep.subr.bf16.mxu0 0
  %4045 = vmatpush1.bf16.msra.mxu0 0
  %4046 = vmatprep.subr.bf16.mxu0 0
  %4047 = vmatpush1.bf16.msra.mxu0 0
  %4048 = vmatprep.subr.bf16.mxu0 0
  %4049 = vmatpush1.bf16.msra.mxu0 0
  %4050 = vmatprep.subr.bf16.mxu0 0
  %4051 = vmatpush1.bf16.msra.mxu0 0
  %4052 = vmatprep.subr.bf16.mxu0 0
  %4053 = vmatpush1.bf16.msra.mxu0 0
  %4054 = vmatprep.subr.bf16.mxu0 0
  %4055 = vmatpush1.bf16.msra.mxu0 0
  %4056 = vmatprep.mubr.bf16.mxu0 0
  %4057 = vmatmul.mubr.bf16.gmra.mrb[0].mxu0 %v4019
  %v4058 = vpop.f32.mrb[0].mxu0
  %v4059 = vadd.f32 0.0, %v4058
  %v4060 = vpop.f32.mrb[0].mxu0
  %v4061 = vpop.f32.mrb[0].mxu0
  %v4062 = vadd.f32 0.0, %v4061
  %v4063 = vpop.f32.mrb[0].mxu0
  %4064 = vdwg.mxu0
  %v4065 = vadd.f32 %v3599, %v4059
  %v4066 = vadd.f32 %v3600, %v4062
  %s4067 = scalar_lea.vmem %s8, 1
  %v4068 = vld [vmem:[%s4067] sm:$0x1]
  %v4070 = vlaneseq
  %v4071 = vshrl.u32 %v4070, 7
  %v4072 = vsub.s32 0, %v4071
  %v4073 = vrot.slane %v4068, %v4072
  %v4075 = vadd.f32 %v4065, %v4073
  %v4076 = vadd.f32 %v4066, %v4073
  %v4077 = vadd.f32 %v2201, %v4075
  %v4078 = vadd.f32 %v2202, %v4076
  %s4079 = scalar_lea.vmem %s9, 1
  %v4080 = vld [vmem:[%s4079] sm:$0x1]
  %s4081 = scalar_lea.vmem %s10, 1
  %v4082 = vld [vmem:[%s4081] sm:$0x1]
  %v4083 = vsel %vm110, %v4077, 0.0
  %4084 = vadd.xlane.f32.xlu0 %v4083
  %v4085 = vpop.xlane.xlu0 %4084
  %v4086 = vsel %vm110, %v4078, 0.0
  %4087 = vadd.xlane.f32.xlu0 %v4086
  %v4088 = vpop.xlane.xlu0 %4087
  %v4089 = vmul.f32 %v4085, %v1965
  %v4090 = vmul.f32 %v4088, %v1965
  %v4091 = vsub.f32 %v4077, %v4089
  %v4092 = vsub.f32 %v4078, %v4090
  %v4093 = vmul.f32 %v4091, %v4091
  %v4094 = vmul.f32 %v4092, %v4092
  %v4095 = vsel %vm110, %v4093, 0.0
  %4096 = vadd.xlane.f32.xlu0 %v4095
  %v4097 = vpop.xlane.xlu0 %4096
  %v4098 = vsel %vm110, %v4094, 0.0
  %4099 = vadd.xlane.f32.xlu0 %v4098
  %v4100 = vpop.xlane.xlu0 %4099
  %v4101 = vmul.f32 %v4097, %v1965
  %v4102 = vmul.f32 %v4100, %v1965
  %v4103 = vadd.f32 %v4101, 1e-05
  %v4104 = vadd.f32 %v4102, 1e-05
  %v4105 = vrsqrt.pop %v4103
  %v4106 = vrsqrt.pop %v4104
  %v4107 = vmul.f32 %v4091, %v4105
  %v4108 = vmul.f32 %v4092, %v4106
  %v4110 = vlaneseq
  %v4111 = vshrl.u32 %v4110, 7
  %v4112 = vsub.s32 0, %v4111
  %v4113 = vrot.slane %v4080, %v4112
  %v4115 = vmul.f32 %v4107, %v4113
  %v4116 = vmul.f32 %v4108, %v4113
  %v4118 = vlaneseq
  %v4119 = vshrl.u32 %v4118, 7
  %v4120 = vsub.s32 0, %v4119
  %v4121 = vrot.slane %v4082, %v4120
  %v4123 = vadd.f32 %v4115, %v4121
  %v4124 = vadd.f32 %v4116, %v4121
  %s4125 = scalar_lea.vmem %s11, 16
  %v4126 = vld [vmem:[%s4125] sm:$0xf]
  %v4127 = vld [vmem:[%s4125 + $0x4] sm:$0xf]
  %v4128 = vld [vmem:[%s4125 + $0x8] sm:$0xf]
  %v4129 = vld [vmem:[%s4125 + $0xc] sm:$0xf]
  %v4130 = vpack.c.bf16 %v4124, %v4123
  %s4131 = scalar_lea.vmem %s12, 1
  %v4132 = vld [vmem:[%s4131] sm:$0x1]
  %v4134 = vlaneseq
  %v4135 = vshrl.u32 %v4134, 7
  %v4136 = vsub.s32 0, %v4135
  %v4137 = vrot.slane %v4132, %v4136
  %v4143 = vunpack.c.l.b16 %v4126
  %v4144 = vunpack.c.l.b16 %v4127
  %v4145 = vunpack.c.l.b16 %v4128
  %v4146 = vunpack.c.l.b16 %v4129
  %v4147 = vpack.c.b16 %v4144, %v4143
  %v4148 = vpack.c.b16 %v4146, %v4145
  %v4152 = vsel %vm110, %v4130, 0
  %4154 = vmatprep.subr.bf16.mxu0 0
  %4155 = vmatpush1.bf16.msra.mxu0 %v4147
  %4156 = vmatprep.subr.bf16.mxu0 0
  %4157 = vmatpush1.bf16.msra.mxu0 %v4148
  %4158 = vmatprep.subr.bf16.mxu0 0
  %4159 = vmatpush1.bf16.msra.mxu0 0
  %4160 = vmatprep.subr.bf16.mxu0 0
  %4161 = vmatpush1.bf16.msra.mxu0 0
  %4162 = vmatprep.subr.bf16.mxu0 0
  %4163 = vmatpush1.bf16.msra.mxu0 0
  %4164 = vmatprep.subr.bf16.mxu0 0
  %4165 = vmatpush1.bf16.msra.mxu0 0
  %4166 = vmatprep.subr.bf16.mxu0 0
  %4167 = vmatpush1.bf16.msra.mxu0 0
  %4168 = vmatprep.subr.bf16.mxu0 0
  %4169 = vmatpush1.bf16.msra.mxu0 0
  %4170 = vmatprep.subr.bf16.mxu0 0
  %4171 = vmatpush1.bf16.msra.mxu0 0
  %4172 = vmatprep.subr.bf16.mxu0 0
  %4173 = vmatpush1.bf16.msra.mxu0 0
  %4174 = vmatprep.subr.bf16.mxu0 0
  %4175 = vmatpush1.bf16.msra.mxu0 0
  %4176 = vmatprep.subr.bf16.mxu0 0
  %4177 = vmatpush1.bf16.msra.mxu0 0
  %4178 = vmatprep.subr.bf16.mxu0 0
  %4179 = vmatpush1.bf16.msra.mxu0 0
  %4180 = vmatprep.subr.bf16.mxu0 0
  %4181 = vmatpush1.bf16.msra.mxu0 0
  %4182 = vmatprep.subr.bf16.mxu0 0
  %4183 = vmatpush1.bf16.msra.mxu0 0
  %4184 = vmatprep.subr.bf16.mxu0 0
  %4185 = vmatpush1.bf16.msra.mxu0 0
  %4186 = vmatprep.mubr.bf16.mxu0 0
  %4187 = vmatmul.mubr.bf16.gmra.mrb[0].mxu0 %v4152
  %v4188 = vpop.f32.mrb[0].mxu0
  %v4189 = vadd.f32 %v4137, %v4188
  %v4190 = vpop.f32.mrb[0].mxu0
  %v4191 = vpop.f32.mrb[0].mxu0
  %v4192 = vadd.f32 %v4137, %v4191
  %v4193 = vpop.f32.mrb[0].mxu0
  %4194 = vdwg.mxu0
  %v4195 = vmax.f32 %v4189, 0.0
  %v4196 = vmax.f32 %v4192, 0.0
  %s4197 = scalar_lea.vmem %s13, 32
  %v4198 = vld [vmem:[%s4197] sm:$0xf]
  %v4199 = vld [vmem:[%s4197 + $0x4] sm:$0xf]
  %v4200 = vld [vmem:[%s4197 + $0x8] sm:$0xf]
  %v4201 = vld [vmem:[%s4197 + $0xc] sm:$0xf]
  %v4202 = vld [vmem:[%s4197 + $0x10] sm:$0xf]
  %v4203 = vld [vmem:[%s4197 + $0x14] sm:$0xf]
  %v4204 = vld [vmem:[%s4197 + $0x18] sm:$0xf]
  %v4205 = vld [vmem:[%s4197 + $0x1c] sm:$0xf]
  %v4206 = vpack.c.bf16 %v4196, %v4195
  %s4207 = scalar_lea.vmem %s14, 1
  %v4208 = vld [vmem:[%s4207] sm:$0x1]
  %v4210 = vlaneseq
  %v4211 = vshrl.u32 %v4210, 7
  %v4212 = vsub.s32 0, %v4211
  %v4213 = vrot.slane %v4208, %v4212
  %v4223 = vunpack.c.l.b16 %v4198
  %v4224 = vunpack.c.l.b16 %v4199
  %v4225 = vunpack.c.l.b16 %v4200
  %v4226 = vunpack.c.l.b16 %v4201
  %v4227 = vunpack.c.l.b16 %v4202
  %v4228 = vunpack.c.l.b16 %v4203
  %v4229 = vunpack.c.l.b16 %v4204
  %v4230 = vunpack.c.l.b16 %v4205
  %v4231 = vpack.c.b16 %v4224, %v4223
  %v4232 = vpack.c.b16 %v4226, %v4225
  %v4233 = vpack.c.b16 %v4228, %v4227
  %v4234 = vpack.c.b16 %v4230, %v4229
  %v4240 = vsel %vm2112, %v4206, 0
  %4242 = vmatprep.subr.bf16.mxu0 0
  %4243 = vmatpush1.bf16.msra.mxu0 %v4231
  %4244 = vmatprep.subr.bf16.mxu0 0
  %4245 = vmatpush1.bf16.msra.mxu0 %v4232
  %4246 = vmatprep.subr.bf16.mxu0 0
  %4247 = vmatpush1.bf16.msra.mxu0 %v4233
  %4248 = vmatprep.subr.bf16.mxu0 0
  %4249 = vmatpush1.bf16.msra.mxu0 %v4234
  %4250 = vmatprep.subr.bf16.mxu0 0
  %4251 = vmatpush1.bf16.msra.mxu0 0
  %4252 = vmatprep.subr.bf16.mxu0 0
  %4253 = vmatpush1.bf16.msra.mxu0 0
  %4254 = vmatprep.subr.bf16.mxu0 0
  %4255 = vmatpush1.bf16.msra.mxu0 0
  %4256 = vmatprep.subr.bf16.mxu0 0
  %4257 = vmatpush1.bf16.msra.mxu0 0
  %4258 = vmatprep.subr.bf16.mxu0 0
  %4259 = vmatpush1.bf16.msra.mxu0 0
  %4260 = vmatprep.subr.bf16.mxu0 0
  %4261 = vmatpush1.bf16.msra.mxu0 0
  %4262 = vmatprep.subr.bf16.mxu0 0
  %4263 = vmatpush1.bf16.msra.mxu0 0
  %4264 = vmatprep.subr.bf16.mxu0 0
  %4265 = vmatpush1.bf16.msra.mxu0 0
  %4266 = vmatprep.subr.bf16.mxu0 0
  %4267 = vmatpush1.bf16.msra.mxu0 0
  %4268 = vmatprep.subr.bf16.mxu0 0
  %4269 = vmatpush1.bf16.msra.mxu0 0
  %4270 = vmatprep.subr.bf16.mxu0 0
  %4271 = vmatpush1.bf16.msra.mxu0 0
  %4272 = vmatprep.subr.bf16.mxu0 0
  %4273 = vmatpush1.bf16.msra.mxu0 0
  %4274 = vmatprep.mubr.bf16.mxu0 0
  %4275 = vmatmul.mubr.bf16.gmra.mrb[0].mxu0 %v4240
  %v4276 = vpop.f32.mrb[0].mxu0
  %v4277 = vadd.f32 %v4213, %v4276
  %v4278 = vpop.f32.mrb[0].mxu0
  %v4279 = vpop.f32.mrb[0].mxu0
  %v4280 = vadd.f32 %v4213, %v4279
  %v4281 = vpop.f32.mrb[0].mxu0
  %4282 = vdwg.mxu0
  %v4283 = vadd.f32 %v4123, %v4277
  %v4284 = vadd.f32 %v4124, %v4280
  %s4285 = scalar_lea.vmem %s15, 1
  %v4286 = vld [vmem:[%s4285] sm:$0x1]
  %s4287 = scalar_lea.vmem %s16, 1
  %v4288 = vld [vmem:[%s4287] sm:$0x1]
  %v4289 = vsel %vm110, %v4283, 0.0
  %4290 = vadd.xlane.f32.xlu0 %v4289
  %v4291 = vpop.xlane.xlu0 %4290
  %v4292 = vsel %vm110, %v4284, 0.0
  %4293 = vadd.xlane.f32.xlu0 %v4292
  %v4294 = vpop.xlane.xlu0 %4293
  %v4295 = vmul.f32 %v4291, %v1965
  %v4296 = vmul.f32 %v4294, %v1965
  %v4297 = vsub.f32 %v4283, %v4295
  %v4298 = vsub.f32 %v4284, %v4296
  %v4299 = vmul.f32 %v4297, %v4297
  %v4300 = vmul.f32 %v4298, %v4298
  %v4301 = vsel %vm110, %v4299, 0.0
  %4302 = vadd.xlane.f32.xlu0 %v4301
  %v4303 = vpop.xlane.xlu0 %4302
  %v4304 = vsel %vm110, %v4300, 0.0
  %4305 = vadd.xlane.f32.xlu0 %v4304
  %v4306 = vpop.xlane.xlu0 %4305
  %v4307 = vmul.f32 %v4303, %v1965
  %v4308 = vmul.f32 %v4306, %v1965
  %v4309 = vadd.f32 %v4307, 1e-05
  %v4310 = vadd.f32 %v4308, 1e-05
  %v4311 = vrsqrt.pop %v4309
  %v4312 = vrsqrt.pop %v4310
  %v4313 = vmul.f32 %v4297, %v4311
  %v4314 = vmul.f32 %v4298, %v4312
  %v4316 = vlaneseq
  %v4317 = vshrl.u32 %v4316, 7
  %v4318 = vsub.s32 0, %v4317
  %v4319 = vrot.slane %v4286, %v4318
  %v4321 = vmul.f32 %v4313, %v4319
  %v4322 = vmul.f32 %v4314, %v4319
  %v4324 = vlaneseq
  %v4325 = vshrl.u32 %v4324, 7
  %v4326 = vsub.s32 0, %v4325
  %v4327 = vrot.slane %v4288, %v4326
  %v4329 = vadd.f32 %v4321, %v4327
  %v4330 = vadd.f32 %v4322, %v4327
  %v4331 = vld [vmem:[%s17] sm:$0xf]
  %v4332 = vld [vmem:[%s17 + $0x4] sm:$0xf]
  %v4333 = vld [vmem:[%s17 + $0x8] sm:$0xf]
  %v4334 = vld [vmem:[%s17 + $0xc] sm:$0xf]
  %v4335 = vpack.c.bf16 %v4329, %v4329
  %v4336 = vpack.c.bf16 %v4330, %v4330
  %s4337 = scalar_lea.vmem %s17, 16
  %v4338 = vld [vmem:[%s4337] sm:$0xf]
  %v4339 = vld [vmem:[%s4337 + $0x4] sm:$0xf]
  %v4340 = vld [vmem:[%s4337 + $0x8] sm:$0xf]
  %v4341 = vld [vmem:[%s4337 + $0xc] sm:$0xf]
  %v4344 = vunpack.c.l.b16 %v4335
  %v4345 = vunpack.c.l.b16 %v4336
  %v4346 = vrot.slane %v4344, 1
  %vm4347 = vcmask 1041409
  %v4348 = vsel %vm4347, %v4345, %v4346
  %v4349 = vpack.c.b16 %v4348, %v4348
  %v4354 = vunpack.c.l.b16 %v4338
  %v4355 = vunpack.c.l.b16 %v4339
  %v4356 = vunpack.c.l.b16 %v4340
  %v4357 = vunpack.c.l.b16 %v4341
  %v4358 = vpack.c.b16 %v4355, %v4354
  %v4359 = vpack.c.b16 %v4357, %v4356
  %v4363 = vsel %vm110, %v4349, 0
  %4365 = vmatprep.subr.bf16.mxu0 0
  %4366 = vmatpush1.bf16.msra.mxu0 %v4358
  %4367 = vmatprep.subr.bf16.mxu0 0
  %4368 = vmatpush1.bf16.msra.mxu0 %v4359
  %4369 = vmatprep.subr.bf16.mxu0 0
  %4370 = vmatpush1.bf16.msra.mxu0 0
  %4371 = vmatprep.subr.bf16.mxu0 0
  %4372 = vmatpush1.bf16.msra.mxu0 0
  %4373 = vmatprep.subr.bf16.mxu0 0
  %4374 = vmatpush1.bf16.msra.mxu0 0
  %4375 = vmatprep.subr.bf16.mxu0 0
  %4376 = vmatpush1.bf16.msra.mxu0 0
  %4377 = vmatprep.subr.bf16.mxu0 0
  %4378 = vmatpush1.bf16.msra.mxu0 0
  %4379 = vmatprep.subr.bf16.mxu0 0
  %4380 = vmatpush1.bf16.msra.mxu0 0
  %4381 = vmatprep.subr.bf16.mxu0 0
  %4382 = vmatpush1.bf16.msra.mxu0 0
  %4383 = vmatprep.subr.bf16.mxu0 0
  %4384 = vmatpush1.bf16.msra.mxu0 0
  %4385 = vmatprep.subr.bf16.mxu0 0
  %4386 = vmatpush1.bf16.msra.mxu0 0
  %4387 = vmatprep.subr.bf16.mxu0 0
  %4388 = vmatpush1.bf16.msra.mxu0 0
  %4389 = vmatprep.subr.bf16.mxu0 0
  %4390 = vmatpush1.bf16.msra.mxu0 0
  %4391 = vmatprep.subr.bf16.mxu0 0
  %4392 = vmatpush1.bf16.msra.mxu0 0
  %4393 = vmatprep.subr.bf16.mxu0 0
  %4394 = vmatpush1.bf16.msra.mxu0 0
  %4395 = vmatprep.subr.bf16.mxu0 0
  %4396 = vmatpush1.bf16.msra.mxu0 0
  %4397 = vmatprep.mubr.bf16.mxu0 0
  %4398 = vmatmul.mubr.bf16.gmra.mrb[0].mxu0 %v4363
  %v4399 = vpop.f32.mrb[0].mxu0
  %v4400 = vadd.f32 0.0, %v4399
  %v4401 = vpop.f32.mrb[0].mxu0
  %v4402 = vpop.f32.mrb[0].mxu0
  %v4403 = vpop.f32.mrb[0].mxu0
  %4404 = vdwg.mxu0
  %v4405 = vrot.slane %v4345, 7
  %v4406 = vsel %vm4347, %v4405, %v4344
  %v4407 = vpack.c.b16 %v4406, %v4406
  %v4412 = vunpack.c.l.b16 %v4331
  %v4413 = vunpack.c.l.b16 %v4332
  %v4414 = vunpack.c.l.b16 %v4333
  %v4415 = vunpack.c.l.b16 %v4334
  %v4416 = vpack.c.b16 %v4413, %v4412
  %v4417 = vpack.c.b16 %v4415, %v4414
  %v4421 = vsel %vm110, %v4407, 0
  %4423 = vmatprep.subr.bf16.mxu0 0
  %4424 = vmatpush1.bf16.msra.mxu0 %v4416
  %4425 = vmatprep.subr.bf16.mxu0 0
  %4426 = vmatpush1.bf16.msra.mxu0 %v4417
  %4427 = vmatprep.subr.bf16.mxu0 0
  %4428 = vmatpush1.bf16.msra.mxu0 0
  %4429 = vmatprep.subr.bf16.mxu0 0
  %4430 = vmatpush1.bf16.msra.mxu0 0
  %4431 = vmatprep.subr.bf16.mxu0 0
  %4432 = vmatpush1.bf16.msra.mxu0 0
  %4433 = vmatprep.subr.bf16.mxu0 0
  %4434 = vmatpush1.bf16.msra.mxu0 0
  %4435 = vmatprep.subr.bf16.mxu0 0
  %4436 = vmatpush1.bf16.msra.mxu0 0
  %4437 = vmatprep.subr.bf16.mxu0 0
  %4438 = vmatpush1.bf16.msra.mxu0 0
  %4439 = vmatprep.subr.bf16.mxu0 0
  %4440 = vmatpush1.bf16.msra.mxu0 0
  %4441 = vmatprep.subr.bf16.mxu0 0
  %4442 = vmatpush1.bf16.msra.mxu0 0
  %4443 = vmatprep.subr.bf16.mxu0 0
  %4444 = vmatpush1.bf16.msra.mxu0 0
  %4445 = vmatprep.subr.bf16.mxu0 0
  %4446 = vmatpush1.bf16.msra.mxu0 0
  %4447 = vmatprep.subr.bf16.mxu0 0
  %4448 = vmatpush1.bf16.msra.mxu0 0
  %4449 = vmatprep.subr.bf16.mxu0 0
  %4450 = vmatpush1.bf16.msra.mxu0 0
  %4451 = vmatprep.subr.bf16.mxu0 0
  %4452 = vmatpush1.bf16.msra.mxu0 0
  %4453 = vmatprep.subr.bf16.mxu0 0
  %4454 = vmatpush1.bf16.msra.mxu0 0
  %4455 = vmatprep.mubr.bf16.mxu0 0
  %4456 = vmatmul.mubr.bf16.gmra.mrb[0].mxu0 %v4421
  %v4457 = vpop.f32.mrb[0].mxu0
  %v4458 = vadd.f32 %v4400, %v4457
  %v4459 = vpop.f32.mrb[0].mxu0
  %v4460 = vpop.f32.mrb[0].mxu0
  %v4461 = vpop.f32.mrb[0].mxu0
  %4462 = vdwg.mxu0
  %s4463 = scalar_lea.vmem %s17, 32
  %v4464 = vld [vmem:[%s4463] sm:$0xf]
  %v4465 = vld [vmem:[%s4463 + $0x4] sm:$0xf]
  %v4466 = vld [vmem:[%s4463 + $0x8] sm:$0xf]
  %v4467 = vld [vmem:[%s4463 + $0xc] sm:$0xf]
  %v4468 = vrot.slane %v4344, 2
  %v4469 = vrot.slane %v4345, 1
  %v4470 = vsel %vm4347, %v4469, %v4468
  %v4471 = vpack.c.b16 %v4470, %v4470
  %v4476 = vunpack.c.l.b16 %v4464
  %v4477 = vunpack.c.l.b16 %v4465
  %v4478 = vunpack.c.l.b16 %v4466
  %v4479 = vunpack.c.l.b16 %v4467
  %v4480 = vpack.c.b16 %v4477, %v4476
  %v4481 = vpack.c.b16 %v4479, %v4478
  %v4485 = vsel %vm110, %v4471, 0
  %4487 = vmatprep.subr.bf16.mxu0 0
  %4488 = vmatpush1.bf16.msra.mxu0 %v4480
  %4489 = vmatprep.subr.bf16.mxu0 0
  %4490 = vmatpush1.bf16.msra.mxu0 %v4481
  %4491 = vmatprep.subr.bf16.mxu0 0
  %4492 = vmatpush1.bf16.msra.mxu0 0
  %4493 = vmatprep.subr.bf16.mxu0 0
  %4494 = vmatpush1.bf16.msra.mxu0 0
  %4495 = vmatprep.subr.bf16.mxu0 0
  %4496 = vmatpush1.bf16.msra.mxu0 0
  %4497 = vmatprep.subr.bf16.mxu0 0
  %4498 = vmatpush1.bf16.msra.mxu0 0
  %4499 = vmatprep.subr.bf16.mxu0 0
  %4500 = vmatpush1.bf16.msra.mxu0 0
  %4501 = vmatprep.subr.bf16.mxu0 0
  %4502 = vmatpush1.bf16.msra.mxu0 0
  %4503 = vmatprep.subr.bf16.mxu0 0
  %4504 = vmatpush1.bf16.msra.mxu0 0
  %4505 = vmatprep.subr.bf16.mxu0 0
  %4506 = vmatpush1.bf16.msra.mxu0 0
  %4507 = vmatprep.subr.bf16.mxu0 0
  %4508 = vmatpush1.bf16.msra.mxu0 0
  %4509 = vmatprep.subr.bf16.mxu0 0
  %4510 = vmatpush1.bf16.msra.mxu0 0
  %4511 = vmatprep.subr.bf16.mxu0 0
  %4512 = vmatpush1.bf16.msra.mxu0 0
  %4513 = vmatprep.subr.bf16.mxu0 0
  %4514 = vmatpush1.bf16.msra.mxu0 0
  %4515 = vmatprep.subr.bf16.mxu0 0
  %4516 = vmatpush1.bf16.msra.mxu0 0
  %4517 = vmatprep.subr.bf16.mxu0 0
  %4518 = vmatpush1.bf16.msra.mxu0 0
  %4519 = vmatprep.mubr.bf16.mxu0 0
  %4520 = vmatmul.mubr.bf16.gmra.mrb[0].mxu0 %v4485
  %v4521 = vpop.f32.mrb[0].mxu0
  %v4522 = vadd.f32 0.0, %v4521
  %v4523 = vpop.f32.mrb[0].mxu0
  %v4524 = vpop.f32.mrb[0].mxu0
  %v4525 = vpop.f32.mrb[0].mxu0
  %4526 = vdwg.mxu0
  %v4527 = vadd.f32 %v4458, %v4522
  %s4528 = scalar_lea.vmem %s17, 48
  %v4529 = vld [vmem:[%s4528] sm:$0xf]
  %v4530 = vld [vmem:[%s4528 + $0x4] sm:$0xf]
  %v4531 = vld [vmem:[%s4528 + $0x8] sm:$0xf]
  %v4532 = vld [vmem:[%s4528 + $0xc] sm:$0xf]
  %v4533 = vrot.slane %v4344, 3
  %v4534 = vrot.slane %v4345, 2
  %v4535 = vsel %vm4347, %v4534, %v4533
  %v4536 = vpack.c.b16 %v4535, %v4535
  %v4541 = vunpack.c.l.b16 %v4529
  %v4542 = vunpack.c.l.b16 %v4530
  %v4543 = vunpack.c.l.b16 %v4531
  %v4544 = vunpack.c.l.b16 %v4532
  %v4545 = vpack.c.b16 %v4542, %v4541
  %v4546 = vpack.c.b16 %v4544, %v4543
  %v4550 = vsel %vm110, %v4536, 0
  %4552 = vmatprep.subr.bf16.mxu0 0
  %4553 = vmatpush1.bf16.msra.mxu0 %v4545
  %4554 = vmatprep.subr.bf16.mxu0 0
  %4555 = vmatpush1.bf16.msra.mxu0 %v4546
  %4556 = vmatprep.subr.bf16.mxu0 0
  %4557 = vmatpush1.bf16.msra.mxu0 0
  %4558 = vmatprep.subr.bf16.mxu0 0
  %4559 = vmatpush1.bf16.msra.mxu0 0
  %4560 = vmatprep.subr.bf16.mxu0 0
  %4561 = vmatpush1.bf16.msra.mxu0 0
  %4562 = vmatprep.subr.bf16.mxu0 0
  %4563 = vmatpush1.bf16.msra.mxu0 0
  %4564 = vmatprep.subr.bf16.mxu0 0
  %4565 = vmatpush1.bf16.msra.mxu0 0
  %4566 = vmatprep.subr.bf16.mxu0 0
  %4567 = vmatpush1.bf16.msra.mxu0 0
  %4568 = vmatprep.subr.bf16.mxu0 0
  %4569 = vmatpush1.bf16.msra.mxu0 0
  %4570 = vmatprep.subr.bf16.mxu0 0
  %4571 = vmatpush1.bf16.msra.mxu0 0
  %4572 = vmatprep.subr.bf16.mxu0 0
  %4573 = vmatpush1.bf16.msra.mxu0 0
  %4574 = vmatprep.subr.bf16.mxu0 0
  %4575 = vmatpush1.bf16.msra.mxu0 0
  %4576 = vmatprep.subr.bf16.mxu0 0
  %4577 = vmatpush1.bf16.msra.mxu0 0
  %4578 = vmatprep.subr.bf16.mxu0 0
  %4579 = vmatpush1.bf16.msra.mxu0 0
  %4580 = vmatprep.subr.bf16.mxu0 0
  %4581 = vmatpush1.bf16.msra.mxu0 0
  %4582 = vmatprep.subr.bf16.mxu0 0
  %4583 = vmatpush1.bf16.msra.mxu0 0
  %4584 = vmatprep.mubr.bf16.mxu0 0
  %4585 = vmatmul.mubr.bf16.gmra.mrb[0].mxu0 %v4550
  %v4586 = vpop.f32.mrb[0].mxu0
  %v4587 = vadd.f32 0.0, %v4586
  %v4588 = vpop.f32.mrb[0].mxu0
  %v4589 = vpop.f32.mrb[0].mxu0
  %v4590 = vpop.f32.mrb[0].mxu0
  %4591 = vdwg.mxu0
  %v4592 = vadd.f32 %v4527, %v4587
  %s4593 = scalar_lea.vmem %s17, 64
  %v4594 = vld [vmem:[%s4593] sm:$0xf]
  %v4595 = vld [vmem:[%s4593 + $0x4] sm:$0xf]
  %v4596 = vld [vmem:[%s4593 + $0x8] sm:$0xf]
  %v4597 = vld [vmem:[%s4593 + $0xc] sm:$0xf]
  %v4598 = vrot.slane %v4344, 4
  %v4599 = vrot.slane %v4345, 3
  %v4600 = vsel %vm4347, %v4599, %v4598
  %v4601 = vpack.c.b16 %v4600, %v4600
  %v4606 = vunpack.c.l.b16 %v4594
  %v4607 = vunpack.c.l.b16 %v4595
  %v4608 = vunpack.c.l.b16 %v4596
  %v4609 = vunpack.c.l.b16 %v4597
  %v4610 = vpack.c.b16 %v4607, %v4606
  %v4611 = vpack.c.b16 %v4609, %v4608
  %v4615 = vsel %vm110, %v4601, 0
  %4617 = vmatprep.subr.bf16.mxu0 0
  %4618 = vmatpush1.bf16.msra.mxu0 %v4610
  %4619 = vmatprep.subr.bf16.mxu0 0
  %4620 = vmatpush1.bf16.msra.mxu0 %v4611
  %4621 = vmatprep.subr.bf16.mxu0 0
  %4622 = vmatpush1.bf16.msra.mxu0 0
  %4623 = vmatprep.subr.bf16.mxu0 0
  %4624 = vmatpush1.bf16.msra.mxu0 0
  %4625 = vmatprep.subr.bf16.mxu0 0
  %4626 = vmatpush1.bf16.msra.mxu0 0
  %4627 = vmatprep.subr.bf16.mxu0 0
  %4628 = vmatpush1.bf16.msra.mxu0 0
  %4629 = vmatprep.subr.bf16.mxu0 0
  %4630 = vmatpush1.bf16.msra.mxu0 0
  %4631 = vmatprep.subr.bf16.mxu0 0
  %4632 = vmatpush1.bf16.msra.mxu0 0
  %4633 = vmatprep.subr.bf16.mxu0 0
  %4634 = vmatpush1.bf16.msra.mxu0 0
  %4635 = vmatprep.subr.bf16.mxu0 0
  %4636 = vmatpush1.bf16.msra.mxu0 0
  %4637 = vmatprep.subr.bf16.mxu0 0
  %4638 = vmatpush1.bf16.msra.mxu0 0
  %4639 = vmatprep.subr.bf16.mxu0 0
  %4640 = vmatpush1.bf16.msra.mxu0 0
  %4641 = vmatprep.subr.bf16.mxu0 0
  %4642 = vmatpush1.bf16.msra.mxu0 0
  %4643 = vmatprep.subr.bf16.mxu0 0
  %4644 = vmatpush1.bf16.msra.mxu0 0
  %4645 = vmatprep.subr.bf16.mxu0 0
  %4646 = vmatpush1.bf16.msra.mxu0 0
  %4647 = vmatprep.subr.bf16.mxu0 0
  %4648 = vmatpush1.bf16.msra.mxu0 0
  %4649 = vmatprep.mubr.bf16.mxu0 0
  %4650 = vmatmul.mubr.bf16.gmra.mrb[0].mxu0 %v4615
  %v4651 = vpop.f32.mrb[0].mxu0
  %v4652 = vadd.f32 0.0, %v4651
  %v4653 = vpop.f32.mrb[0].mxu0
  %v4654 = vpop.f32.mrb[0].mxu0
  %v4655 = vpop.f32.mrb[0].mxu0
  %4656 = vdwg.mxu0
  %v4657 = vadd.f32 %v4592, %v4652
  %s4658 = scalar_lea.vmem %s17, 80
  %v4659 = vld [vmem:[%s4658] sm:$0xf]
  %v4660 = vld [vmem:[%s4658 + $0x4] sm:$0xf]
  %v4661 = vld [vmem:[%s4658 + $0x8] sm:$0xf]
  %v4662 = vld [vmem:[%s4658 + $0xc] sm:$0xf]
  %v4663 = vrot.slane %v4344, 5
  %v4664 = vrot.slane %v4345, 4
  %v4665 = vsel %vm4347, %v4664, %v4663
  %v4666 = vpack.c.b16 %v4665, %v4665
  %v4671 = vunpack.c.l.b16 %v4659
  %v4672 = vunpack.c.l.b16 %v4660
  %v4673 = vunpack.c.l.b16 %v4661
  %v4674 = vunpack.c.l.b16 %v4662
  %v4675 = vpack.c.b16 %v4672, %v4671
  %v4676 = vpack.c.b16 %v4674, %v4673
  %v4680 = vsel %vm110, %v4666, 0
  %4682 = vmatprep.subr.bf16.mxu0 0
  %4683 = vmatpush1.bf16.msra.mxu0 %v4675
  %4684 = vmatprep.subr.bf16.mxu0 0
  %4685 = vmatpush1.bf16.msra.mxu0 %v4676
  %4686 = vmatprep.subr.bf16.mxu0 0
  %4687 = vmatpush1.bf16.msra.mxu0 0
  %4688 = vmatprep.subr.bf16.mxu0 0
  %4689 = vmatpush1.bf16.msra.mxu0 0
  %4690 = vmatprep.subr.bf16.mxu0 0
  %4691 = vmatpush1.bf16.msra.mxu0 0
  %4692 = vmatprep.subr.bf16.mxu0 0
  %4693 = vmatpush1.bf16.msra.mxu0 0
  %4694 = vmatprep.subr.bf16.mxu0 0
  %4695 = vmatpush1.bf16.msra.mxu0 0
  %4696 = vmatprep.subr.bf16.mxu0 0
  %4697 = vmatpush1.bf16.msra.mxu0 0
  %4698 = vmatprep.subr.bf16.mxu0 0
  %4699 = vmatpush1.bf16.msra.mxu0 0
  %4700 = vmatprep.subr.bf16.mxu0 0
  %4701 = vmatpush1.bf16.msra.mxu0 0
  %4702 = vmatprep.subr.bf16.mxu0 0
  %4703 = vmatpush1.bf16.msra.mxu0 0
  %4704 = vmatprep.subr.bf16.mxu0 0
  %4705 = vmatpush1.bf16.msra.mxu0 0
  %4706 = vmatprep.subr.bf16.mxu0 0
  %4707 = vmatpush1.bf16.msra.mxu0 0
  %4708 = vmatprep.subr.bf16.mxu0 0
  %4709 = vmatpush1.bf16.msra.mxu0 0
  %4710 = vmatprep.subr.bf16.mxu0 0
  %4711 = vmatpush1.bf16.msra.mxu0 0
  %4712 = vmatprep.subr.bf16.mxu0 0
  %4713 = vmatpush1.bf16.msra.mxu0 0
  %4714 = vmatprep.mubr.bf16.mxu0 0
  %4715 = vmatmul.mubr.bf16.gmra.mrb[0].mxu0 %v4680
  %v4716 = vpop.f32.mrb[0].mxu0
  %v4717 = vadd.f32 0.0, %v4716
  %v4718 = vpop.f32.mrb[0].mxu0
  %v4719 = vpop.f32.mrb[0].mxu0
  %v4720 = vpop.f32.mrb[0].mxu0
  %4721 = vdwg.mxu0
  %v4722 = vadd.f32 %v4657, %v4717
  %s4723 = scalar_lea.vmem %s17, 96
  %v4724 = vld [vmem:[%s4723] sm:$0xf]
  %v4725 = vld [vmem:[%s4723 + $0x4] sm:$0xf]
  %v4726 = vld [vmem:[%s4723 + $0x8] sm:$0xf]
  %v4727 = vld [vmem:[%s4723 + $0xc] sm:$0xf]
  %v4728 = vrot.slane %v4344, 6
  %v4729 = vrot.slane %v4345, 5
  %v4730 = vsel %vm4347, %v4729, %v4728
  %v4731 = vpack.c.b16 %v4730, %v4730
  %v4736 = vunpack.c.l.b16 %v4724
  %v4737 = vunpack.c.l.b16 %v4725
  %v4738 = vunpack.c.l.b16 %v4726
  %v4739 = vunpack.c.l.b16 %v4727
  %v4740 = vpack.c.b16 %v4737, %v4736
  %v4741 = vpack.c.b16 %v4739, %v4738
  %v4745 = vsel %vm110, %v4731, 0
  %4747 = vmatprep.subr.bf16.mxu0 0
  %4748 = vmatpush1.bf16.msra.mxu0 %v4740
  %4749 = vmatprep.subr.bf16.mxu0 0
  %4750 = vmatpush1.bf16.msra.mxu0 %v4741
  %4751 = vmatprep.subr.bf16.mxu0 0
  %4752 = vmatpush1.bf16.msra.mxu0 0
  %4753 = vmatprep.subr.bf16.mxu0 0
  %4754 = vmatpush1.bf16.msra.mxu0 0
  %4755 = vmatprep.subr.bf16.mxu0 0
  %4756 = vmatpush1.bf16.msra.mxu0 0
  %4757 = vmatprep.subr.bf16.mxu0 0
  %4758 = vmatpush1.bf16.msra.mxu0 0
  %4759 = vmatprep.subr.bf16.mxu0 0
  %4760 = vmatpush1.bf16.msra.mxu0 0
  %4761 = vmatprep.subr.bf16.mxu0 0
  %4762 = vmatpush1.bf16.msra.mxu0 0
  %4763 = vmatprep.subr.bf16.mxu0 0
  %4764 = vmatpush1.bf16.msra.mxu0 0
  %4765 = vmatprep.subr.bf16.mxu0 0
  %4766 = vmatpush1.bf16.msra.mxu0 0
  %4767 = vmatprep.subr.bf16.mxu0 0
  %4768 = vmatpush1.bf16.msra.mxu0 0
  %4769 = vmatprep.subr.bf16.mxu0 0
  %4770 = vmatpush1.bf16.msra.mxu0 0
  %4771 = vmatprep.subr.bf16.mxu0 0
  %4772 = vmatpush1.bf16.msra.mxu0 0
  %4773 = vmatprep.subr.bf16.mxu0 0
  %4774 = vmatpush1.bf16.msra.mxu0 0
  %4775 = vmatprep.subr.bf16.mxu0 0
  %4776 = vmatpush1.bf16.msra.mxu0 0
  %4777 = vmatprep.subr.bf16.mxu0 0
  %4778 = vmatpush1.bf16.msra.mxu0 0
  %4779 = vmatprep.mubr.bf16.mxu0 0
  %4780 = vmatmul.mubr.bf16.gmra.mrb[0].mxu0 %v4745
  %v4781 = vpop.f32.mrb[0].mxu0
  %v4782 = vadd.f32 0.0, %v4781
  %v4783 = vpop.f32.mrb[0].mxu0
  %v4784 = vpop.f32.mrb[0].mxu0
  %v4785 = vpop.f32.mrb[0].mxu0
  %4786 = vdwg.mxu0
  %v4787 = vadd.f32 %v4722, %v4782
  %s4788 = scalar_lea.vmem %s17, 112
  %v4789 = vld [vmem:[%s4788] sm:$0xf]
  %v4790 = vld [vmem:[%s4788 + $0x4] sm:$0xf]
  %v4791 = vld [vmem:[%s4788 + $0x8] sm:$0xf]
  %v4792 = vld [vmem:[%s4788 + $0xc] sm:$0xf]
  %v4793 = vrot.slane %v4344, 7
  %v4794 = vrot.slane %v4345, 6
  %v4795 = vsel %vm4347, %v4794, %v4793
  %v4796 = vpack.c.b16 %v4795, %v4795
  %v4801 = vunpack.c.l.b16 %v4789
  %v4802 = vunpack.c.l.b16 %v4790
  %v4803 = vunpack.c.l.b16 %v4791
  %v4804 = vunpack.c.l.b16 %v4792
  %v4805 = vpack.c.b16 %v4802, %v4801
  %v4806 = vpack.c.b16 %v4804, %v4803
  %v4810 = vsel %vm110, %v4796, 0
  %4812 = vmatprep.subr.bf16.mxu0 0
  %4813 = vmatpush1.bf16.msra.mxu0 %v4805
  %4814 = vmatprep.subr.bf16.mxu0 0
  %4815 = vmatpush1.bf16.msra.mxu0 %v4806
  %4816 = vmatprep.subr.bf16.mxu0 0
  %4817 = vmatpush1.bf16.msra.mxu0 0
  %4818 = vmatprep.subr.bf16.mxu0 0
  %4819 = vmatpush1.bf16.msra.mxu0 0
  %4820 = vmatprep.subr.bf16.mxu0 0
  %4821 = vmatpush1.bf16.msra.mxu0 0
  %4822 = vmatprep.subr.bf16.mxu0 0
  %4823 = vmatpush1.bf16.msra.mxu0 0
  %4824 = vmatprep.subr.bf16.mxu0 0
  %4825 = vmatpush1.bf16.msra.mxu0 0
  %4826 = vmatprep.subr.bf16.mxu0 0
  %4827 = vmatpush1.bf16.msra.mxu0 0
  %4828 = vmatprep.subr.bf16.mxu0 0
  %4829 = vmatpush1.bf16.msra.mxu0 0
  %4830 = vmatprep.subr.bf16.mxu0 0
  %4831 = vmatpush1.bf16.msra.mxu0 0
  %4832 = vmatprep.subr.bf16.mxu0 0
  %4833 = vmatpush1.bf16.msra.mxu0 0
  %4834 = vmatprep.subr.bf16.mxu0 0
  %4835 = vmatpush1.bf16.msra.mxu0 0
  %4836 = vmatprep.subr.bf16.mxu0 0
  %4837 = vmatpush1.bf16.msra.mxu0 0
  %4838 = vmatprep.subr.bf16.mxu0 0
  %4839 = vmatpush1.bf16.msra.mxu0 0
  %4840 = vmatprep.subr.bf16.mxu0 0
  %4841 = vmatpush1.bf16.msra.mxu0 0
  %4842 = vmatprep.subr.bf16.mxu0 0
  %4843 = vmatpush1.bf16.msra.mxu0 0
  %4844 = vmatprep.mubr.bf16.mxu0 0
  %4845 = vmatmul.mubr.bf16.gmra.mrb[0].mxu0 %v4810
  %v4846 = vpop.f32.mrb[0].mxu0
  %v4847 = vadd.f32 0.0, %v4846
  %v4848 = vpop.f32.mrb[0].mxu0
  %v4849 = vpop.f32.mrb[0].mxu0
  %v4850 = vpop.f32.mrb[0].mxu0
  %4851 = vdwg.mxu0
  %v4852 = vadd.f32 %v4787, %v4847
  %v4853 = vld [vmem:[%s18] sm:$0x1]
  %v4855 = vlaneseq
  %v4856 = vshrl.u32 %v4855, 7
  %v4857 = vsub.s32 0, %v4856
  %v4858 = vrot.slane %v4853, %v4857
  %v4860 = vadd.f32 %v4852, %v4858
  %v4861 = vmax.f32 %v4860, 0.0
  %v4862 = vld [vmem:[%s19] sm:$0xf]
  %v4863 = vld [vmem:[%s19 + $0x4] sm:$0xf]
  %v4864 = vld [vmem:[%s19 + $0x8] sm:$0xf]
  %v4865 = vld [vmem:[%s19 + $0xc] sm:$0xf]
  %v4866 = vpack.c.bf16 %v4861, %v4861
  %v4867 = vld [vmem:[%s20] sm:$0x1]
  %v4869 = vlaneseq
  %v4870 = vshrl.u32 %v4869, 7
  %v4871 = vsub.s32 0, %v4870
  %v4872 = vrot.slane %v4867, %v4871
  %v4878 = vunpack.c.l.b16 %v4862
  %v4879 = vunpack.c.l.b16 %v4863
  %v4880 = vunpack.c.l.b16 %v4864
  %v4881 = vunpack.c.l.b16 %v4865
  %v4882 = vpack.c.b16 %v4879, %v4878
  %v4883 = vpack.c.b16 %v4881, %v4880
  %v4887 = vsel %vm110, %v4866, 0
  %4889 = vmatprep.subr.bf16.mxu0 0
  %4890 = vmatpush1.bf16.msra.mxu0 %v4882
  %4891 = vmatprep.subr.bf16.mxu0 0
  %4892 = vmatpush1.bf16.msra.mxu0 %v4883
  %4893 = vmatprep.subr.bf16.mxu0 0
  %4894 = vmatpush1.bf16.msra.mxu0 0
  %4895 = vmatprep.subr.bf16.mxu0 0
  %4896 = vmatpush1.bf16.msra.mxu0 0
  %4897 = vmatprep.subr.bf16.mxu0 0
  %4898 = vmatpush1.bf16.msra.mxu0 0
  %4899 = vmatprep.subr.bf16.mxu0 0
  %4900 = vmatpush1.bf16.msra.mxu0 0
  %4901 = vmatprep.subr.bf16.mxu0 0
  %4902 = vmatpush1.bf16.msra.mxu0 0
  %4903 = vmatprep.subr.bf16.mxu0 0
  %4904 = vmatpush1.bf16.msra.mxu0 0
  %4905 = vmatprep.subr.bf16.mxu0 0
  %4906 = vmatpush1.bf16.msra.mxu0 0
  %4907 = vmatprep.subr.bf16.mxu0 0
  %4908 = vmatpush1.bf16.msra.mxu0 0
  %4909 = vmatprep.subr.bf16.mxu0 0
  %4910 = vmatpush1.bf16.msra.mxu0 0
  %4911 = vmatprep.subr.bf16.mxu0 0
  %4912 = vmatpush1.bf16.msra.mxu0 0
  %4913 = vmatprep.subr.bf16.mxu0 0
  %4914 = vmatpush1.bf16.msra.mxu0 0
  %4915 = vmatprep.subr.bf16.mxu0 0
  %4916 = vmatpush1.bf16.msra.mxu0 0
  %4917 = vmatprep.subr.bf16.mxu0 0
  %4918 = vmatpush1.bf16.msra.mxu0 0
  %4919 = vmatprep.subr.bf16.mxu0 0
  %4920 = vmatpush1.bf16.msra.mxu0 0
  %4921 = vmatprep.mubr.bf16.mxu0 0
  %4922 = vmatmul.mubr.bf16.gmra.mrb[0].mxu0 %v4887
  %v4923 = vpop.f32.mrb[0].mxu0
  %v4924 = vadd.f32 %v4872, %v4923
  %v4925 = vpop.f32.mrb[0].mxu0
  %v4926 = vpop.f32.mrb[0].mxu0
  %v4927 = vpop.f32.mrb[0].mxu0
  %4928 = vdwg.mxu0
  %v4929 = vmax.f32 %v4924, 0.0
  %v4930 = vld [vmem:[%s21] sm:$0xf]
  %v4931 = vld [vmem:[%s21 + $0x4] sm:$0xf]
  %v4932 = vld [vmem:[%s21 + $0x8] sm:$0xf]
  %v4933 = vld [vmem:[%s21 + $0xc] sm:$0xf]
  %v4934 = vld [vmem:[%s21 + $0x10] sm:$0xf]
  %v4935 = vld [vmem:[%s21 + $0x14] sm:$0xf]
  %v4936 = vld [vmem:[%s21 + $0x18] sm:$0xf]
  %v4937 = vld [vmem:[%s21 + $0x1c] sm:$0xf]
  %v4938 = vpack.c.bf16 %v4929, %v4929
  %v4939 = vld [vmem:[%s22] sm:$0x1]
  %v4941 = vlaneseq
  %v4942 = vshrl.u32 %v4941, 7
  %v4943 = vsub.s32 0, %v4942
  %v4944 = vrot.slane %v4939, %v4943
  %v4954 = vunpack.c.l.b16 %v4930
  %v4955 = vunpack.c.l.b16 %v4931
  %v4956 = vunpack.c.l.b16 %v4932
  %v4957 = vunpack.c.l.b16 %v4933
  %v4958 = vunpack.c.l.b16 %v4934
  %v4959 = vunpack.c.l.b16 %v4935
  %v4960 = vunpack.c.l.b16 %v4936
  %v4961 = vunpack.c.l.b16 %v4937
  %v4962 = vpack.c.b16 %v4955, %v4954
  %v4963 = vpack.c.b16 %v4957, %v4956
  %v4964 = vpack.c.b16 %v4959, %v4958
  %v4965 = vpack.c.b16 %v4961, %v4960
  %v4971 = vsel %vm2112, %v4938, 0
  %4973 = vmatprep.subr.bf16.mxu0 0
  %4974 = vmatpush1.bf16.msra.mxu0 %v4962
  %4975 = vmatprep.subr.bf16.mxu0 0
  %4976 = vmatpush1.bf16.msra.mxu0 %v4963
  %4977 = vmatprep.subr.bf16.mxu0 0
  %4978 = vmatpush1.bf16.msra.mxu0 %v4964
  %4979 = vmatprep.subr.bf16.mxu0 0
  %4980 = vmatpush1.bf16.msra.mxu0 %v4965
  %4981 = vmatprep.subr.bf16.mxu0 0
  %4982 = vmatpush1.bf16.msra.mxu0 0
  %4983 = vmatprep.subr.bf16.mxu0 0
  %4984 = vmatpush1.bf16.msra.mxu0 0
  %4985 = vmatprep.subr.bf16.mxu0 0
  %4986 = vmatpush1.bf16.msra.mxu0 0
  %4987 = vmatprep.subr.bf16.mxu0 0
  %4988 = vmatpush1.bf16.msra.mxu0 0
  %4989 = vmatprep.subr.bf16.mxu0 0
  %4990 = vmatpush1.bf16.msra.mxu0 0
  %4991 = vmatprep.subr.bf16.mxu0 0
  %4992 = vmatpush1.bf16.msra.mxu0 0
  %4993 = vmatprep.subr.bf16.mxu0 0
  %4994 = vmatpush1.bf16.msra.mxu0 0
  %4995 = vmatprep.subr.bf16.mxu0 0
  %4996 = vmatpush1.bf16.msra.mxu0 0
  %4997 = vmatprep.subr.bf16.mxu0 0
  %4998 = vmatpush1.bf16.msra.mxu0 0
  %4999 = vmatprep.subr.bf16.mxu0 0
  %5000 = vmatpush1.bf16.msra.mxu0 0
  %5001 = vmatprep.subr.bf16.mxu0 0
  %5002 = vmatpush1.bf16.msra.mxu0 0
  %5003 = vmatprep.subr.bf16.mxu0 0
  %5004 = vmatpush1.bf16.msra.mxu0 0
  %5005 = vmatprep.mubr.bf16.mxu0 0
  %5006 = vmatmul.mubr.bf16.gmra.mrb[0].mxu0 %v4971
  %v5007 = vpop.f32.mrb[0].mxu0
  %v5008 = vadd.f32 %v4944, %v5007
  %v5009 = vpop.f32.mrb[0].mxu0
  %v5010 = vpop.f32.mrb[0].mxu0
  %v5011 = vpop.f32.mrb[0].mxu0
  %5012 = vdwg.mxu0
  %v5013 = vld [vmem:[%s23] sm:$0xf]
  %v5014 = vld [vmem:[%s23 + $0x4] sm:$0xf]
  %v5015 = vld [vmem:[%s23 + $0x8] sm:$0xf]
  %v5016 = vld [vmem:[%s23 + $0xc] sm:$0xf]
  %v5017 = vpack.c.bf16 %v5008, %v5008
  %v5022 = vunpack.c.l.b16 %v5013
  %v5023 = vunpack.c.l.b16 %v5014
  %v5024 = vunpack.c.l.b16 %v5015
  %v5025 = vunpack.c.l.b16 %v5016
  %v5026 = vpack.c.b16 %v5023, %v5022
  %v5027 = vpack.c.b16 %v5025, %v5024
  %v5031 = vsel %vm110, %v5017, 0
  %5033 = vmatprep.subr.bf16.mxu0 0
  %5034 = vmatpush1.bf16.msra.mxu0 %v5026
  %5035 = vmatprep.subr.bf16.mxu0 0
  %5036 = vmatpush1.bf16.msra.mxu0 %v5027
  %5037 = vmatprep.subr.bf16.mxu0 0
  %5038 = vmatpush1.bf16.msra.mxu0 0
  %5039 = vmatprep.subr.bf16.mxu0 0
  %5040 = vmatpush1.bf16.msra.mxu0 0
  %5041 = vmatprep.subr.bf16.mxu0 0
  %5042 = vmatpush1.bf16.msra.mxu0 0
  %5043 = vmatprep.subr.bf16.mxu0 0
  %5044 = vmatpush1.bf16.msra.mxu0 0
  %5045 = vmatprep.subr.bf16.mxu0 0
  %5046 = vmatpush1.bf16.msra.mxu0 0
  %5047 = vmatprep.subr.bf16.mxu0 0
  %5048 = vmatpush1.bf16.msra.mxu0 0
  %5049 = vmatprep.subr.bf16.mxu0 0
  %5050 = vmatpush1.bf16.msra.mxu0 0
  %5051 = vmatprep.subr.bf16.mxu0 0
  %5052 = vmatpush1.bf16.msra.mxu0 0
  %5053 = vmatprep.subr.bf16.mxu0 0
  %5054 = vmatpush1.bf16.msra.mxu0 0
  %5055 = vmatprep.subr.bf16.mxu0 0
  %5056 = vmatpush1.bf16.msra.mxu0 0
  %5057 = vmatprep.subr.bf16.mxu0 0
  %5058 = vmatpush1.bf16.msra.mxu0 0
  %5059 = vmatprep.subr.bf16.mxu0 0
  %5060 = vmatpush1.bf16.msra.mxu0 0
  %5061 = vmatprep.subr.bf16.mxu0 0
  %5062 = vmatpush1.bf16.msra.mxu0 0
  %5063 = vmatprep.subr.bf16.mxu0 0
  %5064 = vmatpush1.bf16.msra.mxu0 0
  %5065 = vmatprep.mubr.bf16.mxu0 0
  %5066 = vmatmul.mubr.bf16.gmra.mrb[0].mxu0 %v5031
  %v5067 = vpop.f32.mrb[0].mxu0
  %v5068 = vadd.f32 0.0, %v5067
  %v5069 = vpop.f32.mrb[0].mxu0
  %v5070 = vpop.f32.mrb[0].mxu0
  %v5071 = vpop.f32.mrb[0].mxu0
  %5072 = vdwg.mxu0
  %v5073 = vmax.f32 %v5008, 0.0
  %v5074 = vld [vmem:[%s24] sm:$0xf]
  %v5075 = vld [vmem:[%s24 + $0x4] sm:$0xf]
  %v5076 = vld [vmem:[%s24 + $0x8] sm:$0xf]
  %v5077 = vld [vmem:[%s24 + $0xc] sm:$0xf]
  %v5078 = vpack.c.bf16 %v5073, %v5073
  %v5079 = vld [vmem:[%s25] sm:$0x1]
  %v5081 = vlaneseq
  %v5082 = vshrl.u32 %v5081, 7
  %v5083 = vsub.s32 0, %v5082
  %v5084 = vrot.slane %v5079, %v5083
  %v5090 = vunpack.c.l.b16 %v5074
  %v5091 = vunpack.c.l.b16 %v5075
  %v5092 = vunpack.c.l.b16 %v5076
  %v5093 = vunpack.c.l.b16 %v5077
  %v5094 = vpack.c.b16 %v5091, %v5090
  %v5095 = vpack.c.b16 %v5093, %v5092
  %v5099 = vsel %vm110, %v5078, 0
  %5101 = vmatprep.subr.bf16.mxu0 0
  %5102 = vmatpush1.bf16.msra.mxu0 %v5094
  %5103 = vmatprep.subr.bf16.mxu0 0
  %5104 = vmatpush1.bf16.msra.mxu0 %v5095
  %5105 = vmatprep.subr.bf16.mxu0 0
  %5106 = vmatpush1.bf16.msra.mxu0 0
  %5107 = vmatprep.subr.bf16.mxu0 0
  %5108 = vmatpush1.bf16.msra.mxu0 0
  %5109 = vmatprep.subr.bf16.mxu0 0
  %5110 = vmatpush1.bf16.msra.mxu0 0
  %5111 = vmatprep.subr.bf16.mxu0 0
  %5112 = vmatpush1.bf16.msra.mxu0 0
  %5113 = vmatprep.subr.bf16.mxu0 0
  %5114 = vmatpush1.bf16.msra.mxu0 0
  %5115 = vmatprep.subr.bf16.mxu0 0
  %5116 = vmatpush1.bf16.msra.mxu0 0
  %5117 = vmatprep.subr.bf16.mxu0 0
  %5118 = vmatpush1.bf16.msra.mxu0 0
  %5119 = vmatprep.subr.bf16.mxu0 0
  %5120 = vmatpush1.bf16.msra.mxu0 0
  %5121 = vmatprep.subr.bf16.mxu0 0
  %5122 = vmatpush1.bf16.msra.mxu0 0
  %5123 = vmatprep.subr.bf16.mxu0 0
  %5124 = vmatpush1.bf16.msra.mxu0 0
  %5125 = vmatprep.subr.bf16.mxu0 0
  %5126 = vmatpush1.bf16.msra.mxu0 0
  %5127 = vmatprep.subr.bf16.mxu0 0
  %5128 = vmatpush1.bf16.msra.mxu0 0
  %5129 = vmatprep.subr.bf16.mxu0 0
  %5130 = vmatpush1.bf16.msra.mxu0 0
  %5131 = vmatprep.subr.bf16.mxu0 0
  %5132 = vmatpush1.bf16.msra.mxu0 0
  %5133 = vmatprep.mubr.bf16.mxu0 0
  %5134 = vmatmul.mubr.bf16.gmra.mrb[0].mxu0 %v5099
  %v5135 = vpop.f32.mrb[0].mxu0
  %v5136 = vadd.f32 %v5084, %v5135
  %v5137 = vpop.f32.mrb[0].mxu0
  %v5138 = vpop.f32.mrb[0].mxu0
  %v5139 = vpop.f32.mrb[0].mxu0
  %5140 = vdwg.mxu0
  %5142 = vrot.lane.b32.xlu0 %v5136, 6
  %v5143 = vpop.permute.xlu0 %5142
  %vm5145 = vcmask 48128
  %v5146 = vsel %vm5145, %v5068, %v5143
  %vm5147 = vcmask 74752
  %5148 = vst.msk [vmem:[%s26] sm:$0x3] %vm5147, %v5146
  // Predicated region
  $region106: #{multitask_forward.1} parent=0 // pred_check
    _
  $region107: #{multitask_forward.1} parent=0 // pred_check_branch
    %5150 = sbr.rel (0) target = $region109
  $region108: #{multitask_forward.1} parent=0 // pred_region
    _
  $region109: #{multitask_forward.1} parent=0 // pred_fallthru
    _
  // Predicated region
  $region110: #{multitask_forward.1} parent=0 // pred_check
    _
  $region111: #{multitask_forward.1} parent=0 // pred_check_branch
    %5152 = sbr.rel (0) target = $region113
  $region112: #{multitask_forward.1} parent=0 // pred_region
    _
  $region113: #{multitask_forward.1} parent=0 // pred_fallthru
    _

</llo_original>
